<compile_context>
chip_gen: v6e
topology: v6e:2x2x1
jax: 0.10.0
libtpu: 0.0.40
codegen_flags: <defaults>
</compile_context>

<pallas_src>
import functools
import math

import jax
import jax.numpy as jnp
from jax.experimental import pallas as pl
from jax.experimental.pallas import tpu as pltpu


def _layer_norm(v, gamma, beta, eps, d):
    # torch.std is unbiased (d-1); eps is added to std, not var (Annotated
    # Transformer custom LayerNorm). Exact division for tight allclose.
    mean = jnp.mean(v, axis=-1, keepdims=True)
    centered = v - mean
    var = jnp.sum(centered * centered, axis=-1, keepdims=True) * (1.0 / (d - 1))
    std = jnp.sqrt(var)
    return gamma * (centered / (std + eps)) + beta


def encoder_layer_kernel(
    x_full_ref, x_tile_ref, mask_ref,
    wq_ref, bq_ref, wk_ref, bk_ref, wv_ref, bv_ref, wo_ref, bo_ref,
    g1_ref, be1_ref,
    w1_ref, bf1_ref, w2_ref, bf2_ref,
    g2_ref, be2_ref,
    o_ref,
    k_cache, v_cache, heads_ref, ff_acc,
    *, num_heads, d_k, eps, ffn_chunk,
):
    f32 = jnp.float32
    bf16 = jnp.bfloat16

    Bb, S, D = x_full_ref.shape
    TQ = x_tile_ref.shape[1]
    d_ff = w1_ref.shape[-1]
    qt = pl.program_id(1)

    # ---- once per batch block: K/V over the full sequence, cached in VMEM ----
    @pl.when(qt == 0)
    def _():
        xf = x_full_ref[...]                                    # (Bb, S, D) f32
        xn = _layer_norm(xf, g1_ref[...], be1_ref[...], eps, D)
        xn2d = xn.reshape(Bb * S, D).astype(bf16)               # M = Bb*S
        k = jnp.dot(xn2d, wk_ref[...], preferred_element_type=f32) + bk_ref[...]
        v = jnp.dot(xn2d, wv_ref[...], preferred_element_type=f32) + bv_ref[...]
        k_cache[...] = k.astype(bf16).reshape(Bb, S, D)
        v_cache[...] = v.astype(bf16).reshape(Bb, S, D)

    # ---- sublayer 0 on this q-tile: x + self_attn(norm(x)) -------------------
    x_t = x_tile_ref[...]                                       # (Bb, TQ, D) f32
    xn_t = _layer_norm(x_t, g1_ref[...], be1_ref[...], eps, D)
    xn_t2 = xn_t.reshape(Bb * TQ, D).astype(bf16)

    # Q projection at M = Bb*TQ, K = D; 1/sqrt(d_k) folded into Q once.
    q = jnp.dot(xn_t2, wq_ref[...], preferred_element_type=f32) + bq_ref[...]
    q = q * (1.0 / math.sqrt(d_k))
    q_b = q.astype(bf16).reshape(Bb, TQ, D)

    # Per-batch-row attention (mask differs per row).  Each head stores its
    # output into its column slice of the bf16 scratch; the output projection
    # is a single full-K matmul afterwards (no per-head K=d_k Wo dots, no
    # loop-carried f32 accumulator).
    # TODO(synk): on v6e/v7x a single head-batched dot_general over a
    # (H, TQ, d_k) layout would further amortize MXU drains.
    for b in range(Bb):                                         # static, small
        mask_row = mask_ref[b]                                  # (1, S) f32
        mask_bias = jnp.broadcast_to(
            jnp.where(mask_row > 0.0, 0.0, -1e9), (TQ, S))      # hoisted once
        qb = q_b[b]                                             # (TQ, D) bf16
        kb = k_cache[b]                                         # (S, D)  bf16
        vb = v_cache[b]
        for h in range(num_heads):                              # static unroll
            lo, hi = h * d_k, (h + 1) * d_k
            s = jax.lax.dot_general(
                qb[:, lo:hi], kb[:, lo:hi],
                (((1,), (1,)), ((), ())),
                preferred_element_type=f32)                     # (TQ, S)
            s = s + mask_bias
            m = jnp.max(s, axis=-1, keepdims=True)
            p = jnp.exp(s - m)
            p = p * pl.reciprocal(jnp.sum(p, axis=-1, keepdims=True), approx=True)
            ho = jnp.dot(p.astype(bf16), vb[:, lo:hi],
                         preferred_element_type=f32)            # (TQ, d_k)
            heads_ref[b, :, lo:hi] = ho.astype(bf16)

    heads2d = heads_ref[...].reshape(Bb * TQ, D)                # bf16, staged
    attn = jnp.dot(heads2d, wo_ref[...],
                   preferred_element_type=f32) + bo_ref[...]    # one K=D matmul
    x1 = x_t.reshape(Bb * TQ, D) + attn                         # residual 1

    # ---- sublayer 1 on this q-tile: x1 + ffn(norm(x1)) -----------------------
    xn2 = _layer_norm(x1, g2_ref[...], be2_ref[...], eps, D)
    xn2_b = xn2.astype(bf16)

    ff_acc[...] = jnp.zeros_like(ff_acc)
    # TODO(synk): for very large d_ff on v7x (64 MiB VMEM/TC), stream w1/w2
    # chunks from HBM via a d_ff grid axis / pltpu.emit_pipeline instead of
    # keeping them fully resident.
    for c0 in range(0, d_ff, ffn_chunk):                        # static unroll
        c1 = min(c0 + ffn_chunk, d_ff)
        h1 = jnp.dot(xn2_b, w1_ref[:, c0:c1],
                     preferred_element_type=f32) + bf1_ref[:, c0:c1]
        h1 = jnp.maximum(h1, 0.0)
        # Accumulate into a VMEM scratch ref -> bounds vreg live ranges.
        ff_acc[...] += jnp.dot(h1.astype(bf16), w2_ref[c0:c1, :],
                               preferred_element_type=f32)

    out = x1 + ff_acc[...] + bf2_ref[...]
    o_ref[...] = out.reshape(Bb, TQ, D)


def encoder_layer(x, mask, params, *, num_heads, q_tile=256, ffn_chunk=512):
    B, S, D = x.shape
    d_ff = params["w1"].shape[1]
    d_k = D // num_heads

    # Query-tile size (grid axis 1).
    # TODO(synk): pad S to a multiple of the q-tile (masking pad keys) for
    # ragged / non-multiple sequence lengths; here we fall back to TQ = S.
    TQ = min(q_tile, S)
    if S % TQ != 0:
        TQ = S
    num_qt = S // TQ

    # Block several batch rows per grid step when the q-tile is small so the
    # projection / FFN matmuls see M = Bb*TQ >= 128 rows.
    Bb = 1
    if TQ < 128:
        Bb = min(B, max(1, 128 // TQ))
        while B % Bb != 0:
            Bb -= 1
    num_bb = B // Bb

    kern = functools.partial(
        encoder_layer_kernel,
        num_heads=num_heads, d_k=d_k, eps=1e-6,
        ffn_chunk=min(ffn_chunk, d_ff),
    )

    def bf16(a):
        return a.astype(jnp.bfloat16)

    # bf16 MXU operands, f32 accumulation; biases / LN params stay f32.
    wq, wk, wv, wo = bf16(params["wq"]), bf16(params["wk"]), bf16(params["wv"]), bf16(params["wo"])
    w1, w2 = bf16(params["w1"]), bf16(params["w2"])

    args = (
        x, x, mask,
        wq, params["bq"], wk, params["bk"],
        wv, params["bv"], wo, params["bo"],
        params["g1"], params["be1"],
        w1, params["bf1"], w2, params["bf2"],
        params["g2"], params["be2"],
    )

    try:
        vmem_cap = int(pltpu.get_tpu_info().vmem_capacity_bytes)
    except Exception:
        vmem_cap = 64 * 1024 * 1024

    def make_call(single_buffer_weights):
        def full_spec(a):
            nd = a.ndim
            if single_buffer_weights:
                # Grid-invariant operands: one resident copy instead of two.
                return pl.BlockSpec(a.shape, lambda b, q, _nd=nd: (0,) * _nd,
                                    pipeline_mode=pl.Buffered(1))
            return pl.BlockSpec(a.shape, lambda b, q, _nd=nd: (0,) * _nd)

        in_specs = [
            pl.BlockSpec((Bb, S, D), lambda b, q: (b, 0, 0)),    # x (full seq -> K/V)
            pl.BlockSpec((Bb, TQ, D), lambda b, q: (b, q, 0)),   # x (q-tile)
            pl.BlockSpec((Bb, 1, S), lambda b, q: (b, 0, 0)),    # mask
            full_spec(wq), full_spec(params["bq"]),
            full_spec(wk), full_spec(params["bk"]),
            full_spec(wv), full_spec(params["bv"]),
            full_spec(wo), full_spec(params["bo"]),
            full_spec(params["g1"]), full_spec(params["be1"]),
            full_spec(w1), full_spec(params["bf1"]),
            full_spec(w2), full_spec(params["bf2"]),
            full_spec(params["g2"]), full_spec(params["be2"]),
        ]

        # VMEM budget: weights (1 or 2 buffers), biases, pipelined I/O blocks,
        # scratch, and the dominant in-flight temporaries (scores, f32 acts).
        wbuf = 1 if single_buffer_weights else 2
        weight_bytes = wbuf * 2 * (4 * D * D + 2 * D * d_ff)         # bf16
        bias_bytes = wbuf * 4 * (8 * D + d_ff)                       # f32
        io_bytes = 2 * 4 * (Bb * S * D + 2 * Bb * TQ * D + Bb * S)   # dbl-buf
        scratch_bytes = 2 * (2 * Bb * S * D + Bb * TQ * D) + 4 * Bb * TQ * D
        act_bytes = 4 * (8 * Bb * TQ * D + 6 * Bb * S * D
                         + 4 * TQ * S + 2 * Bb * TQ * min(ffn_chunk, d_ff))
        est = weight_bytes + bias_bytes + io_bytes + scratch_bytes + act_bytes
        est += 4 * 1024 * 1024                   # compiler-internal headroom
        vmem_limit = int(min(max(est, 32 * 1024 * 1024), int(0.9 * vmem_cap)))

        return pl.pallas_call(
            kern,
            out_shape=jax.ShapeDtypeStruct((B, S, D), jnp.float32),
            grid=(num_bb, num_qt),
            in_specs=in_specs,
            out_specs=pl.BlockSpec((Bb, TQ, D), lambda b, q: (b, q, 0)),
            scratch_shapes=[
                pltpu.VMEM((Bb, S, D), jnp.bfloat16),    # K cache (per batch block)
                pltpu.VMEM((Bb, S, D), jnp.bfloat16),    # V cache
                pltpu.VMEM((Bb, TQ, D), jnp.bfloat16),   # staged head outputs
                pltpu.VMEM((Bb * TQ, D), jnp.float32),   # FFN accumulator
            ],
            compiler_params=pltpu.CompilerParams(
                # q-tile axis must be "arbitrary": the K/V scratch written at
                # qt==0 is reused by later q-tiles of the same batch block.
                dimension_semantics=("parallel", "arbitrary"),
                vmem_limit_bytes=vmem_limit,
            ),
        )

    try:
        return make_call(True)(*args)
    except Exception:
        # TODO(synk): pl.Buffered(1) single-buffering rejected by this
        # jax/Mosaic version; fall back to default double-buffered weights.
        return make_call(False)(*args)


def init_params(key, d_model, d_ff):
    ks = jax.random.split(key, 8)
    scale = 0.05

    def w(k, shape):
        return (scale * jax.random.normal(k, shape)).astype(jnp.float32)

    return {
        "wq": w(ks[0], (d_model, d_model)), "bq": jnp.zeros((1, d_model), jnp.float32),
        "wk": w(ks[1], (d_model, d_model)), "bk": jnp.zeros((1, d_model), jnp.float32),
        "wv": w(ks[2], (d_model, d_model)), "bv": jnp.zeros((1, d_model), jnp.float32),
        "wo": w(ks[3], (d_model, d_model)), "bo": jnp.zeros((1, d_model), jnp.float32),
        "g1": jnp.ones((1, d_model), jnp.float32), "be1": jnp.zeros((1, d_model), jnp.float32),
        "w1": w(ks[4], (d_model, d_ff)), "bf1": jnp.zeros((1, d_ff), jnp.float32),
        "w2": w(ks[5], (d_ff, d_model)), "bf2": jnp.zeros((1, d_model), jnp.float32),
        "g2": jnp.ones((1, d_model), jnp.float32), "be2": jnp.zeros((1, d_model), jnp.float32),
    }


if __name__ == "__main__":
    # Small but lane-dense demo shapes (D = 128 -> full 128-lane stores).
    B, S, D, H, D_FF = 2, 16, 128, 4, 256

    key = jax.random.PRNGKey(0)
    kx, kp = jax.random.split(key)

    x = jax.random.normal(kx, (B, S, D), dtype=jnp.float32)
    # key_value_mask: last two key positions of batch 1 are masked out.
    mask = jnp.ones((B, 1, S), dtype=jnp.float32)
    mask = mask.at[1, 0, S - 2:].set(0.0)

    params = init_params(kp, D, D_FF)

    out = encoder_layer(x, mask, params, num_heads=H)
    out = jax.block_until_ready(out)
    assert out.shape == (B, S, D)
    assert bool(jnp.all(jnp.isfinite(out)))

    print("KERNEL_OK")
</pallas_src>

<mosaic_0001>
module attributes {stable_mosaic.version = 11 : i64} {
  func.func @encoder_layer_kernel(%arg0: i32, %arg1: i32, %arg2: memref<2x16x128xf32, #tpu.memory_space<vmem>>, %arg3: memref<2x16x128xf32, #tpu.memory_space<vmem>>, %arg4: memref<2x1x16xf32, #tpu.memory_space<vmem>>, %arg5: memref<128x128xbf16, #tpu.memory_space<vmem>>, %arg6: memref<1x128xf32, #tpu.memory_space<vmem>>, %arg7: memref<128x128xbf16, #tpu.memory_space<vmem>>, %arg8: memref<1x128xf32, #tpu.memory_space<vmem>>, %arg9: memref<128x128xbf16, #tpu.memory_space<vmem>>, %arg10: memref<1x128xf32, #tpu.memory_space<vmem>>, %arg11: memref<128x128xbf16, #tpu.memory_space<vmem>>, %arg12: memref<1x128xf32, #tpu.memory_space<vmem>>, %arg13: memref<1x128xf32, #tpu.memory_space<vmem>>, %arg14: memref<1x128xf32, #tpu.memory_space<vmem>>, %arg15: memref<128x256xbf16, #tpu.memory_space<vmem>>, %arg16: memref<1x256xf32, #tpu.memory_space<vmem>>, %arg17: memref<256x128xbf16, #tpu.memory_space<vmem>>, %arg18: memref<1x128xf32, #tpu.memory_space<vmem>>, %arg19: memref<1x128xf32, #tpu.memory_space<vmem>>, %arg20: memref<1x128xf32, #tpu.memory_space<vmem>>, %arg21: memref<2x16x128xf32, #tpu.memory_space<vmem>>, %arg22: memref<2x16x128xbf16, #tpu.memory_space<vmem>>, %arg23: memref<2x16x128xbf16, #tpu.memory_space<vmem>>, %arg24: memref<2x16x128xbf16, #tpu.memory_space<vmem>>, %arg25: memref<32x128xf32, #tpu.memory_space<vmem>>) attributes {dimension_semantics = [#tpu.dimension_semantics<parallel>, #tpu.dimension_semantics<arbitrary>], iteration_bounds = array<i64: 1, 1>, scalar_prefetch = 0 : i64, scratch_operands = 4 : i64, tpu.core_type = #tpu.core_type<tc>, window_params = [{transform_indices = @transform_0, window_bounds = array<i64: 2, 16, 128>}, {transform_indices = @transform_1, window_bounds = array<i64: 2, 16, 128>}, {transform_indices = @transform_2, window_bounds = array<i64: 2, 1, 16>}, {pipeline_mode = #tpu.pipeline_mode<synchronous>, transform_indices = @transform_3, window_bounds = array<i64: 128, 128>}, {pipeline_mode = #tpu.pipeline_mode<synchronous>, transform_indices = @transform_4, window_bounds = array<i64: 1, 128>}, {pipeline_mode = #tpu.pipeline_mode<synchronous>, transform_indices = @transform_5, window_bounds = array<i64: 128, 128>}, {pipeline_mode = #tpu.pipeline_mode<synchronous>, transform_indices = @transform_6, window_bounds = array<i64: 1, 128>}, {pipeline_mode = #tpu.pipeline_mode<synchronous>, transform_indices = @transform_7, window_bounds = array<i64: 128, 128>}, {pipeline_mode = #tpu.pipeline_mode<synchronous>, transform_indices = @transform_8, window_bounds = array<i64: 1, 128>}, {pipeline_mode = #tpu.pipeline_mode<synchronous>, transform_indices = @transform_9, window_bounds = array<i64: 128, 128>}, {pipeline_mode = #tpu.pipeline_mode<synchronous>, transform_indices = @transform_10, window_bounds = array<i64: 1, 128>}, {pipeline_mode = #tpu.pipeline_mode<synchronous>, transform_indices = @transform_11, window_bounds = array<i64: 1, 128>}, {pipeline_mode = #tpu.pipeline_mode<synchronous>, transform_indices = @transform_12, window_bounds = array<i64: 1, 128>}, {pipeline_mode = #tpu.pipeline_mode<synchronous>, transform_indices = @transform_13, window_bounds = array<i64: 128, 256>}, {pipeline_mode = #tpu.pipeline_mode<synchronous>, transform_indices = @transform_14, window_bounds = array<i64: 1, 256>}, {pipeline_mode = #tpu.pipeline_mode<synchronous>, transform_indices = @transform_15, window_bounds = array<i64: 256, 128>}, {pipeline_mode = #tpu.pipeline_mode<synchronous>, transform_indices = @transform_16, window_bounds = array<i64: 1, 128>}, {pipeline_mode = #tpu.pipeline_mode<synchronous>, transform_indices = @transform_17, window_bounds = array<i64: 1, 128>}, {pipeline_mode = #tpu.pipeline_mode<synchronous>, transform_indices = @transform_18, window_bounds = array<i64: 1, 128>}, {transform_indices = @transform_19, window_bounds = array<i64: 2, 16, 128>}]} {
    %c0_i32 = arith.constant 0 : i32
    %0 = arith.cmpi eq, %arg1, %c0_i32 : i32
    %1 = arith.extui %0 : i1 to i32
    %c0_i32_0 = arith.constant 0 : i32
    %2 = arith.cmpi ne, %1, %c0_i32_0 : i32
    scf.if %2 {
      %c0_133 = arith.constant 0 : index
      %c0_134 = arith.constant 0 : index
      %c0_135 = arith.constant 0 : index
      %291 = vector.load %arg2[%c0_133, %c0_134, %c0_135] : memref<2x16x128xf32, #tpu.memory_space<vmem>>, vector<2x16x128xf32>
      %c0_136 = arith.constant 0 : index
      %c0_137 = arith.constant 0 : index
      %292 = vector.load %arg13[%c0_136, %c0_137] : memref<1x128xf32, #tpu.memory_space<vmem>>, vector<1x128xf32>
      %c0_138 = arith.constant 0 : index
      %c0_139 = arith.constant 0 : index
      %293 = vector.load %arg14[%c0_138, %c0_139] : memref<1x128xf32, #tpu.memory_space<vmem>>, vector<1x128xf32>
      %cst_140 = arith.constant dense<0.000000e+00> : vector<2x16xf32>
      %294 = vector.multi_reduction <add>, %291, %cst_140 [2] : vector<2x16x128xf32> to vector<2x16xf32>
      %295 = vector.shape_cast %294 : vector<2x16xf32> to vector<2x16x1xf32>
      %cst_141 = arith.constant 1.280000e+02 : f32
      %296 = vector.broadcast %cst_141 : f32 to vector<2x16x1xf32>
      %297 = arith.divf %295, %296 : vector<2x16x1xf32>
      %298 = vector.broadcast %297 : vector<2x16x1xf32> to vector<2x16x128xf32>
      %299 = arith.subf %291, %298 : vector<2x16x128xf32>
      %300 = arith.mulf %299, %299 : vector<2x16x128xf32>
      %cst_142 = arith.constant dense<0.000000e+00> : vector<2x16xf32>
      %301 = vector.multi_reduction <add>, %300, %cst_142 [2] : vector<2x16x128xf32> to vector<2x16xf32>
      %302 = vector.shape_cast %301 : vector<2x16xf32> to vector<2x16x1xf32>
      %cst_143 = arith.constant 0.00787401571 : f32
      %303 = vector.broadcast %cst_143 : f32 to vector<2x16x1xf32>
      %304 = arith.mulf %302, %303 : vector<2x16x1xf32>
      %305 = math.sqrt %304 : vector<2x16x1xf32>
      %cst_144 = arith.constant 9.99999997E-7 : f32
      %306 = vector.broadcast %cst_144 : f32 to vector<2x16x1xf32>
      %307 = arith.addf %305, %306 : vector<2x16x1xf32>
      %308 = vector.broadcast %307 : vector<2x16x1xf32> to vector<2x16x128xf32>
      %309 = arith.divf %299, %308 : vector<2x16x128xf32>
      %310 = vector.shape_cast %292 : vector<1x128xf32> to vector<1x1x128xf32>
      %311 = vector.broadcast %310 : vector<1x1x128xf32> to vector<2x16x128xf32>
      %312 = arith.mulf %311, %309 : vector<2x16x128xf32>
      %313 = vector.shape_cast %293 : vector<1x128xf32> to vector<1x1x128xf32>
      %314 = vector.broadcast %313 : vector<1x1x128xf32> to vector<2x16x128xf32>
      %315 = arith.addf %312, %314 : vector<2x16x128xf32>
      %316 = vector.shape_cast %315 : vector<2x16x128xf32> to vector<32x128xf32>
      %317 = arith.truncf %316 : vector<32x128xf32> to vector<32x128xbf16>
      %c0_145 = arith.constant 0 : index
      %c0_146 = arith.constant 0 : index
      %318 = vector.load %arg7[%c0_145, %c0_146] : memref<128x128xbf16, #tpu.memory_space<vmem>>, vector<128x128xbf16>
      %cst_147 = arith.constant dense<0.000000e+00> : vector<32x128xf32>
      %319 = tpu.matmul %317, %318, %cst_147 {dimension_numbers = #tpu.dot_dimension_numbers<[1], [0], [0], [1], [0, 0, 1, 1], [], []>} : vector<32x128xbf16>, vector<128x128xbf16>, vector<32x128xf32> -> vector<32x128xf32>
      %c0_148 = arith.constant 0 : index
      %c0_149 = arith.constant 0 : index
      %320 = vector.load %arg8[%c0_148, %c0_149] : memref<1x128xf32, #tpu.memory_space<vmem>>, vector<1x128xf32>
      %321 = vector.broadcast %320 : vector<1x128xf32> to vector<32x128xf32>
      %322 = arith.addf %319, %321 : vector<32x128xf32>
      %c0_150 = arith.constant 0 : index
      %c0_151 = arith.constant 0 : index
      %323 = vector.load %arg9[%c0_150, %c0_151] : memref<128x128xbf16, #tpu.memory_space<vmem>>, vector<128x128xbf16>
      %cst_152 = arith.constant dense<0.000000e+00> : vector<32x128xf32>
      %324 = tpu.matmul %317, %323, %cst_152 {dimension_numbers = #tpu.dot_dimension_numbers<[1], [0], [0], [1], [0, 0, 1, 1], [], []>} : vector<32x128xbf16>, vector<128x128xbf16>, vector<32x128xf32> -> vector<32x128xf32>
      %c0_153 = arith.constant 0 : index
      %c0_154 = arith.constant 0 : index
      %325 = vector.load %arg10[%c0_153, %c0_154] : memref<1x128xf32, #tpu.memory_space<vmem>>, vector<1x128xf32>
      %326 = vector.broadcast %325 : vector<1x128xf32> to vector<32x128xf32>
      %327 = arith.addf %324, %326 : vector<32x128xf32>
      %328 = arith.truncf %322 : vector<32x128xf32> to vector<32x128xbf16>
      %329 = vector.shape_cast %328 : vector<32x128xbf16> to vector<2x16x128xbf16>
      %c0_155 = arith.constant 0 : index
      %c0_156 = arith.constant 0 : index
      %c0_157 = arith.constant 0 : index
      %330 = vector.load %arg22[%c0_155, %c0_156, %c0_157] : memref<2x16x128xbf16, #tpu.memory_space<vmem>>, vector<2x16x128xbf16>
      tpu.vector_store %arg22[%c0_155, %c0_156, %c0_157], %329 {strides = array<i32>} : memref<2x16x128xbf16, #tpu.memory_space<vmem>>, vector<2x16x128xbf16>,
      %331 = arith.truncf %327 : vector<32x128xf32> to vector<32x128xbf16>
      %332 = vector.shape_cast %331 : vector<32x128xbf16> to vector<2x16x128xbf16>
      %c0_158 = arith.constant 0 : index
      %c0_159 = arith.constant 0 : index
      %c0_160 = arith.constant 0 : index
      %333 = vector.load %arg23[%c0_158, %c0_159, %c0_160] : memref<2x16x128xbf16, #tpu.memory_space<vmem>>, vector<2x16x128xbf16>
      tpu.vector_store %arg23[%c0_158, %c0_159, %c0_160], %332 {strides = array<i32>} : memref<2x16x128xbf16, #tpu.memory_space<vmem>>, vector<2x16x128xbf16>,
    } else {
    }
    %c0 = arith.constant 0 : index
    %c0_1 = arith.constant 0 : index
    %c0_2 = arith.constant 0 : index
    %3 = vector.load %arg3[%c0, %c0_1, %c0_2] : memref<2x16x128xf32, #tpu.memory_space<vmem>>, vector<2x16x128xf32>
    %c0_3 = arith.constant 0 : index
    %c0_4 = arith.constant 0 : index
    %4 = vector.load %arg13[%c0_3, %c0_4] : memref<1x128xf32, #tpu.memory_space<vmem>>, vector<1x128xf32>
    %c0_5 = arith.constant 0 : index
    %c0_6 = arith.constant 0 : index
    %5 = vector.load %arg14[%c0_5, %c0_6] : memref<1x128xf32, #tpu.memory_space<vmem>>, vector<1x128xf32>
    %cst = arith.constant dense<0.000000e+00> : vector<2x16xf32>
    %6 = vector.multi_reduction <add>, %3, %cst [2] : vector<2x16x128xf32> to vector<2x16xf32>
    %7 = vector.shape_cast %6 : vector<2x16xf32> to vector<2x16x1xf32>
    %cst_7 = arith.constant 1.280000e+02 : f32
    %8 = vector.broadcast %cst_7 : f32 to vector<2x16x1xf32>
    %9 = arith.divf %7, %8 : vector<2x16x1xf32>
    %10 = vector.broadcast %9 : vector<2x16x1xf32> to vector<2x16x128xf32>
    %11 = arith.subf %3, %10 : vector<2x16x128xf32>
    %12 = arith.mulf %11, %11 : vector<2x16x128xf32>
    %cst_8 = arith.constant dense<0.000000e+00> : vector<2x16xf32>
    %13 = vector.multi_reduction <add>, %12, %cst_8 [2] : vector<2x16x128xf32> to vector<2x16xf32>
    %14 = vector.shape_cast %13 : vector<2x16xf32> to vector<2x16x1xf32>
    %cst_9 = arith.constant 0.00787401571 : f32
    %15 = vector.broadcast %cst_9 : f32 to vector<2x16x1xf32>
    %16 = arith.mulf %14, %15 : vector<2x16x1xf32>
    %17 = math.sqrt %16 : vector<2x16x1xf32>
    %cst_10 = arith.constant 9.99999997E-7 : f32
    %18 = vector.broadcast %cst_10 : f32 to vector<2x16x1xf32>
    %19 = arith.addf %17, %18 : vector<2x16x1xf32>
    %20 = vector.broadcast %19 : vector<2x16x1xf32> to vector<2x16x128xf32>
    %21 = arith.divf %11, %20 : vector<2x16x128xf32>
    %22 = vector.shape_cast %4 : vector<1x128xf32> to vector<1x1x128xf32>
    %23 = vector.broadcast %22 : vector<1x1x128xf32> to vector<2x16x128xf32>
    %24 = arith.mulf %23, %21 : vector<2x16x128xf32>
    %25 = vector.shape_cast %5 : vector<1x128xf32> to vector<1x1x128xf32>
    %26 = vector.broadcast %25 : vector<1x1x128xf32> to vector<2x16x128xf32>
    %27 = arith.addf %24, %26 : vector<2x16x128xf32>
    %28 = vector.shape_cast %27 : vector<2x16x128xf32> to vector<32x128xf32>
    %29 = arith.truncf %28 : vector<32x128xf32> to vector<32x128xbf16>
    %c0_11 = arith.constant 0 : index
    %c0_12 = arith.constant 0 : index
    %30 = vector.load %arg5[%c0_11, %c0_12] : memref<128x128xbf16, #tpu.memory_space<vmem>>, vector<128x128xbf16>
    %cst_13 = arith.constant dense<0.000000e+00> : vector<32x128xf32>
    %31 = tpu.matmul %29, %30, %cst_13 {dimension_numbers = #tpu.dot_dimension_numbers<[1], [0], [0], [1], [0, 0, 1, 1], [], []>} : vector<32x128xbf16>, vector<128x128xbf16>, vector<32x128xf32> -> vector<32x128xf32>
    %c0_14 = arith.constant 0 : index
    %c0_15 = arith.constant 0 : index
    %32 = vector.load %arg6[%c0_14, %c0_15] : memref<1x128xf32, #tpu.memory_space<vmem>>, vector<1x128xf32>
    %33 = vector.broadcast %32 : vector<1x128xf32> to vector<32x128xf32>
    %34 = arith.addf %31, %33 : vector<32x128xf32>
    %cst_16 = arith.constant 0.176776692 : f32
    %35 = vector.broadcast %cst_16 : f32 to vector<32x128xf32>
    %36 = arith.mulf %34, %35 : vector<32x128xf32>
    %37 = arith.truncf %36 : vector<32x128xf32> to vector<32x128xbf16>
    %38 = vector.shape_cast %37 : vector<32x128xbf16> to vector<2x16x128xbf16>
    %c0_17 = arith.constant 0 : index
    %c0_18 = arith.constant 0 : index
    %c0_19 = arith.constant 0 : index
    %39 = vector.load %arg4[%c0_17, %c0_18, %c0_19] : memref<2x1x16xf32, #tpu.memory_space<vmem>>, vector<1x1x16xf32>
    %40 = vector.shape_cast %39 : vector<1x1x16xf32> to vector<1x16xf32>
    %cst_20 = arith.constant 0.000000e+00 : f32
    %41 = vector.broadcast %cst_20 : f32 to vector<1x16xf32>
    %42 = arith.cmpf ogt, %40, %41 : vector<1x16xf32>
    %cst_21 = arith.constant 0.000000e+00 : f32
    %cst_22 = arith.constant -1.000000e+09 : f32
    %43 = vector.broadcast %cst_21 : f32 to vector<1x16xf32>
    %44 = vector.broadcast %cst_22 : f32 to vector<1x16xf32>
    %45 = arith.select %42, %43, %44 : vector<1x16xi1>, vector<1x16xf32>
    %46 = vector.shape_cast %45 : vector<1x16xf32> to vector<1x16xf32>
    %47 = vector.broadcast %46 : vector<1x16xf32> to vector<16x16xf32>
    %48 = vector.extract_strided_slice %38 {offsets = [0, 0, 0], sizes = [1, 16, 128], strides = [1, 1, 1]} : vector<2x16x128xbf16> to vector<1x16x128xbf16>
    %49 = vector.shape_cast %48 : vector<1x16x128xbf16> to vector<16x128xbf16>
    %c0_23 = arith.constant 0 : index
    %c0_24 = arith.constant 0 : index
    %c0_25 = arith.constant 0 : index
    %50 = vector.load %arg22[%c0_23, %c0_24, %c0_25] : memref<2x16x128xbf16, #tpu.memory_space<vmem>>, vector<1x16x128xbf16>
    %51 = vector.shape_cast %50 : vector<1x16x128xbf16> to vector<16x128xbf16>
    %c0_26 = arith.constant 0 : index
    %c0_27 = arith.constant 0 : index
    %c0_28 = arith.constant 0 : index
    %52 = vector.load %arg23[%c0_26, %c0_27, %c0_28] : memref<2x16x128xbf16, #tpu.memory_space<vmem>>, vector<1x16x128xbf16>
    %53 = vector.shape_cast %52 : vector<1x16x128xbf16> to vector<16x128xbf16>
    %54 = vector.extract_strided_slice %49 {offsets = [0, 0], sizes = [16, 32], strides = [1, 1]} : vector<16x128xbf16> to vector<16x32xbf16>
    %55 = vector.extract_strided_slice %51 {offsets = [0, 0], sizes = [16, 32], strides = [1, 1]} : vector<16x128xbf16> to vector<16x32xbf16>
    %cst_29 = arith.constant dense<0.000000e+00> : vector<16x16xf32>
    %56 = tpu.matmul %54, %55, %cst_29 {dimension_numbers = #tpu.dot_dimension_numbers<[1], [1], [0], [0], [0, 0, 1, 0], [], []>} : vector<16x32xbf16>, vector<16x32xbf16>, vector<16x16xf32> -> vector<16x16xf32>
    %57 = arith.addf %56, %47 : vector<16x16xf32>
    %cst_30 = arith.constant dense<0xFF800000> : vector<16xf32>
    %58 = vector.multi_reduction <maximumf>, %57, %cst_30 [1] : vector<16x16xf32> to vector<16xf32>
    %59 = vector.shape_cast %58 : vector<16xf32> to vector<16x1xf32>
    %60 = vector.broadcast %59 : vector<16x1xf32> to vector<16x16xf32>
    %61 = arith.subf %57, %60 : vector<16x16xf32>
    %62 = math.exp %61 : vector<16x16xf32>
    %cst_31 = arith.constant dense<0.000000e+00> : vector<16xf32>
    %63 = vector.multi_reduction <add>, %62, %cst_31 [1] : vector<16x16xf32> to vector<16xf32>
    %64 = vector.shape_cast %63 : vector<16xf32> to vector<16x1xf32>
    %65 = tpu.reciprocal %64 {approx = true} : vector<16x1xf32> -> vector<16x1xf32>
    %66 = vector.broadcast %65 : vector<16x1xf32> to vector<16x16xf32>
    %67 = arith.mulf %62, %66 : vector<16x16xf32>
    %68 = arith.truncf %67 : vector<16x16xf32> to vector<16x16xbf16>
    %69 = vector.extract_strided_slice %53 {offsets = [0, 0], sizes = [16, 32], strides = [1, 1]} : vector<16x128xbf16> to vector<16x32xbf16>
    %cst_32 = arith.constant dense<0.000000e+00> : vector<16x32xf32>
    %70 = tpu.matmul %68, %69, %cst_32 {dimension_numbers = #tpu.dot_dimension_numbers<[1], [0], [0], [1], [0, 0, 1, 1], [], []>} : vector<16x16xbf16>, vector<16x32xbf16>, vector<16x32xf32> -> vector<16x32xf32>
    %71 = arith.truncf %70 : vector<16x32xf32> to vector<16x32xbf16>
    %c0_33 = arith.constant 0 : index
    %c0_34 = arith.constant 0 : index
    %c0_35 = arith.constant 0 : index
    %72 = vector.load %arg24[%c0_33, %c0_34, %c0_35] : memref<2x16x128xbf16, #tpu.memory_space<vmem>>, vector<1x16x32xbf16>
    %73 = vector.shape_cast %72 : vector<1x16x32xbf16> to vector<16x32xbf16>
    %74 = vector.shape_cast %71 : vector<16x32xbf16> to vector<1x16x32xbf16>
    tpu.vector_store %arg24[%c0_33, %c0_34, %c0_35], %74 {strides = array<i32>} : memref<2x16x128xbf16, #tpu.memory_space<vmem>>, vector<1x16x32xbf16>,
    %75 = vector.extract_strided_slice %49 {offsets = [0, 32], sizes = [16, 32], strides = [1, 1]} : vector<16x128xbf16> to vector<16x32xbf16>
    %76 = vector.extract_strided_slice %51 {offsets = [0, 32], sizes = [16, 32], strides = [1, 1]} : vector<16x128xbf16> to vector<16x32xbf16>
    %cst_36 = arith.constant dense<0.000000e+00> : vector<16x16xf32>
    %77 = tpu.matmul %75, %76, %cst_36 {dimension_numbers = #tpu.dot_dimension_numbers<[1], [1], [0], [0], [0, 0, 1, 0], [], []>} : vector<16x32xbf16>, vector<16x32xbf16>, vector<16x16xf32> -> vector<16x16xf32>
    %78 = arith.addf %77, %47 : vector<16x16xf32>
    %cst_37 = arith.constant dense<0xFF800000> : vector<16xf32>
    %79 = vector.multi_reduction <maximumf>, %78, %cst_37 [1] : vector<16x16xf32> to vector<16xf32>
    %80 = vector.shape_cast %79 : vector<16xf32> to vector<16x1xf32>
    %81 = vector.broadcast %80 : vector<16x1xf32> to vector<16x16xf32>
    %82 = arith.subf %78, %81 : vector<16x16xf32>
    %83 = math.exp %82 : vector<16x16xf32>
    %cst_38 = arith.constant dense<0.000000e+00> : vector<16xf32>
    %84 = vector.multi_reduction <add>, %83, %cst_38 [1] : vector<16x16xf32> to vector<16xf32>
    %85 = vector.shape_cast %84 : vector<16xf32> to vector<16x1xf32>
    %86 = tpu.reciprocal %85 {approx = true} : vector<16x1xf32> -> vector<16x1xf32>
    %87 = vector.broadcast %86 : vector<16x1xf32> to vector<16x16xf32>
    %88 = arith.mulf %83, %87 : vector<16x16xf32>
    %89 = arith.truncf %88 : vector<16x16xf32> to vector<16x16xbf16>
    %90 = vector.extract_strided_slice %53 {offsets = [0, 32], sizes = [16, 32], strides = [1, 1]} : vector<16x128xbf16> to vector<16x32xbf16>
    %cst_39 = arith.constant dense<0.000000e+00> : vector<16x32xf32>
    %91 = tpu.matmul %89, %90, %cst_39 {dimension_numbers = #tpu.dot_dimension_numbers<[1], [0], [0], [1], [0, 0, 1, 1], [], []>} : vector<16x16xbf16>, vector<16x32xbf16>, vector<16x32xf32> -> vector<16x32xf32>
    %92 = arith.truncf %91 : vector<16x32xf32> to vector<16x32xbf16>
    %c0_40 = arith.constant 0 : index
    %c0_41 = arith.constant 0 : index
    %c32 = arith.constant 32 : index
    %93 = vector.load %arg24[%c0_40, %c0_41, %c32] : memref<2x16x128xbf16, #tpu.memory_space<vmem>>, vector<1x16x32xbf16>
    %94 = vector.shape_cast %93 : vector<1x16x32xbf16> to vector<16x32xbf16>
    %95 = vector.shape_cast %92 : vector<16x32xbf16> to vector<1x16x32xbf16>
    tpu.vector_store %arg24[%c0_40, %c0_41, %c32], %95 {strides = array<i32>} : memref<2x16x128xbf16, #tpu.memory_space<vmem>>, vector<1x16x32xbf16>,
    %96 = vector.extract_strided_slice %49 {offsets = [0, 64], sizes = [16, 32], strides = [1, 1]} : vector<16x128xbf16> to vector<16x32xbf16>
    %97 = vector.extract_strided_slice %51 {offsets = [0, 64], sizes = [16, 32], strides = [1, 1]} : vector<16x128xbf16> to vector<16x32xbf16>
    %cst_42 = arith.constant dense<0.000000e+00> : vector<16x16xf32>
    %98 = tpu.matmul %96, %97, %cst_42 {dimension_numbers = #tpu.dot_dimension_numbers<[1], [1], [0], [0], [0, 0, 1, 0], [], []>} : vector<16x32xbf16>, vector<16x32xbf16>, vector<16x16xf32> -> vector<16x16xf32>
    %99 = arith.addf %98, %47 : vector<16x16xf32>
    %cst_43 = arith.constant dense<0xFF800000> : vector<16xf32>
    %100 = vector.multi_reduction <maximumf>, %99, %cst_43 [1] : vector<16x16xf32> to vector<16xf32>
    %101 = vector.shape_cast %100 : vector<16xf32> to vector<16x1xf32>
    %102 = vector.broadcast %101 : vector<16x1xf32> to vector<16x16xf32>
    %103 = arith.subf %99, %102 : vector<16x16xf32>
    %104 = math.exp %103 : vector<16x16xf32>
    %cst_44 = arith.constant dense<0.000000e+00> : vector<16xf32>
    %105 = vector.multi_reduction <add>, %104, %cst_44 [1] : vector<16x16xf32> to vector<16xf32>
    %106 = vector.shape_cast %105 : vector<16xf32> to vector<16x1xf32>
    %107 = tpu.reciprocal %106 {approx = true} : vector<16x1xf32> -> vector<16x1xf32>
    %108 = vector.broadcast %107 : vector<16x1xf32> to vector<16x16xf32>
    %109 = arith.mulf %104, %108 : vector<16x16xf32>
    %110 = arith.truncf %109 : vector<16x16xf32> to vector<16x16xbf16>
    %111 = vector.extract_strided_slice %53 {offsets = [0, 64], sizes = [16, 32], strides = [1, 1]} : vector<16x128xbf16> to vector<16x32xbf16>
    %cst_45 = arith.constant dense<0.000000e+00> : vector<16x32xf32>
    %112 = tpu.matmul %110, %111, %cst_45 {dimension_numbers = #tpu.dot_dimension_numbers<[1], [0], [0], [1], [0, 0, 1, 1], [], []>} : vector<16x16xbf16>, vector<16x32xbf16>, vector<16x32xf32> -> vector<16x32xf32>
    %113 = arith.truncf %112 : vector<16x32xf32> to vector<16x32xbf16>
    %c0_46 = arith.constant 0 : index
    %c0_47 = arith.constant 0 : index
    %c64 = arith.constant 64 : index
    %114 = vector.load %arg24[%c0_46, %c0_47, %c64] : memref<2x16x128xbf16, #tpu.memory_space<vmem>>, vector<1x16x32xbf16>
    %115 = vector.shape_cast %114 : vector<1x16x32xbf16> to vector<16x32xbf16>
    %116 = vector.shape_cast %113 : vector<16x32xbf16> to vector<1x16x32xbf16>
    tpu.vector_store %arg24[%c0_46, %c0_47, %c64], %116 {strides = array<i32>} : memref<2x16x128xbf16, #tpu.memory_space<vmem>>, vector<1x16x32xbf16>,
    %117 = vector.extract_strided_slice %49 {offsets = [0, 96], sizes = [16, 32], strides = [1, 1]} : vector<16x128xbf16> to vector<16x32xbf16>
    %118 = vector.extract_strided_slice %51 {offsets = [0, 96], sizes = [16, 32], strides = [1, 1]} : vector<16x128xbf16> to vector<16x32xbf16>
    %cst_48 = arith.constant dense<0.000000e+00> : vector<16x16xf32>
    %119 = tpu.matmul %117, %118, %cst_48 {dimension_numbers = #tpu.dot_dimension_numbers<[1], [1], [0], [0], [0, 0, 1, 0], [], []>} : vector<16x32xbf16>, vector<16x32xbf16>, vector<16x16xf32> -> vector<16x16xf32>
    %120 = arith.addf %119, %47 : vector<16x16xf32>
    %cst_49 = arith.constant dense<0xFF800000> : vector<16xf32>
    %121 = vector.multi_reduction <maximumf>, %120, %cst_49 [1] : vector<16x16xf32> to vector<16xf32>
    %122 = vector.shape_cast %121 : vector<16xf32> to vector<16x1xf32>
    %123 = vector.broadcast %122 : vector<16x1xf32> to vector<16x16xf32>
    %124 = arith.subf %120, %123 : vector<16x16xf32>
    %125 = math.exp %124 : vector<16x16xf32>
    %cst_50 = arith.constant dense<0.000000e+00> : vector<16xf32>
    %126 = vector.multi_reduction <add>, %125, %cst_50 [1] : vector<16x16xf32> to vector<16xf32>
    %127 = vector.shape_cast %126 : vector<16xf32> to vector<16x1xf32>
    %128 = tpu.reciprocal %127 {approx = true} : vector<16x1xf32> -> vector<16x1xf32>
    %129 = vector.broadcast %128 : vector<16x1xf32> to vector<16x16xf32>
    %130 = arith.mulf %125, %129 : vector<16x16xf32>
    %131 = arith.truncf %130 : vector<16x16xf32> to vector<16x16xbf16>
    %132 = vector.extract_strided_slice %53 {offsets = [0, 96], sizes = [16, 32], strides = [1, 1]} : vector<16x128xbf16> to vector<16x32xbf16>
    %cst_51 = arith.constant dense<0.000000e+00> : vector<16x32xf32>
    %133 = tpu.matmul %131, %132, %cst_51 {dimension_numbers = #tpu.dot_dimension_numbers<[1], [0], [0], [1], [0, 0, 1, 1], [], []>} : vector<16x16xbf16>, vector<16x32xbf16>, vector<16x32xf32> -> vector<16x32xf32>
    %134 = arith.truncf %133 : vector<16x32xf32> to vector<16x32xbf16>
    %c0_52 = arith.constant 0 : index
    %c0_53 = arith.constant 0 : index
    %c96 = arith.constant 96 : index
    %135 = vector.load %arg24[%c0_52, %c0_53, %c96] : memref<2x16x128xbf16, #tpu.memory_space<vmem>>, vector<1x16x32xbf16>
    %136 = vector.shape_cast %135 : vector<1x16x32xbf16> to vector<16x32xbf16>
    %137 = vector.shape_cast %134 : vector<16x32xbf16> to vector<1x16x32xbf16>
    tpu.vector_store %arg24[%c0_52, %c0_53, %c96], %137 {strides = array<i32>} : memref<2x16x128xbf16, #tpu.memory_space<vmem>>, vector<1x16x32xbf16>,
    %c1 = arith.constant 1 : index
    %c0_54 = arith.constant 0 : index
    %c0_55 = arith.constant 0 : index
    %138 = vector.load %arg4[%c1, %c0_54, %c0_55] : memref<2x1x16xf32, #tpu.memory_space<vmem>>, vector<1x1x16xf32>
    %139 = vector.shape_cast %138 : vector<1x1x16xf32> to vector<1x16xf32>
    %cst_56 = arith.constant 0.000000e+00 : f32
    %140 = vector.broadcast %cst_56 : f32 to vector<1x16xf32>
    %141 = arith.cmpf ogt, %139, %140 : vector<1x16xf32>
    %cst_57 = arith.constant 0.000000e+00 : f32
    %cst_58 = arith.constant -1.000000e+09 : f32
    %142 = vector.broadcast %cst_57 : f32 to vector<1x16xf32>
    %143 = vector.broadcast %cst_58 : f32 to vector<1x16xf32>
    %144 = arith.select %141, %142, %143 : vector<1x16xi1>, vector<1x16xf32>
    %145 = vector.shape_cast %144 : vector<1x16xf32> to vector<1x16xf32>
    %146 = vector.broadcast %145 : vector<1x16xf32> to vector<16x16xf32>
    %147 = vector.extract_strided_slice %38 {offsets = [1, 0, 0], sizes = [1, 16, 128], strides = [1, 1, 1]} : vector<2x16x128xbf16> to vector<1x16x128xbf16>
    %148 = vector.shape_cast %147 : vector<1x16x128xbf16> to vector<16x128xbf16>
    %c1_59 = arith.constant 1 : index
    %c0_60 = arith.constant 0 : index
    %c0_61 = arith.constant 0 : index
    %149 = vector.load %arg22[%c1_59, %c0_60, %c0_61] : memref<2x16x128xbf16, #tpu.memory_space<vmem>>, vector<1x16x128xbf16>
    %150 = vector.shape_cast %149 : vector<1x16x128xbf16> to vector<16x128xbf16>
    %c1_62 = arith.constant 1 : index
    %c0_63 = arith.constant 0 : index
    %c0_64 = arith.constant 0 : index
    %151 = vector.load %arg23[%c1_62, %c0_63, %c0_64] : memref<2x16x128xbf16, #tpu.memory_space<vmem>>, vector<1x16x128xbf16>
    %152 = vector.shape_cast %151 : vector<1x16x128xbf16> to vector<16x128xbf16>
    %153 = vector.extract_strided_slice %148 {offsets = [0, 0], sizes = [16, 32], strides = [1, 1]} : vector<16x128xbf16> to vector<16x32xbf16>
    %154 = vector.extract_strided_slice %150 {offsets = [0, 0], sizes = [16, 32], strides = [1, 1]} : vector<16x128xbf16> to vector<16x32xbf16>
    %cst_65 = arith.constant dense<0.000000e+00> : vector<16x16xf32>
    %155 = tpu.matmul %153, %154, %cst_65 {dimension_numbers = #tpu.dot_dimension_numbers<[1], [1], [0], [0], [0, 0, 1, 0], [], []>} : vector<16x32xbf16>, vector<16x32xbf16>, vector<16x16xf32> -> vector<16x16xf32>
    %156 = arith.addf %155, %146 : vector<16x16xf32>
    %cst_66 = arith.constant dense<0xFF800000> : vector<16xf32>
    %157 = vector.multi_reduction <maximumf>, %156, %cst_66 [1] : vector<16x16xf32> to vector<16xf32>
    %158 = vector.shape_cast %157 : vector<16xf32> to vector<16x1xf32>
    %159 = vector.broadcast %158 : vector<16x1xf32> to vector<16x16xf32>
    %160 = arith.subf %156, %159 : vector<16x16xf32>
    %161 = math.exp %160 : vector<16x16xf32>
    %cst_67 = arith.constant dense<0.000000e+00> : vector<16xf32>
    %162 = vector.multi_reduction <add>, %161, %cst_67 [1] : vector<16x16xf32> to vector<16xf32>
    %163 = vector.shape_cast %162 : vector<16xf32> to vector<16x1xf32>
    %164 = tpu.reciprocal %163 {approx = true} : vector<16x1xf32> -> vector<16x1xf32>
    %165 = vector.broadcast %164 : vector<16x1xf32> to vector<16x16xf32>
    %166 = arith.mulf %161, %165 : vector<16x16xf32>
    %167 = arith.truncf %166 : vector<16x16xf32> to vector<16x16xbf16>
    %168 = vector.extract_strided_slice %152 {offsets = [0, 0], sizes = [16, 32], strides = [1, 1]} : vector<16x128xbf16> to vector<16x32xbf16>
    %cst_68 = arith.constant dense<0.000000e+00> : vector<16x32xf32>
    %169 = tpu.matmul %167, %168, %cst_68 {dimension_numbers = #tpu.dot_dimension_numbers<[1], [0], [0], [1], [0, 0, 1, 1], [], []>} : vector<16x16xbf16>, vector<16x32xbf16>, vector<16x32xf32> -> vector<16x32xf32>
    %170 = arith.truncf %169 : vector<16x32xf32> to vector<16x32xbf16>
    %c1_69 = arith.constant 1 : index
    %c0_70 = arith.constant 0 : index
    %c0_71 = arith.constant 0 : index
    %171 = vector.load %arg24[%c1_69, %c0_70, %c0_71] : memref<2x16x128xbf16, #tpu.memory_space<vmem>>, vector<1x16x32xbf16>
    %172 = vector.shape_cast %171 : vector<1x16x32xbf16> to vector<16x32xbf16>
    %173 = vector.shape_cast %170 : vector<16x32xbf16> to vector<1x16x32xbf16>
    tpu.vector_store %arg24[%c1_69, %c0_70, %c0_71], %173 {strides = array<i32>} : memref<2x16x128xbf16, #tpu.memory_space<vmem>>, vector<1x16x32xbf16>,
    %174 = vector.extract_strided_slice %148 {offsets = [0, 32], sizes = [16, 32], strides = [1, 1]} : vector<16x128xbf16> to vector<16x32xbf16>
    %175 = vector.extract_strided_slice %150 {offsets = [0, 32], sizes = [16, 32], strides = [1, 1]} : vector<16x128xbf16> to vector<16x32xbf16>
    %cst_72 = arith.constant dense<0.000000e+00> : vector<16x16xf32>
    %176 = tpu.matmul %174, %175, %cst_72 {dimension_numbers = #tpu.dot_dimension_numbers<[1], [1], [0], [0], [0, 0, 1, 0], [], []>} : vector<16x32xbf16>, vector<16x32xbf16>, vector<16x16xf32> -> vector<16x16xf32>
    %177 = arith.addf %176, %146 : vector<16x16xf32>
    %cst_73 = arith.constant dense<0xFF800000> : vector<16xf32>
    %178 = vector.multi_reduction <maximumf>, %177, %cst_73 [1] : vector<16x16xf32> to vector<16xf32>
    %179 = vector.shape_cast %178 : vector<16xf32> to vector<16x1xf32>
    %180 = vector.broadcast %179 : vector<16x1xf32> to vector<16x16xf32>
    %181 = arith.subf %177, %180 : vector<16x16xf32>
    %182 = math.exp %181 : vector<16x16xf32>
    %cst_74 = arith.constant dense<0.000000e+00> : vector<16xf32>
    %183 = vector.multi_reduction <add>, %182, %cst_74 [1] : vector<16x16xf32> to vector<16xf32>
    %184 = vector.shape_cast %183 : vector<16xf32> to vector<16x1xf32>
    %185 = tpu.reciprocal %184 {approx = true} : vector<16x1xf32> -> vector<16x1xf32>
    %186 = vector.broadcast %185 : vector<16x1xf32> to vector<16x16xf32>
    %187 = arith.mulf %182, %186 : vector<16x16xf32>
    %188 = arith.truncf %187 : vector<16x16xf32> to vector<16x16xbf16>
    %189 = vector.extract_strided_slice %152 {offsets = [0, 32], sizes = [16, 32], strides = [1, 1]} : vector<16x128xbf16> to vector<16x32xbf16>
    %cst_75 = arith.constant dense<0.000000e+00> : vector<16x32xf32>
    %190 = tpu.matmul %188, %189, %cst_75 {dimension_numbers = #tpu.dot_dimension_numbers<[1], [0], [0], [1], [0, 0, 1, 1], [], []>} : vector<16x16xbf16>, vector<16x32xbf16>, vector<16x32xf32> -> vector<16x32xf32>
    %191 = arith.truncf %190 : vector<16x32xf32> to vector<16x32xbf16>
    %c1_76 = arith.constant 1 : index
    %c0_77 = arith.constant 0 : index
    %c32_78 = arith.constant 32 : index
    %192 = vector.load %arg24[%c1_76, %c0_77, %c32_78] : memref<2x16x128xbf16, #tpu.memory_space<vmem>>, vector<1x16x32xbf16>
    %193 = vector.shape_cast %192 : vector<1x16x32xbf16> to vector<16x32xbf16>
    %194 = vector.shape_cast %191 : vector<16x32xbf16> to vector<1x16x32xbf16>
    tpu.vector_store %arg24[%c1_76, %c0_77, %c32_78], %194 {strides = array<i32>} : memref<2x16x128xbf16, #tpu.memory_space<vmem>>, vector<1x16x32xbf16>,
    %195 = vector.extract_strided_slice %148 {offsets = [0, 64], sizes = [16, 32], strides = [1, 1]} : vector<16x128xbf16> to vector<16x32xbf16>
    %196 = vector.extract_strided_slice %150 {offsets = [0, 64], sizes = [16, 32], strides = [1, 1]} : vector<16x128xbf16> to vector<16x32xbf16>
    %cst_79 = arith.constant dense<0.000000e+00> : vector<16x16xf32>
    %197 = tpu.matmul %195, %196, %cst_79 {dimension_numbers = #tpu.dot_dimension_numbers<[1], [1], [0], [0], [0, 0, 1, 0], [], []>} : vector<16x32xbf16>, vector<16x32xbf16>, vector<16x16xf32> -> vector<16x16xf32>
    %198 = arith.addf %197, %146 : vector<16x16xf32>
    %cst_80 = arith.constant dense<0xFF800000> : vector<16xf32>
    %199 = vector.multi_reduction <maximumf>, %198, %cst_80 [1] : vector<16x16xf32> to vector<16xf32>
    %200 = vector.shape_cast %199 : vector<16xf32> to vector<16x1xf32>
    %201 = vector.broadcast %200 : vector<16x1xf32> to vector<16x16xf32>
    %202 = arith.subf %198, %201 : vector<16x16xf32>
    %203 = math.exp %202 : vector<16x16xf32>
    %cst_81 = arith.constant dense<0.000000e+00> : vector<16xf32>
    %204 = vector.multi_reduction <add>, %203, %cst_81 [1] : vector<16x16xf32> to vector<16xf32>
    %205 = vector.shape_cast %204 : vector<16xf32> to vector<16x1xf32>
    %206 = tpu.reciprocal %205 {approx = true} : vector<16x1xf32> -> vector<16x1xf32>
    %207 = vector.broadcast %206 : vector<16x1xf32> to vector<16x16xf32>
    %208 = arith.mulf %203, %207 : vector<16x16xf32>
    %209 = arith.truncf %208 : vector<16x16xf32> to vector<16x16xbf16>
    %210 = vector.extract_strided_slice %152 {offsets = [0, 64], sizes = [16, 32], strides = [1, 1]} : vector<16x128xbf16> to vector<16x32xbf16>
    %cst_82 = arith.constant dense<0.000000e+00> : vector<16x32xf32>
    %211 = tpu.matmul %209, %210, %cst_82 {dimension_numbers = #tpu.dot_dimension_numbers<[1], [0], [0], [1], [0, 0, 1, 1], [], []>} : vector<16x16xbf16>, vector<16x32xbf16>, vector<16x32xf32> -> vector<16x32xf32>
    %212 = arith.truncf %211 : vector<16x32xf32> to vector<16x32xbf16>
    %c1_83 = arith.constant 1 : index
    %c0_84 = arith.constant 0 : index
    %c64_85 = arith.constant 64 : index
    %213 = vector.load %arg24[%c1_83, %c0_84, %c64_85] : memref<2x16x128xbf16, #tpu.memory_space<vmem>>, vector<1x16x32xbf16>
    %214 = vector.shape_cast %213 : vector<1x16x32xbf16> to vector<16x32xbf16>
    %215 = vector.shape_cast %212 : vector<16x32xbf16> to vector<1x16x32xbf16>
    tpu.vector_store %arg24[%c1_83, %c0_84, %c64_85], %215 {strides = array<i32>} : memref<2x16x128xbf16, #tpu.memory_space<vmem>>, vector<1x16x32xbf16>,
    %216 = vector.extract_strided_slice %148 {offsets = [0, 96], sizes = [16, 32], strides = [1, 1]} : vector<16x128xbf16> to vector<16x32xbf16>
    %217 = vector.extract_strided_slice %150 {offsets = [0, 96], sizes = [16, 32], strides = [1, 1]} : vector<16x128xbf16> to vector<16x32xbf16>
    %cst_86 = arith.constant dense<0.000000e+00> : vector<16x16xf32>
    %218 = tpu.matmul %216, %217, %cst_86 {dimension_numbers = #tpu.dot_dimension_numbers<[1], [1], [0], [0], [0, 0, 1, 0], [], []>} : vector<16x32xbf16>, vector<16x32xbf16>, vector<16x16xf32> -> vector<16x16xf32>
    %219 = arith.addf %218, %146 : vector<16x16xf32>
    %cst_87 = arith.constant dense<0xFF800000> : vector<16xf32>
    %220 = vector.multi_reduction <maximumf>, %219, %cst_87 [1] : vector<16x16xf32> to vector<16xf32>
    %221 = vector.shape_cast %220 : vector<16xf32> to vector<16x1xf32>
    %222 = vector.broadcast %221 : vector<16x1xf32> to vector<16x16xf32>
    %223 = arith.subf %219, %222 : vector<16x16xf32>
    %224 = math.exp %223 : vector<16x16xf32>
    %cst_88 = arith.constant dense<0.000000e+00> : vector<16xf32>
    %225 = vector.multi_reduction <add>, %224, %cst_88 [1] : vector<16x16xf32> to vector<16xf32>
    %226 = vector.shape_cast %225 : vector<16xf32> to vector<16x1xf32>
    %227 = tpu.reciprocal %226 {approx = true} : vector<16x1xf32> -> vector<16x1xf32>
    %228 = vector.broadcast %227 : vector<16x1xf32> to vector<16x16xf32>
    %229 = arith.mulf %224, %228 : vector<16x16xf32>
    %230 = arith.truncf %229 : vector<16x16xf32> to vector<16x16xbf16>
    %231 = vector.extract_strided_slice %152 {offsets = [0, 96], sizes = [16, 32], strides = [1, 1]} : vector<16x128xbf16> to vector<16x32xbf16>
    %cst_89 = arith.constant dense<0.000000e+00> : vector<16x32xf32>
    %232 = tpu.matmul %230, %231, %cst_89 {dimension_numbers = #tpu.dot_dimension_numbers<[1], [0], [0], [1], [0, 0, 1, 1], [], []>} : vector<16x16xbf16>, vector<16x32xbf16>, vector<16x32xf32> -> vector<16x32xf32>
    %233 = arith.truncf %232 : vector<16x32xf32> to vector<16x32xbf16>
    %c1_90 = arith.constant 1 : index
    %c0_91 = arith.constant 0 : index
    %c96_92 = arith.constant 96 : index
    %234 = vector.load %arg24[%c1_90, %c0_91, %c96_92] : memref<2x16x128xbf16, #tpu.memory_space<vmem>>, vector<1x16x32xbf16>
    %235 = vector.shape_cast %234 : vector<1x16x32xbf16> to vector<16x32xbf16>
    %236 = vector.shape_cast %233 : vector<16x32xbf16> to vector<1x16x32xbf16>
    tpu.vector_store %arg24[%c1_90, %c0_91, %c96_92], %236 {strides = array<i32>} : memref<2x16x128xbf16, #tpu.memory_space<vmem>>, vector<1x16x32xbf16>,
    %c0_93 = arith.constant 0 : index
    %c0_94 = arith.constant 0 : index
    %c0_95 = arith.constant 0 : index
    %237 = vector.load %arg24[%c0_93, %c0_94, %c0_95] : memref<2x16x128xbf16, #tpu.memory_space<vmem>>, vector<2x16x128xbf16>
    %238 = vector.shape_cast %237 : vector<2x16x128xbf16> to vector<32x128xbf16>
    %c0_96 = arith.constant 0 : index
    %c0_97 = arith.constant 0 : index
    %239 = vector.load %arg11[%c0_96, %c0_97] : memref<128x128xbf16, #tpu.memory_space<vmem>>, vector<128x128xbf16>
    %cst_98 = arith.constant dense<0.000000e+00> : vector<32x128xf32>
    %240 = tpu.matmul %238, %239, %cst_98 {dimension_numbers = #tpu.dot_dimension_numbers<[1], [0], [0], [1], [0, 0, 1, 1], [], []>} : vector<32x128xbf16>, vector<128x128xbf16>, vector<32x128xf32> -> vector<32x128xf32>
    %c0_99 = arith.constant 0 : index
    %c0_100 = arith.constant 0 : index
    %241 = vector.load %arg12[%c0_99, %c0_100] : memref<1x128xf32, #tpu.memory_space<vmem>>, vector<1x128xf32>
    %242 = vector.broadcast %241 : vector<1x128xf32> to vector<32x128xf32>
    %243 = arith.addf %240, %242 : vector<32x128xf32>
    %244 = vector.shape_cast %3 : vector<2x16x128xf32> to vector<32x128xf32>
    %245 = arith.addf %244, %243 : vector<32x128xf32>
    %c0_101 = arith.constant 0 : index
    %c0_102 = arith.constant 0 : index
    %246 = vector.load %arg19[%c0_101, %c0_102] : memref<1x128xf32, #tpu.memory_space<vmem>>, vector<1x128xf32>
    %c0_103 = arith.constant 0 : index
    %c0_104 = arith.constant 0 : index
    %247 = vector.load %arg20[%c0_103, %c0_104] : memref<1x128xf32, #tpu.memory_space<vmem>>, vector<1x128xf32>
    %cst_105 = arith.constant dense<0.000000e+00> : vector<32xf32>
    %248 = vector.multi_reduction <add>, %245, %cst_105 [1] : vector<32x128xf32> to vector<32xf32>
    %249 = vector.shape_cast %248 : vector<32xf32> to vector<32x1xf32>
    %cst_106 = arith.constant 1.280000e+02 : f32
    %250 = vector.broadcast %cst_106 : f32 to vector<32x1xf32>
    %251 = arith.divf %249, %250 : vector<32x1xf32>
    %252 = vector.broadcast %251 : vector<32x1xf32> to vector<32x128xf32>
    %253 = arith.subf %245, %252 : vector<32x128xf32>
    %254 = arith.mulf %253, %253 : vector<32x128xf32>
    %cst_107 = arith.constant dense<0.000000e+00> : vector<32xf32>
    %255 = vector.multi_reduction <add>, %254, %cst_107 [1] : vector<32x128xf32> to vector<32xf32>
    %256 = vector.shape_cast %255 : vector<32xf32> to vector<32x1xf32>
    %cst_108 = arith.constant 0.00787401571 : f32
    %257 = vector.broadcast %cst_108 : f32 to vector<32x1xf32>
    %258 = arith.mulf %256, %257 : vector<32x1xf32>
    %259 = math.sqrt %258 : vector<32x1xf32>
    %cst_109 = arith.constant 9.99999997E-7 : f32
    %260 = vector.broadcast %cst_109 : f32 to vector<32x1xf32>
    %261 = arith.addf %259, %260 : vector<32x1xf32>
    %262 = vector.broadcast %261 : vector<32x1xf32> to vector<32x128xf32>
    %263 = arith.divf %253, %262 : vector<32x128xf32>
    %264 = vector.broadcast %246 : vector<1x128xf32> to vector<32x128xf32>
    %265 = arith.mulf %264, %263 : vector<32x128xf32>
    %266 = vector.broadcast %247 : vector<1x128xf32> to vector<32x128xf32>
    %267 = arith.addf %265, %266 : vector<32x128xf32>
    %268 = arith.truncf %267 : vector<32x128xf32> to vector<32x128xbf16>
    %cst_110 = arith.constant 0.000000e+00 : f32
    %269 = vector.broadcast %cst_110 : f32 to vector<32x128xf32>
    %c0_111 = arith.constant 0 : index
    %c0_112 = arith.constant 0 : index
    %270 = vector.load %arg25[%c0_111, %c0_112] : memref<32x128xf32, #tpu.memory_space<vmem>>, vector<32x128xf32>
    tpu.vector_store %arg25[%c0_111, %c0_112], %269 {strides = array<i32>} : memref<32x128xf32, #tpu.memory_space<vmem>>, vector<32x128xf32>,
    %c0_113 = arith.constant 0 : index
    %c0_114 = arith.constant 0 : index
    %271 = vector.load %arg15[%c0_113, %c0_114] : memref<128x256xbf16, #tpu.memory_space<vmem>>, vector<128x256xbf16>
    %cst_115 = arith.constant dense<0.000000e+00> : vector<32x256xf32>
    %272 = tpu.matmul %268, %271, %cst_115 {dimension_numbers = #tpu.dot_dimension_numbers<[1], [0], [0], [1], [0, 0, 1, 1], [], []>} : vector<32x128xbf16>, vector<128x256xbf16>, vector<32x256xf32> -> vector<32x256xf32>
    %c0_116 = arith.constant 0 : index
    %c0_117 = arith.constant 0 : index
    %273 = vector.load %arg16[%c0_116, %c0_117] : memref<1x256xf32, #tpu.memory_space<vmem>>, vector<1x256xf32>
    %274 = vector.broadcast %273 : vector<1x256xf32> to vector<32x256xf32>
    %275 = arith.addf %272, %274 : vector<32x256xf32>
    %cst_118 = arith.constant 0.000000e+00 : f32
    %276 = vector.broadcast %cst_118 : f32 to vector<32x256xf32>
    %277 = arith.maximumf %275, %276 : vector<32x256xf32>
    %c0_119 = arith.constant 0 : index
    %c0_120 = arith.constant 0 : index
    %278 = vector.load %arg25[%c0_119, %c0_120] : memref<32x128xf32, #tpu.memory_space<vmem>>, vector<32x128xf32>
    %279 = arith.truncf %277 : vector<32x256xf32> to vector<32x256xbf16>
    %c0_121 = arith.constant 0 : index
    %c0_122 = arith.constant 0 : index
    %280 = vector.load %arg17[%c0_121, %c0_122] : memref<256x128xbf16, #tpu.memory_space<vmem>>, vector<256x128xbf16>
    %cst_123 = arith.constant dense<0.000000e+00> : vector<32x128xf32>
    %281 = tpu.matmul %279, %280, %cst_123 {dimension_numbers = #tpu.dot_dimension_numbers<[1], [0], [0], [1], [0, 0, 1, 1], [], []>} : vector<32x256xbf16>, vector<256x128xbf16>, vector<32x128xf32> -> vector<32x128xf32>
    %282 = arith.addf %278, %281 : vector<32x128xf32>
    %c0_124 = arith.constant 0 : index
    %c0_125 = arith.constant 0 : index
    %283 = vector.load %arg25[%c0_124, %c0_125] : memref<32x128xf32, #tpu.memory_space<vmem>>, vector<32x128xf32>
    tpu.vector_store %arg25[%c0_124, %c0_125], %282 {strides = array<i32>} : memref<32x128xf32, #tpu.memory_space<vmem>>, vector<32x128xf32>,
    %c0_126 = arith.constant 0 : index
    %c0_127 = arith.constant 0 : index
    %284 = vector.load %arg25[%c0_126, %c0_127] : memref<32x128xf32, #tpu.memory_space<vmem>>, vector<32x128xf32>
    %285 = arith.addf %245, %284 : vector<32x128xf32>
    %c0_128 = arith.constant 0 : index
    %c0_129 = arith.constant 0 : index
    %286 = vector.load %arg18[%c0_128, %c0_129] : memref<1x128xf32, #tpu.memory_space<vmem>>, vector<1x128xf32>
    %287 = vector.broadcast %286 : vector<1x128xf32> to vector<32x128xf32>
    %288 = arith.addf %285, %287 : vector<32x128xf32>
    %289 = vector.shape_cast %288 : vector<32x128xf32> to vector<2x16x128xf32>
    %c0_130 = arith.constant 0 : index
    %c0_131 = arith.constant 0 : index
    %c0_132 = arith.constant 0 : index
    %290 = vector.load %arg21[%c0_130, %c0_131, %c0_132] : memref<2x16x128xf32, #tpu.memory_space<vmem>>, vector<2x16x128xf32>
    tpu.vector_store %arg21[%c0_130, %c0_131, %c0_132], %289 {strides = array<i32>} : memref<2x16x128xf32, #tpu.memory_space<vmem>>, vector<2x16x128xf32>,
    return
  }
  func.func @transform_0(%arg0: i32, %arg1: i32) -> (i32, i32, i32) {
    %c0_i32 = arith.constant 0 : i32
    %c0_i32_0 = arith.constant 0 : i32
    %c0_i32_1 = arith.constant 0 : i32
    return %arg0, %c0_i32, %c0_i32_0 : i32, i32, i32
  }
  func.func @transform_1(%arg0: i32, %arg1: i32) -> (i32, i32, i32) {
    %c0_i32 = arith.constant 0 : i32
    %c0_i32_0 = arith.constant 0 : i32
    return %arg0, %arg1, %c0_i32 : i32, i32, i32
  }
  func.func @transform_2(%arg0: i32, %arg1: i32) -> (i32, i32, i32) {
    %c0_i32 = arith.constant 0 : i32
    %c0_i32_0 = arith.constant 0 : i32
    %c0_i32_1 = arith.constant 0 : i32
    return %arg0, %c0_i32, %c0_i32_0 : i32, i32, i32
  }
  func.func @transform_3(%arg0: i32, %arg1: i32) -> (i32, i32) {
    %c0_i32 = arith.constant 0 : i32
    %c0_i32_0 = arith.constant 0 : i32
    %c0_i32_1 = arith.constant 0 : i32
    return %c0_i32, %c0_i32_0 : i32, i32
  }
  func.func @transform_4(%arg0: i32, %arg1: i32) -> (i32, i32) {
    %c0_i32 = arith.constant 0 : i32
    %c0_i32_0 = arith.constant 0 : i32
    %c0_i32_1 = arith.constant 0 : i32
    return %c0_i32, %c0_i32_0 : i32, i32
  }
  func.func @transform_5(%arg0: i32, %arg1: i32) -> (i32, i32) {
    %c0_i32 = arith.constant 0 : i32
    %c0_i32_0 = arith.constant 0 : i32
    %c0_i32_1 = arith.constant 0 : i32
    return %c0_i32, %c0_i32_0 : i32, i32
  }
  func.func @transform_6(%arg0: i32, %arg1: i32) -> (i32, i32) {
    %c0_i32 = arith.constant 0 : i32
    %c0_i32_0 = arith.constant 0 : i32
    %c0_i32_1 = arith.constant 0 : i32
    return %c0_i32, %c0_i32_0 : i32, i32
  }
  func.func @transform_7(%arg0: i32, %arg1: i32) -> (i32, i32) {
    %c0_i32 = arith.constant 0 : i32
    %c0_i32_0 = arith.constant 0 : i32
    %c0_i32_1 = arith.constant 0 : i32
    return %c0_i32, %c0_i32_0 : i32, i32
  }
  func.func @transform_8(%arg0: i32, %arg1: i32) -> (i32, i32) {
    %c0_i32 = arith.constant 0 : i32
    %c0_i32_0 = arith.constant 0 : i32
    %c0_i32_1 = arith.constant 0 : i32
    return %c0_i32, %c0_i32_0 : i32, i32
  }
  func.func @transform_9(%arg0: i32, %arg1: i32) -> (i32, i32) {
    %c0_i32 = arith.constant 0 : i32
    %c0_i32_0 = arith.constant 0 : i32
    %c0_i32_1 = arith.constant 0 : i32
    return %c0_i32, %c0_i32_0 : i32, i32
  }
  func.func @transform_10(%arg0: i32, %arg1: i32) -> (i32, i32) {
    %c0_i32 = arith.constant 0 : i32
    %c0_i32_0 = arith.constant 0 : i32
    %c0_i32_1 = arith.constant 0 : i32
    return %c0_i32, %c0_i32_0 : i32, i32
  }
  func.func @transform_11(%arg0: i32, %arg1: i32) -> (i32, i32) {
    %c0_i32 = arith.constant 0 : i32
    %c0_i32_0 = arith.constant 0 : i32
    %c0_i32_1 = arith.constant 0 : i32
    return %c0_i32, %c0_i32_0 : i32, i32
  }
  func.func @transform_12(%arg0: i32, %arg1: i32) -> (i32, i32) {
    %c0_i32 = arith.constant 0 : i32
    %c0_i32_0 = arith.constant 0 : i32
    %c0_i32_1 = arith.constant 0 : i32
    return %c0_i32, %c0_i32_0 : i32, i32
  }
  func.func @transform_13(%arg0: i32, %arg1: i32) -> (i32, i32) {
    %c0_i32 = arith.constant 0 : i32
    %c0_i32_0 = arith.constant 0 : i32
    %c0_i32_1 = arith.constant 0 : i32
    return %c0_i32, %c0_i32_0 : i32, i32
  }
  func.func @transform_14(%arg0: i32, %arg1: i32) -> (i32, i32) {
    %c0_i32 = arith.constant 0 : i32
    %c0_i32_0 = arith.constant 0 : i32
    %c0_i32_1 = arith.constant 0 : i32
    return %c0_i32, %c0_i32_0 : i32, i32
  }
  func.func @transform_15(%arg0: i32, %arg1: i32) -> (i32, i32) {
    %c0_i32 = arith.constant 0 : i32
    %c0_i32_0 = arith.constant 0 : i32
    %c0_i32_1 = arith.constant 0 : i32
    return %c0_i32, %c0_i32_0 : i32, i32
  }
  func.func @transform_16(%arg0: i32, %arg1: i32) -> (i32, i32) {
    %c0_i32 = arith.constant 0 : i32
    %c0_i32_0 = arith.constant 0 : i32
    %c0_i32_1 = arith.constant 0 : i32
    return %c0_i32, %c0_i32_0 : i32, i32
  }
  func.func @transform_17(%arg0: i32, %arg1: i32) -> (i32, i32) {
    %c0_i32 = arith.constant 0 : i32
    %c0_i32_0 = arith.constant 0 : i32
    %c0_i32_1 = arith.constant 0 : i32
    return %c0_i32, %c0_i32_0 : i32, i32
  }
  func.func @transform_18(%arg0: i32, %arg1: i32) -> (i32, i32) {
    %c0_i32 = arith.constant 0 : i32
    %c0_i32_0 = arith.constant 0 : i32
    %c0_i32_1 = arith.constant 0 : i32
    return %c0_i32, %c0_i32_0 : i32, i32
  }
  func.func @transform_19(%arg0: i32, %arg1: i32) -> (i32, i32, i32) {
    %c0_i32 = arith.constant 0 : i32
    %c0_i32_0 = arith.constant 0 : i32
    return %arg0, %arg1, %c0_i32 : i32, i32, i32
  }
}

module attributes {stable_mosaic.version = 11 : i64} {
  func.func @encoder_layer_kernel(%arg0: i32, %arg1: i32, %arg2: memref<2x16x128xf32, #tpu.memory_space<vmem>>, %arg3: memref<2x16x128xf32, #tpu.memory_space<vmem>>, %arg4: memref<2x1x16xf32, #tpu.memory_space<vmem>>, %arg5: memref<128x128xbf16, #tpu.memory_space<vmem>>, %arg6: memref<1x128xf32, #tpu.memory_space<vmem>>, %arg7: memref<128x128xbf16, #tpu.memory_space<vmem>>, %arg8: memref<1x128xf32, #tpu.memory_space<vmem>>, %arg9: memref<128x128xbf16, #tpu.memory_space<vmem>>, %arg10: memref<1x128xf32, #tpu.memory_space<vmem>>, %arg11: memref<128x128xbf16, #tpu.memory_space<vmem>>, %arg12: memref<1x128xf32, #tpu.memory_space<vmem>>, %arg13: memref<1x128xf32, #tpu.memory_space<vmem>>, %arg14: memref<1x128xf32, #tpu.memory_space<vmem>>, %arg15: memref<128x256xbf16, #tpu.memory_space<vmem>>, %arg16: memref<1x256xf32, #tpu.memory_space<vmem>>, %arg17: memref<256x128xbf16, #tpu.memory_space<vmem>>, %arg18: memref<1x128xf32, #tpu.memory_space<vmem>>, %arg19: memref<1x128xf32, #tpu.memory_space<vmem>>, %arg20: memref<1x128xf32, #tpu.memory_space<vmem>>, %arg21: memref<2x16x128xf32, #tpu.memory_space<vmem>>, %arg22: memref<2x16x128xbf16, #tpu.memory_space<vmem>>, %arg23: memref<2x16x128xbf16, #tpu.memory_space<vmem>>, %arg24: memref<2x16x128xbf16, #tpu.memory_space<vmem>>, %arg25: memref<32x128xf32, #tpu.memory_space<vmem>>) attributes {dimension_semantics = [#tpu.dimension_semantics<parallel>, #tpu.dimension_semantics<arbitrary>], iteration_bounds = array<i64: 1, 1>, scalar_prefetch = 0 : i64, scratch_operands = 4 : i64, tpu.core_type = #tpu.core_type<tc>, window_params = [{transform_indices = @transform_0, window_bounds = array<i64: 2, 16, 128>}, {transform_indices = @transform_1, window_bounds = array<i64: 2, 16, 128>}, {transform_indices = @transform_2, window_bounds = array<i64: 2, 1, 16>}, {pipeline_mode = #tpu.pipeline_mode<synchronous>, transform_indices = @transform_3, window_bounds = array<i64: 128, 128>}, {pipeline_mode = #tpu.pipeline_mode<synchronous>, transform_indices = @transform_4, window_bounds = array<i64: 1, 128>}, {pipeline_mode = #tpu.pipeline_mode<synchronous>, transform_indices = @transform_5, window_bounds = array<i64: 128, 128>}, {pipeline_mode = #tpu.pipeline_mode<synchronous>, transform_indices = @transform_6, window_bounds = array<i64: 1, 128>}, {pipeline_mode = #tpu.pipeline_mode<synchronous>, transform_indices = @transform_7, window_bounds = array<i64: 128, 128>}, {pipeline_mode = #tpu.pipeline_mode<synchronous>, transform_indices = @transform_8, window_bounds = array<i64: 1, 128>}, {pipeline_mode = #tpu.pipeline_mode<synchronous>, transform_indices = @transform_9, window_bounds = array<i64: 128, 128>}, {pipeline_mode = #tpu.pipeline_mode<synchronous>, transform_indices = @transform_10, window_bounds = array<i64: 1, 128>}, {pipeline_mode = #tpu.pipeline_mode<synchronous>, transform_indices = @transform_11, window_bounds = array<i64: 1, 128>}, {pipeline_mode = #tpu.pipeline_mode<synchronous>, transform_indices = @transform_12, window_bounds = array<i64: 1, 128>}, {pipeline_mode = #tpu.pipeline_mode<synchronous>, transform_indices = @transform_13, window_bounds = array<i64: 128, 256>}, {pipeline_mode = #tpu.pipeline_mode<synchronous>, transform_indices = @transform_14, window_bounds = array<i64: 1, 256>}, {pipeline_mode = #tpu.pipeline_mode<synchronous>, transform_indices = @transform_15, window_bounds = array<i64: 256, 128>}, {pipeline_mode = #tpu.pipeline_mode<synchronous>, transform_indices = @transform_16, window_bounds = array<i64: 1, 128>}, {pipeline_mode = #tpu.pipeline_mode<synchronous>, transform_indices = @transform_17, window_bounds = array<i64: 1, 128>}, {pipeline_mode = #tpu.pipeline_mode<synchronous>, transform_indices = @transform_18, window_bounds = array<i64: 1, 128>}, {transform_indices = @transform_19, window_bounds = array<i64: 2, 16, 128>}]} {
    %c0_i32 = arith.constant 0 : i32
    %0 = arith.cmpi eq, %arg1, %c0_i32 : i32
    %1 = arith.extui %0 : i1 to i32
    %c0_i32_0 = arith.constant 0 : i32
    %2 = arith.cmpi ne, %1, %c0_i32_0 : i32
    scf.if %2 {
      %c0_133 = arith.constant 0 : index
      %c0_134 = arith.constant 0 : index
      %c0_135 = arith.constant 0 : index
      %291 = vector.load %arg2[%c0_133, %c0_134, %c0_135] : memref<2x16x128xf32, #tpu.memory_space<vmem>>, vector<2x16x128xf32>
      %c0_136 = arith.constant 0 : index
      %c0_137 = arith.constant 0 : index
      %292 = vector.load %arg13[%c0_136, %c0_137] : memref<1x128xf32, #tpu.memory_space<vmem>>, vector<1x128xf32>
      %c0_138 = arith.constant 0 : index
      %c0_139 = arith.constant 0 : index
      %293 = vector.load %arg14[%c0_138, %c0_139] : memref<1x128xf32, #tpu.memory_space<vmem>>, vector<1x128xf32>
      %cst_140 = arith.constant dense<0.000000e+00> : vector<2x16xf32>
      %294 = vector.multi_reduction <add>, %291, %cst_140 [2] : vector<2x16x128xf32> to vector<2x16xf32>
      %295 = vector.shape_cast %294 : vector<2x16xf32> to vector<2x16x1xf32>
      %cst_141 = arith.constant 1.280000e+02 : f32
      %296 = vector.broadcast %cst_141 : f32 to vector<2x16x1xf32>
      %297 = arith.divf %295, %296 : vector<2x16x1xf32>
      %298 = vector.broadcast %297 : vector<2x16x1xf32> to vector<2x16x128xf32>
      %299 = arith.subf %291, %298 : vector<2x16x128xf32>
      %300 = arith.mulf %299, %299 : vector<2x16x128xf32>
      %cst_142 = arith.constant dense<0.000000e+00> : vector<2x16xf32>
      %301 = vector.multi_reduction <add>, %300, %cst_142 [2] : vector<2x16x128xf32> to vector<2x16xf32>
      %302 = vector.shape_cast %301 : vector<2x16xf32> to vector<2x16x1xf32>
      %cst_143 = arith.constant 0.00787401571 : f32
      %303 = vector.broadcast %cst_143 : f32 to vector<2x16x1xf32>
      %304 = arith.mulf %302, %303 : vector<2x16x1xf32>
      %305 = math.sqrt %304 : vector<2x16x1xf32>
      %cst_144 = arith.constant 9.99999997E-7 : f32
      %306 = vector.broadcast %cst_144 : f32 to vector<2x16x1xf32>
      %307 = arith.addf %305, %306 : vector<2x16x1xf32>
      %308 = vector.broadcast %307 : vector<2x16x1xf32> to vector<2x16x128xf32>
      %309 = arith.divf %299, %308 : vector<2x16x128xf32>
      %310 = vector.shape_cast %292 : vector<1x128xf32> to vector<1x1x128xf32>
      %311 = vector.broadcast %310 : vector<1x1x128xf32> to vector<2x16x128xf32>
      %312 = arith.mulf %311, %309 : vector<2x16x128xf32>
      %313 = vector.shape_cast %293 : vector<1x128xf32> to vector<1x1x128xf32>
      %314 = vector.broadcast %313 : vector<1x1x128xf32> to vector<2x16x128xf32>
      %315 = arith.addf %312, %314 : vector<2x16x128xf32>
      %316 = vector.shape_cast %315 : vector<2x16x128xf32> to vector<32x128xf32>
      %317 = arith.truncf %316 : vector<32x128xf32> to vector<32x128xbf16>
      %c0_145 = arith.constant 0 : index
      %c0_146 = arith.constant 0 : index
      %318 = vector.load %arg7[%c0_145, %c0_146] : memref<128x128xbf16, #tpu.memory_space<vmem>>, vector<128x128xbf16>
      %cst_147 = arith.constant dense<0.000000e+00> : vector<32x128xf32>
      %319 = tpu.matmul %317, %318, %cst_147 {dimension_numbers = #tpu.dot_dimension_numbers<[1], [0], [0], [1], [0, 0, 1, 1], [], []>} : vector<32x128xbf16>, vector<128x128xbf16>, vector<32x128xf32> -> vector<32x128xf32>
      %c0_148 = arith.constant 0 : index
      %c0_149 = arith.constant 0 : index
      %320 = vector.load %arg8[%c0_148, %c0_149] : memref<1x128xf32, #tpu.memory_space<vmem>>, vector<1x128xf32>
      %321 = vector.broadcast %320 : vector<1x128xf32> to vector<32x128xf32>
      %322 = arith.addf %319, %321 : vector<32x128xf32>
      %c0_150 = arith.constant 0 : index
      %c0_151 = arith.constant 0 : index
      %323 = vector.load %arg9[%c0_150, %c0_151] : memref<128x128xbf16, #tpu.memory_space<vmem>>, vector<128x128xbf16>
      %cst_152 = arith.constant dense<0.000000e+00> : vector<32x128xf32>
      %324 = tpu.matmul %317, %323, %cst_152 {dimension_numbers = #tpu.dot_dimension_numbers<[1], [0], [0], [1], [0, 0, 1, 1], [], []>} : vector<32x128xbf16>, vector<128x128xbf16>, vector<32x128xf32> -> vector<32x128xf32>
      %c0_153 = arith.constant 0 : index
      %c0_154 = arith.constant 0 : index
      %325 = vector.load %arg10[%c0_153, %c0_154] : memref<1x128xf32, #tpu.memory_space<vmem>>, vector<1x128xf32>
      %326 = vector.broadcast %325 : vector<1x128xf32> to vector<32x128xf32>
      %327 = arith.addf %324, %326 : vector<32x128xf32>
      %328 = arith.truncf %322 : vector<32x128xf32> to vector<32x128xbf16>
      %329 = vector.shape_cast %328 : vector<32x128xbf16> to vector<2x16x128xbf16>
      %c0_155 = arith.constant 0 : index
      %c0_156 = arith.constant 0 : index
      %c0_157 = arith.constant 0 : index
      %330 = vector.load %arg22[%c0_155, %c0_156, %c0_157] : memref<2x16x128xbf16, #tpu.memory_space<vmem>>, vector<2x16x128xbf16>
      tpu.vector_store %arg22[%c0_155, %c0_156, %c0_157], %329 {strides = array<i32>} : memref<2x16x128xbf16, #tpu.memory_space<vmem>>, vector<2x16x128xbf16>,
      %331 = arith.truncf %327 : vector<32x128xf32> to vector<32x128xbf16>
      %332 = vector.shape_cast %331 : vector<32x128xbf16> to vector<2x16x128xbf16>
      %c0_158 = arith.constant 0 : index
      %c0_159 = arith.constant 0 : index
      %c0_160 = arith.constant 0 : index
      %333 = vector.load %arg23[%c0_158, %c0_159, %c0_160] : memref<2x16x128xbf16, #tpu.memory_space<vmem>>, vector<2x16x128xbf16>
      tpu.vector_store %arg23[%c0_158, %c0_159, %c0_160], %332 {strides = array<i32>} : memref<2x16x128xbf16, #tpu.memory_space<vmem>>, vector<2x16x128xbf16>,
    } else {
    }
    %c0 = arith.constant 0 : index
    %c0_1 = arith.constant 0 : index
    %c0_2 = arith.constant 0 : index
    %3 = vector.load %arg3[%c0, %c0_1, %c0_2] : memref<2x16x128xf32, #tpu.memory_space<vmem>>, vector<2x16x128xf32>
    %c0_3 = arith.constant 0 : index
    %c0_4 = arith.constant 0 : index
    %4 = vector.load %arg13[%c0_3, %c0_4] : memref<1x128xf32, #tpu.memory_space<vmem>>, vector<1x128xf32>
    %c0_5 = arith.constant 0 : index
    %c0_6 = arith.constant 0 : index
    %5 = vector.load %arg14[%c0_5, %c0_6] : memref<1x128xf32, #tpu.memory_space<vmem>>, vector<1x128xf32>
    %cst = arith.constant dense<0.000000e+00> : vector<2x16xf32>
    %6 = vector.multi_reduction <add>, %3, %cst [2] : vector<2x16x128xf32> to vector<2x16xf32>
    %7 = vector.shape_cast %6 : vector<2x16xf32> to vector<2x16x1xf32>
    %cst_7 = arith.constant 1.280000e+02 : f32
    %8 = vector.broadcast %cst_7 : f32 to vector<2x16x1xf32>
    %9 = arith.divf %7, %8 : vector<2x16x1xf32>
    %10 = vector.broadcast %9 : vector<2x16x1xf32> to vector<2x16x128xf32>
    %11 = arith.subf %3, %10 : vector<2x16x128xf32>
    %12 = arith.mulf %11, %11 : vector<2x16x128xf32>
    %cst_8 = arith.constant dense<0.000000e+00> : vector<2x16xf32>
    %13 = vector.multi_reduction <add>, %12, %cst_8 [2] : vector<2x16x128xf32> to vector<2x16xf32>
    %14 = vector.shape_cast %13 : vector<2x16xf32> to vector<2x16x1xf32>
    %cst_9 = arith.constant 0.00787401571 : f32
    %15 = vector.broadcast %cst_9 : f32 to vector<2x16x1xf32>
    %16 = arith.mulf %14, %15 : vector<2x16x1xf32>
    %17 = math.sqrt %16 : vector<2x16x1xf32>
    %cst_10 = arith.constant 9.99999997E-7 : f32
    %18 = vector.broadcast %cst_10 : f32 to vector<2x16x1xf32>
    %19 = arith.addf %17, %18 : vector<2x16x1xf32>
    %20 = vector.broadcast %19 : vector<2x16x1xf32> to vector<2x16x128xf32>
    %21 = arith.divf %11, %20 : vector<2x16x128xf32>
    %22 = vector.shape_cast %4 : vector<1x128xf32> to vector<1x1x128xf32>
    %23 = vector.broadcast %22 : vector<1x1x128xf32> to vector<2x16x128xf32>
    %24 = arith.mulf %23, %21 : vector<2x16x128xf32>
    %25 = vector.shape_cast %5 : vector<1x128xf32> to vector<1x1x128xf32>
    %26 = vector.broadcast %25 : vector<1x1x128xf32> to vector<2x16x128xf32>
    %27 = arith.addf %24, %26 : vector<2x16x128xf32>
    %28 = vector.shape_cast %27 : vector<2x16x128xf32> to vector<32x128xf32>
    %29 = arith.truncf %28 : vector<32x128xf32> to vector<32x128xbf16>
    %c0_11 = arith.constant 0 : index
    %c0_12 = arith.constant 0 : index
    %30 = vector.load %arg5[%c0_11, %c0_12] : memref<128x128xbf16, #tpu.memory_space<vmem>>, vector<128x128xbf16>
    %cst_13 = arith.constant dense<0.000000e+00> : vector<32x128xf32>
    %31 = tpu.matmul %29, %30, %cst_13 {dimension_numbers = #tpu.dot_dimension_numbers<[1], [0], [0], [1], [0, 0, 1, 1], [], []>} : vector<32x128xbf16>, vector<128x128xbf16>, vector<32x128xf32> -> vector<32x128xf32>
    %c0_14 = arith.constant 0 : index
    %c0_15 = arith.constant 0 : index
    %32 = vector.load %arg6[%c0_14, %c0_15] : memref<1x128xf32, #tpu.memory_space<vmem>>, vector<1x128xf32>
    %33 = vector.broadcast %32 : vector<1x128xf32> to vector<32x128xf32>
    %34 = arith.addf %31, %33 : vector<32x128xf32>
    %cst_16 = arith.constant 0.176776692 : f32
    %35 = vector.broadcast %cst_16 : f32 to vector<32x128xf32>
    %36 = arith.mulf %34, %35 : vector<32x128xf32>
    %37 = arith.truncf %36 : vector<32x128xf32> to vector<32x128xbf16>
    %38 = vector.shape_cast %37 : vector<32x128xbf16> to vector<2x16x128xbf16>
    %c0_17 = arith.constant 0 : index
    %c0_18 = arith.constant 0 : index
    %c0_19 = arith.constant 0 : index
    %39 = vector.load %arg4[%c0_17, %c0_18, %c0_19] : memref<2x1x16xf32, #tpu.memory_space<vmem>>, vector<1x1x16xf32>
    %40 = vector.shape_cast %39 : vector<1x1x16xf32> to vector<1x16xf32>
    %cst_20 = arith.constant 0.000000e+00 : f32
    %41 = vector.broadcast %cst_20 : f32 to vector<1x16xf32>
    %42 = arith.cmpf ogt, %40, %41 : vector<1x16xf32>
    %cst_21 = arith.constant 0.000000e+00 : f32
    %cst_22 = arith.constant -1.000000e+09 : f32
    %43 = vector.broadcast %cst_21 : f32 to vector<1x16xf32>
    %44 = vector.broadcast %cst_22 : f32 to vector<1x16xf32>
    %45 = arith.select %42, %43, %44 : vector<1x16xi1>, vector<1x16xf32>
    %46 = vector.shape_cast %45 : vector<1x16xf32> to vector<1x16xf32>
    %47 = vector.broadcast %46 : vector<1x16xf32> to vector<16x16xf32>
    %48 = vector.extract_strided_slice %38 {offsets = [0, 0, 0], sizes = [1, 16, 128], strides = [1, 1, 1]} : vector<2x16x128xbf16> to vector<1x16x128xbf16>
    %49 = vector.shape_cast %48 : vector<1x16x128xbf16> to vector<16x128xbf16>
    %c0_23 = arith.constant 0 : index
    %c0_24 = arith.constant 0 : index
    %c0_25 = arith.constant 0 : index
    %50 = vector.load %arg22[%c0_23, %c0_24, %c0_25] : memref<2x16x128xbf16, #tpu.memory_space<vmem>>, vector<1x16x128xbf16>
    %51 = vector.shape_cast %50 : vector<1x16x128xbf16> to vector<16x128xbf16>
    %c0_26 = arith.constant 0 : index
    %c0_27 = arith.constant 0 : index
    %c0_28 = arith.constant 0 : index
    %52 = vector.load %arg23[%c0_26, %c0_27, %c0_28] : memref<2x16x128xbf16, #tpu.memory_space<vmem>>, vector<1x16x128xbf16>
    %53 = vector.shape_cast %52 : vector<1x16x128xbf16> to vector<16x128xbf16>
    %54 = vector.extract_strided_slice %49 {offsets = [0, 0], sizes = [16, 32], strides = [1, 1]} : vector<16x128xbf16> to vector<16x32xbf16>
    %55 = vector.extract_strided_slice %51 {offsets = [0, 0], sizes = [16, 32], strides = [1, 1]} : vector<16x128xbf16> to vector<16x32xbf16>
    %cst_29 = arith.constant dense<0.000000e+00> : vector<16x16xf32>
    %56 = tpu.matmul %54, %55, %cst_29 {dimension_numbers = #tpu.dot_dimension_numbers<[1], [1], [0], [0], [0, 0, 1, 0], [], []>} : vector<16x32xbf16>, vector<16x32xbf16>, vector<16x16xf32> -> vector<16x16xf32>
    %57 = arith.addf %56, %47 : vector<16x16xf32>
    %cst_30 = arith.constant dense<0xFF800000> : vector<16xf32>
    %58 = vector.multi_reduction <maximumf>, %57, %cst_30 [1] : vector<16x16xf32> to vector<16xf32>
    %59 = vector.shape_cast %58 : vector<16xf32> to vector<16x1xf32>
    %60 = vector.broadcast %59 : vector<16x1xf32> to vector<16x16xf32>
    %61 = arith.subf %57, %60 : vector<16x16xf32>
    %62 = math.exp %61 : vector<16x16xf32>
    %cst_31 = arith.constant dense<0.000000e+00> : vector<16xf32>
    %63 = vector.multi_reduction <add>, %62, %cst_31 [1] : vector<16x16xf32> to vector<16xf32>
    %64 = vector.shape_cast %63 : vector<16xf32> to vector<16x1xf32>
    %65 = tpu.reciprocal %64 {approx = true} : vector<16x1xf32> -> vector<16x1xf32>
    %66 = vector.broadcast %65 : vector<16x1xf32> to vector<16x16xf32>
    %67 = arith.mulf %62, %66 : vector<16x16xf32>
    %68 = arith.truncf %67 : vector<16x16xf32> to vector<16x16xbf16>
    %69 = vector.extract_strided_slice %53 {offsets = [0, 0], sizes = [16, 32], strides = [1, 1]} : vector<16x128xbf16> to vector<16x32xbf16>
    %cst_32 = arith.constant dense<0.000000e+00> : vector<16x32xf32>
    %70 = tpu.matmul %68, %69, %cst_32 {dimension_numbers = #tpu.dot_dimension_numbers<[1], [0], [0], [1], [0, 0, 1, 1], [], []>} : vector<16x16xbf16>, vector<16x32xbf16>, vector<16x32xf32> -> vector<16x32xf32>
    %71 = arith.truncf %70 : vector<16x32xf32> to vector<16x32xbf16>
    %c0_33 = arith.constant 0 : index
    %c0_34 = arith.constant 0 : index
    %c0_35 = arith.constant 0 : index
    %72 = vector.load %arg24[%c0_33, %c0_34, %c0_35] : memref<2x16x128xbf16, #tpu.memory_space<vmem>>, vector<1x16x32xbf16>
    %73 = vector.shape_cast %72 : vector<1x16x32xbf16> to vector<16x32xbf16>
    %74 = vector.shape_cast %71 : vector<16x32xbf16> to vector<1x16x32xbf16>
    tpu.vector_store %arg24[%c0_33, %c0_34, %c0_35], %74 {strides = array<i32>} : memref<2x16x128xbf16, #tpu.memory_space<vmem>>, vector<1x16x32xbf16>,
    %75 = vector.extract_strided_slice %49 {offsets = [0, 32], sizes = [16, 32], strides = [1, 1]} : vector<16x128xbf16> to vector<16x32xbf16>
    %76 = vector.extract_strided_slice %51 {offsets = [0, 32], sizes = [16, 32], strides = [1, 1]} : vector<16x128xbf16> to vector<16x32xbf16>
    %cst_36 = arith.constant dense<0.000000e+00> : vector<16x16xf32>
    %77 = tpu.matmul %75, %76, %cst_36 {dimension_numbers = #tpu.dot_dimension_numbers<[1], [1], [0], [0], [0, 0, 1, 0], [], []>} : vector<16x32xbf16>, vector<16x32xbf16>, vector<16x16xf32> -> vector<16x16xf32>
    %78 = arith.addf %77, %47 : vector<16x16xf32>
    %cst_37 = arith.constant dense<0xFF800000> : vector<16xf32>
    %79 = vector.multi_reduction <maximumf>, %78, %cst_37 [1] : vector<16x16xf32> to vector<16xf32>
    %80 = vector.shape_cast %79 : vector<16xf32> to vector<16x1xf32>
    %81 = vector.broadcast %80 : vector<16x1xf32> to vector<16x16xf32>
    %82 = arith.subf %78, %81 : vector<16x16xf32>
    %83 = math.exp %82 : vector<16x16xf32>
    %cst_38 = arith.constant dense<0.000000e+00> : vector<16xf32>
    %84 = vector.multi_reduction <add>, %83, %cst_38 [1] : vector<16x16xf32> to vector<16xf32>
    %85 = vector.shape_cast %84 : vector<16xf32> to vector<16x1xf32>
    %86 = tpu.reciprocal %85 {approx = true} : vector<16x1xf32> -> vector<16x1xf32>
    %87 = vector.broadcast %86 : vector<16x1xf32> to vector<16x16xf32>
    %88 = arith.mulf %83, %87 : vector<16x16xf32>
    %89 = arith.truncf %88 : vector<16x16xf32> to vector<16x16xbf16>
    %90 = vector.extract_strided_slice %53 {offsets = [0, 32], sizes = [16, 32], strides = [1, 1]} : vector<16x128xbf16> to vector<16x32xbf16>
    %cst_39 = arith.constant dense<0.000000e+00> : vector<16x32xf32>
    %91 = tpu.matmul %89, %90, %cst_39 {dimension_numbers = #tpu.dot_dimension_numbers<[1], [0], [0], [1], [0, 0, 1, 1], [], []>} : vector<16x16xbf16>, vector<16x32xbf16>, vector<16x32xf32> -> vector<16x32xf32>
    %92 = arith.truncf %91 : vector<16x32xf32> to vector<16x32xbf16>
    %c0_40 = arith.constant 0 : index
    %c0_41 = arith.constant 0 : index
    %c32 = arith.constant 32 : index
    %93 = vector.load %arg24[%c0_40, %c0_41, %c32] : memref<2x16x128xbf16, #tpu.memory_space<vmem>>, vector<1x16x32xbf16>
    %94 = vector.shape_cast %93 : vector<1x16x32xbf16> to vector<16x32xbf16>
    %95 = vector.shape_cast %92 : vector<16x32xbf16> to vector<1x16x32xbf16>
    tpu.vector_store %arg24[%c0_40, %c0_41, %c32], %95 {strides = array<i32>} : memref<2x16x128xbf16, #tpu.memory_space<vmem>>, vector<1x16x32xbf16>,
    %96 = vector.extract_strided_slice %49 {offsets = [0, 64], sizes = [16, 32], strides = [1, 1]} : vector<16x128xbf16> to vector<16x32xbf16>
    %97 = vector.extract_strided_slice %51 {offsets = [0, 64], sizes = [16, 32], strides = [1, 1]} : vector<16x128xbf16> to vector<16x32xbf16>
    %cst_42 = arith.constant dense<0.000000e+00> : vector<16x16xf32>
    %98 = tpu.matmul %96, %97, %cst_42 {dimension_numbers = #tpu.dot_dimension_numbers<[1], [1], [0], [0], [0, 0, 1, 0], [], []>} : vector<16x32xbf16>, vector<16x32xbf16>, vector<16x16xf32> -> vector<16x16xf32>
    %99 = arith.addf %98, %47 : vector<16x16xf32>
    %cst_43 = arith.constant dense<0xFF800000> : vector<16xf32>
    %100 = vector.multi_reduction <maximumf>, %99, %cst_43 [1] : vector<16x16xf32> to vector<16xf32>
    %101 = vector.shape_cast %100 : vector<16xf32> to vector<16x1xf32>
    %102 = vector.broadcast %101 : vector<16x1xf32> to vector<16x16xf32>
    %103 = arith.subf %99, %102 : vector<16x16xf32>
    %104 = math.exp %103 : vector<16x16xf32>
    %cst_44 = arith.constant dense<0.000000e+00> : vector<16xf32>
    %105 = vector.multi_reduction <add>, %104, %cst_44 [1] : vector<16x16xf32> to vector<16xf32>
    %106 = vector.shape_cast %105 : vector<16xf32> to vector<16x1xf32>
    %107 = tpu.reciprocal %106 {approx = true} : vector<16x1xf32> -> vector<16x1xf32>
    %108 = vector.broadcast %107 : vector<16x1xf32> to vector<16x16xf32>
    %109 = arith.mulf %104, %108 : vector<16x16xf32>
    %110 = arith.truncf %109 : vector<16x16xf32> to vector<16x16xbf16>
    %111 = vector.extract_strided_slice %53 {offsets = [0, 64], sizes = [16, 32], strides = [1, 1]} : vector<16x128xbf16> to vector<16x32xbf16>
    %cst_45 = arith.constant dense<0.000000e+00> : vector<16x32xf32>
    %112 = tpu.matmul %110, %111, %cst_45 {dimension_numbers = #tpu.dot_dimension_numbers<[1], [0], [0], [1], [0, 0, 1, 1], [], []>} : vector<16x16xbf16>, vector<16x32xbf16>, vector<16x32xf32> -> vector<16x32xf32>
    %113 = arith.truncf %112 : vector<16x32xf32> to vector<16x32xbf16>
    %c0_46 = arith.constant 0 : index
    %c0_47 = arith.constant 0 : index
    %c64 = arith.constant 64 : index
    %114 = vector.load %arg24[%c0_46, %c0_47, %c64] : memref<2x16x128xbf16, #tpu.memory_space<vmem>>, vector<1x16x32xbf16>
    %115 = vector.shape_cast %114 : vector<1x16x32xbf16> to vector<16x32xbf16>
    %116 = vector.shape_cast %113 : vector<16x32xbf16> to vector<1x16x32xbf16>
    tpu.vector_store %arg24[%c0_46, %c0_47, %c64], %116 {strides = array<i32>} : memref<2x16x128xbf16, #tpu.memory_space<vmem>>, vector<1x16x32xbf16>,
    %117 = vector.extract_strided_slice %49 {offsets = [0, 96], sizes = [16, 32], strides = [1, 1]} : vector<16x128xbf16> to vector<16x32xbf16>
    %118 = vector.extract_strided_slice %51 {offsets = [0, 96], sizes = [16, 32], strides = [1, 1]} : vector<16x128xbf16> to vector<16x32xbf16>
    %cst_48 = arith.constant dense<0.000000e+00> : vector<16x16xf32>
    %119 = tpu.matmul %117, %118, %cst_48 {dimension_numbers = #tpu.dot_dimension_numbers<[1], [1], [0], [0], [0, 0, 1, 0], [], []>} : vector<16x32xbf16>, vector<16x32xbf16>, vector<16x16xf32> -> vector<16x16xf32>
    %120 = arith.addf %119, %47 : vector<16x16xf32>
    %cst_49 = arith.constant dense<0xFF800000> : vector<16xf32>
    %121 = vector.multi_reduction <maximumf>, %120, %cst_49 [1] : vector<16x16xf32> to vector<16xf32>
    %122 = vector.shape_cast %121 : vector<16xf32> to vector<16x1xf32>
    %123 = vector.broadcast %122 : vector<16x1xf32> to vector<16x16xf32>
    %124 = arith.subf %120, %123 : vector<16x16xf32>
    %125 = math.exp %124 : vector<16x16xf32>
    %cst_50 = arith.constant dense<0.000000e+00> : vector<16xf32>
    %126 = vector.multi_reduction <add>, %125, %cst_50 [1] : vector<16x16xf32> to vector<16xf32>
    %127 = vector.shape_cast %126 : vector<16xf32> to vector<16x1xf32>
    %128 = tpu.reciprocal %127 {approx = true} : vector<16x1xf32> -> vector<16x1xf32>
    %129 = vector.broadcast %128 : vector<16x1xf32> to vector<16x16xf32>
    %130 = arith.mulf %125, %129 : vector<16x16xf32>
    %131 = arith.truncf %130 : vector<16x16xf32> to vector<16x16xbf16>
    %132 = vector.extract_strided_slice %53 {offsets = [0, 96], sizes = [16, 32], strides = [1, 1]} : vector<16x128xbf16> to vector<16x32xbf16>
    %cst_51 = arith.constant dense<0.000000e+00> : vector<16x32xf32>
    %133 = tpu.matmul %131, %132, %cst_51 {dimension_numbers = #tpu.dot_dimension_numbers<[1], [0], [0], [1], [0, 0, 1, 1], [], []>} : vector<16x16xbf16>, vector<16x32xbf16>, vector<16x32xf32> -> vector<16x32xf32>
    %134 = arith.truncf %133 : vector<16x32xf32> to vector<16x32xbf16>
    %c0_52 = arith.constant 0 : index
    %c0_53 = arith.constant 0 : index
    %c96 = arith.constant 96 : index
    %135 = vector.load %arg24[%c0_52, %c0_53, %c96] : memref<2x16x128xbf16, #tpu.memory_space<vmem>>, vector<1x16x32xbf16>
    %136 = vector.shape_cast %135 : vector<1x16x32xbf16> to vector<16x32xbf16>
    %137 = vector.shape_cast %134 : vector<16x32xbf16> to vector<1x16x32xbf16>
    tpu.vector_store %arg24[%c0_52, %c0_53, %c96], %137 {strides = array<i32>} : memref<2x16x128xbf16, #tpu.memory_space<vmem>>, vector<1x16x32xbf16>,
    %c1 = arith.constant 1 : index
    %c0_54 = arith.constant 0 : index
    %c0_55 = arith.constant 0 : index
    %138 = vector.load %arg4[%c1, %c0_54, %c0_55] : memref<2x1x16xf32, #tpu.memory_space<vmem>>, vector<1x1x16xf32>
    %139 = vector.shape_cast %138 : vector<1x1x16xf32> to vector<1x16xf32>
    %cst_56 = arith.constant 0.000000e+00 : f32
    %140 = vector.broadcast %cst_56 : f32 to vector<1x16xf32>
    %141 = arith.cmpf ogt, %139, %140 : vector<1x16xf32>
    %cst_57 = arith.constant 0.000000e+00 : f32
    %cst_58 = arith.constant -1.000000e+09 : f32
    %142 = vector.broadcast %cst_57 : f32 to vector<1x16xf32>
    %143 = vector.broadcast %cst_58 : f32 to vector<1x16xf32>
    %144 = arith.select %141, %142, %143 : vector<1x16xi1>, vector<1x16xf32>
    %145 = vector.shape_cast %144 : vector<1x16xf32> to vector<1x16xf32>
    %146 = vector.broadcast %145 : vector<1x16xf32> to vector<16x16xf32>
    %147 = vector.extract_strided_slice %38 {offsets = [1, 0, 0], sizes = [1, 16, 128], strides = [1, 1, 1]} : vector<2x16x128xbf16> to vector<1x16x128xbf16>
    %148 = vector.shape_cast %147 : vector<1x16x128xbf16> to vector<16x128xbf16>
    %c1_59 = arith.constant 1 : index
    %c0_60 = arith.constant 0 : index
    %c0_61 = arith.constant 0 : index
    %149 = vector.load %arg22[%c1_59, %c0_60, %c0_61] : memref<2x16x128xbf16, #tpu.memory_space<vmem>>, vector<1x16x128xbf16>
    %150 = vector.shape_cast %149 : vector<1x16x128xbf16> to vector<16x128xbf16>
    %c1_62 = arith.constant 1 : index
    %c0_63 = arith.constant 0 : index
    %c0_64 = arith.constant 0 : index
    %151 = vector.load %arg23[%c1_62, %c0_63, %c0_64] : memref<2x16x128xbf16, #tpu.memory_space<vmem>>, vector<1x16x128xbf16>
    %152 = vector.shape_cast %151 : vector<1x16x128xbf16> to vector<16x128xbf16>
    %153 = vector.extract_strided_slice %148 {offsets = [0, 0], sizes = [16, 32], strides = [1, 1]} : vector<16x128xbf16> to vector<16x32xbf16>
    %154 = vector.extract_strided_slice %150 {offsets = [0, 0], sizes = [16, 32], strides = [1, 1]} : vector<16x128xbf16> to vector<16x32xbf16>
    %cst_65 = arith.constant dense<0.000000e+00> : vector<16x16xf32>
    %155 = tpu.matmul %153, %154, %cst_65 {dimension_numbers = #tpu.dot_dimension_numbers<[1], [1], [0], [0], [0, 0, 1, 0], [], []>} : vector<16x32xbf16>, vector<16x32xbf16>, vector<16x16xf32> -> vector<16x16xf32>
    %156 = arith.addf %155, %146 : vector<16x16xf32>
    %cst_66 = arith.constant dense<0xFF800000> : vector<16xf32>
    %157 = vector.multi_reduction <maximumf>, %156, %cst_66 [1] : vector<16x16xf32> to vector<16xf32>
    %158 = vector.shape_cast %157 : vector<16xf32> to vector<16x1xf32>
    %159 = vector.broadcast %158 : vector<16x1xf32> to vector<16x16xf32>
    %160 = arith.subf %156, %159 : vector<16x16xf32>
    %161 = math.exp %160 : vector<16x16xf32>
    %cst_67 = arith.constant dense<0.000000e+00> : vector<16xf32>
    %162 = vector.multi_reduction <add>, %161, %cst_67 [1] : vector<16x16xf32> to vector<16xf32>
    %163 = vector.shape_cast %162 : vector<16xf32> to vector<16x1xf32>
    %164 = tpu.reciprocal %163 {approx = true} : vector<16x1xf32> -> vector<16x1xf32>
    %165 = vector.broadcast %164 : vector<16x1xf32> to vector<16x16xf32>
    %166 = arith.mulf %161, %165 : vector<16x16xf32>
    %167 = arith.truncf %166 : vector<16x16xf32> to vector<16x16xbf16>
    %168 = vector.extract_strided_slice %152 {offsets = [0, 0], sizes = [16, 32], strides = [1, 1]} : vector<16x128xbf16> to vector<16x32xbf16>
    %cst_68 = arith.constant dense<0.000000e+00> : vector<16x32xf32>
    %169 = tpu.matmul %167, %168, %cst_68 {dimension_numbers = #tpu.dot_dimension_numbers<[1], [0], [0], [1], [0, 0, 1, 1], [], []>} : vector<16x16xbf16>, vector<16x32xbf16>, vector<16x32xf32> -> vector<16x32xf32>
    %170 = arith.truncf %169 : vector<16x32xf32> to vector<16x32xbf16>
    %c1_69 = arith.constant 1 : index
    %c0_70 = arith.constant 0 : index
    %c0_71 = arith.constant 0 : index
    %171 = vector.load %arg24[%c1_69, %c0_70, %c0_71] : memref<2x16x128xbf16, #tpu.memory_space<vmem>>, vector<1x16x32xbf16>
    %172 = vector.shape_cast %171 : vector<1x16x32xbf16> to vector<16x32xbf16>
    %173 = vector.shape_cast %170 : vector<16x32xbf16> to vector<1x16x32xbf16>
    tpu.vector_store %arg24[%c1_69, %c0_70, %c0_71], %173 {strides = array<i32>} : memref<2x16x128xbf16, #tpu.memory_space<vmem>>, vector<1x16x32xbf16>,
    %174 = vector.extract_strided_slice %148 {offsets = [0, 32], sizes = [16, 32], strides = [1, 1]} : vector<16x128xbf16> to vector<16x32xbf16>
    %175 = vector.extract_strided_slice %150 {offsets = [0, 32], sizes = [16, 32], strides = [1, 1]} : vector<16x128xbf16> to vector<16x32xbf16>
    %cst_72 = arith.constant dense<0.000000e+00> : vector<16x16xf32>
    %176 = tpu.matmul %174, %175, %cst_72 {dimension_numbers = #tpu.dot_dimension_numbers<[1], [1], [0], [0], [0, 0, 1, 0], [], []>} : vector<16x32xbf16>, vector<16x32xbf16>, vector<16x16xf32> -> vector<16x16xf32>
    %177 = arith.addf %176, %146 : vector<16x16xf32>
    %cst_73 = arith.constant dense<0xFF800000> : vector<16xf32>
    %178 = vector.multi_reduction <maximumf>, %177, %cst_73 [1] : vector<16x16xf32> to vector<16xf32>
    %179 = vector.shape_cast %178 : vector<16xf32> to vector<16x1xf32>
    %180 = vector.broadcast %179 : vector<16x1xf32> to vector<16x16xf32>
    %181 = arith.subf %177, %180 : vector<16x16xf32>
    %182 = math.exp %181 : vector<16x16xf32>
    %cst_74 = arith.constant dense<0.000000e+00> : vector<16xf32>
    %183 = vector.multi_reduction <add>, %182, %cst_74 [1] : vector<16x16xf32> to vector<16xf32>
    %184 = vector.shape_cast %183 : vector<16xf32> to vector<16x1xf32>
    %185 = tpu.reciprocal %184 {approx = true} : vector<16x1xf32> -> vector<16x1xf32>
    %186 = vector.broadcast %185 : vector<16x1xf32> to vector<16x16xf32>
    %187 = arith.mulf %182, %186 : vector<16x16xf32>
    %188 = arith.truncf %187 : vector<16x16xf32> to vector<16x16xbf16>
    %189 = vector.extract_strided_slice %152 {offsets = [0, 32], sizes = [16, 32], strides = [1, 1]} : vector<16x128xbf16> to vector<16x32xbf16>
    %cst_75 = arith.constant dense<0.000000e+00> : vector<16x32xf32>
    %190 = tpu.matmul %188, %189, %cst_75 {dimension_numbers = #tpu.dot_dimension_numbers<[1], [0], [0], [1], [0, 0, 1, 1], [], []>} : vector<16x16xbf16>, vector<16x32xbf16>, vector<16x32xf32> -> vector<16x32xf32>
    %191 = arith.truncf %190 : vector<16x32xf32> to vector<16x32xbf16>
    %c1_76 = arith.constant 1 : index
    %c0_77 = arith.constant 0 : index
    %c32_78 = arith.constant 32 : index
    %192 = vector.load %arg24[%c1_76, %c0_77, %c32_78] : memref<2x16x128xbf16, #tpu.memory_space<vmem>>, vector<1x16x32xbf16>
    %193 = vector.shape_cast %192 : vector<1x16x32xbf16> to vector<16x32xbf16>
    %194 = vector.shape_cast %191 : vector<16x32xbf16> to vector<1x16x32xbf16>
    tpu.vector_store %arg24[%c1_76, %c0_77, %c32_78], %194 {strides = array<i32>} : memref<2x16x128xbf16, #tpu.memory_space<vmem>>, vector<1x16x32xbf16>,
    %195 = vector.extract_strided_slice %148 {offsets = [0, 64], sizes = [16, 32], strides = [1, 1]} : vector<16x128xbf16> to vector<16x32xbf16>
    %196 = vector.extract_strided_slice %150 {offsets = [0, 64], sizes = [16, 32], strides = [1, 1]} : vector<16x128xbf16> to vector<16x32xbf16>
    %cst_79 = arith.constant dense<0.000000e+00> : vector<16x16xf32>
    %197 = tpu.matmul %195, %196, %cst_79 {dimension_numbers = #tpu.dot_dimension_numbers<[1], [1], [0], [0], [0, 0, 1, 0], [], []>} : vector<16x32xbf16>, vector<16x32xbf16>, vector<16x16xf32> -> vector<16x16xf32>
    %198 = arith.addf %197, %146 : vector<16x16xf32>
    %cst_80 = arith.constant dense<0xFF800000> : vector<16xf32>
    %199 = vector.multi_reduction <maximumf>, %198, %cst_80 [1] : vector<16x16xf32> to vector<16xf32>
    %200 = vector.shape_cast %199 : vector<16xf32> to vector<16x1xf32>
    %201 = vector.broadcast %200 : vector<16x1xf32> to vector<16x16xf32>
    %202 = arith.subf %198, %201 : vector<16x16xf32>
    %203 = math.exp %202 : vector<16x16xf32>
    %cst_81 = arith.constant dense<0.000000e+00> : vector<16xf32>
    %204 = vector.multi_reduction <add>, %203, %cst_81 [1] : vector<16x16xf32> to vector<16xf32>
    %205 = vector.shape_cast %204 : vector<16xf32> to vector<16x1xf32>
    %206 = tpu.reciprocal %205 {approx = true} : vector<16x1xf32> -> vector<16x1xf32>
    %207 = vector.broadcast %206 : vector<16x1xf32> to vector<16x16xf32>
    %208 = arith.mulf %203, %207 : vector<16x16xf32>
    %209 = arith.truncf %208 : vector<16x16xf32> to vector<16x16xbf16>
    %210 = vector.extract_strided_slice %152 {offsets = [0, 64], sizes = [16, 32], strides = [1, 1]} : vector<16x128xbf16> to vector<16x32xbf16>
    %cst_82 = arith.constant dense<0.000000e+00> : vector<16x32xf32>
    %211 = tpu.matmul %209, %210, %cst_82 {dimension_numbers = #tpu.dot_dimension_numbers<[1], [0], [0], [1], [0, 0, 1, 1], [], []>} : vector<16x16xbf16>, vector<16x32xbf16>, vector<16x32xf32> -> vector<16x32xf32>
    %212 = arith.truncf %211 : vector<16x32xf32> to vector<16x32xbf16>
    %c1_83 = arith.constant 1 : index
    %c0_84 = arith.constant 0 : index
    %c64_85 = arith.constant 64 : index
    %213 = vector.load %arg24[%c1_83, %c0_84, %c64_85] : memref<2x16x128xbf16, #tpu.memory_space<vmem>>, vector<1x16x32xbf16>
    %214 = vector.shape_cast %213 : vector<1x16x32xbf16> to vector<16x32xbf16>
    %215 = vector.shape_cast %212 : vector<16x32xbf16> to vector<1x16x32xbf16>
    tpu.vector_store %arg24[%c1_83, %c0_84, %c64_85], %215 {strides = array<i32>} : memref<2x16x128xbf16, #tpu.memory_space<vmem>>, vector<1x16x32xbf16>,
    %216 = vector.extract_strided_slice %148 {offsets = [0, 96], sizes = [16, 32], strides = [1, 1]} : vector<16x128xbf16> to vector<16x32xbf16>
    %217 = vector.extract_strided_slice %150 {offsets = [0, 96], sizes = [16, 32], strides = [1, 1]} : vector<16x128xbf16> to vector<16x32xbf16>
    %cst_86 = arith.constant dense<0.000000e+00> : vector<16x16xf32>
    %218 = tpu.matmul %216, %217, %cst_86 {dimension_numbers = #tpu.dot_dimension_numbers<[1], [1], [0], [0], [0, 0, 1, 0], [], []>} : vector<16x32xbf16>, vector<16x32xbf16>, vector<16x16xf32> -> vector<16x16xf32>
    %219 = arith.addf %218, %146 : vector<16x16xf32>
    %cst_87 = arith.constant dense<0xFF800000> : vector<16xf32>
    %220 = vector.multi_reduction <maximumf>, %219, %cst_87 [1] : vector<16x16xf32> to vector<16xf32>
    %221 = vector.shape_cast %220 : vector<16xf32> to vector<16x1xf32>
    %222 = vector.broadcast %221 : vector<16x1xf32> to vector<16x16xf32>
    %223 = arith.subf %219, %222 : vector<16x16xf32>
    %224 = math.exp %223 : vector<16x16xf32>
    %cst_88 = arith.constant dense<0.000000e+00> : vector<16xf32>
    %225 = vector.multi_reduction <add>, %224, %cst_88 [1] : vector<16x16xf32> to vector<16xf32>
    %226 = vector.shape_cast %225 : vector<16xf32> to vector<16x1xf32>
    %227 = tpu.reciprocal %226 {approx = true} : vector<16x1xf32> -> vector<16x1xf32>
    %228 = vector.broadcast %227 : vector<16x1xf32> to vector<16x16xf32>
    %229 = arith.mulf %224, %228 : vector<16x16xf32>
    %230 = arith.truncf %229 : vector<16x16xf32> to vector<16x16xbf16>
    %231 = vector.extract_strided_slice %152 {offsets = [0, 96], sizes = [16, 32], strides = [1, 1]} : vector<16x128xbf16> to vector<16x32xbf16>
    %cst_89 = arith.constant dense<0.000000e+00> : vector<16x32xf32>
    %232 = tpu.matmul %230, %231, %cst_89 {dimension_numbers = #tpu.dot_dimension_numbers<[1], [0], [0], [1], [0, 0, 1, 1], [], []>} : vector<16x16xbf16>, vector<16x32xbf16>, vector<16x32xf32> -> vector<16x32xf32>
    %233 = arith.truncf %232 : vector<16x32xf32> to vector<16x32xbf16>
    %c1_90 = arith.constant 1 : index
    %c0_91 = arith.constant 0 : index
    %c96_92 = arith.constant 96 : index
    %234 = vector.load %arg24[%c1_90, %c0_91, %c96_92] : memref<2x16x128xbf16, #tpu.memory_space<vmem>>, vector<1x16x32xbf16>
    %235 = vector.shape_cast %234 : vector<1x16x32xbf16> to vector<16x32xbf16>
    %236 = vector.shape_cast %233 : vector<16x32xbf16> to vector<1x16x32xbf16>
    tpu.vector_store %arg24[%c1_90, %c0_91, %c96_92], %236 {strides = array<i32>} : memref<2x16x128xbf16, #tpu.memory_space<vmem>>, vector<1x16x32xbf16>,
    %c0_93 = arith.constant 0 : index
    %c0_94 = arith.constant 0 : index
    %c0_95 = arith.constant 0 : index
    %237 = vector.load %arg24[%c0_93, %c0_94, %c0_95] : memref<2x16x128xbf16, #tpu.memory_space<vmem>>, vector<2x16x128xbf16>
    %238 = vector.shape_cast %237 : vector<2x16x128xbf16> to vector<32x128xbf16>
    %c0_96 = arith.constant 0 : index
    %c0_97 = arith.constant 0 : index
    %239 = vector.load %arg11[%c0_96, %c0_97] : memref<128x128xbf16, #tpu.memory_space<vmem>>, vector<128x128xbf16>
    %cst_98 = arith.constant dense<0.000000e+00> : vector<32x128xf32>
    %240 = tpu.matmul %238, %239, %cst_98 {dimension_numbers = #tpu.dot_dimension_numbers<[1], [0], [0], [1], [0, 0, 1, 1], [], []>} : vector<32x128xbf16>, vector<128x128xbf16>, vector<32x128xf32> -> vector<32x128xf32>
    %c0_99 = arith.constant 0 : index
    %c0_100 = arith.constant 0 : index
    %241 = vector.load %arg12[%c0_99, %c0_100] : memref<1x128xf32, #tpu.memory_space<vmem>>, vector<1x128xf32>
    %242 = vector.broadcast %241 : vector<1x128xf32> to vector<32x128xf32>
    %243 = arith.addf %240, %242 : vector<32x128xf32>
    %244 = vector.shape_cast %3 : vector<2x16x128xf32> to vector<32x128xf32>
    %245 = arith.addf %244, %243 : vector<32x128xf32>
    %c0_101 = arith.constant 0 : index
    %c0_102 = arith.constant 0 : index
    %246 = vector.load %arg19[%c0_101, %c0_102] : memref<1x128xf32, #tpu.memory_space<vmem>>, vector<1x128xf32>
    %c0_103 = arith.constant 0 : index
    %c0_104 = arith.constant 0 : index
    %247 = vector.load %arg20[%c0_103, %c0_104] : memref<1x128xf32, #tpu.memory_space<vmem>>, vector<1x128xf32>
    %cst_105 = arith.constant dense<0.000000e+00> : vector<32xf32>
    %248 = vector.multi_reduction <add>, %245, %cst_105 [1] : vector<32x128xf32> to vector<32xf32>
    %249 = vector.shape_cast %248 : vector<32xf32> to vector<32x1xf32>
    %cst_106 = arith.constant 1.280000e+02 : f32
    %250 = vector.broadcast %cst_106 : f32 to vector<32x1xf32>
    %251 = arith.divf %249, %250 : vector<32x1xf32>
    %252 = vector.broadcast %251 : vector<32x1xf32> to vector<32x128xf32>
    %253 = arith.subf %245, %252 : vector<32x128xf32>
    %254 = arith.mulf %253, %253 : vector<32x128xf32>
    %cst_107 = arith.constant dense<0.000000e+00> : vector<32xf32>
    %255 = vector.multi_reduction <add>, %254, %cst_107 [1] : vector<32x128xf32> to vector<32xf32>
    %256 = vector.shape_cast %255 : vector<32xf32> to vector<32x1xf32>
    %cst_108 = arith.constant 0.00787401571 : f32
    %257 = vector.broadcast %cst_108 : f32 to vector<32x1xf32>
    %258 = arith.mulf %256, %257 : vector<32x1xf32>
    %259 = math.sqrt %258 : vector<32x1xf32>
    %cst_109 = arith.constant 9.99999997E-7 : f32
    %260 = vector.broadcast %cst_109 : f32 to vector<32x1xf32>
    %261 = arith.addf %259, %260 : vector<32x1xf32>
    %262 = vector.broadcast %261 : vector<32x1xf32> to vector<32x128xf32>
    %263 = arith.divf %253, %262 : vector<32x128xf32>
    %264 = vector.broadcast %246 : vector<1x128xf32> to vector<32x128xf32>
    %265 = arith.mulf %264, %263 : vector<32x128xf32>
    %266 = vector.broadcast %247 : vector<1x128xf32> to vector<32x128xf32>
    %267 = arith.addf %265, %266 : vector<32x128xf32>
    %268 = arith.truncf %267 : vector<32x128xf32> to vector<32x128xbf16>
    %cst_110 = arith.constant 0.000000e+00 : f32
    %269 = vector.broadcast %cst_110 : f32 to vector<32x128xf32>
    %c0_111 = arith.constant 0 : index
    %c0_112 = arith.constant 0 : index
    %270 = vector.load %arg25[%c0_111, %c0_112] : memref<32x128xf32, #tpu.memory_space<vmem>>, vector<32x128xf32>
    tpu.vector_store %arg25[%c0_111, %c0_112], %269 {strides = array<i32>} : memref<32x128xf32, #tpu.memory_space<vmem>>, vector<32x128xf32>,
    %c0_113 = arith.constant 0 : index
    %c0_114 = arith.constant 0 : index
    %271 = vector.load %arg15[%c0_113, %c0_114] : memref<128x256xbf16, #tpu.memory_space<vmem>>, vector<128x256xbf16>
    %cst_115 = arith.constant dense<0.000000e+00> : vector<32x256xf32>
    %272 = tpu.matmul %268, %271, %cst_115 {dimension_numbers = #tpu.dot_dimension_numbers<[1], [0], [0], [1], [0, 0, 1, 1], [], []>} : vector<32x128xbf16>, vector<128x256xbf16>, vector<32x256xf32> -> vector<32x256xf32>
    %c0_116 = arith.constant 0 : index
    %c0_117 = arith.constant 0 : index
    %273 = vector.load %arg16[%c0_116, %c0_117] : memref<1x256xf32, #tpu.memory_space<vmem>>, vector<1x256xf32>
    %274 = vector.broadcast %273 : vector<1x256xf32> to vector<32x256xf32>
    %275 = arith.addf %272, %274 : vector<32x256xf32>
    %cst_118 = arith.constant 0.000000e+00 : f32
    %276 = vector.broadcast %cst_118 : f32 to vector<32x256xf32>
    %277 = arith.maximumf %275, %276 : vector<32x256xf32>
    %c0_119 = arith.constant 0 : index
    %c0_120 = arith.constant 0 : index
    %278 = vector.load %arg25[%c0_119, %c0_120] : memref<32x128xf32, #tpu.memory_space<vmem>>, vector<32x128xf32>
    %279 = arith.truncf %277 : vector<32x256xf32> to vector<32x256xbf16>
    %c0_121 = arith.constant 0 : index
    %c0_122 = arith.constant 0 : index
    %280 = vector.load %arg17[%c0_121, %c0_122] : memref<256x128xbf16, #tpu.memory_space<vmem>>, vector<256x128xbf16>
    %cst_123 = arith.constant dense<0.000000e+00> : vector<32x128xf32>
    %281 = tpu.matmul %279, %280, %cst_123 {dimension_numbers = #tpu.dot_dimension_numbers<[1], [0], [0], [1], [0, 0, 1, 1], [], []>} : vector<32x256xbf16>, vector<256x128xbf16>, vector<32x128xf32> -> vector<32x128xf32>
    %282 = arith.addf %278, %281 : vector<32x128xf32>
    %c0_124 = arith.constant 0 : index
    %c0_125 = arith.constant 0 : index
    %283 = vector.load %arg25[%c0_124, %c0_125] : memref<32x128xf32, #tpu.memory_space<vmem>>, vector<32x128xf32>
    tpu.vector_store %arg25[%c0_124, %c0_125], %282 {strides = array<i32>} : memref<32x128xf32, #tpu.memory_space<vmem>>, vector<32x128xf32>,
    %c0_126 = arith.constant 0 : index
    %c0_127 = arith.constant 0 : index
    %284 = vector.load %arg25[%c0_126, %c0_127] : memref<32x128xf32, #tpu.memory_space<vmem>>, vector<32x128xf32>
    %285 = arith.addf %245, %284 : vector<32x128xf32>
    %c0_128 = arith.constant 0 : index
    %c0_129 = arith.constant 0 : index
    %286 = vector.load %arg18[%c0_128, %c0_129] : memref<1x128xf32, #tpu.memory_space<vmem>>, vector<1x128xf32>
    %287 = vector.broadcast %286 : vector<1x128xf32> to vector<32x128xf32>
    %288 = arith.addf %285, %287 : vector<32x128xf32>
    %289 = vector.shape_cast %288 : vector<32x128xf32> to vector<2x16x128xf32>
    %c0_130 = arith.constant 0 : index
    %c0_131 = arith.constant 0 : index
    %c0_132 = arith.constant 0 : index
    %290 = vector.load %arg21[%c0_130, %c0_131, %c0_132] : memref<2x16x128xf32, #tpu.memory_space<vmem>>, vector<2x16x128xf32>
    tpu.vector_store %arg21[%c0_130, %c0_131, %c0_132], %289 {strides = array<i32>} : memref<2x16x128xf32, #tpu.memory_space<vmem>>, vector<2x16x128xf32>,
    return
  }
  func.func @transform_0(%arg0: i32, %arg1: i32) -> (i32, i32, i32) {
    %c0_i32 = arith.constant 0 : i32
    %c0_i32_0 = arith.constant 0 : i32
    %c0_i32_1 = arith.constant 0 : i32
    return %arg0, %c0_i32, %c0_i32_0 : i32, i32, i32
  }
  func.func @transform_1(%arg0: i32, %arg1: i32) -> (i32, i32, i32) {
    %c0_i32 = arith.constant 0 : i32
    %c0_i32_0 = arith.constant 0 : i32
    return %arg0, %arg1, %c0_i32 : i32, i32, i32
  }
  func.func @transform_2(%arg0: i32, %arg1: i32) -> (i32, i32, i32) {
    %c0_i32 = arith.constant 0 : i32
    %c0_i32_0 = arith.constant 0 : i32
    %c0_i32_1 = arith.constant 0 : i32
    return %arg0, %c0_i32, %c0_i32_0 : i32, i32, i32
  }
  func.func @transform_3(%arg0: i32, %arg1: i32) -> (i32, i32) {
    %c0_i32 = arith.constant 0 : i32
    %c0_i32_0 = arith.constant 0 : i32
    %c0_i32_1 = arith.constant 0 : i32
    return %c0_i32, %c0_i32_0 : i32, i32
  }
  func.func @transform_4(%arg0: i32, %arg1: i32) -> (i32, i32) {
    %c0_i32 = arith.constant 0 : i32
    %c0_i32_0 = arith.constant 0 : i32
    %c0_i32_1 = arith.constant 0 : i32
    return %c0_i32, %c0_i32_0 : i32, i32
  }
  func.func @transform_5(%arg0: i32, %arg1: i32) -> (i32, i32) {
    %c0_i32 = arith.constant 0 : i32
    %c0_i32_0 = arith.constant 0 : i32
    %c0_i32_1 = arith.constant 0 : i32
    return %c0_i32, %c0_i32_0 : i32, i32
  }
  func.func @transform_6(%arg0: i32, %arg1: i32) -> (i32, i32) {
    %c0_i32 = arith.constant 0 : i32
    %c0_i32_0 = arith.constant 0 : i32
    %c0_i32_1 = arith.constant 0 : i32
    return %c0_i32, %c0_i32_0 : i32, i32
  }
  func.func @transform_7(%arg0: i32, %arg1: i32) -> (i32, i32) {
    %c0_i32 = arith.constant 0 : i32
    %c0_i32_0 = arith.constant 0 : i32
    %c0_i32_1 = arith.constant 0 : i32
    return %c0_i32, %c0_i32_0 : i32, i32
  }
  func.func @transform_8(%arg0: i32, %arg1: i32) -> (i32, i32) {
    %c0_i32 = arith.constant 0 : i32
    %c0_i32_0 = arith.constant 0 : i32
    %c0_i32_1 = arith.constant 0 : i32
    return %c0_i32, %c0_i32_0 : i32, i32
  }
  func.func @transform_9(%arg0: i32, %arg1: i32) -> (i32, i32) {
    %c0_i32 = arith.constant 0 : i32
    %c0_i32_0 = arith.constant 0 : i32
    %c0_i32_1 = arith.constant 0 : i32
    return %c0_i32, %c0_i32_0 : i32, i32
  }
  func.func @transform_10(%arg0: i32, %arg1: i32) -> (i32, i32) {
    %c0_i32 = arith.constant 0 : i32
    %c0_i32_0 = arith.constant 0 : i32
    %c0_i32_1 = arith.constant 0 : i32
    return %c0_i32, %c0_i32_0 : i32, i32
  }
  func.func @transform_11(%arg0: i32, %arg1: i32) -> (i32, i32) {
    %c0_i32 = arith.constant 0 : i32
    %c0_i32_0 = arith.constant 0 : i32
    %c0_i32_1 = arith.constant 0 : i32
    return %c0_i32, %c0_i32_0 : i32, i32
  }
  func.func @transform_12(%arg0: i32, %arg1: i32) -> (i32, i32) {
    %c0_i32 = arith.constant 0 : i32
    %c0_i32_0 = arith.constant 0 : i32
    %c0_i32_1 = arith.constant 0 : i32
    return %c0_i32, %c0_i32_0 : i32, i32
  }
  func.func @transform_13(%arg0: i32, %arg1: i32) -> (i32, i32) {
    %c0_i32 = arith.constant 0 : i32
    %c0_i32_0 = arith.constant 0 : i32
    %c0_i32_1 = arith.constant 0 : i32
    return %c0_i32, %c0_i32_0 : i32, i32
  }
  func.func @transform_14(%arg0: i32, %arg1: i32) -> (i32, i32) {
    %c0_i32 = arith.constant 0 : i32
    %c0_i32_0 = arith.constant 0 : i32
    %c0_i32_1 = arith.constant 0 : i32
    return %c0_i32, %c0_i32_0 : i32, i32
  }
  func.func @transform_15(%arg0: i32, %arg1: i32) -> (i32, i32) {
    %c0_i32 = arith.constant 0 : i32
    %c0_i32_0 = arith.constant 0 : i32
    %c0_i32_1 = arith.constant 0 : i32
    return %c0_i32, %c0_i32_0 : i32, i32
  }
  func.func @transform_16(%arg0: i32, %arg1: i32) -> (i32, i32) {
    %c0_i32 = arith.constant 0 : i32
    %c0_i32_0 = arith.constant 0 : i32
    %c0_i32_1 = arith.constant 0 : i32
    return %c0_i32, %c0_i32_0 : i32, i32
  }
  func.func @transform_17(%arg0: i32, %arg1: i32) -> (i32, i32) {
    %c0_i32 = arith.constant 0 : i32
    %c0_i32_0 = arith.constant 0 : i32
    %c0_i32_1 = arith.constant 0 : i32
    return %c0_i32, %c0_i32_0 : i32, i32
  }
  func.func @transform_18(%arg0: i32, %arg1: i32) -> (i32, i32) {
    %c0_i32 = arith.constant 0 : i32
    %c0_i32_0 = arith.constant 0 : i32
    %c0_i32_1 = arith.constant 0 : i32
    return %c0_i32, %c0_i32_0 : i32, i32
  }
  func.func @transform_19(%arg0: i32, %arg1: i32) -> (i32, i32, i32) {
    %c0_i32 = arith.constant 0 : i32
    %c0_i32_0 = arith.constant 0 : i32
    return %arg0, %arg1, %c0_i32 : i32, i32, i32
  }
}

</mosaic_0001>

<llo_original>
// kernel: tpu_custom_call.1
$region0: #{tpu_custom_call.1}
  #allocation0 [shape = 'u32[]', space=smem, size = 0x4, offset = 0x4, fixed_abs, tag = 'smem constant byte address 0x4 - core index']
  #allocation1 [shape = 'u32[144,128]{1,0:T(1,128)}', space=vmem, size = 0x12000, scoped, tag = 'internal scratch']
  #allocation2 [shape = 'bf16[2,16,128]{2,1,0:T(8,128)(2,1)}', space=vmem, size = 0x2000, scoped, tag = 'scratch operand']
  #allocation3 [shape = 'bf16[2,16,128]{2,1,0:T(8,128)(2,1)}', space=vmem, size = 0x2000, scoped, tag = 'scratch operand']
  #allocation4 [shape = 'bf16[2,16,128]{2,1,0:T(8,128)(2,1)}', space=vmem, size = 0x2000, scoped, tag = 'scratch operand']
  #allocation5 [shape = 'f32[32,128]{1,0:T(8,128)}', space=vmem, size = 0x4000, scoped, tag = 'scratch operand']
  %s0 = inlined_call_operand.hbm [shape: f32[2,16,128], index: 0, kind: input, shape index: {}]
  %s1 = inlined_call_operand.hbm [shape: f32[2,16,128], index: 1, kind: input, shape index: {}]
  %s2 = inlined_call_operand.vmem [shape: f32[2,1,16], index: 2, kind: input, shape index: {}]
  %s3 = inlined_call_operand.hbm [shape: bf16[128,128], index: 3, kind: input, shape index: {}]
  %s4 = inlined_call_operand.vmem [shape: f32[1,128], index: 4, kind: input, shape index: {}]
  %s5 = inlined_call_operand.hbm [shape: bf16[128,128], index: 5, kind: input, shape index: {}]
  %s6 = inlined_call_operand.vmem [shape: f32[1,128], index: 6, kind: input, shape index: {}]
  %s7 = inlined_call_operand.hbm [shape: bf16[128,128], index: 7, kind: input, shape index: {}]
  %s8 = inlined_call_operand.vmem [shape: f32[1,128], index: 8, kind: input, shape index: {}]
  %s9 = inlined_call_operand.hbm [shape: bf16[128,128], index: 9, kind: input, shape index: {}]
  %s10 = inlined_call_operand.vmem [shape: f32[1,128], index: 10, kind: input, shape index: {}]
  %s11 = inlined_call_operand.vmem [shape: f32[1,128], index: 11, kind: input, shape index: {}]
  %s12 = inlined_call_operand.vmem [shape: f32[1,128], index: 12, kind: input, shape index: {}]
  %s13 = inlined_call_operand.hbm [shape: bf16[128,256], index: 13, kind: input, shape index: {}]
  %s14 = inlined_call_operand.vmem [shape: f32[1,256], index: 14, kind: input, shape index: {}]
  %s15 = inlined_call_operand.hbm [shape: bf16[256,128], index: 15, kind: input, shape index: {}]
  %s16 = inlined_call_operand.vmem [shape: f32[1,128], index: 16, kind: input, shape index: {}]
  %s17 = inlined_call_operand.vmem [shape: f32[1,128], index: 17, kind: input, shape index: {}]
  %s18 = inlined_call_operand.vmem [shape: f32[1,128], index: 18, kind: input, shape index: {}]
  %s19 = inlined_call_operand.hbm [shape: f32[2,16,128], index: 19, kind: output, shape index: {}]
  %s20 = sld [smem:[#allocation0]]
  $region122: #{tpu_custom_call.1} parent=0
    _
  %s22 = ssub.s32 1, %s20
  %s23 = scalar_select 0, %s22, %s20
  $region1: #{tpu_custom_call.1} parent=0
    #allocation6 [shape = 'u8[16384]{0}', space=vmem, size = 0x4000, scoped, tag = 'input window, operand 0, single buffered']
    #allocation7 [shape = 's32[1]{0}', space=sflag, size = 0x4, scoped, tag = 'scoped memory for tpu_custom_call.1']
    #allocation8 [shape = 's32[1]{0}', space=sflag, size = 0x4, scoped, tag = 'scoped memory for tpu_custom_call.1']
    #allocation9 [shape = 'u8[16384]{0}', space=vmem, size = 0x4000, scoped, tag = 'input window, operand 1, single buffered']
    #allocation10 [shape = 's32[1]{0}', space=sflag, size = 0x4, scoped, tag = 'scoped memory for tpu_custom_call.1']
    #allocation11 [shape = 'u8[32768]{0}', space=vmem, size = 0x8000, scoped, tag = 'input window, operand 3, single buffered']
    #allocation12 [shape = 'u8[32768]{0}', space=vmem, size = 0x8000, scoped, tag = 'input window, operand 5, single buffered']
    #allocation13 [shape = 's32[1]{0}', space=sflag, size = 0x4, scoped, tag = 'scoped memory for tpu_custom_call.1']
    #allocation14 [shape = 'u8[32768]{0}', space=vmem, size = 0x8000, scoped, tag = 'input window, operand 7, single buffered']
    #allocation15 [shape = 'u8[32768]{0}', space=vmem, size = 0x8000, scoped, tag = 'input window, operand 9, single buffered']
    #allocation16 [shape = 's32[1]{0}', space=sflag, size = 0x4, scoped, tag = 'scoped memory for tpu_custom_call.1']
    #allocation17 [shape = 'u8[65536]{0}', space=vmem, size = 0x10000, scoped, tag = 'input window, operand 13, single buffered']
    #allocation18 [shape = 'u8[65536]{0}', space=vmem, size = 0x10000, scoped, tag = 'input window, operand 15, single buffered']
    #allocation19 [shape = 's32[1]{0}', space=sflag, size = 0x4, scoped, tag = 'scoped memory for tpu_custom_call.1']
    #allocation20 [shape = 'u8[16384]{0}', space=vmem, size = 0x4000, scoped, tag = 'output window, operand 0, single buffered']
    %24 = vsyncpa [#allocation7], 0
    %25 = vsyncpa [#allocation10], 0
    %26 = vsyncpa [#allocation13], 0
    %27 = vsyncpa [#allocation16], 0
    %28 = vsyncpa [#allocation19], 0
    %29 = vsyncpa [#allocation8], 0
    // Predicated region
    $region2: #{tpu_custom_call.1} parent=1 // pred_check
      _
    $region3: #{tpu_custom_call.1} parent=1 // pred_check_branch
      %31 = sbr.rel (0) target = $region5
    $region4: #{tpu_custom_call.1} parent=1 // pred_region
      %s33 = ssub.s32 512, 512
      %34 = vsyncadd [#allocation7], %s33
      %s35 = sshll.u32 [#allocation6], 4
      %s36 = int_to_ptr.vmem [resolvable:$true] %s35
      %41 = dma.hbm_to_vmem [thread:$0]  %s0, 512, %s36, [#allocation7], 128, 128, 8
    $region5: #{tpu_custom_call.1} parent=1 // pred_fallthru
      _
    // Predicated region
    $region6: #{tpu_custom_call.1} parent=1 // pred_check
      _
    $region7: #{tpu_custom_call.1} parent=1 // pred_check_branch
      %43 = sbr.rel (0) target = $region9
    $region8: #{tpu_custom_call.1} parent=1 // pred_region
      %s45 = ssub.s32 512, 512
      %46 = vsyncadd [#allocation10], %s45
      %s47 = sshll.u32 [#allocation9], 4
      %s48 = int_to_ptr.vmem [resolvable:$true] %s47
      %53 = dma.hbm_to_vmem [thread:$0]  %s1, 512, %s48, [#allocation10], 128, 128, 8
    $region9: #{tpu_custom_call.1} parent=1 // pred_fallthru
      _
    // Predicated region
    $region10: #{tpu_custom_call.1} parent=1 // pred_check
      _
    $region11: #{tpu_custom_call.1} parent=1 // pred_check_branch
      %55 = sbr.rel (0) target = $region13
    $region12: #{tpu_custom_call.1} parent=1 // pred_region
      _
    $region13: #{tpu_custom_call.1} parent=1 // pred_fallthru
      _
    // Predicated region
    $region14: #{tpu_custom_call.1} parent=1 // pred_check
      _
    $region15: #{tpu_custom_call.1} parent=1 // pred_check_branch
      %57 = sbr.rel (0) target = $region17
    $region16: #{tpu_custom_call.1} parent=1 // pred_region
      %s59 = ssub.s32 1024, 1024
      %60 = vsyncadd [#allocation10], %s59
      %s61 = sshll.u32 [#allocation11], 4
      %s62 = int_to_ptr.vmem [resolvable:$true] %s61
      %67 = dma.hbm_to_vmem [thread:$0]  %s3, 1024, %s62, [#allocation10], 64, 64, 4
    $region17: #{tpu_custom_call.1} parent=1 // pred_fallthru
      _
    // Predicated region
    $region18: #{tpu_custom_call.1} parent=1 // pred_check
      _
    $region19: #{tpu_custom_call.1} parent=1 // pred_check_branch
      %69 = sbr.rel (0) target = $region21
    $region20: #{tpu_custom_call.1} parent=1 // pred_region
      _
    $region21: #{tpu_custom_call.1} parent=1 // pred_fallthru
      _
    // Predicated region
    $region22: #{tpu_custom_call.1} parent=1 // pred_check
      _
    $region23: #{tpu_custom_call.1} parent=1 // pred_check_branch
      %71 = sbr.rel (0) target = $region25
    $region24: #{tpu_custom_call.1} parent=1 // pred_region
      %s73 = ssub.s32 1024, 1024
      %74 = vsyncadd [#allocation13], %s73
      %s75 = sshll.u32 [#allocation12], 4
      %s76 = int_to_ptr.vmem [resolvable:$true] %s75
      %81 = dma.hbm_to_vmem [thread:$0]  %s5, 1024, %s76, [#allocation13], 64, 64, 4
    $region25: #{tpu_custom_call.1} parent=1 // pred_fallthru
      _
    // Predicated region
    $region26: #{tpu_custom_call.1} parent=1 // pred_check
      _
    $region27: #{tpu_custom_call.1} parent=1 // pred_check_branch
      %83 = sbr.rel (0) target = $region29
    $region28: #{tpu_custom_call.1} parent=1 // pred_region
      _
    $region29: #{tpu_custom_call.1} parent=1 // pred_fallthru
      _
    // Predicated region
    $region30: #{tpu_custom_call.1} parent=1 // pred_check
      _
    $region31: #{tpu_custom_call.1} parent=1 // pred_check_branch
      %85 = sbr.rel (0) target = $region33
    $region32: #{tpu_custom_call.1} parent=1 // pred_region
      %s87 = ssub.s32 1024, 1024
      %88 = vsyncadd [#allocation13], %s87
      %s89 = sshll.u32 [#allocation14], 4
      %s90 = int_to_ptr.vmem [resolvable:$true] %s89
      %95 = dma.hbm_to_vmem [thread:$0]  %s7, 1024, %s90, [#allocation13], 64, 64, 4
    $region33: #{tpu_custom_call.1} parent=1 // pred_fallthru
      _
    // Predicated region
    $region34: #{tpu_custom_call.1} parent=1 // pred_check
      _
    $region35: #{tpu_custom_call.1} parent=1 // pred_check_branch
      %97 = sbr.rel (0) target = $region37
    $region36: #{tpu_custom_call.1} parent=1 // pred_region
      _
    $region37: #{tpu_custom_call.1} parent=1 // pred_fallthru
      _
    // Predicated region
    $region38: #{tpu_custom_call.1} parent=1 // pred_check
      _
    $region39: #{tpu_custom_call.1} parent=1 // pred_check_branch
      %99 = sbr.rel (0) target = $region41
    $region40: #{tpu_custom_call.1} parent=1 // pred_region
      %s101 = ssub.s32 1024, 1024
      %102 = vsyncadd [#allocation16], %s101
      %s103 = sshll.u32 [#allocation15], 4
      %s104 = int_to_ptr.vmem [resolvable:$true] %s103
      %109 = dma.hbm_to_vmem [thread:$0]  %s9, 1024, %s104, [#allocation16], 64, 64, 4
    $region41: #{tpu_custom_call.1} parent=1 // pred_fallthru
      _
    // Predicated region
    $region42: #{tpu_custom_call.1} parent=1 // pred_check
      _
    $region43: #{tpu_custom_call.1} parent=1 // pred_check_branch
      %111 = sbr.rel (0) target = $region45
    $region44: #{tpu_custom_call.1} parent=1 // pred_region
      _
    $region45: #{tpu_custom_call.1} parent=1 // pred_fallthru
      _
    // Predicated region
    $region46: #{tpu_custom_call.1} parent=1 // pred_check
      _
    $region47: #{tpu_custom_call.1} parent=1 // pred_check_branch
      %113 = sbr.rel (0) target = $region49
    $region48: #{tpu_custom_call.1} parent=1 // pred_region
      _
    $region49: #{tpu_custom_call.1} parent=1 // pred_fallthru
      _
    // Predicated region
    $region50: #{tpu_custom_call.1} parent=1 // pred_check
      _
    $region51: #{tpu_custom_call.1} parent=1 // pred_check_branch
      %115 = sbr.rel (0) target = $region53
    $region52: #{tpu_custom_call.1} parent=1 // pred_region
      _
    $region53: #{tpu_custom_call.1} parent=1 // pred_fallthru
      _
    // Predicated region
    $region54: #{tpu_custom_call.1} parent=1 // pred_check
      _
    $region55: #{tpu_custom_call.1} parent=1 // pred_check_branch
      %117 = sbr.rel (0) target = $region57
    $region56: #{tpu_custom_call.1} parent=1 // pred_region
      %s119 = ssub.s32 2048, 2048
      %120 = vsyncadd [#allocation16], %s119
      %s121 = sshll.u32 [#allocation17], 4
      %s122 = int_to_ptr.vmem [resolvable:$true] %s121
      %127 = dma.hbm_to_vmem [thread:$0]  %s13, 2048, %s122, [#allocation16], 128, 128, 8
    $region57: #{tpu_custom_call.1} parent=1 // pred_fallthru
      _
    // Predicated region
    $region58: #{tpu_custom_call.1} parent=1 // pred_check
      _
    $region59: #{tpu_custom_call.1} parent=1 // pred_check_branch
      %129 = sbr.rel (0) target = $region61
    $region60: #{tpu_custom_call.1} parent=1 // pred_region
      _
    $region61: #{tpu_custom_call.1} parent=1 // pred_fallthru
      _
    // Predicated region
    $region62: #{tpu_custom_call.1} parent=1 // pred_check
      _
    $region63: #{tpu_custom_call.1} parent=1 // pred_check_branch
      %131 = sbr.rel (0) target = $region65
    $region64: #{tpu_custom_call.1} parent=1 // pred_region
      %s133 = ssub.s32 2048, 2048
      %134 = vsyncadd [#allocation19], %s133
      %s135 = sshll.u32 [#allocation18], 4
      %s136 = int_to_ptr.vmem [resolvable:$true] %s135
      %141 = dma.hbm_to_vmem [thread:$0]  %s15, 2048, %s136, [#allocation19], 64, 64, 4
    $region65: #{tpu_custom_call.1} parent=1 // pred_fallthru
      _
    // Predicated region
    $region66: #{tpu_custom_call.1} parent=1 // pred_check
      _
    $region67: #{tpu_custom_call.1} parent=1 // pred_check_branch
      %143 = sbr.rel (0) target = $region69
    $region68: #{tpu_custom_call.1} parent=1 // pred_region
      _
    $region69: #{tpu_custom_call.1} parent=1 // pred_fallthru
      _
    // Predicated region
    $region70: #{tpu_custom_call.1} parent=1 // pred_check
      _
    $region71: #{tpu_custom_call.1} parent=1 // pred_check_branch
      %145 = sbr.rel (0) target = $region73
    $region72: #{tpu_custom_call.1} parent=1 // pred_region
      _
    $region73: #{tpu_custom_call.1} parent=1 // pred_fallthru
      _
    // Predicated region
    $region74: #{tpu_custom_call.1} parent=1 // pred_check
      _
    $region75: #{tpu_custom_call.1} parent=1 // pred_check_branch
      %147 = sbr.rel (0) target = $region77
    $region76: #{tpu_custom_call.1} parent=1 // pred_region
      _
    $region77: #{tpu_custom_call.1} parent=1 // pred_fallthru
      _
    // Predicated region
    $region78: #{tpu_custom_call.1} parent=1 // pred_check
      _
    $region79: #{tpu_custom_call.1} parent=1 // pred_check_branch
      %149 = sbr.rel (0) target = $region81
    $region80: #{tpu_custom_call.1} parent=1 // pred_region
      %150 = dma.done [#allocation7], 512
    $region81: #{tpu_custom_call.1} parent=1 // pred_fallthru
      _
    // Predicated region
    $region82: #{tpu_custom_call.1} parent=1 // pred_check
      _
    $region83: #{tpu_custom_call.1} parent=1 // pred_check_branch
      %152 = sbr.rel (0) target = $region85
    $region84: #{tpu_custom_call.1} parent=1 // pred_region
      %153 = dma.done [#allocation10], 512
    $region85: #{tpu_custom_call.1} parent=1 // pred_fallthru
      _
    // Predicated region
    $region86: #{tpu_custom_call.1} parent=1 // pred_check
      _
    $region87: #{tpu_custom_call.1} parent=1 // pred_check_branch
      %155 = sbr.rel (0) target = $region89
    $region88: #{tpu_custom_call.1} parent=1 // pred_region
      %156 = dma.done [#allocation10], 1024
    $region89: #{tpu_custom_call.1} parent=1 // pred_fallthru
      _
    // Predicated region
    $region90: #{tpu_custom_call.1} parent=1 // pred_check
      _
    $region91: #{tpu_custom_call.1} parent=1 // pred_check_branch
      %158 = sbr.rel (0) target = $region93
    $region92: #{tpu_custom_call.1} parent=1 // pred_region
      %159 = dma.done [#allocation13], 1024
    $region93: #{tpu_custom_call.1} parent=1 // pred_fallthru
      _
    // Predicated region
    $region94: #{tpu_custom_call.1} parent=1 // pred_check
      _
    $region95: #{tpu_custom_call.1} parent=1 // pred_check_branch
      %161 = sbr.rel (0) target = $region97
    $region96: #{tpu_custom_call.1} parent=1 // pred_region
      %162 = dma.done [#allocation13], 1024
    $region97: #{tpu_custom_call.1} parent=1 // pred_fallthru
      _
    // Predicated region
    $region98: #{tpu_custom_call.1} parent=1 // pred_check
      _
    $region99: #{tpu_custom_call.1} parent=1 // pred_check_branch
      %164 = sbr.rel (0) target = $region101
    $region100: #{tpu_custom_call.1} parent=1 // pred_region
      %165 = dma.done [#allocation16], 1024
    $region101: #{tpu_custom_call.1} parent=1 // pred_fallthru
      _
    // Predicated region
    $region102: #{tpu_custom_call.1} parent=1 // pred_check
      _
    $region103: #{tpu_custom_call.1} parent=1 // pred_check_branch
      %167 = sbr.rel (0) target = $region105
    $region104: #{tpu_custom_call.1} parent=1 // pred_region
      %168 = dma.done [#allocation16], 2048
    $region105: #{tpu_custom_call.1} parent=1 // pred_fallthru
      _
    // Predicated region
    $region106: #{tpu_custom_call.1} parent=1 // pred_check
      _
    $region107: #{tpu_custom_call.1} parent=1 // pred_check_branch
      %170 = sbr.rel (0) target = $region109
    $region108: #{tpu_custom_call.1} parent=1 // pred_region
      %171 = dma.done [#allocation19], 2048
    $region109: #{tpu_custom_call.1} parent=1 // pred_fallthru
      _
    %p173 = scmp.eq.s32.totalorder 0, 0
    // Predicated region
    $region110: #{tpu_custom_call.1} parent=1 // pred_check
      %p174 = pneg %p173
    $region111: #{tpu_custom_call.1} parent=1 // pred_check_branch
      %176 = sbr.rel (%p174) target = $region113
    $region112: #{tpu_custom_call.1} parent=1 // pred_region
      %v177 = vld [vmem:[#allocation6] sm:$0xff]
      %v178 = vld [vmem:[#allocation6 + $0x8] sm:$0xff]
      %v179 = vld [vmem:[#allocation6 + $0x10] sm:$0xff]
      %v180 = vld [vmem:[#allocation6 + $0x18] sm:$0xff]
      %v181 = vld [vmem:[%s11] sm:$0x1]
      %v182 = vld [vmem:[%s12] sm:$0x1]
      %183 = vadd.xlane.f32.xlu0 %v177
      %v184 = vpop.xlane.xlu0 %183
      %185 = vadd.xlane.f32.xlu0 %v178
      %v186 = vpop.xlane.xlu0 %185
      %187 = vadd.xlane.f32.xlu0 %v179
      %v188 = vpop.xlane.xlu0 %187
      %189 = vadd.xlane.f32.xlu0 %v180
      %v190 = vpop.xlane.xlu0 %189
      %v191 = vrcp.pop 128.0
      %v192 = vmul.f32 %v184, %v191
      %v193 = vmul.f32 %v186, %v191
      %v194 = vmul.f32 %v188, %v191
      %v195 = vmul.f32 %v190, %v191
      %v196 = vsub.f32 %v177, %v192
      %v197 = vsub.f32 %v178, %v193
      %v198 = vsub.f32 %v179, %v194
      %v199 = vsub.f32 %v180, %v195
      %v200 = vmul.f32 %v196, %v196
      %v201 = vmul.f32 %v197, %v197
      %v202 = vmul.f32 %v198, %v198
      %v203 = vmul.f32 %v199, %v199
      %204 = vadd.xlane.f32.xlu0 %v200
      %v205 = vpop.xlane.xlu0 %204
      %206 = vadd.xlane.f32.xlu0 %v201
      %v207 = vpop.xlane.xlu0 %206
      %208 = vadd.xlane.f32.xlu0 %v202
      %v209 = vpop.xlane.xlu0 %208
      %210 = vadd.xlane.f32.xlu0 %v203
      %v211 = vpop.xlane.xlu0 %210
      %v212 = vmul.f32 %v205, 0.007874016
      %v213 = vmul.f32 %v207, 0.007874016
      %v214 = vmul.f32 %v209, 0.007874016
      %v215 = vmul.f32 %v211, 0.007874016
      %v216 = vrsqrt.pop %v212
      %v217 = vmul.f32 %v212, %v216
      %vm218 = vcmp.eq.f32.partialorder %v212, inf
      %v219 = vsel %vm218, %v212, %v217
      %vm220 = vcmp.eq.f32.partialorder %v212, 0.0
      %v221 = vand.u32 %v212, 2147483648
      %v222 = vsel %vm220, %v221, %v219
      %v223 = vrsqrt.pop %v213
      %v224 = vmul.f32 %v213, %v223
      %vm225 = vcmp.eq.f32.partialorder %v213, inf
      %v226 = vsel %vm225, %v213, %v224
      %vm227 = vcmp.eq.f32.partialorder %v213, 0.0
      %v228 = vand.u32 %v213, 2147483648
      %v229 = vsel %vm227, %v228, %v226
      %v230 = vrsqrt.pop %v214
      %v231 = vmul.f32 %v214, %v230
      %vm232 = vcmp.eq.f32.partialorder %v214, inf
      %v233 = vsel %vm232, %v214, %v231
      %vm234 = vcmp.eq.f32.partialorder %v214, 0.0
      %v235 = vand.u32 %v214, 2147483648
      %v236 = vsel %vm234, %v235, %v233
      %v237 = vrsqrt.pop %v215
      %v238 = vmul.f32 %v215, %v237
      %vm239 = vcmp.eq.f32.partialorder %v215, inf
      %v240 = vsel %vm239, %v215, %v238
      %vm241 = vcmp.eq.f32.partialorder %v215, 0.0
      %v242 = vand.u32 %v215, 2147483648
      %v243 = vsel %vm241, %v242, %v240
      %v244 = vadd.f32 %v222, 1e-06
      %v245 = vadd.f32 %v229, 1e-06
      %v246 = vadd.f32 %v236, 1e-06
      %v247 = vadd.f32 %v243, 1e-06
      %v248 = vrcp.pop %v244
      %v249 = vmul.f32 %v196, %v248
      %v250 = vrcp.pop %v245
      %v251 = vmul.f32 %v197, %v250
      %v252 = vrcp.pop %v246
      %v253 = vmul.f32 %v198, %v252
      %v254 = vrcp.pop %v247
      %v255 = vmul.f32 %v199, %v254
      %v257 = vlaneseq
      %v258 = vshrl.u32 %v257, 7
      %v259 = vsub.s32 0, %v258
      %v260 = vrot.slane %v181, %v259
      %v262 = vmul.f32 %v260, %v249
      %v263 = vmul.f32 %v260, %v251
      %v264 = vmul.f32 %v260, %v253
      %v265 = vmul.f32 %v260, %v255
      %v267 = vlaneseq
      %v268 = vshrl.u32 %v267, 7
      %v269 = vsub.s32 0, %v268
      %v270 = vrot.slane %v182, %v269
      %v272 = vadd.f32 %v262, %v270
      %v273 = vadd.f32 %v263, %v270
      %v274 = vadd.f32 %v264, %v270
      %v275 = vadd.f32 %v265, %v270
      %v276 = vpack.c.bf16 %v273, %v272
      %v277 = vpack.c.bf16 %v275, %v274
      %v278 = vld [vmem:[#allocation12] sm:$0xf]
      %v279 = vld [vmem:[#allocation12 + $0x4] sm:$0xf]
      %v280 = vld [vmem:[#allocation12 + $0x8] sm:$0xf]
      %v281 = vld [vmem:[#allocation12 + $0xc] sm:$0xf]
      %v282 = vld [vmem:[#allocation12 + $0x10] sm:$0xf]
      %v283 = vld [vmem:[#allocation12 + $0x14] sm:$0xf]
      %v284 = vld [vmem:[#allocation12 + $0x18] sm:$0xf]
      %v285 = vld [vmem:[#allocation12 + $0x1c] sm:$0xf]
      %v286 = vld [vmem:[#allocation12 + $0x20] sm:$0xf]
      %v287 = vld [vmem:[#allocation12 + $0x24] sm:$0xf]
      %v288 = vld [vmem:[#allocation12 + $0x28] sm:$0xf]
      %v289 = vld [vmem:[#allocation12 + $0x2c] sm:$0xf]
      %v290 = vld [vmem:[#allocation12 + $0x30] sm:$0xf]
      %v291 = vld [vmem:[#allocation12 + $0x34] sm:$0xf]
      %v292 = vld [vmem:[#allocation12 + $0x38] sm:$0xf]
      %v293 = vld [vmem:[#allocation12 + $0x3c] sm:$0xf]
      %v294 = vld [vmem:[%s6] sm:$0x1]
      %v296 = vlaneseq
      %v297 = vshrl.u32 %v296, 7
      %v298 = vsub.s32 0, %v297
      %v299 = vrot.slane %v294, %v298
      %v317 = vunpack.c.l.b16 %v278
      %v318 = vunpack.c.l.b16 %v279
      %v319 = vunpack.c.l.b16 %v280
      %v320 = vunpack.c.l.b16 %v281
      %v321 = vunpack.c.l.b16 %v282
      %v322 = vunpack.c.l.b16 %v283
      %v323 = vunpack.c.l.b16 %v284
      %v324 = vunpack.c.l.b16 %v285
      %v325 = vunpack.c.l.b16 %v286
      %v326 = vunpack.c.l.b16 %v287
      %v327 = vunpack.c.l.b16 %v288
      %v328 = vunpack.c.l.b16 %v289
      %v329 = vunpack.c.l.b16 %v290
      %v330 = vunpack.c.l.b16 %v291
      %v331 = vunpack.c.l.b16 %v292
      %v332 = vunpack.c.l.b16 %v293
      %v333 = vpack.c.b16 %v318, %v317
      %v334 = vpack.c.b16 %v320, %v319
      %v335 = vpack.c.b16 %v322, %v321
      %v336 = vpack.c.b16 %v324, %v323
      %v337 = vpack.c.b16 %v326, %v325
      %v338 = vpack.c.b16 %v328, %v327
      %v339 = vpack.c.b16 %v330, %v329
      %v340 = vpack.c.b16 %v332, %v331
      %349 = vmatprep.subr.bf16.mxu0 0
      %350 = vmatpush1.bf16.msra.mxu0 %v340
      %351 = vmatprep.subr.bf16.mxu0 0
      %352 = vmatpush1.bf16.msra.mxu0 %v339
      %353 = vmatprep.subr.bf16.mxu0 0
      %354 = vmatpush1.bf16.msra.mxu0 %v338
      %355 = vmatprep.subr.bf16.mxu0 0
      %356 = vmatpush1.bf16.msra.mxu0 %v337
      %357 = vmatprep.subr.bf16.mxu0 0
      %358 = vmatpush1.bf16.msra.mxu0 %v336
      %359 = vmatprep.subr.bf16.mxu0 0
      %360 = vmatpush1.bf16.msra.mxu0 %v335
      %361 = vmatprep.subr.bf16.mxu0 0
      %362 = vmatpush1.bf16.msra.mxu0 %v334
      %363 = vmatprep.subr.bf16.mxu0 0
      %364 = vmatpush1.bf16.msra.mxu0 %v333
      %365 = vmatprep.subr.bf16.mxu0 0
      %366 = vmatpush2.bf16.msra.mxu0 0
      %367 = vmatprep.subr.bf16.mxu0 0
      %368 = vmatpush2.bf16.msra.mxu0 0
      %369 = vmatprep.subr.bf16.mxu0 0
      %370 = vmatpush2.bf16.msra.mxu0 0
      %371 = vmatprep.subr.bf16.mxu0 0
      %372 = vmatpush2.bf16.msra.mxu0 0
      %373 = vmatprep.subr.bf16.mxu0 0
      %374 = vmatpush2.bf16.msra.mxu0 0
      %375 = vmatprep.subr.bf16.mxu0 0
      %376 = vmatpush2.bf16.msra.mxu0 0
      %377 = vmatprep.subr.bf16.mxu0 0
      %378 = vmatpush2.bf16.msra.mxu0 0
      %379 = vmatprep.subr.bf16.mxu0 0
      %380 = vmatpush2.bf16.msra.mxu0 0
      %381 = vmatprep.mubr.bf16.mxu0 0
      %382 = vmatmul.mubr.bf16.gmra.mxu0 %v276
      %v383 = vpop.f32.mrf.mxu0
      %v384 = vadd.f32 %v299, %v383
      %v385 = vpop.f32.mrf.mxu0
      %v386 = vpop.f32.mrf.mxu0
      %v387 = vadd.f32 %v299, %v386
      %v388 = vpop.f32.mrf.mxu0
      %389 = vmatprep.mubr.bf16.mxu0 0
      %390 = vmatmul.mubr.bf16.gmra.mxu0 %v277
      %v391 = vpop.f32.mrf.mxu0
      %v392 = vadd.f32 %v299, %v391
      %v393 = vpop.f32.mrf.mxu0
      %v394 = vpop.f32.mrf.mxu0
      %v395 = vadd.f32 %v299, %v394
      %v396 = vpop.f32.mrf.mxu0
      %397 = vdwg.mxu0
      %v398 = vld [vmem:[#allocation14] sm:$0xf]
      %v399 = vld [vmem:[#allocation14 + $0x4] sm:$0xf]
      %v400 = vld [vmem:[#allocation14 + $0x8] sm:$0xf]
      %v401 = vld [vmem:[#allocation14 + $0xc] sm:$0xf]
      %v402 = vld [vmem:[#allocation14 + $0x10] sm:$0xf]
      %v403 = vld [vmem:[#allocation14 + $0x14] sm:$0xf]
      %v404 = vld [vmem:[#allocation14 + $0x18] sm:$0xf]
      %v405 = vld [vmem:[#allocation14 + $0x1c] sm:$0xf]
      %v406 = vld [vmem:[#allocation14 + $0x20] sm:$0xf]
      %v407 = vld [vmem:[#allocation14 + $0x24] sm:$0xf]
      %v408 = vld [vmem:[#allocation14 + $0x28] sm:$0xf]
      %v409 = vld [vmem:[#allocation14 + $0x2c] sm:$0xf]
      %v410 = vld [vmem:[#allocation14 + $0x30] sm:$0xf]
      %v411 = vld [vmem:[#allocation14 + $0x34] sm:$0xf]
      %v412 = vld [vmem:[#allocation14 + $0x38] sm:$0xf]
      %v413 = vld [vmem:[#allocation14 + $0x3c] sm:$0xf]
      %v414 = vld [vmem:[%s8] sm:$0x1]
      %v416 = vlaneseq
      %v417 = vshrl.u32 %v416, 7
      %v418 = vsub.s32 0, %v417
      %v419 = vrot.slane %v414, %v418
      %v437 = vunpack.c.l.b16 %v398
      %v438 = vunpack.c.l.b16 %v399
      %v439 = vunpack.c.l.b16 %v400
      %v440 = vunpack.c.l.b16 %v401
      %v441 = vunpack.c.l.b16 %v402
      %v442 = vunpack.c.l.b16 %v403
      %v443 = vunpack.c.l.b16 %v404
      %v444 = vunpack.c.l.b16 %v405
      %v445 = vunpack.c.l.b16 %v406
      %v446 = vunpack.c.l.b16 %v407
      %v447 = vunpack.c.l.b16 %v408
      %v448 = vunpack.c.l.b16 %v409
      %v449 = vunpack.c.l.b16 %v410
      %v450 = vunpack.c.l.b16 %v411
      %v451 = vunpack.c.l.b16 %v412
      %v452 = vunpack.c.l.b16 %v413
      %v453 = vpack.c.b16 %v438, %v437
      %v454 = vpack.c.b16 %v440, %v439
      %v455 = vpack.c.b16 %v442, %v441
      %v456 = vpack.c.b16 %v444, %v443
      %v457 = vpack.c.b16 %v446, %v445
      %v458 = vpack.c.b16 %v448, %v447
      %v459 = vpack.c.b16 %v450, %v449
      %v460 = vpack.c.b16 %v452, %v451
      %469 = vmatprep.subr.bf16.mxu0 0
      %470 = vmatpush1.bf16.msra.mxu0 %v460
      %471 = vmatprep.subr.bf16.mxu0 0
      %472 = vmatpush1.bf16.msra.mxu0 %v459
      %473 = vmatprep.subr.bf16.mxu0 0
      %474 = vmatpush1.bf16.msra.mxu0 %v458
      %475 = vmatprep.subr.bf16.mxu0 0
      %476 = vmatpush1.bf16.msra.mxu0 %v457
      %477 = vmatprep.subr.bf16.mxu0 0
      %478 = vmatpush1.bf16.msra.mxu0 %v456
      %479 = vmatprep.subr.bf16.mxu0 0
      %480 = vmatpush1.bf16.msra.mxu0 %v455
      %481 = vmatprep.subr.bf16.mxu0 0
      %482 = vmatpush1.bf16.msra.mxu0 %v454
      %483 = vmatprep.subr.bf16.mxu0 0
      %484 = vmatpush1.bf16.msra.mxu0 %v453
      %485 = vmatprep.subr.bf16.mxu0 0
      %486 = vmatpush2.bf16.msra.mxu0 0
      %487 = vmatprep.subr.bf16.mxu0 0
      %488 = vmatpush2.bf16.msra.mxu0 0
      %489 = vmatprep.subr.bf16.mxu0 0
      %490 = vmatpush2.bf16.msra.mxu0 0
      %491 = vmatprep.subr.bf16.mxu0 0
      %492 = vmatpush2.bf16.msra.mxu0 0
      %493 = vmatprep.subr.bf16.mxu0 0
      %494 = vmatpush2.bf16.msra.mxu0 0
      %495 = vmatprep.subr.bf16.mxu0 0
      %496 = vmatpush2.bf16.msra.mxu0 0
      %497 = vmatprep.subr.bf16.mxu0 0
      %498 = vmatpush2.bf16.msra.mxu0 0
      %499 = vmatprep.subr.bf16.mxu0 0
      %500 = vmatpush2.bf16.msra.mxu0 0
      %501 = vmatprep.mubr.bf16.mxu0 0
      %502 = vmatmul.mubr.bf16.gmra.mxu0 %v276
      %v503 = vpop.f32.mrf.mxu0
      %v504 = vadd.f32 %v419, %v503
      %v505 = vpop.f32.mrf.mxu0
      %v506 = vpop.f32.mrf.mxu0
      %v507 = vadd.f32 %v419, %v506
      %v508 = vpop.f32.mrf.mxu0
      %509 = vmatprep.mubr.bf16.mxu0 0
      %510 = vmatmul.mubr.bf16.gmra.mxu0 %v277
      %v511 = vpop.f32.mrf.mxu0
      %v512 = vadd.f32 %v419, %v511
      %v513 = vpop.f32.mrf.mxu0
      %v514 = vpop.f32.mrf.mxu0
      %v515 = vadd.f32 %v419, %v514
      %v516 = vpop.f32.mrf.mxu0
      %517 = vdwg.mxu0
      %v518 = vpack.c.bf16 %v387, %v384
      %v519 = vpack.c.bf16 %v395, %v392
      %v522 = vunpack.c.l.b16 %v518
      %v523 = vunpack.c.h.b16 %v518
      %v524 = vunpack.c.l.b16 %v519
      %v525 = vunpack.c.h.b16 %v519
      %v526 = vpack.c.b16 %v522, %v522
      %v527 = vpack.c.b16 %v523, %v523
      %v528 = vpack.c.b16 %v524, %v524
      %v529 = vpack.c.b16 %v525, %v525
      %534 = vst [vmem:[#allocation2] sm:$0xf] %v526
      %535 = vst [vmem:[#allocation2 + $0x4] sm:$0xf] %v527
      %536 = vst [vmem:[#allocation2 + $0x8] sm:$0xf] %v528
      %537 = vst [vmem:[#allocation2 + $0xc] sm:$0xf] %v529
      %v538 = vpack.c.bf16 %v507, %v504
      %v539 = vpack.c.bf16 %v515, %v512
      %v542 = vunpack.c.l.b16 %v538
      %v543 = vunpack.c.h.b16 %v538
      %v544 = vunpack.c.l.b16 %v539
      %v545 = vunpack.c.h.b16 %v539
      %v546 = vpack.c.b16 %v542, %v542
      %v547 = vpack.c.b16 %v543, %v543
      %v548 = vpack.c.b16 %v544, %v544
      %v549 = vpack.c.b16 %v545, %v545
      %554 = vst [vmem:[#allocation3] sm:$0xf] %v546
      %555 = vst [vmem:[#allocation3 + $0x4] sm:$0xf] %v547
      %556 = vst [vmem:[#allocation3 + $0x8] sm:$0xf] %v548
      %557 = vst [vmem:[#allocation3 + $0xc] sm:$0xf] %v549
    $region113: #{tpu_custom_call.1} parent=1 // pred_fallthru
      _
    %v558 = vld [vmem:[#allocation9] sm:$0xff]
    %v559 = vld [vmem:[#allocation9 + $0x8] sm:$0xff]
    %v560 = vld [vmem:[#allocation9 + $0x10] sm:$0xff]
    %v561 = vld [vmem:[#allocation9 + $0x18] sm:$0xff]
    %v562 = vld [vmem:[%s11] sm:$0x1]
    %v563 = vld [vmem:[%s12] sm:$0x1]
    %564 = vadd.xlane.f32.xlu0 %v558
    %v565 = vpop.xlane.xlu0 %564
    %566 = vadd.xlane.f32.xlu0 %v559
    %v567 = vpop.xlane.xlu0 %566
    %568 = vadd.xlane.f32.xlu0 %v560
    %v569 = vpop.xlane.xlu0 %568
    %570 = vadd.xlane.f32.xlu0 %v561
    %v571 = vpop.xlane.xlu0 %570
    %v572 = vrcp.pop 128.0
    %v573 = vmul.f32 %v565, %v572
    %v574 = vmul.f32 %v567, %v572
    %v575 = vmul.f32 %v569, %v572
    %v576 = vmul.f32 %v571, %v572
    %v577 = vsub.f32 %v558, %v573
    %v578 = vsub.f32 %v559, %v574
    %v579 = vsub.f32 %v560, %v575
    %v580 = vsub.f32 %v561, %v576
    %v581 = vmul.f32 %v577, %v577
    %v582 = vmul.f32 %v578, %v578
    %v583 = vmul.f32 %v579, %v579
    %v584 = vmul.f32 %v580, %v580
    %585 = vadd.xlane.f32.xlu0 %v581
    %v586 = vpop.xlane.xlu0 %585
    %587 = vadd.xlane.f32.xlu0 %v582
    %v588 = vpop.xlane.xlu0 %587
    %589 = vadd.xlane.f32.xlu0 %v583
    %v590 = vpop.xlane.xlu0 %589
    %591 = vadd.xlane.f32.xlu0 %v584
    %v592 = vpop.xlane.xlu0 %591
    %v593 = vmul.f32 %v586, 0.007874016
    %v594 = vmul.f32 %v588, 0.007874016
    %v595 = vmul.f32 %v590, 0.007874016
    %v596 = vmul.f32 %v592, 0.007874016
    %v597 = vrsqrt.pop %v593
    %v598 = vmul.f32 %v593, %v597
    %vm599 = vcmp.eq.f32.partialorder %v593, inf
    %v600 = vsel %vm599, %v593, %v598
    %vm601 = vcmp.eq.f32.partialorder %v593, 0.0
    %v602 = vand.u32 %v593, 2147483648
    %v603 = vsel %vm601, %v602, %v600
    %v604 = vrsqrt.pop %v594
    %v605 = vmul.f32 %v594, %v604
    %vm606 = vcmp.eq.f32.partialorder %v594, inf
    %v607 = vsel %vm606, %v594, %v605
    %vm608 = vcmp.eq.f32.partialorder %v594, 0.0
    %v609 = vand.u32 %v594, 2147483648
    %v610 = vsel %vm608, %v609, %v607
    %v611 = vrsqrt.pop %v595
    %v612 = vmul.f32 %v595, %v611
    %vm613 = vcmp.eq.f32.partialorder %v595, inf
    %v614 = vsel %vm613, %v595, %v612
    %vm615 = vcmp.eq.f32.partialorder %v595, 0.0
    %v616 = vand.u32 %v595, 2147483648
    %v617 = vsel %vm615, %v616, %v614
    %v618 = vrsqrt.pop %v596
    %v619 = vmul.f32 %v596, %v618
    %vm620 = vcmp.eq.f32.partialorder %v596, inf
    %v621 = vsel %vm620, %v596, %v619
    %vm622 = vcmp.eq.f32.partialorder %v596, 0.0
    %v623 = vand.u32 %v596, 2147483648
    %v624 = vsel %vm622, %v623, %v621
    %v625 = vadd.f32 %v603, 1e-06
    %v626 = vadd.f32 %v610, 1e-06
    %v627 = vadd.f32 %v617, 1e-06
    %v628 = vadd.f32 %v624, 1e-06
    %v629 = vrcp.pop %v625
    %v630 = vmul.f32 %v577, %v629
    %v631 = vrcp.pop %v626
    %v632 = vmul.f32 %v578, %v631
    %v633 = vrcp.pop %v627
    %v634 = vmul.f32 %v579, %v633
    %v635 = vrcp.pop %v628
    %v636 = vmul.f32 %v580, %v635
    %v638 = vlaneseq
    %v639 = vshrl.u32 %v638, 7
    %v640 = vsub.s32 0, %v639
    %v641 = vrot.slane %v562, %v640
    %v643 = vmul.f32 %v641, %v630
    %v644 = vmul.f32 %v641, %v632
    %v645 = vmul.f32 %v641, %v634
    %v646 = vmul.f32 %v641, %v636
    %v648 = vlaneseq
    %v649 = vshrl.u32 %v648, 7
    %v650 = vsub.s32 0, %v649
    %v651 = vrot.slane %v563, %v650
    %v653 = vadd.f32 %v643, %v651
    %v654 = vadd.f32 %v644, %v651
    %v655 = vadd.f32 %v645, %v651
    %v656 = vadd.f32 %v646, %v651
    %v657 = vpack.c.bf16 %v654, %v653
    %v658 = vpack.c.bf16 %v656, %v655
    %v659 = vld [vmem:[#allocation11] sm:$0xf]
    %v660 = vld [vmem:[#allocation11 + $0x4] sm:$0xf]
    %v661 = vld [vmem:[#allocation11 + $0x8] sm:$0xf]
    %v662 = vld [vmem:[#allocation11 + $0xc] sm:$0xf]
    %v663 = vld [vmem:[#allocation11 + $0x10] sm:$0xf]
    %v664 = vld [vmem:[#allocation11 + $0x14] sm:$0xf]
    %v665 = vld [vmem:[#allocation11 + $0x18] sm:$0xf]
    %v666 = vld [vmem:[#allocation11 + $0x1c] sm:$0xf]
    %v667 = vld [vmem:[#allocation11 + $0x20] sm:$0xf]
    %v668 = vld [vmem:[#allocation11 + $0x24] sm:$0xf]
    %v669 = vld [vmem:[#allocation11 + $0x28] sm:$0xf]
    %v670 = vld [vmem:[#allocation11 + $0x2c] sm:$0xf]
    %v671 = vld [vmem:[#allocation11 + $0x30] sm:$0xf]
    %v672 = vld [vmem:[#allocation11 + $0x34] sm:$0xf]
    %v673 = vld [vmem:[#allocation11 + $0x38] sm:$0xf]
    %v674 = vld [vmem:[#allocation11 + $0x3c] sm:$0xf]
    %v675 = vld [vmem:[%s4] sm:$0x1]
    %v677 = vlaneseq
    %v678 = vshrl.u32 %v677, 7
    %v679 = vsub.s32 0, %v678
    %v680 = vrot.slane %v675, %v679
    %v698 = vunpack.c.l.b16 %v659
    %v699 = vunpack.c.l.b16 %v660
    %v700 = vunpack.c.l.b16 %v661
    %v701 = vunpack.c.l.b16 %v662
    %v702 = vunpack.c.l.b16 %v663
    %v703 = vunpack.c.l.b16 %v664
    %v704 = vunpack.c.l.b16 %v665
    %v705 = vunpack.c.l.b16 %v666
    %v706 = vunpack.c.l.b16 %v667
    %v707 = vunpack.c.l.b16 %v668
    %v708 = vunpack.c.l.b16 %v669
    %v709 = vunpack.c.l.b16 %v670
    %v710 = vunpack.c.l.b16 %v671
    %v711 = vunpack.c.l.b16 %v672
    %v712 = vunpack.c.l.b16 %v673
    %v713 = vunpack.c.l.b16 %v674
    %v714 = vpack.c.b16 %v699, %v698
    %v715 = vpack.c.b16 %v701, %v700
    %v716 = vpack.c.b16 %v703, %v702
    %v717 = vpack.c.b16 %v705, %v704
    %v718 = vpack.c.b16 %v707, %v706
    %v719 = vpack.c.b16 %v709, %v708
    %v720 = vpack.c.b16 %v711, %v710
    %v721 = vpack.c.b16 %v713, %v712
    %730 = vmatprep.subr.bf16.mxu0 0
    %731 = vmatpush1.bf16.msra.mxu0 %v721
    %732 = vmatprep.subr.bf16.mxu0 0
    %733 = vmatpush1.bf16.msra.mxu0 %v720
    %734 = vmatprep.subr.bf16.mxu0 0
    %735 = vmatpush1.bf16.msra.mxu0 %v719
    %736 = vmatprep.subr.bf16.mxu0 0
    %737 = vmatpush1.bf16.msra.mxu0 %v718
    %738 = vmatprep.subr.bf16.mxu0 0
    %739 = vmatpush1.bf16.msra.mxu0 %v717
    %740 = vmatprep.subr.bf16.mxu0 0
    %741 = vmatpush1.bf16.msra.mxu0 %v716
    %742 = vmatprep.subr.bf16.mxu0 0
    %743 = vmatpush1.bf16.msra.mxu0 %v715
    %744 = vmatprep.subr.bf16.mxu0 0
    %745 = vmatpush1.bf16.msra.mxu0 %v714
    %746 = vmatprep.subr.bf16.mxu0 0
    %747 = vmatpush2.bf16.msra.mxu0 0
    %748 = vmatprep.subr.bf16.mxu0 0
    %749 = vmatpush2.bf16.msra.mxu0 0
    %750 = vmatprep.subr.bf16.mxu0 0
    %751 = vmatpush2.bf16.msra.mxu0 0
    %752 = vmatprep.subr.bf16.mxu0 0
    %753 = vmatpush2.bf16.msra.mxu0 0
    %754 = vmatprep.subr.bf16.mxu0 0
    %755 = vmatpush2.bf16.msra.mxu0 0
    %756 = vmatprep.subr.bf16.mxu0 0
    %757 = vmatpush2.bf16.msra.mxu0 0
    %758 = vmatprep.subr.bf16.mxu0 0
    %759 = vmatpush2.bf16.msra.mxu0 0
    %760 = vmatprep.subr.bf16.mxu0 0
    %761 = vmatpush2.bf16.msra.mxu0 0
    %762 = vmatprep.mubr.bf16.mxu0 0
    %763 = vmatmul.mubr.bf16.gmra.mxu0 %v657
    %v764 = vpop.f32.mrf.mxu0
    %v765 = vadd.f32 %v680, %v764
    %v766 = vpop.f32.mrf.mxu0
    %v767 = vpop.f32.mrf.mxu0
    %v768 = vadd.f32 %v680, %v767
    %v769 = vpop.f32.mrf.mxu0
    %770 = vmatprep.mubr.bf16.mxu0 0
    %771 = vmatmul.mubr.bf16.gmra.mxu0 %v658
    %v772 = vpop.f32.mrf.mxu0
    %v773 = vadd.f32 %v680, %v772
    %v774 = vpop.f32.mrf.mxu0
    %v775 = vpop.f32.mrf.mxu0
    %v776 = vadd.f32 %v680, %v775
    %v777 = vpop.f32.mrf.mxu0
    %778 = vdwg.mxu0
    %v779 = vmul.f32 %v765, 0.17677669
    %v780 = vmul.f32 %v768, 0.17677669
    %v781 = vmul.f32 %v773, 0.17677669
    %v782 = vmul.f32 %v776, 0.17677669
    %v783 = vpack.c.bf16 %v780, %v779
    %v784 = vpack.c.bf16 %v782, %v781
    %v785 = vld [vmem:[%s2] sm:$0x1]
    %vm786 = vcmp.gt.f32.partialorder %v785, 0.0
    %v787 = vsel %vm786, 0.0, -1e+09
    %v789 = vlaneseq
    %v790 = vshrl.u32 %v789, 7
    %v791 = vsub.s32 0, %v790
    %v792 = vrot.slane %v787, %v791
    %v794 = vld [vmem:[#allocation2] sm:$0xf]
    %v795 = vld [vmem:[#allocation2 + $0x4] sm:$0xf]
    %v796 = vld [vmem:[#allocation3] sm:$0xf]
    %v797 = vld [vmem:[#allocation3 + $0x4] sm:$0xf]
    %v800 = vunpack.c.l.b16 %v794
    %v801 = vunpack.c.l.b16 %v795
    %v802 = vpack.c.b16 %v801, %v800
    %vm803 = vcmask 261120
    %v805 = vsel %vm803, %v783, 0
    %v808 = vsel %vm803, %v802, 0
    %810 = vmatprep.subr.bf16.mxu0 0
    %811 = vmatpush1.bf16.xpose.msra.mxu0 0
    %812 = vmatprep.subr.bf16.mxu0 0
    %813 = vmatpush1.bf16.xpose.msra.mxu0 0
    %814 = vmatprep.subr.bf16.mxu0 0
    %815 = vmatpush1.bf16.xpose.msra.mxu0 0
    %816 = vmatprep.subr.bf16.mxu0 0
    %817 = vmatpush1.bf16.xpose.msra.mxu0 0
    %818 = vmatprep.subr.bf16.mxu0 0
    %819 = vmatpush1.bf16.xpose.msra.mxu0 0
    %820 = vmatprep.subr.bf16.mxu0 0
    %821 = vmatpush1.bf16.xpose.msra.mxu0 0
    %822 = vmatprep.subr.bf16.mxu0 0
    %823 = vmatpush1.bf16.xpose.msra.mxu0 0
    %824 = vmatprep.subr.bf16.mxu0 0
    %825 = vmatpush1.bf16.xpose.msra.mxu0 %v808
    %826 = vmatprep.subr.bf16.mxu0 0
    %827 = vmatpush2.bf16.xpose.msra.mxu0 0
    %828 = vmatprep.subr.bf16.mxu0 0
    %829 = vmatpush2.bf16.xpose.msra.mxu0 0
    %830 = vmatprep.subr.bf16.mxu0 0
    %831 = vmatpush2.bf16.xpose.msra.mxu0 0
    %832 = vmatprep.subr.bf16.mxu0 0
    %833 = vmatpush2.bf16.xpose.msra.mxu0 0
    %834 = vmatprep.subr.bf16.mxu0 0
    %835 = vmatpush2.bf16.xpose.msra.mxu0 0
    %836 = vmatprep.subr.bf16.mxu0 0
    %837 = vmatpush2.bf16.xpose.msra.mxu0 0
    %838 = vmatprep.subr.bf16.mxu0 0
    %839 = vmatpush2.bf16.xpose.msra.mxu0 0
    %840 = vmatprep.subr.bf16.mxu0 0
    %841 = vmatpush2.bf16.xpose.msra.mxu0 0
    %842 = vmatprep.mubr.bf16.mxu0 0
    %843 = vmatmul.mubr.bf16.gmra.mxu0 %v805
    %v844 = vpop.f32.mrf.mxu0
    %v845 = vadd.f32 %v792, %v844
    %v846 = vpop.f32.mrf.mxu0
    %v847 = vpop.f32.mrf.mxu0
    %v848 = vadd.f32 %v792, %v847
    %v849 = vpop.f32.mrf.mxu0
    %850 = vdwg.mxu0
    %vm851 = vcmask 130048
    %v852 = vsel %vm851, %v845, -inf
    %853 = vmax.xlane.f32.xlu0 %v852
    %v854 = vpop.xlane.xlu0 %853
    %v855 = vsel %vm851, %v848, -inf
    %856 = vmax.xlane.f32.xlu0 %v855
    %v857 = vpop.xlane.xlu0 %856
    %v858 = vsub.f32 %v845, %v854
    %v859 = vsub.f32 %v848, %v857
    %v860 = vmul.f32 %v858, 1.442695
    %v861 = vpow.pop %v860
    %v862 = vmul.f32 %v859, 1.442695
    %v863 = vpow.pop %v862
    %v864 = vsel %vm851, %v861, 0.0
    %865 = vadd.xlane.f32.xlu0 %v864
    %v866 = vpop.xlane.xlu0 %865
    %v867 = vsel %vm851, %v863, 0.0
    %868 = vadd.xlane.f32.xlu0 %v867
    %v869 = vpop.xlane.xlu0 %868
    %v870 = vrcp.pop %v866
    %v871 = vrcp.pop %v869
    %v872 = vmul.f32 %v861, %v870
    %v873 = vmul.f32 %v863, %v871
    %v874 = vpack.c.bf16 %v873, %v872
    %v877 = vunpack.c.l.b16 %v796
    %v878 = vunpack.c.l.b16 %v797
    %v879 = vpack.c.b16 %v878, %v877
    %v882 = vsel %vm851, %v874, 0
    %884 = vmatprep.subr.bf16.mxu0 0
    %885 = vmatpush1.bf16.msra.mxu0 0
    %886 = vmatprep.subr.bf16.mxu0 0
    %887 = vmatpush1.bf16.msra.mxu0 0
    %888 = vmatprep.subr.bf16.mxu0 0
    %889 = vmatpush1.bf16.msra.mxu0 0
    %890 = vmatprep.subr.bf16.mxu0 0
    %891 = vmatpush1.bf16.msra.mxu0 0
    %892 = vmatprep.subr.bf16.mxu0 0
    %893 = vmatpush1.bf16.msra.mxu0 0
    %894 = vmatprep.subr.bf16.mxu0 0
    %895 = vmatpush1.bf16.msra.mxu0 0
    %896 = vmatprep.subr.bf16.mxu0 0
    %897 = vmatpush1.bf16.msra.mxu0 0
    %898 = vmatprep.subr.bf16.mxu0 0
    %899 = vmatpush1.bf16.msra.mxu0 %v879
    %900 = vmatprep.subr.bf16.mxu0 0
    %901 = vmatpush2.bf16.msra.mxu0 0
    %902 = vmatprep.subr.bf16.mxu0 0
    %903 = vmatpush2.bf16.msra.mxu0 0
    %904 = vmatprep.subr.bf16.mxu0 0
    %905 = vmatpush2.bf16.msra.mxu0 0
    %906 = vmatprep.subr.bf16.mxu0 0
    %907 = vmatpush2.bf16.msra.mxu0 0
    %908 = vmatprep.subr.bf16.mxu0 0
    %909 = vmatpush2.bf16.msra.mxu0 0
    %910 = vmatprep.subr.bf16.mxu0 0
    %911 = vmatpush2.bf16.msra.mxu0 0
    %912 = vmatprep.subr.bf16.mxu0 0
    %913 = vmatpush2.bf16.msra.mxu0 0
    %914 = vmatprep.subr.bf16.mxu0 0
    %915 = vmatpush2.bf16.msra.mxu0 0
    %916 = vmatprep.mubr.bf16.mxu0 0
    %917 = vmatmul.mubr.bf16.gmra.mxu0 %v882
    %v918 = vpop.f32.mrf.mxu0
    %v919 = vadd.f32 0.0, %v918
    %v920 = vpop.f32.mrf.mxu0
    %v921 = vpop.f32.mrf.mxu0
    %v922 = vadd.f32 0.0, %v921
    %v923 = vpop.f32.mrf.mxu0
    %924 = vdwg.mxu0
    %v925 = vpack.c.bf16 %v922, %v919
    %v927 = vunpack.c.l.b16 %v925
    %v928 = vunpack.c.h.b16 %v925
    %v929 = vpack.c.b16 %v927, %v927
    %v930 = vpack.c.b16 %v928, %v928
    %vm933 = vcmask 257024
    %934 = vst.msk [vmem:[#allocation4] sm:$0xf] %vm933, %v929
    %935 = vst.msk [vmem:[#allocation4 + $0x4] sm:$0xf] %vm933, %v930
    %937 = vrot.lane.b32.xlu0 %v783, 96
    %v938 = vpop.permute.xlu0 %937
    %939 = vrot.lane.b32.xlu0 %v802, 96
    %v940 = vpop.permute.xlu0 %939
    %v942 = vsel %vm803, %v938, 0
    %v945 = vsel %vm803, %v940, 0
    %947 = vmatprep.subr.bf16.mxu0 0
    %948 = vmatpush1.bf16.xpose.msra.mxu0 0
    %949 = vmatprep.subr.bf16.mxu0 0
    %950 = vmatpush1.bf16.xpose.msra.mxu0 0
    %951 = vmatprep.subr.bf16.mxu0 0
    %952 = vmatpush1.bf16.xpose.msra.mxu0 0
    %953 = vmatprep.subr.bf16.mxu0 0
    %954 = vmatpush1.bf16.xpose.msra.mxu0 0
    %955 = vmatprep.subr.bf16.mxu0 0
    %956 = vmatpush1.bf16.xpose.msra.mxu0 0
    %957 = vmatprep.subr.bf16.mxu0 0
    %958 = vmatpush1.bf16.xpose.msra.mxu0 0
    %959 = vmatprep.subr.bf16.mxu0 0
    %960 = vmatpush1.bf16.xpose.msra.mxu0 0
    %961 = vmatprep.subr.bf16.mxu0 0
    %962 = vmatpush1.bf16.xpose.msra.mxu0 %v945
    %963 = vmatprep.subr.bf16.mxu0 0
    %964 = vmatpush2.bf16.xpose.msra.mxu0 0
    %965 = vmatprep.subr.bf16.mxu0 0
    %966 = vmatpush2.bf16.xpose.msra.mxu0 0
    %967 = vmatprep.subr.bf16.mxu0 0
    %968 = vmatpush2.bf16.xpose.msra.mxu0 0
    %969 = vmatprep.subr.bf16.mxu0 0
    %970 = vmatpush2.bf16.xpose.msra.mxu0 0
    %971 = vmatprep.subr.bf16.mxu0 0
    %972 = vmatpush2.bf16.xpose.msra.mxu0 0
    %973 = vmatprep.subr.bf16.mxu0 0
    %974 = vmatpush2.bf16.xpose.msra.mxu0 0
    %975 = vmatprep.subr.bf16.mxu0 0
    %976 = vmatpush2.bf16.xpose.msra.mxu0 0
    %977 = vmatprep.subr.bf16.mxu0 0
    %978 = vmatpush2.bf16.xpose.msra.mxu0 0
    %979 = vmatprep.mubr.bf16.mxu0 0
    %980 = vmatmul.mubr.bf16.gmra.mxu0 %v942
    %v981 = vpop.f32.mrf.mxu0
    %v982 = vadd.f32 %v792, %v981
    %v983 = vpop.f32.mrf.mxu0
    %v984 = vpop.f32.mrf.mxu0
    %v985 = vadd.f32 %v792, %v984
    %v986 = vpop.f32.mrf.mxu0
    %987 = vdwg.mxu0
    %v988 = vsel %vm851, %v982, -inf
    %989 = vmax.xlane.f32.xlu0 %v988
    %v990 = vpop.xlane.xlu0 %989
    %v991 = vsel %vm851, %v985, -inf
    %992 = vmax.xlane.f32.xlu0 %v991
    %v993 = vpop.xlane.xlu0 %992
    %v994 = vsub.f32 %v982, %v990
    %v995 = vsub.f32 %v985, %v993
    %v996 = vmul.f32 %v994, 1.442695
    %v997 = vpow.pop %v996
    %v998 = vmul.f32 %v995, 1.442695
    %v999 = vpow.pop %v998
    %v1000 = vsel %vm851, %v997, 0.0
    %1001 = vadd.xlane.f32.xlu0 %v1000
    %v1002 = vpop.xlane.xlu0 %1001
    %v1003 = vsel %vm851, %v999, 0.0
    %1004 = vadd.xlane.f32.xlu0 %v1003
    %v1005 = vpop.xlane.xlu0 %1004
    %v1006 = vrcp.pop %v1002
    %v1007 = vrcp.pop %v1005
    %v1008 = vmul.f32 %v997, %v1006
    %v1009 = vmul.f32 %v999, %v1007
    %v1010 = vpack.c.bf16 %v1009, %v1008
    %1011 = vrot.lane.b32.xlu0 %v879, 96
    %v1012 = vpop.permute.xlu0 %1011
    %v1015 = vsel %vm851, %v1010, 0
    %1017 = vmatprep.subr.bf16.mxu0 0
    %1018 = vmatpush1.bf16.msra.mxu0 0
    %1019 = vmatprep.subr.bf16.mxu0 0
    %1020 = vmatpush1.bf16.msra.mxu0 0
    %1021 = vmatprep.subr.bf16.mxu0 0
    %1022 = vmatpush1.bf16.msra.mxu0 0
    %1023 = vmatprep.subr.bf16.mxu0 0
    %1024 = vmatpush1.bf16.msra.mxu0 0
    %1025 = vmatprep.subr.bf16.mxu0 0
    %1026 = vmatpush1.bf16.msra.mxu0 0
    %1027 = vmatprep.subr.bf16.mxu0 0
    %1028 = vmatpush1.bf16.msra.mxu0 0
    %1029 = vmatprep.subr.bf16.mxu0 0
    %1030 = vmatpush1.bf16.msra.mxu0 0
    %1031 = vmatprep.subr.bf16.mxu0 0
    %1032 = vmatpush1.bf16.msra.mxu0 %v1012
    %1033 = vmatprep.subr.bf16.mxu0 0
    %1034 = vmatpush2.bf16.msra.mxu0 0
    %1035 = vmatprep.subr.bf16.mxu0 0
    %1036 = vmatpush2.bf16.msra.mxu0 0
    %1037 = vmatprep.subr.bf16.mxu0 0
    %1038 = vmatpush2.bf16.msra.mxu0 0
    %1039 = vmatprep.subr.bf16.mxu0 0
    %1040 = vmatpush2.bf16.msra.mxu0 0
    %1041 = vmatprep.subr.bf16.mxu0 0
    %1042 = vmatpush2.bf16.msra.mxu0 0
    %1043 = vmatprep.subr.bf16.mxu0 0
    %1044 = vmatpush2.bf16.msra.mxu0 0
    %1045 = vmatprep.subr.bf16.mxu0 0
    %1046 = vmatpush2.bf16.msra.mxu0 0
    %1047 = vmatprep.subr.bf16.mxu0 0
    %1048 = vmatpush2.bf16.msra.mxu0 0
    %1049 = vmatprep.mubr.bf16.mxu0 0
    %1050 = vmatmul.mubr.bf16.gmra.mxu0 %v1015
    %v1051 = vpop.f32.mrf.mxu0
    %v1052 = vadd.f32 0.0, %v1051
    %v1053 = vpop.f32.mrf.mxu0
    %v1054 = vpop.f32.mrf.mxu0
    %v1055 = vadd.f32 0.0, %v1054
    %v1056 = vpop.f32.mrf.mxu0
    %1057 = vdwg.mxu0
    %v1058 = vpack.c.bf16 %v1055, %v1052
    %v1060 = vunpack.c.l.b16 %v1058
    %v1061 = vunpack.c.h.b16 %v1058
    %v1062 = vpack.c.b16 %v1060, %v1060
    %v1063 = vpack.c.b16 %v1061, %v1061
    %1064 = vrot.lane.b32.xlu0 %v1062, 32
    %v1065 = vpop.permute.xlu0 %1064
    %1066 = vrot.lane.b32.xlu0 %v1063, 32
    %v1067 = vpop.permute.xlu0 %1066
    %vm1070 = vcmask 519424
    %1071 = vst.msk [vmem:[#allocation4] sm:$0xf] %vm1070, %v1065
    %1072 = vst.msk [vmem:[#allocation4 + $0x4] sm:$0xf] %vm1070, %v1067
    %1073 = vrot.lane.b32.xlu0 %v783, 64
    %v1074 = vpop.permute.xlu0 %1073
    %1075 = vrot.lane.b32.xlu0 %v802, 64
    %v1076 = vpop.permute.xlu0 %1075
    %v1078 = vsel %vm803, %v1074, 0
    %v1081 = vsel %vm803, %v1076, 0
    %1083 = vmatprep.subr.bf16.mxu0 0
    %1084 = vmatpush1.bf16.xpose.msra.mxu0 0
    %1085 = vmatprep.subr.bf16.mxu0 0
    %1086 = vmatpush1.bf16.xpose.msra.mxu0 0
    %1087 = vmatprep.subr.bf16.mxu0 0
    %1088 = vmatpush1.bf16.xpose.msra.mxu0 0
    %1089 = vmatprep.subr.bf16.mxu0 0
    %1090 = vmatpush1.bf16.xpose.msra.mxu0 0
    %1091 = vmatprep.subr.bf16.mxu0 0
    %1092 = vmatpush1.bf16.xpose.msra.mxu0 0
    %1093 = vmatprep.subr.bf16.mxu0 0
    %1094 = vmatpush1.bf16.xpose.msra.mxu0 0
    %1095 = vmatprep.subr.bf16.mxu0 0
    %1096 = vmatpush1.bf16.xpose.msra.mxu0 0
    %1097 = vmatprep.subr.bf16.mxu0 0
    %1098 = vmatpush1.bf16.xpose.msra.mxu0 %v1081
    %1099 = vmatprep.subr.bf16.mxu0 0
    %1100 = vmatpush2.bf16.xpose.msra.mxu0 0
    %1101 = vmatprep.subr.bf16.mxu0 0
    %1102 = vmatpush2.bf16.xpose.msra.mxu0 0
    %1103 = vmatprep.subr.bf16.mxu0 0
    %1104 = vmatpush2.bf16.xpose.msra.mxu0 0
    %1105 = vmatprep.subr.bf16.mxu0 0
    %1106 = vmatpush2.bf16.xpose.msra.mxu0 0
    %1107 = vmatprep.subr.bf16.mxu0 0
    %1108 = vmatpush2.bf16.xpose.msra.mxu0 0
    %1109 = vmatprep.subr.bf16.mxu0 0
    %1110 = vmatpush2.bf16.xpose.msra.mxu0 0
    %1111 = vmatprep.subr.bf16.mxu0 0
    %1112 = vmatpush2.bf16.xpose.msra.mxu0 0
    %1113 = vmatprep.subr.bf16.mxu0 0
    %1114 = vmatpush2.bf16.xpose.msra.mxu0 0
    %1115 = vmatprep.mubr.bf16.mxu0 0
    %1116 = vmatmul.mubr.bf16.gmra.mxu0 %v1078
    %v1117 = vpop.f32.mrf.mxu0
    %v1118 = vadd.f32 %v792, %v1117
    %v1119 = vpop.f32.mrf.mxu0
    %v1120 = vpop.f32.mrf.mxu0
    %v1121 = vadd.f32 %v792, %v1120
    %v1122 = vpop.f32.mrf.mxu0
    %1123 = vdwg.mxu0
    %v1124 = vsel %vm851, %v1118, -inf
    %1125 = vmax.xlane.f32.xlu0 %v1124
    %v1126 = vpop.xlane.xlu0 %1125
    %v1127 = vsel %vm851, %v1121, -inf
    %1128 = vmax.xlane.f32.xlu0 %v1127
    %v1129 = vpop.xlane.xlu0 %1128
    %v1130 = vsub.f32 %v1118, %v1126
    %v1131 = vsub.f32 %v1121, %v1129
    %v1132 = vmul.f32 %v1130, 1.442695
    %v1133 = vpow.pop %v1132
    %v1134 = vmul.f32 %v1131, 1.442695
    %v1135 = vpow.pop %v1134
    %v1136 = vsel %vm851, %v1133, 0.0
    %1137 = vadd.xlane.f32.xlu0 %v1136
    %v1138 = vpop.xlane.xlu0 %1137
    %v1139 = vsel %vm851, %v1135, 0.0
    %1140 = vadd.xlane.f32.xlu0 %v1139
    %v1141 = vpop.xlane.xlu0 %1140
    %v1142 = vrcp.pop %v1138
    %v1143 = vrcp.pop %v1141
    %v1144 = vmul.f32 %v1133, %v1142
    %v1145 = vmul.f32 %v1135, %v1143
    %v1146 = vpack.c.bf16 %v1145, %v1144
    %1147 = vrot.lane.b32.xlu0 %v879, 64
    %v1148 = vpop.permute.xlu0 %1147
    %v1151 = vsel %vm851, %v1146, 0
    %1153 = vmatprep.subr.bf16.mxu0 0
    %1154 = vmatpush1.bf16.msra.mxu0 0
    %1155 = vmatprep.subr.bf16.mxu0 0
    %1156 = vmatpush1.bf16.msra.mxu0 0
    %1157 = vmatprep.subr.bf16.mxu0 0
    %1158 = vmatpush1.bf16.msra.mxu0 0
    %1159 = vmatprep.subr.bf16.mxu0 0
    %1160 = vmatpush1.bf16.msra.mxu0 0
    %1161 = vmatprep.subr.bf16.mxu0 0
    %1162 = vmatpush1.bf16.msra.mxu0 0
    %1163 = vmatprep.subr.bf16.mxu0 0
    %1164 = vmatpush1.bf16.msra.mxu0 0
    %1165 = vmatprep.subr.bf16.mxu0 0
    %1166 = vmatpush1.bf16.msra.mxu0 0
    %1167 = vmatprep.subr.bf16.mxu0 0
    %1168 = vmatpush1.bf16.msra.mxu0 %v1148
    %1169 = vmatprep.subr.bf16.mxu0 0
    %1170 = vmatpush2.bf16.msra.mxu0 0
    %1171 = vmatprep.subr.bf16.mxu0 0
    %1172 = vmatpush2.bf16.msra.mxu0 0
    %1173 = vmatprep.subr.bf16.mxu0 0
    %1174 = vmatpush2.bf16.msra.mxu0 0
    %1175 = vmatprep.subr.bf16.mxu0 0
    %1176 = vmatpush2.bf16.msra.mxu0 0
    %1177 = vmatprep.subr.bf16.mxu0 0
    %1178 = vmatpush2.bf16.msra.mxu0 0
    %1179 = vmatprep.subr.bf16.mxu0 0
    %1180 = vmatpush2.bf16.msra.mxu0 0
    %1181 = vmatprep.subr.bf16.mxu0 0
    %1182 = vmatpush2.bf16.msra.mxu0 0
    %1183 = vmatprep.subr.bf16.mxu0 0
    %1184 = vmatpush2.bf16.msra.mxu0 0
    %1185 = vmatprep.mubr.bf16.mxu0 0
    %1186 = vmatmul.mubr.bf16.gmra.mxu0 %v1151
    %v1187 = vpop.f32.mrf.mxu0
    %v1188 = vadd.f32 0.0, %v1187
    %v1189 = vpop.f32.mrf.mxu0
    %v1190 = vpop.f32.mrf.mxu0
    %v1191 = vadd.f32 0.0, %v1190
    %v1192 = vpop.f32.mrf.mxu0
    %1193 = vdwg.mxu0
    %v1194 = vpack.c.bf16 %v1191, %v1188
    %v1196 = vunpack.c.l.b16 %v1194
    %v1197 = vunpack.c.h.b16 %v1194
    %v1198 = vpack.c.b16 %v1196, %v1196
    %v1199 = vpack.c.b16 %v1197, %v1197
    %1200 = vrot.lane.b32.xlu0 %v1198, 64
    %v1201 = vpop.permute.xlu0 %1200
    %1202 = vrot.lane.b32.xlu0 %v1199, 64
    %v1203 = vpop.permute.xlu0 %1202
    %vm1206 = vcmask 781824
    %1207 = vst.msk [vmem:[#allocation4] sm:$0xf] %vm1206, %v1201
    %1208 = vst.msk [vmem:[#allocation4 + $0x4] sm:$0xf] %vm1206, %v1203
    %1209 = vrot.lane.b32.xlu0 %v783, 32
    %v1210 = vpop.permute.xlu0 %1209
    %1211 = vrot.lane.b32.xlu0 %v802, 32
    %v1212 = vpop.permute.xlu0 %1211
    %v1214 = vsel %vm803, %v1210, 0
    %v1217 = vsel %vm803, %v1212, 0
    %1219 = vmatprep.subr.bf16.mxu0 0
    %1220 = vmatpush1.bf16.xpose.msra.mxu0 0
    %1221 = vmatprep.subr.bf16.mxu0 0
    %1222 = vmatpush1.bf16.xpose.msra.mxu0 0
    %1223 = vmatprep.subr.bf16.mxu0 0
    %1224 = vmatpush1.bf16.xpose.msra.mxu0 0
    %1225 = vmatprep.subr.bf16.mxu0 0
    %1226 = vmatpush1.bf16.xpose.msra.mxu0 0
    %1227 = vmatprep.subr.bf16.mxu0 0
    %1228 = vmatpush1.bf16.xpose.msra.mxu0 0
    %1229 = vmatprep.subr.bf16.mxu0 0
    %1230 = vmatpush1.bf16.xpose.msra.mxu0 0
    %1231 = vmatprep.subr.bf16.mxu0 0
    %1232 = vmatpush1.bf16.xpose.msra.mxu0 0
    %1233 = vmatprep.subr.bf16.mxu0 0
    %1234 = vmatpush1.bf16.xpose.msra.mxu0 %v1217
    %1235 = vmatprep.subr.bf16.mxu0 0
    %1236 = vmatpush2.bf16.xpose.msra.mxu0 0
    %1237 = vmatprep.subr.bf16.mxu0 0
    %1238 = vmatpush2.bf16.xpose.msra.mxu0 0
    %1239 = vmatprep.subr.bf16.mxu0 0
    %1240 = vmatpush2.bf16.xpose.msra.mxu0 0
    %1241 = vmatprep.subr.bf16.mxu0 0
    %1242 = vmatpush2.bf16.xpose.msra.mxu0 0
    %1243 = vmatprep.subr.bf16.mxu0 0
    %1244 = vmatpush2.bf16.xpose.msra.mxu0 0
    %1245 = vmatprep.subr.bf16.mxu0 0
    %1246 = vmatpush2.bf16.xpose.msra.mxu0 0
    %1247 = vmatprep.subr.bf16.mxu0 0
    %1248 = vmatpush2.bf16.xpose.msra.mxu0 0
    %1249 = vmatprep.subr.bf16.mxu0 0
    %1250 = vmatpush2.bf16.xpose.msra.mxu0 0
    %1251 = vmatprep.mubr.bf16.mxu0 0
    %1252 = vmatmul.mubr.bf16.gmra.mxu0 %v1214
    %v1253 = vpop.f32.mrf.mxu0
    %v1254 = vadd.f32 %v792, %v1253
    %v1255 = vpop.f32.mrf.mxu0
    %v1256 = vpop.f32.mrf.mxu0
    %v1257 = vadd.f32 %v792, %v1256
    %v1258 = vpop.f32.mrf.mxu0
    %1259 = vdwg.mxu0
    %v1260 = vsel %vm851, %v1254, -inf
    %1261 = vmax.xlane.f32.xlu0 %v1260
    %v1262 = vpop.xlane.xlu0 %1261
    %v1263 = vsel %vm851, %v1257, -inf
    %1264 = vmax.xlane.f32.xlu0 %v1263
    %v1265 = vpop.xlane.xlu0 %1264
    %v1266 = vsub.f32 %v1254, %v1262
    %v1267 = vsub.f32 %v1257, %v1265
    %v1268 = vmul.f32 %v1266, 1.442695
    %v1269 = vpow.pop %v1268
    %v1270 = vmul.f32 %v1267, 1.442695
    %v1271 = vpow.pop %v1270
    %v1272 = vsel %vm851, %v1269, 0.0
    %1273 = vadd.xlane.f32.xlu0 %v1272
    %v1274 = vpop.xlane.xlu0 %1273
    %v1275 = vsel %vm851, %v1271, 0.0
    %1276 = vadd.xlane.f32.xlu0 %v1275
    %v1277 = vpop.xlane.xlu0 %1276
    %v1278 = vrcp.pop %v1274
    %v1279 = vrcp.pop %v1277
    %v1280 = vmul.f32 %v1269, %v1278
    %v1281 = vmul.f32 %v1271, %v1279
    %v1282 = vpack.c.bf16 %v1281, %v1280
    %1283 = vrot.lane.b32.xlu0 %v879, 32
    %v1284 = vpop.permute.xlu0 %1283
    %v1287 = vsel %vm851, %v1282, 0
    %1289 = vmatprep.subr.bf16.mxu0 0
    %1290 = vmatpush1.bf16.msra.mxu0 0
    %1291 = vmatprep.subr.bf16.mxu0 0
    %1292 = vmatpush1.bf16.msra.mxu0 0
    %1293 = vmatprep.subr.bf16.mxu0 0
    %1294 = vmatpush1.bf16.msra.mxu0 0
    %1295 = vmatprep.subr.bf16.mxu0 0
    %1296 = vmatpush1.bf16.msra.mxu0 0
    %1297 = vmatprep.subr.bf16.mxu0 0
    %1298 = vmatpush1.bf16.msra.mxu0 0
    %1299 = vmatprep.subr.bf16.mxu0 0
    %1300 = vmatpush1.bf16.msra.mxu0 0
    %1301 = vmatprep.subr.bf16.mxu0 0
    %1302 = vmatpush1.bf16.msra.mxu0 0
    %1303 = vmatprep.subr.bf16.mxu0 0
    %1304 = vmatpush1.bf16.msra.mxu0 %v1284
    %1305 = vmatprep.subr.bf16.mxu0 0
    %1306 = vmatpush2.bf16.msra.mxu0 0
    %1307 = vmatprep.subr.bf16.mxu0 0
    %1308 = vmatpush2.bf16.msra.mxu0 0
    %1309 = vmatprep.subr.bf16.mxu0 0
    %1310 = vmatpush2.bf16.msra.mxu0 0
    %1311 = vmatprep.subr.bf16.mxu0 0
    %1312 = vmatpush2.bf16.msra.mxu0 0
    %1313 = vmatprep.subr.bf16.mxu0 0
    %1314 = vmatpush2.bf16.msra.mxu0 0
    %1315 = vmatprep.subr.bf16.mxu0 0
    %1316 = vmatpush2.bf16.msra.mxu0 0
    %1317 = vmatprep.subr.bf16.mxu0 0
    %1318 = vmatpush2.bf16.msra.mxu0 0
    %1319 = vmatprep.subr.bf16.mxu0 0
    %1320 = vmatpush2.bf16.msra.mxu0 0
    %1321 = vmatprep.mubr.bf16.mxu0 0
    %1322 = vmatmul.mubr.bf16.gmra.mxu0 %v1287
    %v1323 = vpop.f32.mrf.mxu0
    %v1324 = vadd.f32 0.0, %v1323
    %v1325 = vpop.f32.mrf.mxu0
    %v1326 = vpop.f32.mrf.mxu0
    %v1327 = vadd.f32 0.0, %v1326
    %v1328 = vpop.f32.mrf.mxu0
    %1329 = vdwg.mxu0
    %v1330 = vpack.c.bf16 %v1327, %v1324
    %v1332 = vunpack.c.l.b16 %v1330
    %v1333 = vunpack.c.h.b16 %v1330
    %v1334 = vpack.c.b16 %v1332, %v1332
    %v1335 = vpack.c.b16 %v1333, %v1333
    %1336 = vrot.lane.b32.xlu0 %v1334, 96
    %v1337 = vpop.permute.xlu0 %1336
    %1338 = vrot.lane.b32.xlu0 %v1335, 96
    %v1339 = vpop.permute.xlu0 %1338
    %vm1342 = vcmask 1044224
    %1343 = vst.msk [vmem:[#allocation4] sm:$0xf] %vm1342, %v1337
    %1344 = vst.msk [vmem:[#allocation4 + $0x4] sm:$0xf] %vm1342, %v1339
    %s1345 = scalar_lea.vmem %s2, 1
    %v1346 = vld [vmem:[%s1345] sm:$0x1]
    %vm1347 = vcmp.gt.f32.partialorder %v1346, 0.0
    %v1348 = vsel %vm1347, 0.0, -1e+09
    %v1350 = vlaneseq
    %v1351 = vshrl.u32 %v1350, 7
    %v1352 = vsub.s32 0, %v1351
    %v1353 = vrot.slane %v1348, %v1352
    %s1355 = scalar_lea.vmem [#allocation2], 8
    %v1356 = vld [vmem:[%s1355] sm:$0xf]
    %v1357 = vld [vmem:[%s1355 + $0x4] sm:$0xf]
    %s1358 = scalar_lea.vmem [#allocation3], 8
    %v1359 = vld [vmem:[%s1358] sm:$0xf]
    %v1360 = vld [vmem:[%s1358 + $0x4] sm:$0xf]
    %v1363 = vunpack.c.l.b16 %v1356
    %v1364 = vunpack.c.l.b16 %v1357
    %v1365 = vpack.c.b16 %v1364, %v1363
    %v1367 = vsel %vm803, %v784, 0
    %v1370 = vsel %vm803, %v1365, 0
    %1372 = vmatprep.subr.bf16.mxu0 0
    %1373 = vmatpush1.bf16.xpose.msra.mxu0 0
    %1374 = vmatprep.subr.bf16.mxu0 0
    %1375 = vmatpush1.bf16.xpose.msra.mxu0 0
    %1376 = vmatprep.subr.bf16.mxu0 0
    %1377 = vmatpush1.bf16.xpose.msra.mxu0 0
    %1378 = vmatprep.subr.bf16.mxu0 0
    %1379 = vmatpush1.bf16.xpose.msra.mxu0 0
    %1380 = vmatprep.subr.bf16.mxu0 0
    %1381 = vmatpush1.bf16.xpose.msra.mxu0 0
    %1382 = vmatprep.subr.bf16.mxu0 0
    %1383 = vmatpush1.bf16.xpose.msra.mxu0 0
    %1384 = vmatprep.subr.bf16.mxu0 0
    %1385 = vmatpush1.bf16.xpose.msra.mxu0 0
    %1386 = vmatprep.subr.bf16.mxu0 0
    %1387 = vmatpush1.bf16.xpose.msra.mxu0 %v1370
    %1388 = vmatprep.subr.bf16.mxu0 0
    %1389 = vmatpush2.bf16.xpose.msra.mxu0 0
    %1390 = vmatprep.subr.bf16.mxu0 0
    %1391 = vmatpush2.bf16.xpose.msra.mxu0 0
    %1392 = vmatprep.subr.bf16.mxu0 0
    %1393 = vmatpush2.bf16.xpose.msra.mxu0 0
    %1394 = vmatprep.subr.bf16.mxu0 0
    %1395 = vmatpush2.bf16.xpose.msra.mxu0 0
    %1396 = vmatprep.subr.bf16.mxu0 0
    %1397 = vmatpush2.bf16.xpose.msra.mxu0 0
    %1398 = vmatprep.subr.bf16.mxu0 0
    %1399 = vmatpush2.bf16.xpose.msra.mxu0 0
    %1400 = vmatprep.subr.bf16.mxu0 0
    %1401 = vmatpush2.bf16.xpose.msra.mxu0 0
    %1402 = vmatprep.subr.bf16.mxu0 0
    %1403 = vmatpush2.bf16.xpose.msra.mxu0 0
    %1404 = vmatprep.mubr.bf16.mxu0 0
    %1405 = vmatmul.mubr.bf16.gmra.mxu0 %v1367
    %v1406 = vpop.f32.mrf.mxu0
    %v1407 = vadd.f32 %v1353, %v1406
    %v1408 = vpop.f32.mrf.mxu0
    %v1409 = vpop.f32.mrf.mxu0
    %v1410 = vadd.f32 %v1353, %v1409
    %v1411 = vpop.f32.mrf.mxu0
    %1412 = vdwg.mxu0
    %v1413 = vsel %vm851, %v1407, -inf
    %1414 = vmax.xlane.f32.xlu0 %v1413
    %v1415 = vpop.xlane.xlu0 %1414
    %v1416 = vsel %vm851, %v1410, -inf
    %1417 = vmax.xlane.f32.xlu0 %v1416
    %v1418 = vpop.xlane.xlu0 %1417
    %v1419 = vsub.f32 %v1407, %v1415
    %v1420 = vsub.f32 %v1410, %v1418
    %v1421 = vmul.f32 %v1419, 1.442695
    %v1422 = vpow.pop %v1421
    %v1423 = vmul.f32 %v1420, 1.442695
    %v1424 = vpow.pop %v1423
    %v1425 = vsel %vm851, %v1422, 0.0
    %1426 = vadd.xlane.f32.xlu0 %v1425
    %v1427 = vpop.xlane.xlu0 %1426
    %v1428 = vsel %vm851, %v1424, 0.0
    %1429 = vadd.xlane.f32.xlu0 %v1428
    %v1430 = vpop.xlane.xlu0 %1429
    %v1431 = vrcp.pop %v1427
    %v1432 = vrcp.pop %v1430
    %v1433 = vmul.f32 %v1422, %v1431
    %v1434 = vmul.f32 %v1424, %v1432
    %v1435 = vpack.c.bf16 %v1434, %v1433
    %v1438 = vunpack.c.l.b16 %v1359
    %v1439 = vunpack.c.l.b16 %v1360
    %v1440 = vpack.c.b16 %v1439, %v1438
    %v1443 = vsel %vm851, %v1435, 0
    %1445 = vmatprep.subr.bf16.mxu0 0
    %1446 = vmatpush1.bf16.msra.mxu0 0
    %1447 = vmatprep.subr.bf16.mxu0 0
    %1448 = vmatpush1.bf16.msra.mxu0 0
    %1449 = vmatprep.subr.bf16.mxu0 0
    %1450 = vmatpush1.bf16.msra.mxu0 0
    %1451 = vmatprep.subr.bf16.mxu0 0
    %1452 = vmatpush1.bf16.msra.mxu0 0
    %1453 = vmatprep.subr.bf16.mxu0 0
    %1454 = vmatpush1.bf16.msra.mxu0 0
    %1455 = vmatprep.subr.bf16.mxu0 0
    %1456 = vmatpush1.bf16.msra.mxu0 0
    %1457 = vmatprep.subr.bf16.mxu0 0
    %1458 = vmatpush1.bf16.msra.mxu0 0
    %1459 = vmatprep.subr.bf16.mxu0 0
    %1460 = vmatpush1.bf16.msra.mxu0 %v1440
    %1461 = vmatprep.subr.bf16.mxu0 0
    %1462 = vmatpush2.bf16.msra.mxu0 0
    %1463 = vmatprep.subr.bf16.mxu0 0
    %1464 = vmatpush2.bf16.msra.mxu0 0
    %1465 = vmatprep.subr.bf16.mxu0 0
    %1466 = vmatpush2.bf16.msra.mxu0 0
    %1467 = vmatprep.subr.bf16.mxu0 0
    %1468 = vmatpush2.bf16.msra.mxu0 0
    %1469 = vmatprep.subr.bf16.mxu0 0
    %1470 = vmatpush2.bf16.msra.mxu0 0
    %1471 = vmatprep.subr.bf16.mxu0 0
    %1472 = vmatpush2.bf16.msra.mxu0 0
    %1473 = vmatprep.subr.bf16.mxu0 0
    %1474 = vmatpush2.bf16.msra.mxu0 0
    %1475 = vmatprep.subr.bf16.mxu0 0
    %1476 = vmatpush2.bf16.msra.mxu0 0
    %1477 = vmatprep.mubr.bf16.mxu0 0
    %1478 = vmatmul.mubr.bf16.gmra.mxu0 %v1443
    %v1479 = vpop.f32.mrf.mxu0
    %v1480 = vadd.f32 0.0, %v1479
    %v1481 = vpop.f32.mrf.mxu0
    %v1482 = vpop.f32.mrf.mxu0
    %v1483 = vadd.f32 0.0, %v1482
    %v1484 = vpop.f32.mrf.mxu0
    %1485 = vdwg.mxu0
    %v1486 = vpack.c.bf16 %v1483, %v1480
    %v1488 = vunpack.c.l.b16 %v1486
    %v1489 = vunpack.c.h.b16 %v1486
    %v1490 = vpack.c.b16 %v1488, %v1488
    %v1491 = vpack.c.b16 %v1489, %v1489
    %s1494 = scalar_lea.vmem [#allocation4], 8
    %1495 = vst.msk [vmem:[%s1494] sm:$0xf] %vm933, %v1490
    %1496 = vst.msk [vmem:[%s1494 + $0x4] sm:$0xf] %vm933, %v1491
    %1498 = vrot.lane.b32.xlu0 %v784, 96
    %v1499 = vpop.permute.xlu0 %1498
    %1500 = vrot.lane.b32.xlu0 %v1365, 96
    %v1501 = vpop.permute.xlu0 %1500
    %v1503 = vsel %vm803, %v1499, 0
    %v1506 = vsel %vm803, %v1501, 0
    %1508 = vmatprep.subr.bf16.mxu0 0
    %1509 = vmatpush1.bf16.xpose.msra.mxu0 0
    %1510 = vmatprep.subr.bf16.mxu0 0
    %1511 = vmatpush1.bf16.xpose.msra.mxu0 0
    %1512 = vmatprep.subr.bf16.mxu0 0
    %1513 = vmatpush1.bf16.xpose.msra.mxu0 0
    %1514 = vmatprep.subr.bf16.mxu0 0
    %1515 = vmatpush1.bf16.xpose.msra.mxu0 0
    %1516 = vmatprep.subr.bf16.mxu0 0
    %1517 = vmatpush1.bf16.xpose.msra.mxu0 0
    %1518 = vmatprep.subr.bf16.mxu0 0
    %1519 = vmatpush1.bf16.xpose.msra.mxu0 0
    %1520 = vmatprep.subr.bf16.mxu0 0
    %1521 = vmatpush1.bf16.xpose.msra.mxu0 0
    %1522 = vmatprep.subr.bf16.mxu0 0
    %1523 = vmatpush1.bf16.xpose.msra.mxu0 %v1506
    %1524 = vmatprep.subr.bf16.mxu0 0
    %1525 = vmatpush2.bf16.xpose.msra.mxu0 0
    %1526 = vmatprep.subr.bf16.mxu0 0
    %1527 = vmatpush2.bf16.xpose.msra.mxu0 0
    %1528 = vmatprep.subr.bf16.mxu0 0
    %1529 = vmatpush2.bf16.xpose.msra.mxu0 0
    %1530 = vmatprep.subr.bf16.mxu0 0
    %1531 = vmatpush2.bf16.xpose.msra.mxu0 0
    %1532 = vmatprep.subr.bf16.mxu0 0
    %1533 = vmatpush2.bf16.xpose.msra.mxu0 0
    %1534 = vmatprep.subr.bf16.mxu0 0
    %1535 = vmatpush2.bf16.xpose.msra.mxu0 0
    %1536 = vmatprep.subr.bf16.mxu0 0
    %1537 = vmatpush2.bf16.xpose.msra.mxu0 0
    %1538 = vmatprep.subr.bf16.mxu0 0
    %1539 = vmatpush2.bf16.xpose.msra.mxu0 0
    %1540 = vmatprep.mubr.bf16.mxu0 0
    %1541 = vmatmul.mubr.bf16.gmra.mxu0 %v1503
    %v1542 = vpop.f32.mrf.mxu0
    %v1543 = vadd.f32 %v1353, %v1542
    %v1544 = vpop.f32.mrf.mxu0
    %v1545 = vpop.f32.mrf.mxu0
    %v1546 = vadd.f32 %v1353, %v1545
    %v1547 = vpop.f32.mrf.mxu0
    %1548 = vdwg.mxu0
    %v1549 = vsel %vm851, %v1543, -inf
    %1550 = vmax.xlane.f32.xlu0 %v1549
    %v1551 = vpop.xlane.xlu0 %1550
    %v1552 = vsel %vm851, %v1546, -inf
    %1553 = vmax.xlane.f32.xlu0 %v1552
    %v1554 = vpop.xlane.xlu0 %1553
    %v1555 = vsub.f32 %v1543, %v1551
    %v1556 = vsub.f32 %v1546, %v1554
    %v1557 = vmul.f32 %v1555, 1.442695
    %v1558 = vpow.pop %v1557
    %v1559 = vmul.f32 %v1556, 1.442695
    %v1560 = vpow.pop %v1559
    %v1561 = vsel %vm851, %v1558, 0.0
    %1562 = vadd.xlane.f32.xlu0 %v1561
    %v1563 = vpop.xlane.xlu0 %1562
    %v1564 = vsel %vm851, %v1560, 0.0
    %1565 = vadd.xlane.f32.xlu0 %v1564
    %v1566 = vpop.xlane.xlu0 %1565
    %v1567 = vrcp.pop %v1563
    %v1568 = vrcp.pop %v1566
    %v1569 = vmul.f32 %v1558, %v1567
    %v1570 = vmul.f32 %v1560, %v1568
    %v1571 = vpack.c.bf16 %v1570, %v1569
    %1572 = vrot.lane.b32.xlu0 %v1440, 96
    %v1573 = vpop.permute.xlu0 %1572
    %v1576 = vsel %vm851, %v1571, 0
    %1578 = vmatprep.subr.bf16.mxu0 0
    %1579 = vmatpush1.bf16.msra.mxu0 0
    %1580 = vmatprep.subr.bf16.mxu0 0
    %1581 = vmatpush1.bf16.msra.mxu0 0
    %1582 = vmatprep.subr.bf16.mxu0 0
    %1583 = vmatpush1.bf16.msra.mxu0 0
    %1584 = vmatprep.subr.bf16.mxu0 0
    %1585 = vmatpush1.bf16.msra.mxu0 0
    %1586 = vmatprep.subr.bf16.mxu0 0
    %1587 = vmatpush1.bf16.msra.mxu0 0
    %1588 = vmatprep.subr.bf16.mxu0 0
    %1589 = vmatpush1.bf16.msra.mxu0 0
    %1590 = vmatprep.subr.bf16.mxu0 0
    %1591 = vmatpush1.bf16.msra.mxu0 0
    %1592 = vmatprep.subr.bf16.mxu0 0
    %1593 = vmatpush1.bf16.msra.mxu0 %v1573
    %1594 = vmatprep.subr.bf16.mxu0 0
    %1595 = vmatpush2.bf16.msra.mxu0 0
    %1596 = vmatprep.subr.bf16.mxu0 0
    %1597 = vmatpush2.bf16.msra.mxu0 0
    %1598 = vmatprep.subr.bf16.mxu0 0
    %1599 = vmatpush2.bf16.msra.mxu0 0
    %1600 = vmatprep.subr.bf16.mxu0 0
    %1601 = vmatpush2.bf16.msra.mxu0 0
    %1602 = vmatprep.subr.bf16.mxu0 0
    %1603 = vmatpush2.bf16.msra.mxu0 0
    %1604 = vmatprep.subr.bf16.mxu0 0
    %1605 = vmatpush2.bf16.msra.mxu0 0
    %1606 = vmatprep.subr.bf16.mxu0 0
    %1607 = vmatpush2.bf16.msra.mxu0 0
    %1608 = vmatprep.subr.bf16.mxu0 0
    %1609 = vmatpush2.bf16.msra.mxu0 0
    %1610 = vmatprep.mubr.bf16.mxu0 0
    %1611 = vmatmul.mubr.bf16.gmra.mxu0 %v1576
    %v1612 = vpop.f32.mrf.mxu0
    %v1613 = vadd.f32 0.0, %v1612
    %v1614 = vpop.f32.mrf.mxu0
    %v1615 = vpop.f32.mrf.mxu0
    %v1616 = vadd.f32 0.0, %v1615
    %v1617 = vpop.f32.mrf.mxu0
    %1618 = vdwg.mxu0
    %v1619 = vpack.c.bf16 %v1616, %v1613
    %v1621 = vunpack.c.l.b16 %v1619
    %v1622 = vunpack.c.h.b16 %v1619
    %v1623 = vpack.c.b16 %v1621, %v1621
    %v1624 = vpack.c.b16 %v1622, %v1622
    %1625 = vrot.lane.b32.xlu0 %v1623, 32
    %v1626 = vpop.permute.xlu0 %1625
    %1627 = vrot.lane.b32.xlu0 %v1624, 32
    %v1628 = vpop.permute.xlu0 %1627
    %1631 = vst.msk [vmem:[%s1494] sm:$0xf] %vm1070, %v1626
    %1632 = vst.msk [vmem:[%s1494 + $0x4] sm:$0xf] %vm1070, %v1628
    %1633 = vrot.lane.b32.xlu0 %v784, 64
    %v1634 = vpop.permute.xlu0 %1633
    %1635 = vrot.lane.b32.xlu0 %v1365, 64
    %v1636 = vpop.permute.xlu0 %1635
    %v1638 = vsel %vm803, %v1634, 0
    %v1641 = vsel %vm803, %v1636, 0
    %1643 = vmatprep.subr.bf16.mxu0 0
    %1644 = vmatpush1.bf16.xpose.msra.mxu0 0
    %1645 = vmatprep.subr.bf16.mxu0 0
    %1646 = vmatpush1.bf16.xpose.msra.mxu0 0
    %1647 = vmatprep.subr.bf16.mxu0 0
    %1648 = vmatpush1.bf16.xpose.msra.mxu0 0
    %1649 = vmatprep.subr.bf16.mxu0 0
    %1650 = vmatpush1.bf16.xpose.msra.mxu0 0
    %1651 = vmatprep.subr.bf16.mxu0 0
    %1652 = vmatpush1.bf16.xpose.msra.mxu0 0
    %1653 = vmatprep.subr.bf16.mxu0 0
    %1654 = vmatpush1.bf16.xpose.msra.mxu0 0
    %1655 = vmatprep.subr.bf16.mxu0 0
    %1656 = vmatpush1.bf16.xpose.msra.mxu0 0
    %1657 = vmatprep.subr.bf16.mxu0 0
    %1658 = vmatpush1.bf16.xpose.msra.mxu0 %v1641
    %1659 = vmatprep.subr.bf16.mxu0 0
    %1660 = vmatpush2.bf16.xpose.msra.mxu0 0
    %1661 = vmatprep.subr.bf16.mxu0 0
    %1662 = vmatpush2.bf16.xpose.msra.mxu0 0
    %1663 = vmatprep.subr.bf16.mxu0 0
    %1664 = vmatpush2.bf16.xpose.msra.mxu0 0
    %1665 = vmatprep.subr.bf16.mxu0 0
    %1666 = vmatpush2.bf16.xpose.msra.mxu0 0
    %1667 = vmatprep.subr.bf16.mxu0 0
    %1668 = vmatpush2.bf16.xpose.msra.mxu0 0
    %1669 = vmatprep.subr.bf16.mxu0 0
    %1670 = vmatpush2.bf16.xpose.msra.mxu0 0
    %1671 = vmatprep.subr.bf16.mxu0 0
    %1672 = vmatpush2.bf16.xpose.msra.mxu0 0
    %1673 = vmatprep.subr.bf16.mxu0 0
    %1674 = vmatpush2.bf16.xpose.msra.mxu0 0
    %1675 = vmatprep.mubr.bf16.mxu0 0
    %1676 = vmatmul.mubr.bf16.gmra.mxu0 %v1638
    %v1677 = vpop.f32.mrf.mxu0
    %v1678 = vadd.f32 %v1353, %v1677
    %v1679 = vpop.f32.mrf.mxu0
    %v1680 = vpop.f32.mrf.mxu0
    %v1681 = vadd.f32 %v1353, %v1680
    %v1682 = vpop.f32.mrf.mxu0
    %1683 = vdwg.mxu0
    %v1684 = vsel %vm851, %v1678, -inf
    %1685 = vmax.xlane.f32.xlu0 %v1684
    %v1686 = vpop.xlane.xlu0 %1685
    %v1687 = vsel %vm851, %v1681, -inf
    %1688 = vmax.xlane.f32.xlu0 %v1687
    %v1689 = vpop.xlane.xlu0 %1688
    %v1690 = vsub.f32 %v1678, %v1686
    %v1691 = vsub.f32 %v1681, %v1689
    %v1692 = vmul.f32 %v1690, 1.442695
    %v1693 = vpow.pop %v1692
    %v1694 = vmul.f32 %v1691, 1.442695
    %v1695 = vpow.pop %v1694
    %v1696 = vsel %vm851, %v1693, 0.0
    %1697 = vadd.xlane.f32.xlu0 %v1696
    %v1698 = vpop.xlane.xlu0 %1697
    %v1699 = vsel %vm851, %v1695, 0.0
    %1700 = vadd.xlane.f32.xlu0 %v1699
    %v1701 = vpop.xlane.xlu0 %1700
    %v1702 = vrcp.pop %v1698
    %v1703 = vrcp.pop %v1701
    %v1704 = vmul.f32 %v1693, %v1702
    %v1705 = vmul.f32 %v1695, %v1703
    %v1706 = vpack.c.bf16 %v1705, %v1704
    %1707 = vrot.lane.b32.xlu0 %v1440, 64
    %v1708 = vpop.permute.xlu0 %1707
    %v1711 = vsel %vm851, %v1706, 0
    %1713 = vmatprep.subr.bf16.mxu0 0
    %1714 = vmatpush1.bf16.msra.mxu0 0
    %1715 = vmatprep.subr.bf16.mxu0 0
    %1716 = vmatpush1.bf16.msra.mxu0 0
    %1717 = vmatprep.subr.bf16.mxu0 0
    %1718 = vmatpush1.bf16.msra.mxu0 0
    %1719 = vmatprep.subr.bf16.mxu0 0
    %1720 = vmatpush1.bf16.msra.mxu0 0
    %1721 = vmatprep.subr.bf16.mxu0 0
    %1722 = vmatpush1.bf16.msra.mxu0 0
    %1723 = vmatprep.subr.bf16.mxu0 0
    %1724 = vmatpush1.bf16.msra.mxu0 0
    %1725 = vmatprep.subr.bf16.mxu0 0
    %1726 = vmatpush1.bf16.msra.mxu0 0
    %1727 = vmatprep.subr.bf16.mxu0 0
    %1728 = vmatpush1.bf16.msra.mxu0 %v1708
    %1729 = vmatprep.subr.bf16.mxu0 0
    %1730 = vmatpush2.bf16.msra.mxu0 0
    %1731 = vmatprep.subr.bf16.mxu0 0
    %1732 = vmatpush2.bf16.msra.mxu0 0
    %1733 = vmatprep.subr.bf16.mxu0 0
    %1734 = vmatpush2.bf16.msra.mxu0 0
    %1735 = vmatprep.subr.bf16.mxu0 0
    %1736 = vmatpush2.bf16.msra.mxu0 0
    %1737 = vmatprep.subr.bf16.mxu0 0
    %1738 = vmatpush2.bf16.msra.mxu0 0
    %1739 = vmatprep.subr.bf16.mxu0 0
    %1740 = vmatpush2.bf16.msra.mxu0 0
    %1741 = vmatprep.subr.bf16.mxu0 0
    %1742 = vmatpush2.bf16.msra.mxu0 0
    %1743 = vmatprep.subr.bf16.mxu0 0
    %1744 = vmatpush2.bf16.msra.mxu0 0
    %1745 = vmatprep.mubr.bf16.mxu0 0
    %1746 = vmatmul.mubr.bf16.gmra.mxu0 %v1711
    %v1747 = vpop.f32.mrf.mxu0
    %v1748 = vadd.f32 0.0, %v1747
    %v1749 = vpop.f32.mrf.mxu0
    %v1750 = vpop.f32.mrf.mxu0
    %v1751 = vadd.f32 0.0, %v1750
    %v1752 = vpop.f32.mrf.mxu0
    %1753 = vdwg.mxu0
    %v1754 = vpack.c.bf16 %v1751, %v1748
    %v1756 = vunpack.c.l.b16 %v1754
    %v1757 = vunpack.c.h.b16 %v1754
    %v1758 = vpack.c.b16 %v1756, %v1756
    %v1759 = vpack.c.b16 %v1757, %v1757
    %1760 = vrot.lane.b32.xlu0 %v1758, 64
    %v1761 = vpop.permute.xlu0 %1760
    %1762 = vrot.lane.b32.xlu0 %v1759, 64
    %v1763 = vpop.permute.xlu0 %1762
    %1766 = vst.msk [vmem:[%s1494] sm:$0xf] %vm1206, %v1761
    %1767 = vst.msk [vmem:[%s1494 + $0x4] sm:$0xf] %vm1206, %v1763
    %1768 = vrot.lane.b32.xlu0 %v784, 32
    %v1769 = vpop.permute.xlu0 %1768
    %1770 = vrot.lane.b32.xlu0 %v1365, 32
    %v1771 = vpop.permute.xlu0 %1770
    %v1773 = vsel %vm803, %v1769, 0
    %v1776 = vsel %vm803, %v1771, 0
    %1778 = vmatprep.subr.bf16.mxu0 0
    %1779 = vmatpush1.bf16.xpose.msra.mxu0 0
    %1780 = vmatprep.subr.bf16.mxu0 0
    %1781 = vmatpush1.bf16.xpose.msra.mxu0 0
    %1782 = vmatprep.subr.bf16.mxu0 0
    %1783 = vmatpush1.bf16.xpose.msra.mxu0 0
    %1784 = vmatprep.subr.bf16.mxu0 0
    %1785 = vmatpush1.bf16.xpose.msra.mxu0 0
    %1786 = vmatprep.subr.bf16.mxu0 0
    %1787 = vmatpush1.bf16.xpose.msra.mxu0 0
    %1788 = vmatprep.subr.bf16.mxu0 0
    %1789 = vmatpush1.bf16.xpose.msra.mxu0 0
    %1790 = vmatprep.subr.bf16.mxu0 0
    %1791 = vmatpush1.bf16.xpose.msra.mxu0 0
    %1792 = vmatprep.subr.bf16.mxu0 0
    %1793 = vmatpush1.bf16.xpose.msra.mxu0 %v1776
    %1794 = vmatprep.subr.bf16.mxu0 0
    %1795 = vmatpush2.bf16.xpose.msra.mxu0 0
    %1796 = vmatprep.subr.bf16.mxu0 0
    %1797 = vmatpush2.bf16.xpose.msra.mxu0 0
    %1798 = vmatprep.subr.bf16.mxu0 0
    %1799 = vmatpush2.bf16.xpose.msra.mxu0 0
    %1800 = vmatprep.subr.bf16.mxu0 0
    %1801 = vmatpush2.bf16.xpose.msra.mxu0 0
    %1802 = vmatprep.subr.bf16.mxu0 0
    %1803 = vmatpush2.bf16.xpose.msra.mxu0 0
    %1804 = vmatprep.subr.bf16.mxu0 0
    %1805 = vmatpush2.bf16.xpose.msra.mxu0 0
    %1806 = vmatprep.subr.bf16.mxu0 0
    %1807 = vmatpush2.bf16.xpose.msra.mxu0 0
    %1808 = vmatprep.subr.bf16.mxu0 0
    %1809 = vmatpush2.bf16.xpose.msra.mxu0 0
    %1810 = vmatprep.mubr.bf16.mxu0 0
    %1811 = vmatmul.mubr.bf16.gmra.mxu0 %v1773
    %v1812 = vpop.f32.mrf.mxu0
    %v1813 = vadd.f32 %v1353, %v1812
    %v1814 = vpop.f32.mrf.mxu0
    %v1815 = vpop.f32.mrf.mxu0
    %v1816 = vadd.f32 %v1353, %v1815
    %v1817 = vpop.f32.mrf.mxu0
    %1818 = vdwg.mxu0
    %v1819 = vsel %vm851, %v1813, -inf
    %1820 = vmax.xlane.f32.xlu0 %v1819
    %v1821 = vpop.xlane.xlu0 %1820
    %v1822 = vsel %vm851, %v1816, -inf
    %1823 = vmax.xlane.f32.xlu0 %v1822
    %v1824 = vpop.xlane.xlu0 %1823
    %v1825 = vsub.f32 %v1813, %v1821
    %v1826 = vsub.f32 %v1816, %v1824
    %v1827 = vmul.f32 %v1825, 1.442695
    %v1828 = vpow.pop %v1827
    %v1829 = vmul.f32 %v1826, 1.442695
    %v1830 = vpow.pop %v1829
    %v1831 = vsel %vm851, %v1828, 0.0
    %1832 = vadd.xlane.f32.xlu0 %v1831
    %v1833 = vpop.xlane.xlu0 %1832
    %v1834 = vsel %vm851, %v1830, 0.0
    %1835 = vadd.xlane.f32.xlu0 %v1834
    %v1836 = vpop.xlane.xlu0 %1835
    %v1837 = vrcp.pop %v1833
    %v1838 = vrcp.pop %v1836
    %v1839 = vmul.f32 %v1828, %v1837
    %v1840 = vmul.f32 %v1830, %v1838
    %v1841 = vpack.c.bf16 %v1840, %v1839
    %1842 = vrot.lane.b32.xlu0 %v1440, 32
    %v1843 = vpop.permute.xlu0 %1842
    %v1846 = vsel %vm851, %v1841, 0
    %1848 = vmatprep.subr.bf16.mxu0 0
    %1849 = vmatpush1.bf16.msra.mxu0 0
    %1850 = vmatprep.subr.bf16.mxu0 0
    %1851 = vmatpush1.bf16.msra.mxu0 0
    %1852 = vmatprep.subr.bf16.mxu0 0
    %1853 = vmatpush1.bf16.msra.mxu0 0
    %1854 = vmatprep.subr.bf16.mxu0 0
    %1855 = vmatpush1.bf16.msra.mxu0 0
    %1856 = vmatprep.subr.bf16.mxu0 0
    %1857 = vmatpush1.bf16.msra.mxu0 0
    %1858 = vmatprep.subr.bf16.mxu0 0
    %1859 = vmatpush1.bf16.msra.mxu0 0
    %1860 = vmatprep.subr.bf16.mxu0 0
    %1861 = vmatpush1.bf16.msra.mxu0 0
    %1862 = vmatprep.subr.bf16.mxu0 0
    %1863 = vmatpush1.bf16.msra.mxu0 %v1843
    %1864 = vmatprep.subr.bf16.mxu0 0
    %1865 = vmatpush2.bf16.msra.mxu0 0
    %1866 = vmatprep.subr.bf16.mxu0 0
    %1867 = vmatpush2.bf16.msra.mxu0 0
    %1868 = vmatprep.subr.bf16.mxu0 0
    %1869 = vmatpush2.bf16.msra.mxu0 0
    %1870 = vmatprep.subr.bf16.mxu0 0
    %1871 = vmatpush2.bf16.msra.mxu0 0
    %1872 = vmatprep.subr.bf16.mxu0 0
    %1873 = vmatpush2.bf16.msra.mxu0 0
    %1874 = vmatprep.subr.bf16.mxu0 0
    %1875 = vmatpush2.bf16.msra.mxu0 0
    %1876 = vmatprep.subr.bf16.mxu0 0
    %1877 = vmatpush2.bf16.msra.mxu0 0
    %1878 = vmatprep.subr.bf16.mxu0 0
    %1879 = vmatpush2.bf16.msra.mxu0 0
    %1880 = vmatprep.mubr.bf16.mxu0 0
    %1881 = vmatmul.mubr.bf16.gmra.mxu0 %v1846
    %v1882 = vpop.f32.mrf.mxu0
    %v1883 = vadd.f32 0.0, %v1882
    %v1884 = vpop.f32.mrf.mxu0
    %v1885 = vpop.f32.mrf.mxu0
    %v1886 = vadd.f32 0.0, %v1885
    %v1887 = vpop.f32.mrf.mxu0
    %1888 = vdwg.mxu0
    %v1889 = vpack.c.bf16 %v1886, %v1883
    %v1891 = vunpack.c.l.b16 %v1889
    %v1892 = vunpack.c.h.b16 %v1889
    %v1893 = vpack.c.b16 %v1891, %v1891
    %v1894 = vpack.c.b16 %v1892, %v1892
    %1895 = vrot.lane.b32.xlu0 %v1893, 96
    %v1896 = vpop.permute.xlu0 %1895
    %1897 = vrot.lane.b32.xlu0 %v1894, 96
    %v1898 = vpop.permute.xlu0 %1897
    %1901 = vst.msk [vmem:[%s1494] sm:$0xf] %vm1342, %v1896
    %1902 = vst.msk [vmem:[%s1494 + $0x4] sm:$0xf] %vm1342, %v1898
    %v1903 = vld [vmem:[#allocation4] sm:$0xf]
    %v1904 = vld [vmem:[#allocation4 + $0x4] sm:$0xf]
    %v1905 = vld [vmem:[#allocation4 + $0x8] sm:$0xf]
    %v1906 = vld [vmem:[#allocation4 + $0xc] sm:$0xf]
    %v1907 = vld [vmem:[#allocation15] sm:$0xf]
    %v1908 = vld [vmem:[#allocation15 + $0x4] sm:$0xf]
    %v1909 = vld [vmem:[#allocation15 + $0x8] sm:$0xf]
    %v1910 = vld [vmem:[#allocation15 + $0xc] sm:$0xf]
    %v1911 = vld [vmem:[#allocation15 + $0x10] sm:$0xf]
    %v1912 = vld [vmem:[#allocation15 + $0x14] sm:$0xf]
    %v1913 = vld [vmem:[#allocation15 + $0x18] sm:$0xf]
    %v1914 = vld [vmem:[#allocation15 + $0x1c] sm:$0xf]
    %v1915 = vld [vmem:[#allocation15 + $0x20] sm:$0xf]
    %v1916 = vld [vmem:[#allocation15 + $0x24] sm:$0xf]
    %v1917 = vld [vmem:[#allocation15 + $0x28] sm:$0xf]
    %v1918 = vld [vmem:[#allocation15 + $0x2c] sm:$0xf]
    %v1919 = vld [vmem:[#allocation15 + $0x30] sm:$0xf]
    %v1920 = vld [vmem:[#allocation15 + $0x34] sm:$0xf]
    %v1921 = vld [vmem:[#allocation15 + $0x38] sm:$0xf]
    %v1922 = vld [vmem:[#allocation15 + $0x3c] sm:$0xf]
    %v1923 = vld [vmem:[%s10] sm:$0x1]
    %v1925 = vlaneseq
    %v1926 = vshrl.u32 %v1925, 7
    %v1927 = vsub.s32 0, %v1926
    %v1928 = vrot.slane %v1923, %v1927
    %v1934 = vunpack.c.l.b16 %v1903
    %v1935 = vunpack.c.l.b16 %v1904
    %v1936 = vunpack.c.l.b16 %v1905
    %v1937 = vunpack.c.l.b16 %v1906
    %v1938 = vpack.c.b16 %v1935, %v1934
    %v1939 = vpack.c.b16 %v1937, %v1936
    %v1958 = vunpack.c.l.b16 %v1907
    %v1959 = vunpack.c.l.b16 %v1908
    %v1960 = vunpack.c.l.b16 %v1909
    %v1961 = vunpack.c.l.b16 %v1910
    %v1962 = vunpack.c.l.b16 %v1911
    %v1963 = vunpack.c.l.b16 %v1912
    %v1964 = vunpack.c.l.b16 %v1913
    %v1965 = vunpack.c.l.b16 %v1914
    %v1966 = vunpack.c.l.b16 %v1915
    %v1967 = vunpack.c.l.b16 %v1916
    %v1968 = vunpack.c.l.b16 %v1917
    %v1969 = vunpack.c.l.b16 %v1918
    %v1970 = vunpack.c.l.b16 %v1919
    %v1971 = vunpack.c.l.b16 %v1920
    %v1972 = vunpack.c.l.b16 %v1921
    %v1973 = vunpack.c.l.b16 %v1922
    %v1974 = vpack.c.b16 %v1959, %v1958
    %v1975 = vpack.c.b16 %v1961, %v1960
    %v1976 = vpack.c.b16 %v1963, %v1962
    %v1977 = vpack.c.b16 %v1965, %v1964
    %v1978 = vpack.c.b16 %v1967, %v1966
    %v1979 = vpack.c.b16 %v1969, %v1968
    %v1980 = vpack.c.b16 %v1971, %v1970
    %v1981 = vpack.c.b16 %v1973, %v1972
    %1990 = vmatprep.subr.bf16.mxu0 0
    %1991 = vmatpush1.bf16.msra.mxu0 %v1981
    %1992 = vmatprep.subr.bf16.mxu0 0
    %1993 = vmatpush1.bf16.msra.mxu0 %v1980
    %1994 = vmatprep.subr.bf16.mxu0 0
    %1995 = vmatpush1.bf16.msra.mxu0 %v1979
    %1996 = vmatprep.subr.bf16.mxu0 0
    %1997 = vmatpush1.bf16.msra.mxu0 %v1978
    %1998 = vmatprep.subr.bf16.mxu0 0
    %1999 = vmatpush1.bf16.msra.mxu0 %v1977
    %2000 = vmatprep.subr.bf16.mxu0 0
    %2001 = vmatpush1.bf16.msra.mxu0 %v1976
    %2002 = vmatprep.subr.bf16.mxu0 0
    %2003 = vmatpush1.bf16.msra.mxu0 %v1975
    %2004 = vmatprep.subr.bf16.mxu0 0
    %2005 = vmatpush1.bf16.msra.mxu0 %v1974
    %2006 = vmatprep.subr.bf16.mxu0 0
    %2007 = vmatpush2.bf16.msra.mxu0 0
    %2008 = vmatprep.subr.bf16.mxu0 0
    %2009 = vmatpush2.bf16.msra.mxu0 0
    %2010 = vmatprep.subr.bf16.mxu0 0
    %2011 = vmatpush2.bf16.msra.mxu0 0
    %2012 = vmatprep.subr.bf16.mxu0 0
    %2013 = vmatpush2.bf16.msra.mxu0 0
    %2014 = vmatprep.subr.bf16.mxu0 0
    %2015 = vmatpush2.bf16.msra.mxu0 0
    %2016 = vmatprep.subr.bf16.mxu0 0
    %2017 = vmatpush2.bf16.msra.mxu0 0
    %2018 = vmatprep.subr.bf16.mxu0 0
    %2019 = vmatpush2.bf16.msra.mxu0 0
    %2020 = vmatprep.subr.bf16.mxu0 0
    %2021 = vmatpush2.bf16.msra.mxu0 0
    %2022 = vmatprep.mubr.bf16.mxu0 0
    %2023 = vmatmul.mubr.bf16.gmra.mxu0 %v1938
    %v2024 = vpop.f32.mrf.mxu0
    %v2025 = vadd.f32 %v1928, %v2024
    %v2026 = vpop.f32.mrf.mxu0
    %v2027 = vpop.f32.mrf.mxu0
    %v2028 = vadd.f32 %v1928, %v2027
    %v2029 = vpop.f32.mrf.mxu0
    %2030 = vmatprep.mubr.bf16.mxu0 0
    %2031 = vmatmul.mubr.bf16.gmra.mxu0 %v1939
    %v2032 = vpop.f32.mrf.mxu0
    %v2033 = vadd.f32 %v1928, %v2032
    %v2034 = vpop.f32.mrf.mxu0
    %v2035 = vpop.f32.mrf.mxu0
    %v2036 = vadd.f32 %v1928, %v2035
    %v2037 = vpop.f32.mrf.mxu0
    %2038 = vdwg.mxu0
    %v2039 = vadd.f32 %v558, %v2025
    %v2040 = vadd.f32 %v559, %v2028
    %v2041 = vadd.f32 %v560, %v2033
    %v2042 = vadd.f32 %v561, %v2036
    %v2043 = vld [vmem:[%s17] sm:$0x1]
    %v2044 = vld [vmem:[%s18] sm:$0x1]
    %2045 = vadd.xlane.f32.xlu0 %v2039
    %v2046 = vpop.xlane.xlu0 %2045
    %2047 = vadd.xlane.f32.xlu0 %v2040
    %v2048 = vpop.xlane.xlu0 %2047
    %2049 = vadd.xlane.f32.xlu0 %v2041
    %v2050 = vpop.xlane.xlu0 %2049
    %2051 = vadd.xlane.f32.xlu0 %v2042
    %v2052 = vpop.xlane.xlu0 %2051
    %v2053 = vmul.f32 %v2046, %v572
    %v2054 = vmul.f32 %v2048, %v572
    %v2055 = vmul.f32 %v2050, %v572
    %v2056 = vmul.f32 %v2052, %v572
    %v2057 = vsub.f32 %v2039, %v2053
    %v2058 = vsub.f32 %v2040, %v2054
    %v2059 = vsub.f32 %v2041, %v2055
    %v2060 = vsub.f32 %v2042, %v2056
    %v2061 = vmul.f32 %v2057, %v2057
    %v2062 = vmul.f32 %v2058, %v2058
    %v2063 = vmul.f32 %v2059, %v2059
    %v2064 = vmul.f32 %v2060, %v2060
    %2065 = vadd.xlane.f32.xlu0 %v2061
    %v2066 = vpop.xlane.xlu0 %2065
    %2067 = vadd.xlane.f32.xlu0 %v2062
    %v2068 = vpop.xlane.xlu0 %2067
    %2069 = vadd.xlane.f32.xlu0 %v2063
    %v2070 = vpop.xlane.xlu0 %2069
    %2071 = vadd.xlane.f32.xlu0 %v2064
    %v2072 = vpop.xlane.xlu0 %2071
    %v2073 = vmul.f32 %v2066, 0.007874016
    %v2074 = vmul.f32 %v2068, 0.007874016
    %v2075 = vmul.f32 %v2070, 0.007874016
    %v2076 = vmul.f32 %v2072, 0.007874016
    %v2077 = vrsqrt.pop %v2073
    %v2078 = vmul.f32 %v2073, %v2077
    %vm2079 = vcmp.eq.f32.partialorder %v2073, inf
    %v2080 = vsel %vm2079, %v2073, %v2078
    %vm2081 = vcmp.eq.f32.partialorder %v2073, 0.0
    %v2082 = vand.u32 %v2073, 2147483648
    %v2083 = vsel %vm2081, %v2082, %v2080
    %v2084 = vrsqrt.pop %v2074
    %v2085 = vmul.f32 %v2074, %v2084
    %vm2086 = vcmp.eq.f32.partialorder %v2074, inf
    %v2087 = vsel %vm2086, %v2074, %v2085
    %vm2088 = vcmp.eq.f32.partialorder %v2074, 0.0
    %v2089 = vand.u32 %v2074, 2147483648
    %v2090 = vsel %vm2088, %v2089, %v2087
    %v2091 = vrsqrt.pop %v2075
    %v2092 = vmul.f32 %v2075, %v2091
    %vm2093 = vcmp.eq.f32.partialorder %v2075, inf
    %v2094 = vsel %vm2093, %v2075, %v2092
    %vm2095 = vcmp.eq.f32.partialorder %v2075, 0.0
    %v2096 = vand.u32 %v2075, 2147483648
    %v2097 = vsel %vm2095, %v2096, %v2094
    %v2098 = vrsqrt.pop %v2076
    %v2099 = vmul.f32 %v2076, %v2098
    %vm2100 = vcmp.eq.f32.partialorder %v2076, inf
    %v2101 = vsel %vm2100, %v2076, %v2099
    %vm2102 = vcmp.eq.f32.partialorder %v2076, 0.0
    %v2103 = vand.u32 %v2076, 2147483648
    %v2104 = vsel %vm2102, %v2103, %v2101
    %v2105 = vadd.f32 %v2083, 1e-06
    %v2106 = vadd.f32 %v2090, 1e-06
    %v2107 = vadd.f32 %v2097, 1e-06
    %v2108 = vadd.f32 %v2104, 1e-06
    %v2109 = vrcp.pop %v2105
    %v2110 = vmul.f32 %v2057, %v2109
    %v2111 = vrcp.pop %v2106
    %v2112 = vmul.f32 %v2058, %v2111
    %v2113 = vrcp.pop %v2107
    %v2114 = vmul.f32 %v2059, %v2113
    %v2115 = vrcp.pop %v2108
    %v2116 = vmul.f32 %v2060, %v2115
    %v2118 = vlaneseq
    %v2119 = vshrl.u32 %v2118, 7
    %v2120 = vsub.s32 0, %v2119
    %v2121 = vrot.slane %v2043, %v2120
    %v2123 = vmul.f32 %v2121, %v2110
    %v2124 = vmul.f32 %v2121, %v2112
    %v2125 = vmul.f32 %v2121, %v2114
    %v2126 = vmul.f32 %v2121, %v2116
    %v2128 = vlaneseq
    %v2129 = vshrl.u32 %v2128, 7
    %v2130 = vsub.s32 0, %v2129
    %v2131 = vrot.slane %v2044, %v2130
    %v2133 = vadd.f32 %v2123, %v2131
    %v2134 = vadd.f32 %v2124, %v2131
    %v2135 = vadd.f32 %v2125, %v2131
    %v2136 = vadd.f32 %v2126, %v2131
    %v2137 = vpack.c.bf16 %v2134, %v2133
    %v2138 = vpack.c.bf16 %v2136, %v2135
    %2139 = vst [vmem:[#allocation5] sm:$0xff] 0.0
    %2140 = vst [vmem:[#allocation5 + $0x8] sm:$0xff] 0.0
    %2141 = vst [vmem:[#allocation5 + $0x10] sm:$0xff] 0.0
    %2142 = vst [vmem:[#allocation5 + $0x18] sm:$0xff] 0.0
    %v2143 = vld [vmem:[#allocation17] sm:$0xff]
    %v2144 = vld [vmem:[#allocation17 + $0x8] sm:$0xff]
    %v2145 = vld [vmem:[#allocation17 + $0x10] sm:$0xff]
    %v2146 = vld [vmem:[#allocation17 + $0x18] sm:$0xff]
    %v2147 = vld [vmem:[#allocation17 + $0x20] sm:$0xff]
    %v2148 = vld [vmem:[#allocation17 + $0x28] sm:$0xff]
    %v2149 = vld [vmem:[#allocation17 + $0x30] sm:$0xff]
    %v2150 = vld [vmem:[#allocation17 + $0x38] sm:$0xff]
    %v2151 = vld [vmem:[#allocation17 + $0x40] sm:$0xff]
    %v2152 = vld [vmem:[#allocation17 + $0x48] sm:$0xff]
    %v2153 = vld [vmem:[#allocation17 + $0x50] sm:$0xff]
    %v2154 = vld [vmem:[#allocation17 + $0x58] sm:$0xff]
    %v2155 = vld [vmem:[#allocation17 + $0x60] sm:$0xff]
    %v2156 = vld [vmem:[#allocation17 + $0x68] sm:$0xff]
    %v2157 = vld [vmem:[#allocation17 + $0x70] sm:$0xff]
    %v2158 = vld [vmem:[#allocation17 + $0x78] sm:$0xff]
    %v2159 = vld [vmem:[%s14] sm:$0x3]
    %v2161 = vlaneseq
    %v2162 = vshrl.u32 %v2161, 7
    %v2163 = vsub.s32 0, %v2162
    %v2164 = vrot.slane %v2159, %v2163
    %v2165 = vlaneseq
    %v2166 = vshrl.u32 %v2165, 7
    %v2167 = vsub.s32 1, %v2166
    %v2168 = vrot.slane %v2159, %v2167
    %v2187 = vunpack.c.l.b16 %v2143
    %v2188 = vunpack.c.h.b16 %v2143
    %v2189 = vunpack.c.l.b16 %v2144
    %v2190 = vunpack.c.h.b16 %v2144
    %v2191 = vunpack.c.l.b16 %v2145
    %v2192 = vunpack.c.h.b16 %v2145
    %v2193 = vunpack.c.l.b16 %v2146
    %v2194 = vunpack.c.h.b16 %v2146
    %v2195 = vunpack.c.l.b16 %v2147
    %v2196 = vunpack.c.h.b16 %v2147
    %v2197 = vunpack.c.l.b16 %v2148
    %v2198 = vunpack.c.h.b16 %v2148
    %v2199 = vunpack.c.l.b16 %v2149
    %v2200 = vunpack.c.h.b16 %v2149
    %v2201 = vunpack.c.l.b16 %v2150
    %v2202 = vunpack.c.h.b16 %v2150
    %v2203 = vunpack.c.l.b16 %v2151
    %v2204 = vunpack.c.h.b16 %v2151
    %v2205 = vunpack.c.l.b16 %v2152
    %v2206 = vunpack.c.h.b16 %v2152
    %v2207 = vunpack.c.l.b16 %v2153
    %v2208 = vunpack.c.h.b16 %v2153
    %v2209 = vunpack.c.l.b16 %v2154
    %v2210 = vunpack.c.h.b16 %v2154
    %v2211 = vunpack.c.l.b16 %v2155
    %v2212 = vunpack.c.h.b16 %v2155
    %v2213 = vunpack.c.l.b16 %v2156
    %v2214 = vunpack.c.h.b16 %v2156
    %v2215 = vunpack.c.l.b16 %v2157
    %v2216 = vunpack.c.h.b16 %v2157
    %v2217 = vunpack.c.l.b16 %v2158
    %v2218 = vunpack.c.h.b16 %v2158
    %v2219 = vpack.c.b16 %v2189, %v2187
    %v2220 = vpack.c.b16 %v2190, %v2188
    %v2221 = vpack.c.b16 %v2193, %v2191
    %v2222 = vpack.c.b16 %v2194, %v2192
    %v2223 = vpack.c.b16 %v2197, %v2195
    %v2224 = vpack.c.b16 %v2198, %v2196
    %v2225 = vpack.c.b16 %v2201, %v2199
    %v2226 = vpack.c.b16 %v2202, %v2200
    %v2227 = vpack.c.b16 %v2205, %v2203
    %v2228 = vpack.c.b16 %v2206, %v2204
    %v2229 = vpack.c.b16 %v2209, %v2207
    %v2230 = vpack.c.b16 %v2210, %v2208
    %v2231 = vpack.c.b16 %v2213, %v2211
    %v2232 = vpack.c.b16 %v2214, %v2212
    %v2233 = vpack.c.b16 %v2217, %v2215
    %v2234 = vpack.c.b16 %v2218, %v2216
    %2251 = vmatprep.subr.bf16.mxu0 %v2234
    %2252 = vmatpush1.bf16.msra.mxu0 %v2233
    %2253 = vmatprep.subr.bf16.mxu0 %v2232
    %2254 = vmatpush1.bf16.msra.mxu0 %v2231
    %2255 = vmatprep.subr.bf16.mxu0 %v2230
    %2256 = vmatpush1.bf16.msra.mxu0 %v2229
    %2257 = vmatprep.subr.bf16.mxu0 %v2228
    %2258 = vmatpush1.bf16.msra.mxu0 %v2227
    %2259 = vmatprep.subr.bf16.mxu0 %v2226
    %2260 = vmatpush1.bf16.msra.mxu0 %v2225
    %2261 = vmatprep.subr.bf16.mxu0 %v2224
    %2262 = vmatpush1.bf16.msra.mxu0 %v2223
    %2263 = vmatprep.subr.bf16.mxu0 %v2222
    %2264 = vmatpush1.bf16.msra.mxu0 %v2221
    %2265 = vmatprep.subr.bf16.mxu0 %v2220
    %2266 = vmatpush1.bf16.msra.mxu0 %v2219
    %2267 = vmatprep.subr.bf16.mxu0 0
    %2268 = vmatpush2.bf16.msra.mxu0 0
    %2269 = vmatprep.subr.bf16.mxu0 0
    %2270 = vmatpush2.bf16.msra.mxu0 0
    %2271 = vmatprep.subr.bf16.mxu0 0
    %2272 = vmatpush2.bf16.msra.mxu0 0
    %2273 = vmatprep.subr.bf16.mxu0 0
    %2274 = vmatpush2.bf16.msra.mxu0 0
    %2275 = vmatprep.subr.bf16.mxu0 0
    %2276 = vmatpush2.bf16.msra.mxu0 0
    %2277 = vmatprep.subr.bf16.mxu0 0
    %2278 = vmatpush2.bf16.msra.mxu0 0
    %2279 = vmatprep.subr.bf16.mxu0 0
    %2280 = vmatpush2.bf16.msra.mxu0 0
    %2281 = vmatprep.subr.bf16.mxu0 0
    %2282 = vmatpush2.bf16.msra.mxu0 0
    %2283 = vmatprep.mubr.bf16.mxu0 0
    %2284 = vmatmul.mubr.bf16.gmra.mxu0 %v2137
    %v2285 = vpop.f32.mrf.mxu0
    %v2286 = vadd.f32 %v2164, %v2285
    %v2287 = vpop.f32.mrf.mxu0
    %v2288 = vadd.f32 %v2168, %v2287
    %v2289 = vpop.f32.mrf.mxu0
    %v2290 = vadd.f32 %v2164, %v2289
    %v2291 = vpop.f32.mrf.mxu0
    %v2292 = vadd.f32 %v2168, %v2291
    %2293 = vmatprep.mubr.bf16.mxu0 0
    %2294 = vmatmul.mubr.bf16.gmra.mxu0 %v2138
    %v2295 = vpop.f32.mrf.mxu0
    %v2296 = vadd.f32 %v2164, %v2295
    %v2297 = vpop.f32.mrf.mxu0
    %v2298 = vadd.f32 %v2168, %v2297
    %v2299 = vpop.f32.mrf.mxu0
    %v2300 = vadd.f32 %v2164, %v2299
    %v2301 = vpop.f32.mrf.mxu0
    %v2302 = vadd.f32 %v2168, %v2301
    %2303 = vdwg.mxu0
    %v2304 = vmax.f32 %v2286, 0.0
    %v2305 = vmax.f32 %v2288, 0.0
    %v2306 = vmax.f32 %v2290, 0.0
    %v2307 = vmax.f32 %v2292, 0.0
    %v2308 = vmax.f32 %v2296, 0.0
    %v2309 = vmax.f32 %v2298, 0.0
    %v2310 = vmax.f32 %v2300, 0.0
    %v2311 = vmax.f32 %v2302, 0.0
    %v2312 = vld [vmem:[#allocation5] sm:$0xff]
    %v2313 = vld [vmem:[#allocation5 + $0x8] sm:$0xff]
    %v2314 = vld [vmem:[#allocation5 + $0x10] sm:$0xff]
    %v2315 = vld [vmem:[#allocation5 + $0x18] sm:$0xff]
    %v2316 = vpack.c.bf16 %v2306, %v2304
    %v2317 = vpack.c.bf16 %v2307, %v2305
    %v2318 = vpack.c.bf16 %v2310, %v2308
    %v2319 = vpack.c.bf16 %v2311, %v2309
    %v2320 = vld [vmem:[#allocation18] sm:$0xf]
    %v2321 = vld [vmem:[#allocation18 + $0x4] sm:$0xf]
    %v2322 = vld [vmem:[#allocation18 + $0x8] sm:$0xf]
    %v2323 = vld [vmem:[#allocation18 + $0xc] sm:$0xf]
    %v2324 = vld [vmem:[#allocation18 + $0x10] sm:$0xf]
    %v2325 = vld [vmem:[#allocation18 + $0x14] sm:$0xf]
    %v2326 = vld [vmem:[#allocation18 + $0x18] sm:$0xf]
    %v2327 = vld [vmem:[#allocation18 + $0x1c] sm:$0xf]
    %v2328 = vld [vmem:[#allocation18 + $0x20] sm:$0xf]
    %v2329 = vld [vmem:[#allocation18 + $0x24] sm:$0xf]
    %v2330 = vld [vmem:[#allocation18 + $0x28] sm:$0xf]
    %v2331 = vld [vmem:[#allocation18 + $0x2c] sm:$0xf]
    %v2332 = vld [vmem:[#allocation18 + $0x30] sm:$0xf]
    %v2333 = vld [vmem:[#allocation18 + $0x34] sm:$0xf]
    %v2334 = vld [vmem:[#allocation18 + $0x38] sm:$0xf]
    %v2335 = vld [vmem:[#allocation18 + $0x3c] sm:$0xf]
    %v2336 = vld [vmem:[#allocation18 + $0x40] sm:$0xf]
    %v2337 = vld [vmem:[#allocation18 + $0x44] sm:$0xf]
    %v2338 = vld [vmem:[#allocation18 + $0x48] sm:$0xf]
    %v2339 = vld [vmem:[#allocation18 + $0x4c] sm:$0xf]
    %v2340 = vld [vmem:[#allocation18 + $0x50] sm:$0xf]
    %v2341 = vld [vmem:[#allocation18 + $0x54] sm:$0xf]
    %v2342 = vld [vmem:[#allocation18 + $0x58] sm:$0xf]
    %v2343 = vld [vmem:[#allocation18 + $0x5c] sm:$0xf]
    %v2344 = vld [vmem:[#allocation18 + $0x60] sm:$0xf]
    %v2345 = vld [vmem:[#allocation18 + $0x64] sm:$0xf]
    %v2346 = vld [vmem:[#allocation18 + $0x68] sm:$0xf]
    %v2347 = vld [vmem:[#allocation18 + $0x6c] sm:$0xf]
    %v2348 = vld [vmem:[#allocation18 + $0x70] sm:$0xf]
    %v2349 = vld [vmem:[#allocation18 + $0x74] sm:$0xf]
    %v2350 = vld [vmem:[#allocation18 + $0x78] sm:$0xf]
    %v2351 = vld [vmem:[#allocation18 + $0x7c] sm:$0xf]
    %v2384 = vunpack.c.l.b16 %v2320
    %v2385 = vunpack.c.l.b16 %v2321
    %v2386 = vunpack.c.l.b16 %v2322
    %v2387 = vunpack.c.l.b16 %v2323
    %v2388 = vunpack.c.l.b16 %v2324
    %v2389 = vunpack.c.l.b16 %v2325
    %v2390 = vunpack.c.l.b16 %v2326
    %v2391 = vunpack.c.l.b16 %v2327
    %v2392 = vunpack.c.l.b16 %v2328
    %v2393 = vunpack.c.l.b16 %v2329
    %v2394 = vunpack.c.l.b16 %v2330
    %v2395 = vunpack.c.l.b16 %v2331
    %v2396 = vunpack.c.l.b16 %v2332
    %v2397 = vunpack.c.l.b16 %v2333
    %v2398 = vunpack.c.l.b16 %v2334
    %v2399 = vunpack.c.l.b16 %v2335
    %v2400 = vunpack.c.l.b16 %v2336
    %v2401 = vunpack.c.l.b16 %v2337
    %v2402 = vunpack.c.l.b16 %v2338
    %v2403 = vunpack.c.l.b16 %v2339
    %v2404 = vunpack.c.l.b16 %v2340
    %v2405 = vunpack.c.l.b16 %v2341
    %v2406 = vunpack.c.l.b16 %v2342
    %v2407 = vunpack.c.l.b16 %v2343
    %v2408 = vunpack.c.l.b16 %v2344
    %v2409 = vunpack.c.l.b16 %v2345
    %v2410 = vunpack.c.l.b16 %v2346
    %v2411 = vunpack.c.l.b16 %v2347
    %v2412 = vunpack.c.l.b16 %v2348
    %v2413 = vunpack.c.l.b16 %v2349
    %v2414 = vunpack.c.l.b16 %v2350
    %v2415 = vunpack.c.l.b16 %v2351
    %v2416 = vpack.c.b16 %v2385, %v2384
    %v2417 = vpack.c.b16 %v2387, %v2386
    %v2418 = vpack.c.b16 %v2389, %v2388
    %v2419 = vpack.c.b16 %v2391, %v2390
    %v2420 = vpack.c.b16 %v2393, %v2392
    %v2421 = vpack.c.b16 %v2395, %v2394
    %v2422 = vpack.c.b16 %v2397, %v2396
    %v2423 = vpack.c.b16 %v2399, %v2398
    %v2424 = vpack.c.b16 %v2401, %v2400
    %v2425 = vpack.c.b16 %v2403, %v2402
    %v2426 = vpack.c.b16 %v2405, %v2404
    %v2427 = vpack.c.b16 %v2407, %v2406
    %v2428 = vpack.c.b16 %v2409, %v2408
    %v2429 = vpack.c.b16 %v2411, %v2410
    %v2430 = vpack.c.b16 %v2413, %v2412
    %v2431 = vpack.c.b16 %v2415, %v2414
    %2448 = vmatprep.subr.bf16.mxu0 0
    %2449 = vmatpush1.bf16.msra.mxu0 %v2423
    %2450 = vmatprep.subr.bf16.mxu0 0
    %2451 = vmatpush1.bf16.msra.mxu0 %v2422
    %2452 = vmatprep.subr.bf16.mxu0 0
    %2453 = vmatpush1.bf16.msra.mxu0 %v2421
    %2454 = vmatprep.subr.bf16.mxu0 0
    %2455 = vmatpush1.bf16.msra.mxu0 %v2420
    %2456 = vmatprep.subr.bf16.mxu0 0
    %2457 = vmatpush1.bf16.msra.mxu0 %v2419
    %2458 = vmatprep.subr.bf16.mxu0 0
    %2459 = vmatpush1.bf16.msra.mxu0 %v2418
    %2460 = vmatprep.subr.bf16.mxu0 0
    %2461 = vmatpush1.bf16.msra.mxu0 %v2417
    %2462 = vmatprep.subr.bf16.mxu0 0
    %2463 = vmatpush1.bf16.msra.mxu0 %v2416
    %2464 = vmatprep.subr.bf16.mxu0 0
    %2465 = vmatpush2.bf16.msra.mxu0 %v2431
    %2466 = vmatprep.subr.bf16.mxu0 0
    %2467 = vmatpush2.bf16.msra.mxu0 %v2430
    %2468 = vmatprep.subr.bf16.mxu0 0
    %2469 = vmatpush2.bf16.msra.mxu0 %v2429
    %2470 = vmatprep.subr.bf16.mxu0 0
    %2471 = vmatpush2.bf16.msra.mxu0 %v2428
    %2472 = vmatprep.subr.bf16.mxu0 0
    %2473 = vmatpush2.bf16.msra.mxu0 %v2427
    %2474 = vmatprep.subr.bf16.mxu0 0
    %2475 = vmatpush2.bf16.msra.mxu0 %v2426
    %2476 = vmatprep.subr.bf16.mxu0 0
    %2477 = vmatpush2.bf16.msra.mxu0 %v2425
    %2478 = vmatprep.subr.bf16.mxu0 0
    %2479 = vmatpush2.bf16.msra.mxu0 %v2424
    %2480 = vmatprep.mubr.bf16.mxu0 %v2317
    %2481 = vmatmul.mubr.bf16.gmra.mxu0 %v2316
    %v2482 = vpop.f32.mrf.mxu0
    %v2483 = vadd.f32 0.0, %v2482
    %v2484 = vpop.f32.mrf.mxu0
    %v2485 = vpop.f32.mrf.mxu0
    %v2486 = vadd.f32 0.0, %v2485
    %v2487 = vpop.f32.mrf.mxu0
    %2488 = vmatprep.mubr.bf16.mxu0 %v2319
    %2489 = vmatmul.mubr.bf16.gmra.mxu0 %v2318
    %v2490 = vpop.f32.mrf.mxu0
    %v2491 = vadd.f32 0.0, %v2490
    %v2492 = vpop.f32.mrf.mxu0
    %v2493 = vpop.f32.mrf.mxu0
    %v2494 = vadd.f32 0.0, %v2493
    %v2495 = vpop.f32.mrf.mxu0
    %2496 = vdwg.mxu0
    %v2497 = vadd.f32 %v2312, %v2483
    %v2498 = vadd.f32 %v2313, %v2486
    %v2499 = vadd.f32 %v2314, %v2491
    %v2500 = vadd.f32 %v2315, %v2494
    %2501 = vst [vmem:[#allocation5] sm:$0xff] %v2497
    %2502 = vst [vmem:[#allocation5 + $0x8] sm:$0xff] %v2498
    %2503 = vst [vmem:[#allocation5 + $0x10] sm:$0xff] %v2499
    %2504 = vst [vmem:[#allocation5 + $0x18] sm:$0xff] %v2500
    %v2505 = vld [vmem:[#allocation5] sm:$0xff]
    %v2506 = vld [vmem:[#allocation5 + $0x8] sm:$0xff]
    %v2507 = vld [vmem:[#allocation5 + $0x10] sm:$0xff]
    %v2508 = vld [vmem:[#allocation5 + $0x18] sm:$0xff]
    %v2509 = vadd.f32 %v2039, %v2505
    %v2510 = vadd.f32 %v2040, %v2506
    %v2511 = vadd.f32 %v2041, %v2507
    %v2512 = vadd.f32 %v2042, %v2508
    %v2513 = vld [vmem:[%s16] sm:$0x1]
    %v2515 = vlaneseq
    %v2516 = vshrl.u32 %v2515, 7
    %v2517 = vsub.s32 0, %v2516
    %v2518 = vrot.slane %v2513, %v2517
    %v2520 = vadd.f32 %v2509, %v2518
    %v2521 = vadd.f32 %v2510, %v2518
    %v2522 = vadd.f32 %v2511, %v2518
    %v2523 = vadd.f32 %v2512, %v2518
    %2524 = vst [vmem:[#allocation20] sm:$0xff] %v2520
    %2525 = vst [vmem:[#allocation20 + $0x8] sm:$0xff] %v2521
    %2526 = vst [vmem:[#allocation20 + $0x10] sm:$0xff] %v2522
    %2527 = vst [vmem:[#allocation20 + $0x18] sm:$0xff] %v2523
    // Predicated region
    $region114: #{tpu_custom_call.1} parent=1 // pred_check
      _
    $region115: #{tpu_custom_call.1} parent=1 // pred_check_branch
      %2529 = sbr.rel (0) target = $region117
    $region116: #{tpu_custom_call.1} parent=1 // pred_region
      %s2531 = ssub.s32 512, 512
      %2532 = vsyncadd [#allocation8], %s2531
      %s2533 = sshll.u32 [#allocation20], 4
      %s2534 = int_to_ptr.vmem [resolvable:$true] %s2533
      %2539 = dma.vmem_to_hbm [thread:$0]  %s2534, 512, %s19, [#allocation8], 128, 128, 8
    $region117: #{tpu_custom_call.1} parent=1 // pred_fallthru
      _
    // Predicated region
    $region118: #{tpu_custom_call.1} parent=1 // pred_check
      _
    $region119: #{tpu_custom_call.1} parent=1 // pred_check_branch
      %2541 = sbr.rel (0) target = $region121
    $region120: #{tpu_custom_call.1} parent=1 // pred_region
      %2542 = dma.done [#allocation8], 512
    $region121: #{tpu_custom_call.1} parent=1 // pred_fallthru
      _
    %2543 = vsyncpa [#allocation7], 1
    %2544 = vsyncpa [#allocation10], 1
    %2545 = vsyncpa [#allocation13], 1
    %2546 = vsyncpa [#allocation16], 1
    %2547 = vsyncpa [#allocation19], 1
    %2548 = vsyncpa [#allocation8], 1

// kernel: tpu_custom_call.1
$region0: #{tpu_custom_call.1}
  #allocation0 [shape = 'u32[]', space=smem, size = 0x4, offset = 0x4, fixed_abs, tag = 'smem constant byte address 0x4 - core index']
  #allocation1 [shape = 'u32[144,128]{1,0:T(1,128)}', space=vmem, size = 0x12000, scoped, tag = 'internal scratch']
  #allocation2 [shape = 'bf16[2,16,128]{2,1,0:T(8,128)(2,1)}', space=vmem, size = 0x2000, scoped, tag = 'scratch operand']
  #allocation3 [shape = 'bf16[2,16,128]{2,1,0:T(8,128)(2,1)}', space=vmem, size = 0x2000, scoped, tag = 'scratch operand']
  #allocation4 [shape = 'bf16[2,16,128]{2,1,0:T(8,128)(2,1)}', space=vmem, size = 0x2000, scoped, tag = 'scratch operand']
  #allocation5 [shape = 'f32[32,128]{1,0:T(8,128)}', space=vmem, size = 0x4000, scoped, tag = 'scratch operand']
  %s0 = inlined_call_operand.hbm [shape: f32[2,16,128], index: 0, kind: input, shape index: {}]
  %s1 = inlined_call_operand.hbm [shape: f32[2,16,128], index: 1, kind: input, shape index: {}]
  %s2 = inlined_call_operand.vmem [shape: f32[2,1,16], index: 2, kind: input, shape index: {}]
  %s3 = inlined_call_operand.hbm [shape: bf16[128,128], index: 3, kind: input, shape index: {}]
  %s4 = inlined_call_operand.vmem [shape: f32[1,128], index: 4, kind: input, shape index: {}]
  %s5 = inlined_call_operand.hbm [shape: bf16[128,128], index: 5, kind: input, shape index: {}]
  %s6 = inlined_call_operand.vmem [shape: f32[1,128], index: 6, kind: input, shape index: {}]
  %s7 = inlined_call_operand.hbm [shape: bf16[128,128], index: 7, kind: input, shape index: {}]
  %s8 = inlined_call_operand.vmem [shape: f32[1,128], index: 8, kind: input, shape index: {}]
  %s9 = inlined_call_operand.hbm [shape: bf16[128,128], index: 9, kind: input, shape index: {}]
  %s10 = inlined_call_operand.vmem [shape: f32[1,128], index: 10, kind: input, shape index: {}]
  %s11 = inlined_call_operand.vmem [shape: f32[1,128], index: 11, kind: input, shape index: {}]
  %s12 = inlined_call_operand.vmem [shape: f32[1,128], index: 12, kind: input, shape index: {}]
  %s13 = inlined_call_operand.hbm [shape: bf16[128,256], index: 13, kind: input, shape index: {}]
  %s14 = inlined_call_operand.vmem [shape: f32[1,256], index: 14, kind: input, shape index: {}]
  %s15 = inlined_call_operand.hbm [shape: bf16[256,128], index: 15, kind: input, shape index: {}]
  %s16 = inlined_call_operand.vmem [shape: f32[1,128], index: 16, kind: input, shape index: {}]
  %s17 = inlined_call_operand.vmem [shape: f32[1,128], index: 17, kind: input, shape index: {}]
  %s18 = inlined_call_operand.vmem [shape: f32[1,128], index: 18, kind: input, shape index: {}]
  %s19 = inlined_call_operand.hbm [shape: f32[2,16,128], index: 19, kind: output, shape index: {}]
  %s20 = sld [smem:[#allocation0]]
  $region122: #{tpu_custom_call.1} parent=0
    _
  %s22 = ssub.s32 1, %s20
  %s23 = scalar_select 0, %s22, %s20
  $region1: #{tpu_custom_call.1} parent=0
    #allocation6 [shape = 'u8[16384]{0}', space=vmem, size = 0x4000, scoped, tag = 'input window, operand 0, single buffered']
    #allocation7 [shape = 's32[1]{0}', space=sflag, size = 0x4, scoped, tag = 'scoped memory for tpu_custom_call.1']
    #allocation8 [shape = 's32[1]{0}', space=sflag, size = 0x4, scoped, tag = 'scoped memory for tpu_custom_call.1']
    #allocation9 [shape = 'u8[16384]{0}', space=vmem, size = 0x4000, scoped, tag = 'input window, operand 1, single buffered']
    #allocation10 [shape = 's32[1]{0}', space=sflag, size = 0x4, scoped, tag = 'scoped memory for tpu_custom_call.1']
    #allocation11 [shape = 'u8[32768]{0}', space=vmem, size = 0x8000, scoped, tag = 'input window, operand 3, single buffered']
    #allocation12 [shape = 'u8[32768]{0}', space=vmem, size = 0x8000, scoped, tag = 'input window, operand 5, single buffered']
    #allocation13 [shape = 's32[1]{0}', space=sflag, size = 0x4, scoped, tag = 'scoped memory for tpu_custom_call.1']
    #allocation14 [shape = 'u8[32768]{0}', space=vmem, size = 0x8000, scoped, tag = 'input window, operand 7, single buffered']
    #allocation15 [shape = 'u8[32768]{0}', space=vmem, size = 0x8000, scoped, tag = 'input window, operand 9, single buffered']
    #allocation16 [shape = 's32[1]{0}', space=sflag, size = 0x4, scoped, tag = 'scoped memory for tpu_custom_call.1']
    #allocation17 [shape = 'u8[65536]{0}', space=vmem, size = 0x10000, scoped, tag = 'input window, operand 13, single buffered']
    #allocation18 [shape = 'u8[65536]{0}', space=vmem, size = 0x10000, scoped, tag = 'input window, operand 15, single buffered']
    #allocation19 [shape = 's32[1]{0}', space=sflag, size = 0x4, scoped, tag = 'scoped memory for tpu_custom_call.1']
    #allocation20 [shape = 'u8[16384]{0}', space=vmem, size = 0x4000, scoped, tag = 'output window, operand 0, single buffered']
    %24 = vsyncpa [#allocation7], 0
    %25 = vsyncpa [#allocation10], 0
    %26 = vsyncpa [#allocation13], 0
    %27 = vsyncpa [#allocation16], 0
    %28 = vsyncpa [#allocation19], 0
    %29 = vsyncpa [#allocation8], 0
    // Predicated region
    $region2: #{tpu_custom_call.1} parent=1 // pred_check
      _
    $region3: #{tpu_custom_call.1} parent=1 // pred_check_branch
      %31 = sbr.rel (0) target = $region5
    $region4: #{tpu_custom_call.1} parent=1 // pred_region
      %s33 = ssub.s32 512, 512
      %34 = vsyncadd [#allocation7], %s33
      %s35 = sshll.u32 [#allocation6], 4
      %s36 = int_to_ptr.vmem [resolvable:$true] %s35
      %41 = dma.hbm_to_vmem [thread:$0]  %s0, 512, %s36, [#allocation7], 128, 128, 8
    $region5: #{tpu_custom_call.1} parent=1 // pred_fallthru
      _
    // Predicated region
    $region6: #{tpu_custom_call.1} parent=1 // pred_check
      _
    $region7: #{tpu_custom_call.1} parent=1 // pred_check_branch
      %43 = sbr.rel (0) target = $region9
    $region8: #{tpu_custom_call.1} parent=1 // pred_region
      %s45 = ssub.s32 512, 512
      %46 = vsyncadd [#allocation10], %s45
      %s47 = sshll.u32 [#allocation9], 4
      %s48 = int_to_ptr.vmem [resolvable:$true] %s47
      %53 = dma.hbm_to_vmem [thread:$0]  %s1, 512, %s48, [#allocation10], 128, 128, 8
    $region9: #{tpu_custom_call.1} parent=1 // pred_fallthru
      _
    // Predicated region
    $region10: #{tpu_custom_call.1} parent=1 // pred_check
      _
    $region11: #{tpu_custom_call.1} parent=1 // pred_check_branch
      %55 = sbr.rel (0) target = $region13
    $region12: #{tpu_custom_call.1} parent=1 // pred_region
      _
    $region13: #{tpu_custom_call.1} parent=1 // pred_fallthru
      _
    // Predicated region
    $region14: #{tpu_custom_call.1} parent=1 // pred_check
      _
    $region15: #{tpu_custom_call.1} parent=1 // pred_check_branch
      %57 = sbr.rel (0) target = $region17
    $region16: #{tpu_custom_call.1} parent=1 // pred_region
      %s59 = ssub.s32 1024, 1024
      %60 = vsyncadd [#allocation10], %s59
      %s61 = sshll.u32 [#allocation11], 4
      %s62 = int_to_ptr.vmem [resolvable:$true] %s61
      %67 = dma.hbm_to_vmem [thread:$0]  %s3, 1024, %s62, [#allocation10], 64, 64, 4
    $region17: #{tpu_custom_call.1} parent=1 // pred_fallthru
      _
    // Predicated region
    $region18: #{tpu_custom_call.1} parent=1 // pred_check
      _
    $region19: #{tpu_custom_call.1} parent=1 // pred_check_branch
      %69 = sbr.rel (0) target = $region21
    $region20: #{tpu_custom_call.1} parent=1 // pred_region
      _
    $region21: #{tpu_custom_call.1} parent=1 // pred_fallthru
      _
    // Predicated region
    $region22: #{tpu_custom_call.1} parent=1 // pred_check
      _
    $region23: #{tpu_custom_call.1} parent=1 // pred_check_branch
      %71 = sbr.rel (0) target = $region25
    $region24: #{tpu_custom_call.1} parent=1 // pred_region
      %s73 = ssub.s32 1024, 1024
      %74 = vsyncadd [#allocation13], %s73
      %s75 = sshll.u32 [#allocation12], 4
      %s76 = int_to_ptr.vmem [resolvable:$true] %s75
      %81 = dma.hbm_to_vmem [thread:$0]  %s5, 1024, %s76, [#allocation13], 64, 64, 4
    $region25: #{tpu_custom_call.1} parent=1 // pred_fallthru
      _
    // Predicated region
    $region26: #{tpu_custom_call.1} parent=1 // pred_check
      _
    $region27: #{tpu_custom_call.1} parent=1 // pred_check_branch
      %83 = sbr.rel (0) target = $region29
    $region28: #{tpu_custom_call.1} parent=1 // pred_region
      _
    $region29: #{tpu_custom_call.1} parent=1 // pred_fallthru
      _
    // Predicated region
    $region30: #{tpu_custom_call.1} parent=1 // pred_check
      _
    $region31: #{tpu_custom_call.1} parent=1 // pred_check_branch
      %85 = sbr.rel (0) target = $region33
    $region32: #{tpu_custom_call.1} parent=1 // pred_region
      %s87 = ssub.s32 1024, 1024
      %88 = vsyncadd [#allocation13], %s87
      %s89 = sshll.u32 [#allocation14], 4
      %s90 = int_to_ptr.vmem [resolvable:$true] %s89
      %95 = dma.hbm_to_vmem [thread:$0]  %s7, 1024, %s90, [#allocation13], 64, 64, 4
    $region33: #{tpu_custom_call.1} parent=1 // pred_fallthru
      _
    // Predicated region
    $region34: #{tpu_custom_call.1} parent=1 // pred_check
      _
    $region35: #{tpu_custom_call.1} parent=1 // pred_check_branch
      %97 = sbr.rel (0) target = $region37
    $region36: #{tpu_custom_call.1} parent=1 // pred_region
      _
    $region37: #{tpu_custom_call.1} parent=1 // pred_fallthru
      _
    // Predicated region
    $region38: #{tpu_custom_call.1} parent=1 // pred_check
      _
    $region39: #{tpu_custom_call.1} parent=1 // pred_check_branch
      %99 = sbr.rel (0) target = $region41
    $region40: #{tpu_custom_call.1} parent=1 // pred_region
      %s101 = ssub.s32 1024, 1024
      %102 = vsyncadd [#allocation16], %s101
      %s103 = sshll.u32 [#allocation15], 4
      %s104 = int_to_ptr.vmem [resolvable:$true] %s103
      %109 = dma.hbm_to_vmem [thread:$0]  %s9, 1024, %s104, [#allocation16], 64, 64, 4
    $region41: #{tpu_custom_call.1} parent=1 // pred_fallthru
      _
    // Predicated region
    $region42: #{tpu_custom_call.1} parent=1 // pred_check
      _
    $region43: #{tpu_custom_call.1} parent=1 // pred_check_branch
      %111 = sbr.rel (0) target = $region45
    $region44: #{tpu_custom_call.1} parent=1 // pred_region
      _
    $region45: #{tpu_custom_call.1} parent=1 // pred_fallthru
      _
    // Predicated region
    $region46: #{tpu_custom_call.1} parent=1 // pred_check
      _
    $region47: #{tpu_custom_call.1} parent=1 // pred_check_branch
      %113 = sbr.rel (0) target = $region49
    $region48: #{tpu_custom_call.1} parent=1 // pred_region
      _
    $region49: #{tpu_custom_call.1} parent=1 // pred_fallthru
      _
    // Predicated region
    $region50: #{tpu_custom_call.1} parent=1 // pred_check
      _
    $region51: #{tpu_custom_call.1} parent=1 // pred_check_branch
      %115 = sbr.rel (0) target = $region53
    $region52: #{tpu_custom_call.1} parent=1 // pred_region
      _
    $region53: #{tpu_custom_call.1} parent=1 // pred_fallthru
      _
    // Predicated region
    $region54: #{tpu_custom_call.1} parent=1 // pred_check
      _
    $region55: #{tpu_custom_call.1} parent=1 // pred_check_branch
      %117 = sbr.rel (0) target = $region57
    $region56: #{tpu_custom_call.1} parent=1 // pred_region
      %s119 = ssub.s32 2048, 2048
      %120 = vsyncadd [#allocation16], %s119
      %s121 = sshll.u32 [#allocation17], 4
      %s122 = int_to_ptr.vmem [resolvable:$true] %s121
      %127 = dma.hbm_to_vmem [thread:$0]  %s13, 2048, %s122, [#allocation16], 128, 128, 8
    $region57: #{tpu_custom_call.1} parent=1 // pred_fallthru
      _
    // Predicated region
    $region58: #{tpu_custom_call.1} parent=1 // pred_check
      _
    $region59: #{tpu_custom_call.1} parent=1 // pred_check_branch
      %129 = sbr.rel (0) target = $region61
    $region60: #{tpu_custom_call.1} parent=1 // pred_region
      _
    $region61: #{tpu_custom_call.1} parent=1 // pred_fallthru
      _
    // Predicated region
    $region62: #{tpu_custom_call.1} parent=1 // pred_check
      _
    $region63: #{tpu_custom_call.1} parent=1 // pred_check_branch
      %131 = sbr.rel (0) target = $region65
    $region64: #{tpu_custom_call.1} parent=1 // pred_region
      %s133 = ssub.s32 2048, 2048
      %134 = vsyncadd [#allocation19], %s133
      %s135 = sshll.u32 [#allocation18], 4
      %s136 = int_to_ptr.vmem [resolvable:$true] %s135
      %141 = dma.hbm_to_vmem [thread:$0]  %s15, 2048, %s136, [#allocation19], 64, 64, 4
    $region65: #{tpu_custom_call.1} parent=1 // pred_fallthru
      _
    // Predicated region
    $region66: #{tpu_custom_call.1} parent=1 // pred_check
      _
    $region67: #{tpu_custom_call.1} parent=1 // pred_check_branch
      %143 = sbr.rel (0) target = $region69
    $region68: #{tpu_custom_call.1} parent=1 // pred_region
      _
    $region69: #{tpu_custom_call.1} parent=1 // pred_fallthru
      _
    // Predicated region
    $region70: #{tpu_custom_call.1} parent=1 // pred_check
      _
    $region71: #{tpu_custom_call.1} parent=1 // pred_check_branch
      %145 = sbr.rel (0) target = $region73
    $region72: #{tpu_custom_call.1} parent=1 // pred_region
      _
    $region73: #{tpu_custom_call.1} parent=1 // pred_fallthru
      _
    // Predicated region
    $region74: #{tpu_custom_call.1} parent=1 // pred_check
      _
    $region75: #{tpu_custom_call.1} parent=1 // pred_check_branch
      %147 = sbr.rel (0) target = $region77
    $region76: #{tpu_custom_call.1} parent=1 // pred_region
      _
    $region77: #{tpu_custom_call.1} parent=1 // pred_fallthru
      _
    // Predicated region
    $region78: #{tpu_custom_call.1} parent=1 // pred_check
      _
    $region79: #{tpu_custom_call.1} parent=1 // pred_check_branch
      %149 = sbr.rel (0) target = $region81
    $region80: #{tpu_custom_call.1} parent=1 // pred_region
      %150 = dma.done [#allocation7], 512
    $region81: #{tpu_custom_call.1} parent=1 // pred_fallthru
      _
    // Predicated region
    $region82: #{tpu_custom_call.1} parent=1 // pred_check
      _
    $region83: #{tpu_custom_call.1} parent=1 // pred_check_branch
      %152 = sbr.rel (0) target = $region85
    $region84: #{tpu_custom_call.1} parent=1 // pred_region
      %153 = dma.done [#allocation10], 512
    $region85: #{tpu_custom_call.1} parent=1 // pred_fallthru
      _
    // Predicated region
    $region86: #{tpu_custom_call.1} parent=1 // pred_check
      _
    $region87: #{tpu_custom_call.1} parent=1 // pred_check_branch
      %155 = sbr.rel (0) target = $region89
    $region88: #{tpu_custom_call.1} parent=1 // pred_region
      %156 = dma.done [#allocation10], 1024
    $region89: #{tpu_custom_call.1} parent=1 // pred_fallthru
      _
    // Predicated region
    $region90: #{tpu_custom_call.1} parent=1 // pred_check
      _
    $region91: #{tpu_custom_call.1} parent=1 // pred_check_branch
      %158 = sbr.rel (0) target = $region93
    $region92: #{tpu_custom_call.1} parent=1 // pred_region
      %159 = dma.done [#allocation13], 1024
    $region93: #{tpu_custom_call.1} parent=1 // pred_fallthru
      _
    // Predicated region
    $region94: #{tpu_custom_call.1} parent=1 // pred_check
      _
    $region95: #{tpu_custom_call.1} parent=1 // pred_check_branch
      %161 = sbr.rel (0) target = $region97
    $region96: #{tpu_custom_call.1} parent=1 // pred_region
      %162 = dma.done [#allocation13], 1024
    $region97: #{tpu_custom_call.1} parent=1 // pred_fallthru
      _
    // Predicated region
    $region98: #{tpu_custom_call.1} parent=1 // pred_check
      _
    $region99: #{tpu_custom_call.1} parent=1 // pred_check_branch
      %164 = sbr.rel (0) target = $region101
    $region100: #{tpu_custom_call.1} parent=1 // pred_region
      %165 = dma.done [#allocation16], 1024
    $region101: #{tpu_custom_call.1} parent=1 // pred_fallthru
      _
    // Predicated region
    $region102: #{tpu_custom_call.1} parent=1 // pred_check
      _
    $region103: #{tpu_custom_call.1} parent=1 // pred_check_branch
      %167 = sbr.rel (0) target = $region105
    $region104: #{tpu_custom_call.1} parent=1 // pred_region
      %168 = dma.done [#allocation16], 2048
    $region105: #{tpu_custom_call.1} parent=1 // pred_fallthru
      _
    // Predicated region
    $region106: #{tpu_custom_call.1} parent=1 // pred_check
      _
    $region107: #{tpu_custom_call.1} parent=1 // pred_check_branch
      %170 = sbr.rel (0) target = $region109
    $region108: #{tpu_custom_call.1} parent=1 // pred_region
      %171 = dma.done [#allocation19], 2048
    $region109: #{tpu_custom_call.1} parent=1 // pred_fallthru
      _
    %p173 = scmp.eq.s32.totalorder 0, 0
    // Predicated region
    $region110: #{tpu_custom_call.1} parent=1 // pred_check
      %p174 = pneg %p173
    $region111: #{tpu_custom_call.1} parent=1 // pred_check_branch
      %176 = sbr.rel (%p174) target = $region113
    $region112: #{tpu_custom_call.1} parent=1 // pred_region
      %v177 = vld [vmem:[#allocation6] sm:$0xff]
      %v178 = vld [vmem:[#allocation6 + $0x8] sm:$0xff]
      %v179 = vld [vmem:[#allocation6 + $0x10] sm:$0xff]
      %v180 = vld [vmem:[#allocation6 + $0x18] sm:$0xff]
      %v181 = vld [vmem:[%s11] sm:$0x1]
      %v182 = vld [vmem:[%s12] sm:$0x1]
      %183 = vadd.xlane.f32.xlu0 %v177
      %v184 = vpop.xlane.xlu0 %183
      %185 = vadd.xlane.f32.xlu0 %v178
      %v186 = vpop.xlane.xlu0 %185
      %187 = vadd.xlane.f32.xlu0 %v179
      %v188 = vpop.xlane.xlu0 %187
      %189 = vadd.xlane.f32.xlu0 %v180
      %v190 = vpop.xlane.xlu0 %189
      %v191 = vrcp.pop 128.0
      %v192 = vmul.f32 %v184, %v191
      %v193 = vmul.f32 %v186, %v191
      %v194 = vmul.f32 %v188, %v191
      %v195 = vmul.f32 %v190, %v191
      %v196 = vsub.f32 %v177, %v192
      %v197 = vsub.f32 %v178, %v193
      %v198 = vsub.f32 %v179, %v194
      %v199 = vsub.f32 %v180, %v195
      %v200 = vmul.f32 %v196, %v196
      %v201 = vmul.f32 %v197, %v197
      %v202 = vmul.f32 %v198, %v198
      %v203 = vmul.f32 %v199, %v199
      %204 = vadd.xlane.f32.xlu0 %v200
      %v205 = vpop.xlane.xlu0 %204
      %206 = vadd.xlane.f32.xlu0 %v201
      %v207 = vpop.xlane.xlu0 %206
      %208 = vadd.xlane.f32.xlu0 %v202
      %v209 = vpop.xlane.xlu0 %208
      %210 = vadd.xlane.f32.xlu0 %v203
      %v211 = vpop.xlane.xlu0 %210
      %v212 = vmul.f32 %v205, 0.007874016
      %v213 = vmul.f32 %v207, 0.007874016
      %v214 = vmul.f32 %v209, 0.007874016
      %v215 = vmul.f32 %v211, 0.007874016
      %v216 = vrsqrt.pop %v212
      %v217 = vmul.f32 %v212, %v216
      %vm218 = vcmp.eq.f32.partialorder %v212, inf
      %v219 = vsel %vm218, %v212, %v217
      %vm220 = vcmp.eq.f32.partialorder %v212, 0.0
      %v221 = vand.u32 %v212, 2147483648
      %v222 = vsel %vm220, %v221, %v219
      %v223 = vrsqrt.pop %v213
      %v224 = vmul.f32 %v213, %v223
      %vm225 = vcmp.eq.f32.partialorder %v213, inf
      %v226 = vsel %vm225, %v213, %v224
      %vm227 = vcmp.eq.f32.partialorder %v213, 0.0
      %v228 = vand.u32 %v213, 2147483648
      %v229 = vsel %vm227, %v228, %v226
      %v230 = vrsqrt.pop %v214
      %v231 = vmul.f32 %v214, %v230
      %vm232 = vcmp.eq.f32.partialorder %v214, inf
      %v233 = vsel %vm232, %v214, %v231
      %vm234 = vcmp.eq.f32.partialorder %v214, 0.0
      %v235 = vand.u32 %v214, 2147483648
      %v236 = vsel %vm234, %v235, %v233
      %v237 = vrsqrt.pop %v215
      %v238 = vmul.f32 %v215, %v237
      %vm239 = vcmp.eq.f32.partialorder %v215, inf
      %v240 = vsel %vm239, %v215, %v238
      %vm241 = vcmp.eq.f32.partialorder %v215, 0.0
      %v242 = vand.u32 %v215, 2147483648
      %v243 = vsel %vm241, %v242, %v240
      %v244 = vadd.f32 %v222, 1e-06
      %v245 = vadd.f32 %v229, 1e-06
      %v246 = vadd.f32 %v236, 1e-06
      %v247 = vadd.f32 %v243, 1e-06
      %v248 = vrcp.pop %v244
      %v249 = vmul.f32 %v196, %v248
      %v250 = vrcp.pop %v245
      %v251 = vmul.f32 %v197, %v250
      %v252 = vrcp.pop %v246
      %v253 = vmul.f32 %v198, %v252
      %v254 = vrcp.pop %v247
      %v255 = vmul.f32 %v199, %v254
      %v257 = vlaneseq
      %v258 = vshrl.u32 %v257, 7
      %v259 = vsub.s32 0, %v258
      %v260 = vrot.slane %v181, %v259
      %v262 = vmul.f32 %v260, %v249
      %v263 = vmul.f32 %v260, %v251
      %v264 = vmul.f32 %v260, %v253
      %v265 = vmul.f32 %v260, %v255
      %v267 = vlaneseq
      %v268 = vshrl.u32 %v267, 7
      %v269 = vsub.s32 0, %v268
      %v270 = vrot.slane %v182, %v269
      %v272 = vadd.f32 %v262, %v270
      %v273 = vadd.f32 %v263, %v270
      %v274 = vadd.f32 %v264, %v270
      %v275 = vadd.f32 %v265, %v270
      %v276 = vpack.c.bf16 %v273, %v272
      %v277 = vpack.c.bf16 %v275, %v274
      %v278 = vld [vmem:[#allocation12] sm:$0xf]
      %v279 = vld [vmem:[#allocation12 + $0x4] sm:$0xf]
      %v280 = vld [vmem:[#allocation12 + $0x8] sm:$0xf]
      %v281 = vld [vmem:[#allocation12 + $0xc] sm:$0xf]
      %v282 = vld [vmem:[#allocation12 + $0x10] sm:$0xf]
      %v283 = vld [vmem:[#allocation12 + $0x14] sm:$0xf]
      %v284 = vld [vmem:[#allocation12 + $0x18] sm:$0xf]
      %v285 = vld [vmem:[#allocation12 + $0x1c] sm:$0xf]
      %v286 = vld [vmem:[#allocation12 + $0x20] sm:$0xf]
      %v287 = vld [vmem:[#allocation12 + $0x24] sm:$0xf]
      %v288 = vld [vmem:[#allocation12 + $0x28] sm:$0xf]
      %v289 = vld [vmem:[#allocation12 + $0x2c] sm:$0xf]
      %v290 = vld [vmem:[#allocation12 + $0x30] sm:$0xf]
      %v291 = vld [vmem:[#allocation12 + $0x34] sm:$0xf]
      %v292 = vld [vmem:[#allocation12 + $0x38] sm:$0xf]
      %v293 = vld [vmem:[#allocation12 + $0x3c] sm:$0xf]
      %v294 = vld [vmem:[%s6] sm:$0x1]
      %v296 = vlaneseq
      %v297 = vshrl.u32 %v296, 7
      %v298 = vsub.s32 0, %v297
      %v299 = vrot.slane %v294, %v298
      %v317 = vunpack.c.l.b16 %v278
      %v318 = vunpack.c.l.b16 %v279
      %v319 = vunpack.c.l.b16 %v280
      %v320 = vunpack.c.l.b16 %v281
      %v321 = vunpack.c.l.b16 %v282
      %v322 = vunpack.c.l.b16 %v283
      %v323 = vunpack.c.l.b16 %v284
      %v324 = vunpack.c.l.b16 %v285
      %v325 = vunpack.c.l.b16 %v286
      %v326 = vunpack.c.l.b16 %v287
      %v327 = vunpack.c.l.b16 %v288
      %v328 = vunpack.c.l.b16 %v289
      %v329 = vunpack.c.l.b16 %v290
      %v330 = vunpack.c.l.b16 %v291
      %v331 = vunpack.c.l.b16 %v292
      %v332 = vunpack.c.l.b16 %v293
      %v333 = vpack.c.b16 %v318, %v317
      %v334 = vpack.c.b16 %v320, %v319
      %v335 = vpack.c.b16 %v322, %v321
      %v336 = vpack.c.b16 %v324, %v323
      %v337 = vpack.c.b16 %v326, %v325
      %v338 = vpack.c.b16 %v328, %v327
      %v339 = vpack.c.b16 %v330, %v329
      %v340 = vpack.c.b16 %v332, %v331
      %349 = vmatprep.subr.bf16.mxu0 0
      %350 = vmatpush1.bf16.msra.mxu0 %v340
      %351 = vmatprep.subr.bf16.mxu0 0
      %352 = vmatpush1.bf16.msra.mxu0 %v339
      %353 = vmatprep.subr.bf16.mxu0 0
      %354 = vmatpush1.bf16.msra.mxu0 %v338
      %355 = vmatprep.subr.bf16.mxu0 0
      %356 = vmatpush1.bf16.msra.mxu0 %v337
      %357 = vmatprep.subr.bf16.mxu0 0
      %358 = vmatpush1.bf16.msra.mxu0 %v336
      %359 = vmatprep.subr.bf16.mxu0 0
      %360 = vmatpush1.bf16.msra.mxu0 %v335
      %361 = vmatprep.subr.bf16.mxu0 0
      %362 = vmatpush1.bf16.msra.mxu0 %v334
      %363 = vmatprep.subr.bf16.mxu0 0
      %364 = vmatpush1.bf16.msra.mxu0 %v333
      %365 = vmatprep.subr.bf16.mxu0 0
      %366 = vmatpush2.bf16.msra.mxu0 0
      %367 = vmatprep.subr.bf16.mxu0 0
      %368 = vmatpush2.bf16.msra.mxu0 0
      %369 = vmatprep.subr.bf16.mxu0 0
      %370 = vmatpush2.bf16.msra.mxu0 0
      %371 = vmatprep.subr.bf16.mxu0 0
      %372 = vmatpush2.bf16.msra.mxu0 0
      %373 = vmatprep.subr.bf16.mxu0 0
      %374 = vmatpush2.bf16.msra.mxu0 0
      %375 = vmatprep.subr.bf16.mxu0 0
      %376 = vmatpush2.bf16.msra.mxu0 0
      %377 = vmatprep.subr.bf16.mxu0 0
      %378 = vmatpush2.bf16.msra.mxu0 0
      %379 = vmatprep.subr.bf16.mxu0 0
      %380 = vmatpush2.bf16.msra.mxu0 0
      %381 = vmatprep.mubr.bf16.mxu0 0
      %382 = vmatmul.mubr.bf16.gmra.mxu0 %v276
      %v383 = vpop.f32.mrf.mxu0
      %v384 = vadd.f32 %v299, %v383
      %v385 = vpop.f32.mrf.mxu0
      %v386 = vpop.f32.mrf.mxu0
      %v387 = vadd.f32 %v299, %v386
      %v388 = vpop.f32.mrf.mxu0
      %389 = vmatprep.mubr.bf16.mxu0 0
      %390 = vmatmul.mubr.bf16.gmra.mxu0 %v277
      %v391 = vpop.f32.mrf.mxu0
      %v392 = vadd.f32 %v299, %v391
      %v393 = vpop.f32.mrf.mxu0
      %v394 = vpop.f32.mrf.mxu0
      %v395 = vadd.f32 %v299, %v394
      %v396 = vpop.f32.mrf.mxu0
      %397 = vdwg.mxu0
      %v398 = vld [vmem:[#allocation14] sm:$0xf]
      %v399 = vld [vmem:[#allocation14 + $0x4] sm:$0xf]
      %v400 = vld [vmem:[#allocation14 + $0x8] sm:$0xf]
      %v401 = vld [vmem:[#allocation14 + $0xc] sm:$0xf]
      %v402 = vld [vmem:[#allocation14 + $0x10] sm:$0xf]
      %v403 = vld [vmem:[#allocation14 + $0x14] sm:$0xf]
      %v404 = vld [vmem:[#allocation14 + $0x18] sm:$0xf]
      %v405 = vld [vmem:[#allocation14 + $0x1c] sm:$0xf]
      %v406 = vld [vmem:[#allocation14 + $0x20] sm:$0xf]
      %v407 = vld [vmem:[#allocation14 + $0x24] sm:$0xf]
      %v408 = vld [vmem:[#allocation14 + $0x28] sm:$0xf]
      %v409 = vld [vmem:[#allocation14 + $0x2c] sm:$0xf]
      %v410 = vld [vmem:[#allocation14 + $0x30] sm:$0xf]
      %v411 = vld [vmem:[#allocation14 + $0x34] sm:$0xf]
      %v412 = vld [vmem:[#allocation14 + $0x38] sm:$0xf]
      %v413 = vld [vmem:[#allocation14 + $0x3c] sm:$0xf]
      %v414 = vld [vmem:[%s8] sm:$0x1]
      %v416 = vlaneseq
      %v417 = vshrl.u32 %v416, 7
      %v418 = vsub.s32 0, %v417
      %v419 = vrot.slane %v414, %v418
      %v437 = vunpack.c.l.b16 %v398
      %v438 = vunpack.c.l.b16 %v399
      %v439 = vunpack.c.l.b16 %v400
      %v440 = vunpack.c.l.b16 %v401
      %v441 = vunpack.c.l.b16 %v402
      %v442 = vunpack.c.l.b16 %v403
      %v443 = vunpack.c.l.b16 %v404
      %v444 = vunpack.c.l.b16 %v405
      %v445 = vunpack.c.l.b16 %v406
      %v446 = vunpack.c.l.b16 %v407
      %v447 = vunpack.c.l.b16 %v408
      %v448 = vunpack.c.l.b16 %v409
      %v449 = vunpack.c.l.b16 %v410
      %v450 = vunpack.c.l.b16 %v411
      %v451 = vunpack.c.l.b16 %v412
      %v452 = vunpack.c.l.b16 %v413
      %v453 = vpack.c.b16 %v438, %v437
      %v454 = vpack.c.b16 %v440, %v439
      %v455 = vpack.c.b16 %v442, %v441
      %v456 = vpack.c.b16 %v444, %v443
      %v457 = vpack.c.b16 %v446, %v445
      %v458 = vpack.c.b16 %v448, %v447
      %v459 = vpack.c.b16 %v450, %v449
      %v460 = vpack.c.b16 %v452, %v451
      %469 = vmatprep.subr.bf16.mxu0 0
      %470 = vmatpush1.bf16.msra.mxu0 %v460
      %471 = vmatprep.subr.bf16.mxu0 0
      %472 = vmatpush1.bf16.msra.mxu0 %v459
      %473 = vmatprep.subr.bf16.mxu0 0
      %474 = vmatpush1.bf16.msra.mxu0 %v458
      %475 = vmatprep.subr.bf16.mxu0 0
      %476 = vmatpush1.bf16.msra.mxu0 %v457
      %477 = vmatprep.subr.bf16.mxu0 0
      %478 = vmatpush1.bf16.msra.mxu0 %v456
      %479 = vmatprep.subr.bf16.mxu0 0
      %480 = vmatpush1.bf16.msra.mxu0 %v455
      %481 = vmatprep.subr.bf16.mxu0 0
      %482 = vmatpush1.bf16.msra.mxu0 %v454
      %483 = vmatprep.subr.bf16.mxu0 0
      %484 = vmatpush1.bf16.msra.mxu0 %v453
      %485 = vmatprep.subr.bf16.mxu0 0
      %486 = vmatpush2.bf16.msra.mxu0 0
      %487 = vmatprep.subr.bf16.mxu0 0
      %488 = vmatpush2.bf16.msra.mxu0 0
      %489 = vmatprep.subr.bf16.mxu0 0
      %490 = vmatpush2.bf16.msra.mxu0 0
      %491 = vmatprep.subr.bf16.mxu0 0
      %492 = vmatpush2.bf16.msra.mxu0 0
      %493 = vmatprep.subr.bf16.mxu0 0
      %494 = vmatpush2.bf16.msra.mxu0 0
      %495 = vmatprep.subr.bf16.mxu0 0
      %496 = vmatpush2.bf16.msra.mxu0 0
      %497 = vmatprep.subr.bf16.mxu0 0
      %498 = vmatpush2.bf16.msra.mxu0 0
      %499 = vmatprep.subr.bf16.mxu0 0
      %500 = vmatpush2.bf16.msra.mxu0 0
      %501 = vmatprep.mubr.bf16.mxu0 0
      %502 = vmatmul.mubr.bf16.gmra.mxu0 %v276
      %v503 = vpop.f32.mrf.mxu0
      %v504 = vadd.f32 %v419, %v503
      %v505 = vpop.f32.mrf.mxu0
      %v506 = vpop.f32.mrf.mxu0
      %v507 = vadd.f32 %v419, %v506
      %v508 = vpop.f32.mrf.mxu0
      %509 = vmatprep.mubr.bf16.mxu0 0
      %510 = vmatmul.mubr.bf16.gmra.mxu0 %v277
      %v511 = vpop.f32.mrf.mxu0
      %v512 = vadd.f32 %v419, %v511
      %v513 = vpop.f32.mrf.mxu0
      %v514 = vpop.f32.mrf.mxu0
      %v515 = vadd.f32 %v419, %v514
      %v516 = vpop.f32.mrf.mxu0
      %517 = vdwg.mxu0
      %v518 = vpack.c.bf16 %v387, %v384
      %v519 = vpack.c.bf16 %v395, %v392
      %v522 = vunpack.c.l.b16 %v518
      %v523 = vunpack.c.h.b16 %v518
      %v524 = vunpack.c.l.b16 %v519
      %v525 = vunpack.c.h.b16 %v519
      %v526 = vpack.c.b16 %v522, %v522
      %v527 = vpack.c.b16 %v523, %v523
      %v528 = vpack.c.b16 %v524, %v524
      %v529 = vpack.c.b16 %v525, %v525
      %534 = vst [vmem:[#allocation2] sm:$0xf] %v526
      %535 = vst [vmem:[#allocation2 + $0x4] sm:$0xf] %v527
      %536 = vst [vmem:[#allocation2 + $0x8] sm:$0xf] %v528
      %537 = vst [vmem:[#allocation2 + $0xc] sm:$0xf] %v529
      %v538 = vpack.c.bf16 %v507, %v504
      %v539 = vpack.c.bf16 %v515, %v512
      %v542 = vunpack.c.l.b16 %v538
      %v543 = vunpack.c.h.b16 %v538
      %v544 = vunpack.c.l.b16 %v539
      %v545 = vunpack.c.h.b16 %v539
      %v546 = vpack.c.b16 %v542, %v542
      %v547 = vpack.c.b16 %v543, %v543
      %v548 = vpack.c.b16 %v544, %v544
      %v549 = vpack.c.b16 %v545, %v545
      %554 = vst [vmem:[#allocation3] sm:$0xf] %v546
      %555 = vst [vmem:[#allocation3 + $0x4] sm:$0xf] %v547
      %556 = vst [vmem:[#allocation3 + $0x8] sm:$0xf] %v548
      %557 = vst [vmem:[#allocation3 + $0xc] sm:$0xf] %v549
    $region113: #{tpu_custom_call.1} parent=1 // pred_fallthru
      _
    %v558 = vld [vmem:[#allocation9] sm:$0xff]
    %v559 = vld [vmem:[#allocation9 + $0x8] sm:$0xff]
    %v560 = vld [vmem:[#allocation9 + $0x10] sm:$0xff]
    %v561 = vld [vmem:[#allocation9 + $0x18] sm:$0xff]
    %v562 = vld [vmem:[%s11] sm:$0x1]
    %v563 = vld [vmem:[%s12] sm:$0x1]
    %564 = vadd.xlane.f32.xlu0 %v558
    %v565 = vpop.xlane.xlu0 %564
    %566 = vadd.xlane.f32.xlu0 %v559
    %v567 = vpop.xlane.xlu0 %566
    %568 = vadd.xlane.f32.xlu0 %v560
    %v569 = vpop.xlane.xlu0 %568
    %570 = vadd.xlane.f32.xlu0 %v561
    %v571 = vpop.xlane.xlu0 %570
    %v572 = vrcp.pop 128.0
    %v573 = vmul.f32 %v565, %v572
    %v574 = vmul.f32 %v567, %v572
    %v575 = vmul.f32 %v569, %v572
    %v576 = vmul.f32 %v571, %v572
    %v577 = vsub.f32 %v558, %v573
    %v578 = vsub.f32 %v559, %v574
    %v579 = vsub.f32 %v560, %v575
    %v580 = vsub.f32 %v561, %v576
    %v581 = vmul.f32 %v577, %v577
    %v582 = vmul.f32 %v578, %v578
    %v583 = vmul.f32 %v579, %v579
    %v584 = vmul.f32 %v580, %v580
    %585 = vadd.xlane.f32.xlu0 %v581
    %v586 = vpop.xlane.xlu0 %585
    %587 = vadd.xlane.f32.xlu0 %v582
    %v588 = vpop.xlane.xlu0 %587
    %589 = vadd.xlane.f32.xlu0 %v583
    %v590 = vpop.xlane.xlu0 %589
    %591 = vadd.xlane.f32.xlu0 %v584
    %v592 = vpop.xlane.xlu0 %591
    %v593 = vmul.f32 %v586, 0.007874016
    %v594 = vmul.f32 %v588, 0.007874016
    %v595 = vmul.f32 %v590, 0.007874016
    %v596 = vmul.f32 %v592, 0.007874016
    %v597 = vrsqrt.pop %v593
    %v598 = vmul.f32 %v593, %v597
    %vm599 = vcmp.eq.f32.partialorder %v593, inf
    %v600 = vsel %vm599, %v593, %v598
    %vm601 = vcmp.eq.f32.partialorder %v593, 0.0
    %v602 = vand.u32 %v593, 2147483648
    %v603 = vsel %vm601, %v602, %v600
    %v604 = vrsqrt.pop %v594
    %v605 = vmul.f32 %v594, %v604
    %vm606 = vcmp.eq.f32.partialorder %v594, inf
    %v607 = vsel %vm606, %v594, %v605
    %vm608 = vcmp.eq.f32.partialorder %v594, 0.0
    %v609 = vand.u32 %v594, 2147483648
    %v610 = vsel %vm608, %v609, %v607
    %v611 = vrsqrt.pop %v595
    %v612 = vmul.f32 %v595, %v611
    %vm613 = vcmp.eq.f32.partialorder %v595, inf
    %v614 = vsel %vm613, %v595, %v612
    %vm615 = vcmp.eq.f32.partialorder %v595, 0.0
    %v616 = vand.u32 %v595, 2147483648
    %v617 = vsel %vm615, %v616, %v614
    %v618 = vrsqrt.pop %v596
    %v619 = vmul.f32 %v596, %v618
    %vm620 = vcmp.eq.f32.partialorder %v596, inf
    %v621 = vsel %vm620, %v596, %v619
    %vm622 = vcmp.eq.f32.partialorder %v596, 0.0
    %v623 = vand.u32 %v596, 2147483648
    %v624 = vsel %vm622, %v623, %v621
    %v625 = vadd.f32 %v603, 1e-06
    %v626 = vadd.f32 %v610, 1e-06
    %v627 = vadd.f32 %v617, 1e-06
    %v628 = vadd.f32 %v624, 1e-06
    %v629 = vrcp.pop %v625
    %v630 = vmul.f32 %v577, %v629
    %v631 = vrcp.pop %v626
    %v632 = vmul.f32 %v578, %v631
    %v633 = vrcp.pop %v627
    %v634 = vmul.f32 %v579, %v633
    %v635 = vrcp.pop %v628
    %v636 = vmul.f32 %v580, %v635
    %v638 = vlaneseq
    %v639 = vshrl.u32 %v638, 7
    %v640 = vsub.s32 0, %v639
    %v641 = vrot.slane %v562, %v640
    %v643 = vmul.f32 %v641, %v630
    %v644 = vmul.f32 %v641, %v632
    %v645 = vmul.f32 %v641, %v634
    %v646 = vmul.f32 %v641, %v636
    %v648 = vlaneseq
    %v649 = vshrl.u32 %v648, 7
    %v650 = vsub.s32 0, %v649
    %v651 = vrot.slane %v563, %v650
    %v653 = vadd.f32 %v643, %v651
    %v654 = vadd.f32 %v644, %v651
    %v655 = vadd.f32 %v645, %v651
    %v656 = vadd.f32 %v646, %v651
    %v657 = vpack.c.bf16 %v654, %v653
    %v658 = vpack.c.bf16 %v656, %v655
    %v659 = vld [vmem:[#allocation11] sm:$0xf]
    %v660 = vld [vmem:[#allocation11 + $0x4] sm:$0xf]
    %v661 = vld [vmem:[#allocation11 + $0x8] sm:$0xf]
    %v662 = vld [vmem:[#allocation11 + $0xc] sm:$0xf]
    %v663 = vld [vmem:[#allocation11 + $0x10] sm:$0xf]
    %v664 = vld [vmem:[#allocation11 + $0x14] sm:$0xf]
    %v665 = vld [vmem:[#allocation11 + $0x18] sm:$0xf]
    %v666 = vld [vmem:[#allocation11 + $0x1c] sm:$0xf]
    %v667 = vld [vmem:[#allocation11 + $0x20] sm:$0xf]
    %v668 = vld [vmem:[#allocation11 + $0x24] sm:$0xf]
    %v669 = vld [vmem:[#allocation11 + $0x28] sm:$0xf]
    %v670 = vld [vmem:[#allocation11 + $0x2c] sm:$0xf]
    %v671 = vld [vmem:[#allocation11 + $0x30] sm:$0xf]
    %v672 = vld [vmem:[#allocation11 + $0x34] sm:$0xf]
    %v673 = vld [vmem:[#allocation11 + $0x38] sm:$0xf]
    %v674 = vld [vmem:[#allocation11 + $0x3c] sm:$0xf]
    %v675 = vld [vmem:[%s4] sm:$0x1]
    %v677 = vlaneseq
    %v678 = vshrl.u32 %v677, 7
    %v679 = vsub.s32 0, %v678
    %v680 = vrot.slane %v675, %v679
    %v698 = vunpack.c.l.b16 %v659
    %v699 = vunpack.c.l.b16 %v660
    %v700 = vunpack.c.l.b16 %v661
    %v701 = vunpack.c.l.b16 %v662
    %v702 = vunpack.c.l.b16 %v663
    %v703 = vunpack.c.l.b16 %v664
    %v704 = vunpack.c.l.b16 %v665
    %v705 = vunpack.c.l.b16 %v666
    %v706 = vunpack.c.l.b16 %v667
    %v707 = vunpack.c.l.b16 %v668
    %v708 = vunpack.c.l.b16 %v669
    %v709 = vunpack.c.l.b16 %v670
    %v710 = vunpack.c.l.b16 %v671
    %v711 = vunpack.c.l.b16 %v672
    %v712 = vunpack.c.l.b16 %v673
    %v713 = vunpack.c.l.b16 %v674
    %v714 = vpack.c.b16 %v699, %v698
    %v715 = vpack.c.b16 %v701, %v700
    %v716 = vpack.c.b16 %v703, %v702
    %v717 = vpack.c.b16 %v705, %v704
    %v718 = vpack.c.b16 %v707, %v706
    %v719 = vpack.c.b16 %v709, %v708
    %v720 = vpack.c.b16 %v711, %v710
    %v721 = vpack.c.b16 %v713, %v712
    %730 = vmatprep.subr.bf16.mxu0 0
    %731 = vmatpush1.bf16.msra.mxu0 %v721
    %732 = vmatprep.subr.bf16.mxu0 0
    %733 = vmatpush1.bf16.msra.mxu0 %v720
    %734 = vmatprep.subr.bf16.mxu0 0
    %735 = vmatpush1.bf16.msra.mxu0 %v719
    %736 = vmatprep.subr.bf16.mxu0 0
    %737 = vmatpush1.bf16.msra.mxu0 %v718
    %738 = vmatprep.subr.bf16.mxu0 0
    %739 = vmatpush1.bf16.msra.mxu0 %v717
    %740 = vmatprep.subr.bf16.mxu0 0
    %741 = vmatpush1.bf16.msra.mxu0 %v716
    %742 = vmatprep.subr.bf16.mxu0 0
    %743 = vmatpush1.bf16.msra.mxu0 %v715
    %744 = vmatprep.subr.bf16.mxu0 0
    %745 = vmatpush1.bf16.msra.mxu0 %v714
    %746 = vmatprep.subr.bf16.mxu0 0
    %747 = vmatpush2.bf16.msra.mxu0 0
    %748 = vmatprep.subr.bf16.mxu0 0
    %749 = vmatpush2.bf16.msra.mxu0 0
    %750 = vmatprep.subr.bf16.mxu0 0
    %751 = vmatpush2.bf16.msra.mxu0 0
    %752 = vmatprep.subr.bf16.mxu0 0
    %753 = vmatpush2.bf16.msra.mxu0 0
    %754 = vmatprep.subr.bf16.mxu0 0
    %755 = vmatpush2.bf16.msra.mxu0 0
    %756 = vmatprep.subr.bf16.mxu0 0
    %757 = vmatpush2.bf16.msra.mxu0 0
    %758 = vmatprep.subr.bf16.mxu0 0
    %759 = vmatpush2.bf16.msra.mxu0 0
    %760 = vmatprep.subr.bf16.mxu0 0
    %761 = vmatpush2.bf16.msra.mxu0 0
    %762 = vmatprep.mubr.bf16.mxu0 0
    %763 = vmatmul.mubr.bf16.gmra.mxu0 %v657
    %v764 = vpop.f32.mrf.mxu0
    %v765 = vadd.f32 %v680, %v764
    %v766 = vpop.f32.mrf.mxu0
    %v767 = vpop.f32.mrf.mxu0
    %v768 = vadd.f32 %v680, %v767
    %v769 = vpop.f32.mrf.mxu0
    %770 = vmatprep.mubr.bf16.mxu0 0
    %771 = vmatmul.mubr.bf16.gmra.mxu0 %v658
    %v772 = vpop.f32.mrf.mxu0
    %v773 = vadd.f32 %v680, %v772
    %v774 = vpop.f32.mrf.mxu0
    %v775 = vpop.f32.mrf.mxu0
    %v776 = vadd.f32 %v680, %v775
    %v777 = vpop.f32.mrf.mxu0
    %778 = vdwg.mxu0
    %v779 = vmul.f32 %v765, 0.17677669
    %v780 = vmul.f32 %v768, 0.17677669
    %v781 = vmul.f32 %v773, 0.17677669
    %v782 = vmul.f32 %v776, 0.17677669
    %v783 = vpack.c.bf16 %v780, %v779
    %v784 = vpack.c.bf16 %v782, %v781
    %v785 = vld [vmem:[%s2] sm:$0x1]
    %vm786 = vcmp.gt.f32.partialorder %v785, 0.0
    %v787 = vsel %vm786, 0.0, -1e+09
    %v789 = vlaneseq
    %v790 = vshrl.u32 %v789, 7
    %v791 = vsub.s32 0, %v790
    %v792 = vrot.slane %v787, %v791
    %v794 = vld [vmem:[#allocation2] sm:$0xf]
    %v795 = vld [vmem:[#allocation2 + $0x4] sm:$0xf]
    %v796 = vld [vmem:[#allocation3] sm:$0xf]
    %v797 = vld [vmem:[#allocation3 + $0x4] sm:$0xf]
    %v800 = vunpack.c.l.b16 %v794
    %v801 = vunpack.c.l.b16 %v795
    %v802 = vpack.c.b16 %v801, %v800
    %vm803 = vcmask 261120
    %v805 = vsel %vm803, %v783, 0
    %v808 = vsel %vm803, %v802, 0
    %810 = vmatprep.subr.bf16.mxu0 0
    %811 = vmatpush1.bf16.xpose.msra.mxu0 0
    %812 = vmatprep.subr.bf16.mxu0 0
    %813 = vmatpush1.bf16.xpose.msra.mxu0 0
    %814 = vmatprep.subr.bf16.mxu0 0
    %815 = vmatpush1.bf16.xpose.msra.mxu0 0
    %816 = vmatprep.subr.bf16.mxu0 0
    %817 = vmatpush1.bf16.xpose.msra.mxu0 0
    %818 = vmatprep.subr.bf16.mxu0 0
    %819 = vmatpush1.bf16.xpose.msra.mxu0 0
    %820 = vmatprep.subr.bf16.mxu0 0
    %821 = vmatpush1.bf16.xpose.msra.mxu0 0
    %822 = vmatprep.subr.bf16.mxu0 0
    %823 = vmatpush1.bf16.xpose.msra.mxu0 0
    %824 = vmatprep.subr.bf16.mxu0 0
    %825 = vmatpush1.bf16.xpose.msra.mxu0 %v808
    %826 = vmatprep.subr.bf16.mxu0 0
    %827 = vmatpush2.bf16.xpose.msra.mxu0 0
    %828 = vmatprep.subr.bf16.mxu0 0
    %829 = vmatpush2.bf16.xpose.msra.mxu0 0
    %830 = vmatprep.subr.bf16.mxu0 0
    %831 = vmatpush2.bf16.xpose.msra.mxu0 0
    %832 = vmatprep.subr.bf16.mxu0 0
    %833 = vmatpush2.bf16.xpose.msra.mxu0 0
    %834 = vmatprep.subr.bf16.mxu0 0
    %835 = vmatpush2.bf16.xpose.msra.mxu0 0
    %836 = vmatprep.subr.bf16.mxu0 0
    %837 = vmatpush2.bf16.xpose.msra.mxu0 0
    %838 = vmatprep.subr.bf16.mxu0 0
    %839 = vmatpush2.bf16.xpose.msra.mxu0 0
    %840 = vmatprep.subr.bf16.mxu0 0
    %841 = vmatpush2.bf16.xpose.msra.mxu0 0
    %842 = vmatprep.mubr.bf16.mxu0 0
    %843 = vmatmul.mubr.bf16.gmra.mxu0 %v805
    %v844 = vpop.f32.mrf.mxu0
    %v845 = vadd.f32 %v792, %v844
    %v846 = vpop.f32.mrf.mxu0
    %v847 = vpop.f32.mrf.mxu0
    %v848 = vadd.f32 %v792, %v847
    %v849 = vpop.f32.mrf.mxu0
    %850 = vdwg.mxu0
    %vm851 = vcmask 130048
    %v852 = vsel %vm851, %v845, -inf
    %853 = vmax.xlane.f32.xlu0 %v852
    %v854 = vpop.xlane.xlu0 %853
    %v855 = vsel %vm851, %v848, -inf
    %856 = vmax.xlane.f32.xlu0 %v855
    %v857 = vpop.xlane.xlu0 %856
    %v858 = vsub.f32 %v845, %v854
    %v859 = vsub.f32 %v848, %v857
    %v860 = vmul.f32 %v858, 1.442695
    %v861 = vpow.pop %v860
    %v862 = vmul.f32 %v859, 1.442695
    %v863 = vpow.pop %v862
    %v864 = vsel %vm851, %v861, 0.0
    %865 = vadd.xlane.f32.xlu0 %v864
    %v866 = vpop.xlane.xlu0 %865
    %v867 = vsel %vm851, %v863, 0.0
    %868 = vadd.xlane.f32.xlu0 %v867
    %v869 = vpop.xlane.xlu0 %868
    %v870 = vrcp.pop %v866
    %v871 = vrcp.pop %v869
    %v872 = vmul.f32 %v861, %v870
    %v873 = vmul.f32 %v863, %v871
    %v874 = vpack.c.bf16 %v873, %v872
    %v877 = vunpack.c.l.b16 %v796
    %v878 = vunpack.c.l.b16 %v797
    %v879 = vpack.c.b16 %v878, %v877
    %v882 = vsel %vm851, %v874, 0
    %884 = vmatprep.subr.bf16.mxu0 0
    %885 = vmatpush1.bf16.msra.mxu0 0
    %886 = vmatprep.subr.bf16.mxu0 0
    %887 = vmatpush1.bf16.msra.mxu0 0
    %888 = vmatprep.subr.bf16.mxu0 0
    %889 = vmatpush1.bf16.msra.mxu0 0
    %890 = vmatprep.subr.bf16.mxu0 0
    %891 = vmatpush1.bf16.msra.mxu0 0
    %892 = vmatprep.subr.bf16.mxu0 0
    %893 = vmatpush1.bf16.msra.mxu0 0
    %894 = vmatprep.subr.bf16.mxu0 0
    %895 = vmatpush1.bf16.msra.mxu0 0
    %896 = vmatprep.subr.bf16.mxu0 0
    %897 = vmatpush1.bf16.msra.mxu0 0
    %898 = vmatprep.subr.bf16.mxu0 0
    %899 = vmatpush1.bf16.msra.mxu0 %v879
    %900 = vmatprep.subr.bf16.mxu0 0
    %901 = vmatpush2.bf16.msra.mxu0 0
    %902 = vmatprep.subr.bf16.mxu0 0
    %903 = vmatpush2.bf16.msra.mxu0 0
    %904 = vmatprep.subr.bf16.mxu0 0
    %905 = vmatpush2.bf16.msra.mxu0 0
    %906 = vmatprep.subr.bf16.mxu0 0
    %907 = vmatpush2.bf16.msra.mxu0 0
    %908 = vmatprep.subr.bf16.mxu0 0
    %909 = vmatpush2.bf16.msra.mxu0 0
    %910 = vmatprep.subr.bf16.mxu0 0
    %911 = vmatpush2.bf16.msra.mxu0 0
    %912 = vmatprep.subr.bf16.mxu0 0
    %913 = vmatpush2.bf16.msra.mxu0 0
    %914 = vmatprep.subr.bf16.mxu0 0
    %915 = vmatpush2.bf16.msra.mxu0 0
    %916 = vmatprep.mubr.bf16.mxu0 0
    %917 = vmatmul.mubr.bf16.gmra.mxu0 %v882
    %v918 = vpop.f32.mrf.mxu0
    %v919 = vadd.f32 0.0, %v918
    %v920 = vpop.f32.mrf.mxu0
    %v921 = vpop.f32.mrf.mxu0
    %v922 = vadd.f32 0.0, %v921
    %v923 = vpop.f32.mrf.mxu0
    %924 = vdwg.mxu0
    %v925 = vpack.c.bf16 %v922, %v919
    %v927 = vunpack.c.l.b16 %v925
    %v928 = vunpack.c.h.b16 %v925
    %v929 = vpack.c.b16 %v927, %v927
    %v930 = vpack.c.b16 %v928, %v928
    %vm933 = vcmask 257024
    %934 = vst.msk [vmem:[#allocation4] sm:$0xf] %vm933, %v929
    %935 = vst.msk [vmem:[#allocation4 + $0x4] sm:$0xf] %vm933, %v930
    %937 = vrot.lane.b32.xlu0 %v783, 96
    %v938 = vpop.permute.xlu0 %937
    %939 = vrot.lane.b32.xlu0 %v802, 96
    %v940 = vpop.permute.xlu0 %939
    %v942 = vsel %vm803, %v938, 0
    %v945 = vsel %vm803, %v940, 0
    %947 = vmatprep.subr.bf16.mxu0 0
    %948 = vmatpush1.bf16.xpose.msra.mxu0 0
    %949 = vmatprep.subr.bf16.mxu0 0
    %950 = vmatpush1.bf16.xpose.msra.mxu0 0
    %951 = vmatprep.subr.bf16.mxu0 0
    %952 = vmatpush1.bf16.xpose.msra.mxu0 0
    %953 = vmatprep.subr.bf16.mxu0 0
    %954 = vmatpush1.bf16.xpose.msra.mxu0 0
    %955 = vmatprep.subr.bf16.mxu0 0
    %956 = vmatpush1.bf16.xpose.msra.mxu0 0
    %957 = vmatprep.subr.bf16.mxu0 0
    %958 = vmatpush1.bf16.xpose.msra.mxu0 0
    %959 = vmatprep.subr.bf16.mxu0 0
    %960 = vmatpush1.bf16.xpose.msra.mxu0 0
    %961 = vmatprep.subr.bf16.mxu0 0
    %962 = vmatpush1.bf16.xpose.msra.mxu0 %v945
    %963 = vmatprep.subr.bf16.mxu0 0
    %964 = vmatpush2.bf16.xpose.msra.mxu0 0
    %965 = vmatprep.subr.bf16.mxu0 0
    %966 = vmatpush2.bf16.xpose.msra.mxu0 0
    %967 = vmatprep.subr.bf16.mxu0 0
    %968 = vmatpush2.bf16.xpose.msra.mxu0 0
    %969 = vmatprep.subr.bf16.mxu0 0
    %970 = vmatpush2.bf16.xpose.msra.mxu0 0
    %971 = vmatprep.subr.bf16.mxu0 0
    %972 = vmatpush2.bf16.xpose.msra.mxu0 0
    %973 = vmatprep.subr.bf16.mxu0 0
    %974 = vmatpush2.bf16.xpose.msra.mxu0 0
    %975 = vmatprep.subr.bf16.mxu0 0
    %976 = vmatpush2.bf16.xpose.msra.mxu0 0
    %977 = vmatprep.subr.bf16.mxu0 0
    %978 = vmatpush2.bf16.xpose.msra.mxu0 0
    %979 = vmatprep.mubr.bf16.mxu0 0
    %980 = vmatmul.mubr.bf16.gmra.mxu0 %v942
    %v981 = vpop.f32.mrf.mxu0
    %v982 = vadd.f32 %v792, %v981
    %v983 = vpop.f32.mrf.mxu0
    %v984 = vpop.f32.mrf.mxu0
    %v985 = vadd.f32 %v792, %v984
    %v986 = vpop.f32.mrf.mxu0
    %987 = vdwg.mxu0
    %v988 = vsel %vm851, %v982, -inf
    %989 = vmax.xlane.f32.xlu0 %v988
    %v990 = vpop.xlane.xlu0 %989
    %v991 = vsel %vm851, %v985, -inf
    %992 = vmax.xlane.f32.xlu0 %v991
    %v993 = vpop.xlane.xlu0 %992
    %v994 = vsub.f32 %v982, %v990
    %v995 = vsub.f32 %v985, %v993
    %v996 = vmul.f32 %v994, 1.442695
    %v997 = vpow.pop %v996
    %v998 = vmul.f32 %v995, 1.442695
    %v999 = vpow.pop %v998
    %v1000 = vsel %vm851, %v997, 0.0
    %1001 = vadd.xlane.f32.xlu0 %v1000
    %v1002 = vpop.xlane.xlu0 %1001
    %v1003 = vsel %vm851, %v999, 0.0
    %1004 = vadd.xlane.f32.xlu0 %v1003
    %v1005 = vpop.xlane.xlu0 %1004
    %v1006 = vrcp.pop %v1002
    %v1007 = vrcp.pop %v1005
    %v1008 = vmul.f32 %v997, %v1006
    %v1009 = vmul.f32 %v999, %v1007
    %v1010 = vpack.c.bf16 %v1009, %v1008
    %1011 = vrot.lane.b32.xlu0 %v879, 96
    %v1012 = vpop.permute.xlu0 %1011
    %v1015 = vsel %vm851, %v1010, 0
    %1017 = vmatprep.subr.bf16.mxu0 0
    %1018 = vmatpush1.bf16.msra.mxu0 0
    %1019 = vmatprep.subr.bf16.mxu0 0
    %1020 = vmatpush1.bf16.msra.mxu0 0
    %1021 = vmatprep.subr.bf16.mxu0 0
    %1022 = vmatpush1.bf16.msra.mxu0 0
    %1023 = vmatprep.subr.bf16.mxu0 0
    %1024 = vmatpush1.bf16.msra.mxu0 0
    %1025 = vmatprep.subr.bf16.mxu0 0
    %1026 = vmatpush1.bf16.msra.mxu0 0
    %1027 = vmatprep.subr.bf16.mxu0 0
    %1028 = vmatpush1.bf16.msra.mxu0 0
    %1029 = vmatprep.subr.bf16.mxu0 0
    %1030 = vmatpush1.bf16.msra.mxu0 0
    %1031 = vmatprep.subr.bf16.mxu0 0
    %1032 = vmatpush1.bf16.msra.mxu0 %v1012
    %1033 = vmatprep.subr.bf16.mxu0 0
    %1034 = vmatpush2.bf16.msra.mxu0 0
    %1035 = vmatprep.subr.bf16.mxu0 0
    %1036 = vmatpush2.bf16.msra.mxu0 0
    %1037 = vmatprep.subr.bf16.mxu0 0
    %1038 = vmatpush2.bf16.msra.mxu0 0
    %1039 = vmatprep.subr.bf16.mxu0 0
    %1040 = vmatpush2.bf16.msra.mxu0 0
    %1041 = vmatprep.subr.bf16.mxu0 0
    %1042 = vmatpush2.bf16.msra.mxu0 0
    %1043 = vmatprep.subr.bf16.mxu0 0
    %1044 = vmatpush2.bf16.msra.mxu0 0
    %1045 = vmatprep.subr.bf16.mxu0 0
    %1046 = vmatpush2.bf16.msra.mxu0 0
    %1047 = vmatprep.subr.bf16.mxu0 0
    %1048 = vmatpush2.bf16.msra.mxu0 0
    %1049 = vmatprep.mubr.bf16.mxu0 0
    %1050 = vmatmul.mubr.bf16.gmra.mxu0 %v1015
    %v1051 = vpop.f32.mrf.mxu0
    %v1052 = vadd.f32 0.0, %v1051
    %v1053 = vpop.f32.mrf.mxu0
    %v1054 = vpop.f32.mrf.mxu0
    %v1055 = vadd.f32 0.0, %v1054
    %v1056 = vpop.f32.mrf.mxu0
    %1057 = vdwg.mxu0
    %v1058 = vpack.c.bf16 %v1055, %v1052
    %v1060 = vunpack.c.l.b16 %v1058
    %v1061 = vunpack.c.h.b16 %v1058
    %v1062 = vpack.c.b16 %v1060, %v1060
    %v1063 = vpack.c.b16 %v1061, %v1061
    %1064 = vrot.lane.b32.xlu0 %v1062, 32
    %v1065 = vpop.permute.xlu0 %1064
    %1066 = vrot.lane.b32.xlu0 %v1063, 32
    %v1067 = vpop.permute.xlu0 %1066
    %vm1070 = vcmask 519424
    %1071 = vst.msk [vmem:[#allocation4] sm:$0xf] %vm1070, %v1065
    %1072 = vst.msk [vmem:[#allocation4 + $0x4] sm:$0xf] %vm1070, %v1067
    %1073 = vrot.lane.b32.xlu0 %v783, 64
    %v1074 = vpop.permute.xlu0 %1073
    %1075 = vrot.lane.b32.xlu0 %v802, 64
    %v1076 = vpop.permute.xlu0 %1075
    %v1078 = vsel %vm803, %v1074, 0
    %v1081 = vsel %vm803, %v1076, 0
    %1083 = vmatprep.subr.bf16.mxu0 0
    %1084 = vmatpush1.bf16.xpose.msra.mxu0 0
    %1085 = vmatprep.subr.bf16.mxu0 0
    %1086 = vmatpush1.bf16.xpose.msra.mxu0 0
    %1087 = vmatprep.subr.bf16.mxu0 0
    %1088 = vmatpush1.bf16.xpose.msra.mxu0 0
    %1089 = vmatprep.subr.bf16.mxu0 0
    %1090 = vmatpush1.bf16.xpose.msra.mxu0 0
    %1091 = vmatprep.subr.bf16.mxu0 0
    %1092 = vmatpush1.bf16.xpose.msra.mxu0 0
    %1093 = vmatprep.subr.bf16.mxu0 0
    %1094 = vmatpush1.bf16.xpose.msra.mxu0 0
    %1095 = vmatprep.subr.bf16.mxu0 0
    %1096 = vmatpush1.bf16.xpose.msra.mxu0 0
    %1097 = vmatprep.subr.bf16.mxu0 0
    %1098 = vmatpush1.bf16.xpose.msra.mxu0 %v1081
    %1099 = vmatprep.subr.bf16.mxu0 0
    %1100 = vmatpush2.bf16.xpose.msra.mxu0 0
    %1101 = vmatprep.subr.bf16.mxu0 0
    %1102 = vmatpush2.bf16.xpose.msra.mxu0 0
    %1103 = vmatprep.subr.bf16.mxu0 0
    %1104 = vmatpush2.bf16.xpose.msra.mxu0 0
    %1105 = vmatprep.subr.bf16.mxu0 0
    %1106 = vmatpush2.bf16.xpose.msra.mxu0 0
    %1107 = vmatprep.subr.bf16.mxu0 0
    %1108 = vmatpush2.bf16.xpose.msra.mxu0 0
    %1109 = vmatprep.subr.bf16.mxu0 0
    %1110 = vmatpush2.bf16.xpose.msra.mxu0 0
    %1111 = vmatprep.subr.bf16.mxu0 0
    %1112 = vmatpush2.bf16.xpose.msra.mxu0 0
    %1113 = vmatprep.subr.bf16.mxu0 0
    %1114 = vmatpush2.bf16.xpose.msra.mxu0 0
    %1115 = vmatprep.mubr.bf16.mxu0 0
    %1116 = vmatmul.mubr.bf16.gmra.mxu0 %v1078
    %v1117 = vpop.f32.mrf.mxu0
    %v1118 = vadd.f32 %v792, %v1117
    %v1119 = vpop.f32.mrf.mxu0
    %v1120 = vpop.f32.mrf.mxu0
    %v1121 = vadd.f32 %v792, %v1120
    %v1122 = vpop.f32.mrf.mxu0
    %1123 = vdwg.mxu0
    %v1124 = vsel %vm851, %v1118, -inf
    %1125 = vmax.xlane.f32.xlu0 %v1124
    %v1126 = vpop.xlane.xlu0 %1125
    %v1127 = vsel %vm851, %v1121, -inf
    %1128 = vmax.xlane.f32.xlu0 %v1127
    %v1129 = vpop.xlane.xlu0 %1128
    %v1130 = vsub.f32 %v1118, %v1126
    %v1131 = vsub.f32 %v1121, %v1129
    %v1132 = vmul.f32 %v1130, 1.442695
    %v1133 = vpow.pop %v1132
    %v1134 = vmul.f32 %v1131, 1.442695
    %v1135 = vpow.pop %v1134
    %v1136 = vsel %vm851, %v1133, 0.0
    %1137 = vadd.xlane.f32.xlu0 %v1136
    %v1138 = vpop.xlane.xlu0 %1137
    %v1139 = vsel %vm851, %v1135, 0.0
    %1140 = vadd.xlane.f32.xlu0 %v1139
    %v1141 = vpop.xlane.xlu0 %1140
    %v1142 = vrcp.pop %v1138
    %v1143 = vrcp.pop %v1141
    %v1144 = vmul.f32 %v1133, %v1142
    %v1145 = vmul.f32 %v1135, %v1143
    %v1146 = vpack.c.bf16 %v1145, %v1144
    %1147 = vrot.lane.b32.xlu0 %v879, 64
    %v1148 = vpop.permute.xlu0 %1147
    %v1151 = vsel %vm851, %v1146, 0
    %1153 = vmatprep.subr.bf16.mxu0 0
    %1154 = vmatpush1.bf16.msra.mxu0 0
    %1155 = vmatprep.subr.bf16.mxu0 0
    %1156 = vmatpush1.bf16.msra.mxu0 0
    %1157 = vmatprep.subr.bf16.mxu0 0
    %1158 = vmatpush1.bf16.msra.mxu0 0
    %1159 = vmatprep.subr.bf16.mxu0 0
    %1160 = vmatpush1.bf16.msra.mxu0 0
    %1161 = vmatprep.subr.bf16.mxu0 0
    %1162 = vmatpush1.bf16.msra.mxu0 0
    %1163 = vmatprep.subr.bf16.mxu0 0
    %1164 = vmatpush1.bf16.msra.mxu0 0
    %1165 = vmatprep.subr.bf16.mxu0 0
    %1166 = vmatpush1.bf16.msra.mxu0 0
    %1167 = vmatprep.subr.bf16.mxu0 0
    %1168 = vmatpush1.bf16.msra.mxu0 %v1148
    %1169 = vmatprep.subr.bf16.mxu0 0
    %1170 = vmatpush2.bf16.msra.mxu0 0
    %1171 = vmatprep.subr.bf16.mxu0 0
    %1172 = vmatpush2.bf16.msra.mxu0 0
    %1173 = vmatprep.subr.bf16.mxu0 0
    %1174 = vmatpush2.bf16.msra.mxu0 0
    %1175 = vmatprep.subr.bf16.mxu0 0
    %1176 = vmatpush2.bf16.msra.mxu0 0
    %1177 = vmatprep.subr.bf16.mxu0 0
    %1178 = vmatpush2.bf16.msra.mxu0 0
    %1179 = vmatprep.subr.bf16.mxu0 0
    %1180 = vmatpush2.bf16.msra.mxu0 0
    %1181 = vmatprep.subr.bf16.mxu0 0
    %1182 = vmatpush2.bf16.msra.mxu0 0
    %1183 = vmatprep.subr.bf16.mxu0 0
    %1184 = vmatpush2.bf16.msra.mxu0 0
    %1185 = vmatprep.mubr.bf16.mxu0 0
    %1186 = vmatmul.mubr.bf16.gmra.mxu0 %v1151
    %v1187 = vpop.f32.mrf.mxu0
    %v1188 = vadd.f32 0.0, %v1187
    %v1189 = vpop.f32.mrf.mxu0
    %v1190 = vpop.f32.mrf.mxu0
    %v1191 = vadd.f32 0.0, %v1190
    %v1192 = vpop.f32.mrf.mxu0
    %1193 = vdwg.mxu0
    %v1194 = vpack.c.bf16 %v1191, %v1188
    %v1196 = vunpack.c.l.b16 %v1194
    %v1197 = vunpack.c.h.b16 %v1194
    %v1198 = vpack.c.b16 %v1196, %v1196
    %v1199 = vpack.c.b16 %v1197, %v1197
    %1200 = vrot.lane.b32.xlu0 %v1198, 64
    %v1201 = vpop.permute.xlu0 %1200
    %1202 = vrot.lane.b32.xlu0 %v1199, 64
    %v1203 = vpop.permute.xlu0 %1202
    %vm1206 = vcmask 781824
    %1207 = vst.msk [vmem:[#allocation4] sm:$0xf] %vm1206, %v1201
    %1208 = vst.msk [vmem:[#allocation4 + $0x4] sm:$0xf] %vm1206, %v1203
    %1209 = vrot.lane.b32.xlu0 %v783, 32
    %v1210 = vpop.permute.xlu0 %1209
    %1211 = vrot.lane.b32.xlu0 %v802, 32
    %v1212 = vpop.permute.xlu0 %1211
    %v1214 = vsel %vm803, %v1210, 0
    %v1217 = vsel %vm803, %v1212, 0
    %1219 = vmatprep.subr.bf16.mxu0 0
    %1220 = vmatpush1.bf16.xpose.msra.mxu0 0
    %1221 = vmatprep.subr.bf16.mxu0 0
    %1222 = vmatpush1.bf16.xpose.msra.mxu0 0
    %1223 = vmatprep.subr.bf16.mxu0 0
    %1224 = vmatpush1.bf16.xpose.msra.mxu0 0
    %1225 = vmatprep.subr.bf16.mxu0 0
    %1226 = vmatpush1.bf16.xpose.msra.mxu0 0
    %1227 = vmatprep.subr.bf16.mxu0 0
    %1228 = vmatpush1.bf16.xpose.msra.mxu0 0
    %1229 = vmatprep.subr.bf16.mxu0 0
    %1230 = vmatpush1.bf16.xpose.msra.mxu0 0
    %1231 = vmatprep.subr.bf16.mxu0 0
    %1232 = vmatpush1.bf16.xpose.msra.mxu0 0
    %1233 = vmatprep.subr.bf16.mxu0 0
    %1234 = vmatpush1.bf16.xpose.msra.mxu0 %v1217
    %1235 = vmatprep.subr.bf16.mxu0 0
    %1236 = vmatpush2.bf16.xpose.msra.mxu0 0
    %1237 = vmatprep.subr.bf16.mxu0 0
    %1238 = vmatpush2.bf16.xpose.msra.mxu0 0
    %1239 = vmatprep.subr.bf16.mxu0 0
    %1240 = vmatpush2.bf16.xpose.msra.mxu0 0
    %1241 = vmatprep.subr.bf16.mxu0 0
    %1242 = vmatpush2.bf16.xpose.msra.mxu0 0
    %1243 = vmatprep.subr.bf16.mxu0 0
    %1244 = vmatpush2.bf16.xpose.msra.mxu0 0
    %1245 = vmatprep.subr.bf16.mxu0 0
    %1246 = vmatpush2.bf16.xpose.msra.mxu0 0
    %1247 = vmatprep.subr.bf16.mxu0 0
    %1248 = vmatpush2.bf16.xpose.msra.mxu0 0
    %1249 = vmatprep.subr.bf16.mxu0 0
    %1250 = vmatpush2.bf16.xpose.msra.mxu0 0
    %1251 = vmatprep.mubr.bf16.mxu0 0
    %1252 = vmatmul.mubr.bf16.gmra.mxu0 %v1214
    %v1253 = vpop.f32.mrf.mxu0
    %v1254 = vadd.f32 %v792, %v1253
    %v1255 = vpop.f32.mrf.mxu0
    %v1256 = vpop.f32.mrf.mxu0
    %v1257 = vadd.f32 %v792, %v1256
    %v1258 = vpop.f32.mrf.mxu0
    %1259 = vdwg.mxu0
    %v1260 = vsel %vm851, %v1254, -inf
    %1261 = vmax.xlane.f32.xlu0 %v1260
    %v1262 = vpop.xlane.xlu0 %1261
    %v1263 = vsel %vm851, %v1257, -inf
    %1264 = vmax.xlane.f32.xlu0 %v1263
    %v1265 = vpop.xlane.xlu0 %1264
    %v1266 = vsub.f32 %v1254, %v1262
    %v1267 = vsub.f32 %v1257, %v1265
    %v1268 = vmul.f32 %v1266, 1.442695
    %v1269 = vpow.pop %v1268
    %v1270 = vmul.f32 %v1267, 1.442695
    %v1271 = vpow.pop %v1270
    %v1272 = vsel %vm851, %v1269, 0.0
    %1273 = vadd.xlane.f32.xlu0 %v1272
    %v1274 = vpop.xlane.xlu0 %1273
    %v1275 = vsel %vm851, %v1271, 0.0
    %1276 = vadd.xlane.f32.xlu0 %v1275
    %v1277 = vpop.xlane.xlu0 %1276
    %v1278 = vrcp.pop %v1274
    %v1279 = vrcp.pop %v1277
    %v1280 = vmul.f32 %v1269, %v1278
    %v1281 = vmul.f32 %v1271, %v1279
    %v1282 = vpack.c.bf16 %v1281, %v1280
    %1283 = vrot.lane.b32.xlu0 %v879, 32
    %v1284 = vpop.permute.xlu0 %1283
    %v1287 = vsel %vm851, %v1282, 0
    %1289 = vmatprep.subr.bf16.mxu0 0
    %1290 = vmatpush1.bf16.msra.mxu0 0
    %1291 = vmatprep.subr.bf16.mxu0 0
    %1292 = vmatpush1.bf16.msra.mxu0 0
    %1293 = vmatprep.subr.bf16.mxu0 0
    %1294 = vmatpush1.bf16.msra.mxu0 0
    %1295 = vmatprep.subr.bf16.mxu0 0
    %1296 = vmatpush1.bf16.msra.mxu0 0
    %1297 = vmatprep.subr.bf16.mxu0 0
    %1298 = vmatpush1.bf16.msra.mxu0 0
    %1299 = vmatprep.subr.bf16.mxu0 0
    %1300 = vmatpush1.bf16.msra.mxu0 0
    %1301 = vmatprep.subr.bf16.mxu0 0
    %1302 = vmatpush1.bf16.msra.mxu0 0
    %1303 = vmatprep.subr.bf16.mxu0 0
    %1304 = vmatpush1.bf16.msra.mxu0 %v1284
    %1305 = vmatprep.subr.bf16.mxu0 0
    %1306 = vmatpush2.bf16.msra.mxu0 0
    %1307 = vmatprep.subr.bf16.mxu0 0
    %1308 = vmatpush2.bf16.msra.mxu0 0
    %1309 = vmatprep.subr.bf16.mxu0 0
    %1310 = vmatpush2.bf16.msra.mxu0 0
    %1311 = vmatprep.subr.bf16.mxu0 0
    %1312 = vmatpush2.bf16.msra.mxu0 0
    %1313 = vmatprep.subr.bf16.mxu0 0
    %1314 = vmatpush2.bf16.msra.mxu0 0
    %1315 = vmatprep.subr.bf16.mxu0 0
    %1316 = vmatpush2.bf16.msra.mxu0 0
    %1317 = vmatprep.subr.bf16.mxu0 0
    %1318 = vmatpush2.bf16.msra.mxu0 0
    %1319 = vmatprep.subr.bf16.mxu0 0
    %1320 = vmatpush2.bf16.msra.mxu0 0
    %1321 = vmatprep.mubr.bf16.mxu0 0
    %1322 = vmatmul.mubr.bf16.gmra.mxu0 %v1287
    %v1323 = vpop.f32.mrf.mxu0
    %v1324 = vadd.f32 0.0, %v1323
    %v1325 = vpop.f32.mrf.mxu0
    %v1326 = vpop.f32.mrf.mxu0
    %v1327 = vadd.f32 0.0, %v1326
    %v1328 = vpop.f32.mrf.mxu0
    %1329 = vdwg.mxu0
    %v1330 = vpack.c.bf16 %v1327, %v1324
    %v1332 = vunpack.c.l.b16 %v1330
    %v1333 = vunpack.c.h.b16 %v1330
    %v1334 = vpack.c.b16 %v1332, %v1332
    %v1335 = vpack.c.b16 %v1333, %v1333
    %1336 = vrot.lane.b32.xlu0 %v1334, 96
    %v1337 = vpop.permute.xlu0 %1336
    %1338 = vrot.lane.b32.xlu0 %v1335, 96
    %v1339 = vpop.permute.xlu0 %1338
    %vm1342 = vcmask 1044224
    %1343 = vst.msk [vmem:[#allocation4] sm:$0xf] %vm1342, %v1337
    %1344 = vst.msk [vmem:[#allocation4 + $0x4] sm:$0xf] %vm1342, %v1339
    %s1345 = scalar_lea.vmem %s2, 1
    %v1346 = vld [vmem:[%s1345] sm:$0x1]
    %vm1347 = vcmp.gt.f32.partialorder %v1346, 0.0
    %v1348 = vsel %vm1347, 0.0, -1e+09
    %v1350 = vlaneseq
    %v1351 = vshrl.u32 %v1350, 7
    %v1352 = vsub.s32 0, %v1351
    %v1353 = vrot.slane %v1348, %v1352
    %s1355 = scalar_lea.vmem [#allocation2], 8
    %v1356 = vld [vmem:[%s1355] sm:$0xf]
    %v1357 = vld [vmem:[%s1355 + $0x4] sm:$0xf]
    %s1358 = scalar_lea.vmem [#allocation3], 8
    %v1359 = vld [vmem:[%s1358] sm:$0xf]
    %v1360 = vld [vmem:[%s1358 + $0x4] sm:$0xf]
    %v1363 = vunpack.c.l.b16 %v1356
    %v1364 = vunpack.c.l.b16 %v1357
    %v1365 = vpack.c.b16 %v1364, %v1363
    %v1367 = vsel %vm803, %v784, 0
    %v1370 = vsel %vm803, %v1365, 0
    %1372 = vmatprep.subr.bf16.mxu0 0
    %1373 = vmatpush1.bf16.xpose.msra.mxu0 0
    %1374 = vmatprep.subr.bf16.mxu0 0
    %1375 = vmatpush1.bf16.xpose.msra.mxu0 0
    %1376 = vmatprep.subr.bf16.mxu0 0
    %1377 = vmatpush1.bf16.xpose.msra.mxu0 0
    %1378 = vmatprep.subr.bf16.mxu0 0
    %1379 = vmatpush1.bf16.xpose.msra.mxu0 0
    %1380 = vmatprep.subr.bf16.mxu0 0
    %1381 = vmatpush1.bf16.xpose.msra.mxu0 0
    %1382 = vmatprep.subr.bf16.mxu0 0
    %1383 = vmatpush1.bf16.xpose.msra.mxu0 0
    %1384 = vmatprep.subr.bf16.mxu0 0
    %1385 = vmatpush1.bf16.xpose.msra.mxu0 0
    %1386 = vmatprep.subr.bf16.mxu0 0
    %1387 = vmatpush1.bf16.xpose.msra.mxu0 %v1370
    %1388 = vmatprep.subr.bf16.mxu0 0
    %1389 = vmatpush2.bf16.xpose.msra.mxu0 0
    %1390 = vmatprep.subr.bf16.mxu0 0
    %1391 = vmatpush2.bf16.xpose.msra.mxu0 0
    %1392 = vmatprep.subr.bf16.mxu0 0
    %1393 = vmatpush2.bf16.xpose.msra.mxu0 0
    %1394 = vmatprep.subr.bf16.mxu0 0
    %1395 = vmatpush2.bf16.xpose.msra.mxu0 0
    %1396 = vmatprep.subr.bf16.mxu0 0
    %1397 = vmatpush2.bf16.xpose.msra.mxu0 0
    %1398 = vmatprep.subr.bf16.mxu0 0
    %1399 = vmatpush2.bf16.xpose.msra.mxu0 0
    %1400 = vmatprep.subr.bf16.mxu0 0
    %1401 = vmatpush2.bf16.xpose.msra.mxu0 0
    %1402 = vmatprep.subr.bf16.mxu0 0
    %1403 = vmatpush2.bf16.xpose.msra.mxu0 0
    %1404 = vmatprep.mubr.bf16.mxu0 0
    %1405 = vmatmul.mubr.bf16.gmra.mxu0 %v1367
    %v1406 = vpop.f32.mrf.mxu0
    %v1407 = vadd.f32 %v1353, %v1406
    %v1408 = vpop.f32.mrf.mxu0
    %v1409 = vpop.f32.mrf.mxu0
    %v1410 = vadd.f32 %v1353, %v1409
    %v1411 = vpop.f32.mrf.mxu0
    %1412 = vdwg.mxu0
    %v1413 = vsel %vm851, %v1407, -inf
    %1414 = vmax.xlane.f32.xlu0 %v1413
    %v1415 = vpop.xlane.xlu0 %1414
    %v1416 = vsel %vm851, %v1410, -inf
    %1417 = vmax.xlane.f32.xlu0 %v1416
    %v1418 = vpop.xlane.xlu0 %1417
    %v1419 = vsub.f32 %v1407, %v1415
    %v1420 = vsub.f32 %v1410, %v1418
    %v1421 = vmul.f32 %v1419, 1.442695
    %v1422 = vpow.pop %v1421
    %v1423 = vmul.f32 %v1420, 1.442695
    %v1424 = vpow.pop %v1423
    %v1425 = vsel %vm851, %v1422, 0.0
    %1426 = vadd.xlane.f32.xlu0 %v1425
    %v1427 = vpop.xlane.xlu0 %1426
    %v1428 = vsel %vm851, %v1424, 0.0
    %1429 = vadd.xlane.f32.xlu0 %v1428
    %v1430 = vpop.xlane.xlu0 %1429
    %v1431 = vrcp.pop %v1427
    %v1432 = vrcp.pop %v1430
    %v1433 = vmul.f32 %v1422, %v1431
    %v1434 = vmul.f32 %v1424, %v1432
    %v1435 = vpack.c.bf16 %v1434, %v1433
    %v1438 = vunpack.c.l.b16 %v1359
    %v1439 = vunpack.c.l.b16 %v1360
    %v1440 = vpack.c.b16 %v1439, %v1438
    %v1443 = vsel %vm851, %v1435, 0
    %1445 = vmatprep.subr.bf16.mxu0 0
    %1446 = vmatpush1.bf16.msra.mxu0 0
    %1447 = vmatprep.subr.bf16.mxu0 0
    %1448 = vmatpush1.bf16.msra.mxu0 0
    %1449 = vmatprep.subr.bf16.mxu0 0
    %1450 = vmatpush1.bf16.msra.mxu0 0
    %1451 = vmatprep.subr.bf16.mxu0 0
    %1452 = vmatpush1.bf16.msra.mxu0 0
    %1453 = vmatprep.subr.bf16.mxu0 0
    %1454 = vmatpush1.bf16.msra.mxu0 0
    %1455 = vmatprep.subr.bf16.mxu0 0
    %1456 = vmatpush1.bf16.msra.mxu0 0
    %1457 = vmatprep.subr.bf16.mxu0 0
    %1458 = vmatpush1.bf16.msra.mxu0 0
    %1459 = vmatprep.subr.bf16.mxu0 0
    %1460 = vmatpush1.bf16.msra.mxu0 %v1440
    %1461 = vmatprep.subr.bf16.mxu0 0
    %1462 = vmatpush2.bf16.msra.mxu0 0
    %1463 = vmatprep.subr.bf16.mxu0 0
    %1464 = vmatpush2.bf16.msra.mxu0 0
    %1465 = vmatprep.subr.bf16.mxu0 0
    %1466 = vmatpush2.bf16.msra.mxu0 0
    %1467 = vmatprep.subr.bf16.mxu0 0
    %1468 = vmatpush2.bf16.msra.mxu0 0
    %1469 = vmatprep.subr.bf16.mxu0 0
    %1470 = vmatpush2.bf16.msra.mxu0 0
    %1471 = vmatprep.subr.bf16.mxu0 0
    %1472 = vmatpush2.bf16.msra.mxu0 0
    %1473 = vmatprep.subr.bf16.mxu0 0
    %1474 = vmatpush2.bf16.msra.mxu0 0
    %1475 = vmatprep.subr.bf16.mxu0 0
    %1476 = vmatpush2.bf16.msra.mxu0 0
    %1477 = vmatprep.mubr.bf16.mxu0 0
    %1478 = vmatmul.mubr.bf16.gmra.mxu0 %v1443
    %v1479 = vpop.f32.mrf.mxu0
    %v1480 = vadd.f32 0.0, %v1479
    %v1481 = vpop.f32.mrf.mxu0
    %v1482 = vpop.f32.mrf.mxu0
    %v1483 = vadd.f32 0.0, %v1482
    %v1484 = vpop.f32.mrf.mxu0
    %1485 = vdwg.mxu0
    %v1486 = vpack.c.bf16 %v1483, %v1480
    %v1488 = vunpack.c.l.b16 %v1486
    %v1489 = vunpack.c.h.b16 %v1486
    %v1490 = vpack.c.b16 %v1488, %v1488
    %v1491 = vpack.c.b16 %v1489, %v1489
    %s1494 = scalar_lea.vmem [#allocation4], 8
    %1495 = vst.msk [vmem:[%s1494] sm:$0xf] %vm933, %v1490
    %1496 = vst.msk [vmem:[%s1494 + $0x4] sm:$0xf] %vm933, %v1491
    %1498 = vrot.lane.b32.xlu0 %v784, 96
    %v1499 = vpop.permute.xlu0 %1498
    %1500 = vrot.lane.b32.xlu0 %v1365, 96
    %v1501 = vpop.permute.xlu0 %1500
    %v1503 = vsel %vm803, %v1499, 0
    %v1506 = vsel %vm803, %v1501, 0
    %1508 = vmatprep.subr.bf16.mxu0 0
    %1509 = vmatpush1.bf16.xpose.msra.mxu0 0
    %1510 = vmatprep.subr.bf16.mxu0 0
    %1511 = vmatpush1.bf16.xpose.msra.mxu0 0
    %1512 = vmatprep.subr.bf16.mxu0 0
    %1513 = vmatpush1.bf16.xpose.msra.mxu0 0
    %1514 = vmatprep.subr.bf16.mxu0 0
    %1515 = vmatpush1.bf16.xpose.msra.mxu0 0
    %1516 = vmatprep.subr.bf16.mxu0 0
    %1517 = vmatpush1.bf16.xpose.msra.mxu0 0
    %1518 = vmatprep.subr.bf16.mxu0 0
    %1519 = vmatpush1.bf16.xpose.msra.mxu0 0
    %1520 = vmatprep.subr.bf16.mxu0 0
    %1521 = vmatpush1.bf16.xpose.msra.mxu0 0
    %1522 = vmatprep.subr.bf16.mxu0 0
    %1523 = vmatpush1.bf16.xpose.msra.mxu0 %v1506
    %1524 = vmatprep.subr.bf16.mxu0 0
    %1525 = vmatpush2.bf16.xpose.msra.mxu0 0
    %1526 = vmatprep.subr.bf16.mxu0 0
    %1527 = vmatpush2.bf16.xpose.msra.mxu0 0
    %1528 = vmatprep.subr.bf16.mxu0 0
    %1529 = vmatpush2.bf16.xpose.msra.mxu0 0
    %1530 = vmatprep.subr.bf16.mxu0 0
    %1531 = vmatpush2.bf16.xpose.msra.mxu0 0
    %1532 = vmatprep.subr.bf16.mxu0 0
    %1533 = vmatpush2.bf16.xpose.msra.mxu0 0
    %1534 = vmatprep.subr.bf16.mxu0 0
    %1535 = vmatpush2.bf16.xpose.msra.mxu0 0
    %1536 = vmatprep.subr.bf16.mxu0 0
    %1537 = vmatpush2.bf16.xpose.msra.mxu0 0
    %1538 = vmatprep.subr.bf16.mxu0 0
    %1539 = vmatpush2.bf16.xpose.msra.mxu0 0
    %1540 = vmatprep.mubr.bf16.mxu0 0
    %1541 = vmatmul.mubr.bf16.gmra.mxu0 %v1503
    %v1542 = vpop.f32.mrf.mxu0
    %v1543 = vadd.f32 %v1353, %v1542
    %v1544 = vpop.f32.mrf.mxu0
    %v1545 = vpop.f32.mrf.mxu0
    %v1546 = vadd.f32 %v1353, %v1545
    %v1547 = vpop.f32.mrf.mxu0
    %1548 = vdwg.mxu0
    %v1549 = vsel %vm851, %v1543, -inf
    %1550 = vmax.xlane.f32.xlu0 %v1549
    %v1551 = vpop.xlane.xlu0 %1550
    %v1552 = vsel %vm851, %v1546, -inf
    %1553 = vmax.xlane.f32.xlu0 %v1552
    %v1554 = vpop.xlane.xlu0 %1553
    %v1555 = vsub.f32 %v1543, %v1551
    %v1556 = vsub.f32 %v1546, %v1554
    %v1557 = vmul.f32 %v1555, 1.442695
    %v1558 = vpow.pop %v1557
    %v1559 = vmul.f32 %v1556, 1.442695
    %v1560 = vpow.pop %v1559
    %v1561 = vsel %vm851, %v1558, 0.0
    %1562 = vadd.xlane.f32.xlu0 %v1561
    %v1563 = vpop.xlane.xlu0 %1562
    %v1564 = vsel %vm851, %v1560, 0.0
    %1565 = vadd.xlane.f32.xlu0 %v1564
    %v1566 = vpop.xlane.xlu0 %1565
    %v1567 = vrcp.pop %v1563
    %v1568 = vrcp.pop %v1566
    %v1569 = vmul.f32 %v1558, %v1567
    %v1570 = vmul.f32 %v1560, %v1568
    %v1571 = vpack.c.bf16 %v1570, %v1569
    %1572 = vrot.lane.b32.xlu0 %v1440, 96
    %v1573 = vpop.permute.xlu0 %1572
    %v1576 = vsel %vm851, %v1571, 0
    %1578 = vmatprep.subr.bf16.mxu0 0
    %1579 = vmatpush1.bf16.msra.mxu0 0
    %1580 = vmatprep.subr.bf16.mxu0 0
    %1581 = vmatpush1.bf16.msra.mxu0 0
    %1582 = vmatprep.subr.bf16.mxu0 0
    %1583 = vmatpush1.bf16.msra.mxu0 0
    %1584 = vmatprep.subr.bf16.mxu0 0
    %1585 = vmatpush1.bf16.msra.mxu0 0
    %1586 = vmatprep.subr.bf16.mxu0 0
    %1587 = vmatpush1.bf16.msra.mxu0 0
    %1588 = vmatprep.subr.bf16.mxu0 0
    %1589 = vmatpush1.bf16.msra.mxu0 0
    %1590 = vmatprep.subr.bf16.mxu0 0
    %1591 = vmatpush1.bf16.msra.mxu0 0
    %1592 = vmatprep.subr.bf16.mxu0 0
    %1593 = vmatpush1.bf16.msra.mxu0 %v1573
    %1594 = vmatprep.subr.bf16.mxu0 0
    %1595 = vmatpush2.bf16.msra.mxu0 0
    %1596 = vmatprep.subr.bf16.mxu0 0
    %1597 = vmatpush2.bf16.msra.mxu0 0
    %1598 = vmatprep.subr.bf16.mxu0 0
    %1599 = vmatpush2.bf16.msra.mxu0 0
    %1600 = vmatprep.subr.bf16.mxu0 0
    %1601 = vmatpush2.bf16.msra.mxu0 0
    %1602 = vmatprep.subr.bf16.mxu0 0
    %1603 = vmatpush2.bf16.msra.mxu0 0
    %1604 = vmatprep.subr.bf16.mxu0 0
    %1605 = vmatpush2.bf16.msra.mxu0 0
    %1606 = vmatprep.subr.bf16.mxu0 0
    %1607 = vmatpush2.bf16.msra.mxu0 0
    %1608 = vmatprep.subr.bf16.mxu0 0
    %1609 = vmatpush2.bf16.msra.mxu0 0
    %1610 = vmatprep.mubr.bf16.mxu0 0
    %1611 = vmatmul.mubr.bf16.gmra.mxu0 %v1576
    %v1612 = vpop.f32.mrf.mxu0
    %v1613 = vadd.f32 0.0, %v1612
    %v1614 = vpop.f32.mrf.mxu0
    %v1615 = vpop.f32.mrf.mxu0
    %v1616 = vadd.f32 0.0, %v1615
    %v1617 = vpop.f32.mrf.mxu0
    %1618 = vdwg.mxu0
    %v1619 = vpack.c.bf16 %v1616, %v1613
    %v1621 = vunpack.c.l.b16 %v1619
    %v1622 = vunpack.c.h.b16 %v1619
    %v1623 = vpack.c.b16 %v1621, %v1621
    %v1624 = vpack.c.b16 %v1622, %v1622
    %1625 = vrot.lane.b32.xlu0 %v1623, 32
    %v1626 = vpop.permute.xlu0 %1625
    %1627 = vrot.lane.b32.xlu0 %v1624, 32
    %v1628 = vpop.permute.xlu0 %1627
    %1631 = vst.msk [vmem:[%s1494] sm:$0xf] %vm1070, %v1626
    %1632 = vst.msk [vmem:[%s1494 + $0x4] sm:$0xf] %vm1070, %v1628
    %1633 = vrot.lane.b32.xlu0 %v784, 64
    %v1634 = vpop.permute.xlu0 %1633
    %1635 = vrot.lane.b32.xlu0 %v1365, 64
    %v1636 = vpop.permute.xlu0 %1635
    %v1638 = vsel %vm803, %v1634, 0
    %v1641 = vsel %vm803, %v1636, 0
    %1643 = vmatprep.subr.bf16.mxu0 0
    %1644 = vmatpush1.bf16.xpose.msra.mxu0 0
    %1645 = vmatprep.subr.bf16.mxu0 0
    %1646 = vmatpush1.bf16.xpose.msra.mxu0 0
    %1647 = vmatprep.subr.bf16.mxu0 0
    %1648 = vmatpush1.bf16.xpose.msra.mxu0 0
    %1649 = vmatprep.subr.bf16.mxu0 0
    %1650 = vmatpush1.bf16.xpose.msra.mxu0 0
    %1651 = vmatprep.subr.bf16.mxu0 0
    %1652 = vmatpush1.bf16.xpose.msra.mxu0 0
    %1653 = vmatprep.subr.bf16.mxu0 0
    %1654 = vmatpush1.bf16.xpose.msra.mxu0 0
    %1655 = vmatprep.subr.bf16.mxu0 0
    %1656 = vmatpush1.bf16.xpose.msra.mxu0 0
    %1657 = vmatprep.subr.bf16.mxu0 0
    %1658 = vmatpush1.bf16.xpose.msra.mxu0 %v1641
    %1659 = vmatprep.subr.bf16.mxu0 0
    %1660 = vmatpush2.bf16.xpose.msra.mxu0 0
    %1661 = vmatprep.subr.bf16.mxu0 0
    %1662 = vmatpush2.bf16.xpose.msra.mxu0 0
    %1663 = vmatprep.subr.bf16.mxu0 0
    %1664 = vmatpush2.bf16.xpose.msra.mxu0 0
    %1665 = vmatprep.subr.bf16.mxu0 0
    %1666 = vmatpush2.bf16.xpose.msra.mxu0 0
    %1667 = vmatprep.subr.bf16.mxu0 0
    %1668 = vmatpush2.bf16.xpose.msra.mxu0 0
    %1669 = vmatprep.subr.bf16.mxu0 0
    %1670 = vmatpush2.bf16.xpose.msra.mxu0 0
    %1671 = vmatprep.subr.bf16.mxu0 0
    %1672 = vmatpush2.bf16.xpose.msra.mxu0 0
    %1673 = vmatprep.subr.bf16.mxu0 0
    %1674 = vmatpush2.bf16.xpose.msra.mxu0 0
    %1675 = vmatprep.mubr.bf16.mxu0 0
    %1676 = vmatmul.mubr.bf16.gmra.mxu0 %v1638
    %v1677 = vpop.f32.mrf.mxu0
    %v1678 = vadd.f32 %v1353, %v1677
    %v1679 = vpop.f32.mrf.mxu0
    %v1680 = vpop.f32.mrf.mxu0
    %v1681 = vadd.f32 %v1353, %v1680
    %v1682 = vpop.f32.mrf.mxu0
    %1683 = vdwg.mxu0
    %v1684 = vsel %vm851, %v1678, -inf
    %1685 = vmax.xlane.f32.xlu0 %v1684
    %v1686 = vpop.xlane.xlu0 %1685
    %v1687 = vsel %vm851, %v1681, -inf
    %1688 = vmax.xlane.f32.xlu0 %v1687
    %v1689 = vpop.xlane.xlu0 %1688
    %v1690 = vsub.f32 %v1678, %v1686
    %v1691 = vsub.f32 %v1681, %v1689
    %v1692 = vmul.f32 %v1690, 1.442695
    %v1693 = vpow.pop %v1692
    %v1694 = vmul.f32 %v1691, 1.442695
    %v1695 = vpow.pop %v1694
    %v1696 = vsel %vm851, %v1693, 0.0
    %1697 = vadd.xlane.f32.xlu0 %v1696
    %v1698 = vpop.xlane.xlu0 %1697
    %v1699 = vsel %vm851, %v1695, 0.0
    %1700 = vadd.xlane.f32.xlu0 %v1699
    %v1701 = vpop.xlane.xlu0 %1700
    %v1702 = vrcp.pop %v1698
    %v1703 = vrcp.pop %v1701
    %v1704 = vmul.f32 %v1693, %v1702
    %v1705 = vmul.f32 %v1695, %v1703
    %v1706 = vpack.c.bf16 %v1705, %v1704
    %1707 = vrot.lane.b32.xlu0 %v1440, 64
    %v1708 = vpop.permute.xlu0 %1707
    %v1711 = vsel %vm851, %v1706, 0
    %1713 = vmatprep.subr.bf16.mxu0 0
    %1714 = vmatpush1.bf16.msra.mxu0 0
    %1715 = vmatprep.subr.bf16.mxu0 0
    %1716 = vmatpush1.bf16.msra.mxu0 0
    %1717 = vmatprep.subr.bf16.mxu0 0
    %1718 = vmatpush1.bf16.msra.mxu0 0
    %1719 = vmatprep.subr.bf16.mxu0 0
    %1720 = vmatpush1.bf16.msra.mxu0 0
    %1721 = vmatprep.subr.bf16.mxu0 0
    %1722 = vmatpush1.bf16.msra.mxu0 0
    %1723 = vmatprep.subr.bf16.mxu0 0
    %1724 = vmatpush1.bf16.msra.mxu0 0
    %1725 = vmatprep.subr.bf16.mxu0 0
    %1726 = vmatpush1.bf16.msra.mxu0 0
    %1727 = vmatprep.subr.bf16.mxu0 0
    %1728 = vmatpush1.bf16.msra.mxu0 %v1708
    %1729 = vmatprep.subr.bf16.mxu0 0
    %1730 = vmatpush2.bf16.msra.mxu0 0
    %1731 = vmatprep.subr.bf16.mxu0 0
    %1732 = vmatpush2.bf16.msra.mxu0 0
    %1733 = vmatprep.subr.bf16.mxu0 0
    %1734 = vmatpush2.bf16.msra.mxu0 0
    %1735 = vmatprep.subr.bf16.mxu0 0
    %1736 = vmatpush2.bf16.msra.mxu0 0
    %1737 = vmatprep.subr.bf16.mxu0 0
    %1738 = vmatpush2.bf16.msra.mxu0 0
    %1739 = vmatprep.subr.bf16.mxu0 0
    %1740 = vmatpush2.bf16.msra.mxu0 0
    %1741 = vmatprep.subr.bf16.mxu0 0
    %1742 = vmatpush2.bf16.msra.mxu0 0
    %1743 = vmatprep.subr.bf16.mxu0 0
    %1744 = vmatpush2.bf16.msra.mxu0 0
    %1745 = vmatprep.mubr.bf16.mxu0 0
    %1746 = vmatmul.mubr.bf16.gmra.mxu0 %v1711
    %v1747 = vpop.f32.mrf.mxu0
    %v1748 = vadd.f32 0.0, %v1747
    %v1749 = vpop.f32.mrf.mxu0
    %v1750 = vpop.f32.mrf.mxu0
    %v1751 = vadd.f32 0.0, %v1750
    %v1752 = vpop.f32.mrf.mxu0
    %1753 = vdwg.mxu0
    %v1754 = vpack.c.bf16 %v1751, %v1748
    %v1756 = vunpack.c.l.b16 %v1754
    %v1757 = vunpack.c.h.b16 %v1754
    %v1758 = vpack.c.b16 %v1756, %v1756
    %v1759 = vpack.c.b16 %v1757, %v1757
    %1760 = vrot.lane.b32.xlu0 %v1758, 64
    %v1761 = vpop.permute.xlu0 %1760
    %1762 = vrot.lane.b32.xlu0 %v1759, 64
    %v1763 = vpop.permute.xlu0 %1762
    %1766 = vst.msk [vmem:[%s1494] sm:$0xf] %vm1206, %v1761
    %1767 = vst.msk [vmem:[%s1494 + $0x4] sm:$0xf] %vm1206, %v1763
    %1768 = vrot.lane.b32.xlu0 %v784, 32
    %v1769 = vpop.permute.xlu0 %1768
    %1770 = vrot.lane.b32.xlu0 %v1365, 32
    %v1771 = vpop.permute.xlu0 %1770
    %v1773 = vsel %vm803, %v1769, 0
    %v1776 = vsel %vm803, %v1771, 0
    %1778 = vmatprep.subr.bf16.mxu0 0
    %1779 = vmatpush1.bf16.xpose.msra.mxu0 0
    %1780 = vmatprep.subr.bf16.mxu0 0
    %1781 = vmatpush1.bf16.xpose.msra.mxu0 0
    %1782 = vmatprep.subr.bf16.mxu0 0
    %1783 = vmatpush1.bf16.xpose.msra.mxu0 0
    %1784 = vmatprep.subr.bf16.mxu0 0
    %1785 = vmatpush1.bf16.xpose.msra.mxu0 0
    %1786 = vmatprep.subr.bf16.mxu0 0
    %1787 = vmatpush1.bf16.xpose.msra.mxu0 0
    %1788 = vmatprep.subr.bf16.mxu0 0
    %1789 = vmatpush1.bf16.xpose.msra.mxu0 0
    %1790 = vmatprep.subr.bf16.mxu0 0
    %1791 = vmatpush1.bf16.xpose.msra.mxu0 0
    %1792 = vmatprep.subr.bf16.mxu0 0
    %1793 = vmatpush1.bf16.xpose.msra.mxu0 %v1776
    %1794 = vmatprep.subr.bf16.mxu0 0
    %1795 = vmatpush2.bf16.xpose.msra.mxu0 0
    %1796 = vmatprep.subr.bf16.mxu0 0
    %1797 = vmatpush2.bf16.xpose.msra.mxu0 0
    %1798 = vmatprep.subr.bf16.mxu0 0
    %1799 = vmatpush2.bf16.xpose.msra.mxu0 0
    %1800 = vmatprep.subr.bf16.mxu0 0
    %1801 = vmatpush2.bf16.xpose.msra.mxu0 0
    %1802 = vmatprep.subr.bf16.mxu0 0
    %1803 = vmatpush2.bf16.xpose.msra.mxu0 0
    %1804 = vmatprep.subr.bf16.mxu0 0
    %1805 = vmatpush2.bf16.xpose.msra.mxu0 0
    %1806 = vmatprep.subr.bf16.mxu0 0
    %1807 = vmatpush2.bf16.xpose.msra.mxu0 0
    %1808 = vmatprep.subr.bf16.mxu0 0
    %1809 = vmatpush2.bf16.xpose.msra.mxu0 0
    %1810 = vmatprep.mubr.bf16.mxu0 0
    %1811 = vmatmul.mubr.bf16.gmra.mxu0 %v1773
    %v1812 = vpop.f32.mrf.mxu0
    %v1813 = vadd.f32 %v1353, %v1812
    %v1814 = vpop.f32.mrf.mxu0
    %v1815 = vpop.f32.mrf.mxu0
    %v1816 = vadd.f32 %v1353, %v1815
    %v1817 = vpop.f32.mrf.mxu0
    %1818 = vdwg.mxu0
    %v1819 = vsel %vm851, %v1813, -inf
    %1820 = vmax.xlane.f32.xlu0 %v1819
    %v1821 = vpop.xlane.xlu0 %1820
    %v1822 = vsel %vm851, %v1816, -inf
    %1823 = vmax.xlane.f32.xlu0 %v1822
    %v1824 = vpop.xlane.xlu0 %1823
    %v1825 = vsub.f32 %v1813, %v1821
    %v1826 = vsub.f32 %v1816, %v1824
    %v1827 = vmul.f32 %v1825, 1.442695
    %v1828 = vpow.pop %v1827
    %v1829 = vmul.f32 %v1826, 1.442695
    %v1830 = vpow.pop %v1829
    %v1831 = vsel %vm851, %v1828, 0.0
    %1832 = vadd.xlane.f32.xlu0 %v1831
    %v1833 = vpop.xlane.xlu0 %1832
    %v1834 = vsel %vm851, %v1830, 0.0
    %1835 = vadd.xlane.f32.xlu0 %v1834
    %v1836 = vpop.xlane.xlu0 %1835
    %v1837 = vrcp.pop %v1833
    %v1838 = vrcp.pop %v1836
    %v1839 = vmul.f32 %v1828, %v1837
    %v1840 = vmul.f32 %v1830, %v1838
    %v1841 = vpack.c.bf16 %v1840, %v1839
    %1842 = vrot.lane.b32.xlu0 %v1440, 32
    %v1843 = vpop.permute.xlu0 %1842
    %v1846 = vsel %vm851, %v1841, 0
    %1848 = vmatprep.subr.bf16.mxu0 0
    %1849 = vmatpush1.bf16.msra.mxu0 0
    %1850 = vmatprep.subr.bf16.mxu0 0
    %1851 = vmatpush1.bf16.msra.mxu0 0
    %1852 = vmatprep.subr.bf16.mxu0 0
    %1853 = vmatpush1.bf16.msra.mxu0 0
    %1854 = vmatprep.subr.bf16.mxu0 0
    %1855 = vmatpush1.bf16.msra.mxu0 0
    %1856 = vmatprep.subr.bf16.mxu0 0
    %1857 = vmatpush1.bf16.msra.mxu0 0
    %1858 = vmatprep.subr.bf16.mxu0 0
    %1859 = vmatpush1.bf16.msra.mxu0 0
    %1860 = vmatprep.subr.bf16.mxu0 0
    %1861 = vmatpush1.bf16.msra.mxu0 0
    %1862 = vmatprep.subr.bf16.mxu0 0
    %1863 = vmatpush1.bf16.msra.mxu0 %v1843
    %1864 = vmatprep.subr.bf16.mxu0 0
    %1865 = vmatpush2.bf16.msra.mxu0 0
    %1866 = vmatprep.subr.bf16.mxu0 0
    %1867 = vmatpush2.bf16.msra.mxu0 0
    %1868 = vmatprep.subr.bf16.mxu0 0
    %1869 = vmatpush2.bf16.msra.mxu0 0
    %1870 = vmatprep.subr.bf16.mxu0 0
    %1871 = vmatpush2.bf16.msra.mxu0 0
    %1872 = vmatprep.subr.bf16.mxu0 0
    %1873 = vmatpush2.bf16.msra.mxu0 0
    %1874 = vmatprep.subr.bf16.mxu0 0
    %1875 = vmatpush2.bf16.msra.mxu0 0
    %1876 = vmatprep.subr.bf16.mxu0 0
    %1877 = vmatpush2.bf16.msra.mxu0 0
    %1878 = vmatprep.subr.bf16.mxu0 0
    %1879 = vmatpush2.bf16.msra.mxu0 0
    %1880 = vmatprep.mubr.bf16.mxu0 0
    %1881 = vmatmul.mubr.bf16.gmra.mxu0 %v1846
    %v1882 = vpop.f32.mrf.mxu0
    %v1883 = vadd.f32 0.0, %v1882
    %v1884 = vpop.f32.mrf.mxu0
    %v1885 = vpop.f32.mrf.mxu0
    %v1886 = vadd.f32 0.0, %v1885
    %v1887 = vpop.f32.mrf.mxu0
    %1888 = vdwg.mxu0
    %v1889 = vpack.c.bf16 %v1886, %v1883
    %v1891 = vunpack.c.l.b16 %v1889
    %v1892 = vunpack.c.h.b16 %v1889
    %v1893 = vpack.c.b16 %v1891, %v1891
    %v1894 = vpack.c.b16 %v1892, %v1892
    %1895 = vrot.lane.b32.xlu0 %v1893, 96
    %v1896 = vpop.permute.xlu0 %1895
    %1897 = vrot.lane.b32.xlu0 %v1894, 96
    %v1898 = vpop.permute.xlu0 %1897
    %1901 = vst.msk [vmem:[%s1494] sm:$0xf] %vm1342, %v1896
    %1902 = vst.msk [vmem:[%s1494 + $0x4] sm:$0xf] %vm1342, %v1898
    %v1903 = vld [vmem:[#allocation4] sm:$0xf]
    %v1904 = vld [vmem:[#allocation4 + $0x4] sm:$0xf]
    %v1905 = vld [vmem:[#allocation4 + $0x8] sm:$0xf]
    %v1906 = vld [vmem:[#allocation4 + $0xc] sm:$0xf]
    %v1907 = vld [vmem:[#allocation15] sm:$0xf]
    %v1908 = vld [vmem:[#allocation15 + $0x4] sm:$0xf]
    %v1909 = vld [vmem:[#allocation15 + $0x8] sm:$0xf]
    %v1910 = vld [vmem:[#allocation15 + $0xc] sm:$0xf]
    %v1911 = vld [vmem:[#allocation15 + $0x10] sm:$0xf]
    %v1912 = vld [vmem:[#allocation15 + $0x14] sm:$0xf]
    %v1913 = vld [vmem:[#allocation15 + $0x18] sm:$0xf]
    %v1914 = vld [vmem:[#allocation15 + $0x1c] sm:$0xf]
    %v1915 = vld [vmem:[#allocation15 + $0x20] sm:$0xf]
    %v1916 = vld [vmem:[#allocation15 + $0x24] sm:$0xf]
    %v1917 = vld [vmem:[#allocation15 + $0x28] sm:$0xf]
    %v1918 = vld [vmem:[#allocation15 + $0x2c] sm:$0xf]
    %v1919 = vld [vmem:[#allocation15 + $0x30] sm:$0xf]
    %v1920 = vld [vmem:[#allocation15 + $0x34] sm:$0xf]
    %v1921 = vld [vmem:[#allocation15 + $0x38] sm:$0xf]
    %v1922 = vld [vmem:[#allocation15 + $0x3c] sm:$0xf]
    %v1923 = vld [vmem:[%s10] sm:$0x1]
    %v1925 = vlaneseq
    %v1926 = vshrl.u32 %v1925, 7
    %v1927 = vsub.s32 0, %v1926
    %v1928 = vrot.slane %v1923, %v1927
    %v1934 = vunpack.c.l.b16 %v1903
    %v1935 = vunpack.c.l.b16 %v1904
    %v1936 = vunpack.c.l.b16 %v1905
    %v1937 = vunpack.c.l.b16 %v1906
    %v1938 = vpack.c.b16 %v1935, %v1934
    %v1939 = vpack.c.b16 %v1937, %v1936
    %v1958 = vunpack.c.l.b16 %v1907
    %v1959 = vunpack.c.l.b16 %v1908
    %v1960 = vunpack.c.l.b16 %v1909
    %v1961 = vunpack.c.l.b16 %v1910
    %v1962 = vunpack.c.l.b16 %v1911
    %v1963 = vunpack.c.l.b16 %v1912
    %v1964 = vunpack.c.l.b16 %v1913
    %v1965 = vunpack.c.l.b16 %v1914
    %v1966 = vunpack.c.l.b16 %v1915
    %v1967 = vunpack.c.l.b16 %v1916
    %v1968 = vunpack.c.l.b16 %v1917
    %v1969 = vunpack.c.l.b16 %v1918
    %v1970 = vunpack.c.l.b16 %v1919
    %v1971 = vunpack.c.l.b16 %v1920
    %v1972 = vunpack.c.l.b16 %v1921
    %v1973 = vunpack.c.l.b16 %v1922
    %v1974 = vpack.c.b16 %v1959, %v1958
    %v1975 = vpack.c.b16 %v1961, %v1960
    %v1976 = vpack.c.b16 %v1963, %v1962
    %v1977 = vpack.c.b16 %v1965, %v1964
    %v1978 = vpack.c.b16 %v1967, %v1966
    %v1979 = vpack.c.b16 %v1969, %v1968
    %v1980 = vpack.c.b16 %v1971, %v1970
    %v1981 = vpack.c.b16 %v1973, %v1972
    %1990 = vmatprep.subr.bf16.mxu0 0
    %1991 = vmatpush1.bf16.msra.mxu0 %v1981
    %1992 = vmatprep.subr.bf16.mxu0 0
    %1993 = vmatpush1.bf16.msra.mxu0 %v1980
    %1994 = vmatprep.subr.bf16.mxu0 0
    %1995 = vmatpush1.bf16.msra.mxu0 %v1979
    %1996 = vmatprep.subr.bf16.mxu0 0
    %1997 = vmatpush1.bf16.msra.mxu0 %v1978
    %1998 = vmatprep.subr.bf16.mxu0 0
    %1999 = vmatpush1.bf16.msra.mxu0 %v1977
    %2000 = vmatprep.subr.bf16.mxu0 0
    %2001 = vmatpush1.bf16.msra.mxu0 %v1976
    %2002 = vmatprep.subr.bf16.mxu0 0
    %2003 = vmatpush1.bf16.msra.mxu0 %v1975
    %2004 = vmatprep.subr.bf16.mxu0 0
    %2005 = vmatpush1.bf16.msra.mxu0 %v1974
    %2006 = vmatprep.subr.bf16.mxu0 0
    %2007 = vmatpush2.bf16.msra.mxu0 0
    %2008 = vmatprep.subr.bf16.mxu0 0
    %2009 = vmatpush2.bf16.msra.mxu0 0
    %2010 = vmatprep.subr.bf16.mxu0 0
    %2011 = vmatpush2.bf16.msra.mxu0 0
    %2012 = vmatprep.subr.bf16.mxu0 0
    %2013 = vmatpush2.bf16.msra.mxu0 0
    %2014 = vmatprep.subr.bf16.mxu0 0
    %2015 = vmatpush2.bf16.msra.mxu0 0
    %2016 = vmatprep.subr.bf16.mxu0 0
    %2017 = vmatpush2.bf16.msra.mxu0 0
    %2018 = vmatprep.subr.bf16.mxu0 0
    %2019 = vmatpush2.bf16.msra.mxu0 0
    %2020 = vmatprep.subr.bf16.mxu0 0
    %2021 = vmatpush2.bf16.msra.mxu0 0
    %2022 = vmatprep.mubr.bf16.mxu0 0
    %2023 = vmatmul.mubr.bf16.gmra.mxu0 %v1938
    %v2024 = vpop.f32.mrf.mxu0
    %v2025 = vadd.f32 %v1928, %v2024
    %v2026 = vpop.f32.mrf.mxu0
    %v2027 = vpop.f32.mrf.mxu0
    %v2028 = vadd.f32 %v1928, %v2027
    %v2029 = vpop.f32.mrf.mxu0
    %2030 = vmatprep.mubr.bf16.mxu0 0
    %2031 = vmatmul.mubr.bf16.gmra.mxu0 %v1939
    %v2032 = vpop.f32.mrf.mxu0
    %v2033 = vadd.f32 %v1928, %v2032
    %v2034 = vpop.f32.mrf.mxu0
    %v2035 = vpop.f32.mrf.mxu0
    %v2036 = vadd.f32 %v1928, %v2035
    %v2037 = vpop.f32.mrf.mxu0
    %2038 = vdwg.mxu0
    %v2039 = vadd.f32 %v558, %v2025
    %v2040 = vadd.f32 %v559, %v2028
    %v2041 = vadd.f32 %v560, %v2033
    %v2042 = vadd.f32 %v561, %v2036
    %v2043 = vld [vmem:[%s17] sm:$0x1]
    %v2044 = vld [vmem:[%s18] sm:$0x1]
    %2045 = vadd.xlane.f32.xlu0 %v2039
    %v2046 = vpop.xlane.xlu0 %2045
    %2047 = vadd.xlane.f32.xlu0 %v2040
    %v2048 = vpop.xlane.xlu0 %2047
    %2049 = vadd.xlane.f32.xlu0 %v2041
    %v2050 = vpop.xlane.xlu0 %2049
    %2051 = vadd.xlane.f32.xlu0 %v2042
    %v2052 = vpop.xlane.xlu0 %2051
    %v2053 = vmul.f32 %v2046, %v572
    %v2054 = vmul.f32 %v2048, %v572
    %v2055 = vmul.f32 %v2050, %v572
    %v2056 = vmul.f32 %v2052, %v572
    %v2057 = vsub.f32 %v2039, %v2053
    %v2058 = vsub.f32 %v2040, %v2054
    %v2059 = vsub.f32 %v2041, %v2055
    %v2060 = vsub.f32 %v2042, %v2056
    %v2061 = vmul.f32 %v2057, %v2057
    %v2062 = vmul.f32 %v2058, %v2058
    %v2063 = vmul.f32 %v2059, %v2059
    %v2064 = vmul.f32 %v2060, %v2060
    %2065 = vadd.xlane.f32.xlu0 %v2061
    %v2066 = vpop.xlane.xlu0 %2065
    %2067 = vadd.xlane.f32.xlu0 %v2062
    %v2068 = vpop.xlane.xlu0 %2067
    %2069 = vadd.xlane.f32.xlu0 %v2063
    %v2070 = vpop.xlane.xlu0 %2069
    %2071 = vadd.xlane.f32.xlu0 %v2064
    %v2072 = vpop.xlane.xlu0 %2071
    %v2073 = vmul.f32 %v2066, 0.007874016
    %v2074 = vmul.f32 %v2068, 0.007874016
    %v2075 = vmul.f32 %v2070, 0.007874016
    %v2076 = vmul.f32 %v2072, 0.007874016
    %v2077 = vrsqrt.pop %v2073
    %v2078 = vmul.f32 %v2073, %v2077
    %vm2079 = vcmp.eq.f32.partialorder %v2073, inf
    %v2080 = vsel %vm2079, %v2073, %v2078
    %vm2081 = vcmp.eq.f32.partialorder %v2073, 0.0
    %v2082 = vand.u32 %v2073, 2147483648
    %v2083 = vsel %vm2081, %v2082, %v2080
    %v2084 = vrsqrt.pop %v2074
    %v2085 = vmul.f32 %v2074, %v2084
    %vm2086 = vcmp.eq.f32.partialorder %v2074, inf
    %v2087 = vsel %vm2086, %v2074, %v2085
    %vm2088 = vcmp.eq.f32.partialorder %v2074, 0.0
    %v2089 = vand.u32 %v2074, 2147483648
    %v2090 = vsel %vm2088, %v2089, %v2087
    %v2091 = vrsqrt.pop %v2075
    %v2092 = vmul.f32 %v2075, %v2091
    %vm2093 = vcmp.eq.f32.partialorder %v2075, inf
    %v2094 = vsel %vm2093, %v2075, %v2092
    %vm2095 = vcmp.eq.f32.partialorder %v2075, 0.0
    %v2096 = vand.u32 %v2075, 2147483648
    %v2097 = vsel %vm2095, %v2096, %v2094
    %v2098 = vrsqrt.pop %v2076
    %v2099 = vmul.f32 %v2076, %v2098
    %vm2100 = vcmp.eq.f32.partialorder %v2076, inf
    %v2101 = vsel %vm2100, %v2076, %v2099
    %vm2102 = vcmp.eq.f32.partialorder %v2076, 0.0
    %v2103 = vand.u32 %v2076, 2147483648
    %v2104 = vsel %vm2102, %v2103, %v2101
    %v2105 = vadd.f32 %v2083, 1e-06
    %v2106 = vadd.f32 %v2090, 1e-06
    %v2107 = vadd.f32 %v2097, 1e-06
    %v2108 = vadd.f32 %v2104, 1e-06
    %v2109 = vrcp.pop %v2105
    %v2110 = vmul.f32 %v2057, %v2109
    %v2111 = vrcp.pop %v2106
    %v2112 = vmul.f32 %v2058, %v2111
    %v2113 = vrcp.pop %v2107
    %v2114 = vmul.f32 %v2059, %v2113
    %v2115 = vrcp.pop %v2108
    %v2116 = vmul.f32 %v2060, %v2115
    %v2118 = vlaneseq
    %v2119 = vshrl.u32 %v2118, 7
    %v2120 = vsub.s32 0, %v2119
    %v2121 = vrot.slane %v2043, %v2120
    %v2123 = vmul.f32 %v2121, %v2110
    %v2124 = vmul.f32 %v2121, %v2112
    %v2125 = vmul.f32 %v2121, %v2114
    %v2126 = vmul.f32 %v2121, %v2116
    %v2128 = vlaneseq
    %v2129 = vshrl.u32 %v2128, 7
    %v2130 = vsub.s32 0, %v2129
    %v2131 = vrot.slane %v2044, %v2130
    %v2133 = vadd.f32 %v2123, %v2131
    %v2134 = vadd.f32 %v2124, %v2131
    %v2135 = vadd.f32 %v2125, %v2131
    %v2136 = vadd.f32 %v2126, %v2131
    %v2137 = vpack.c.bf16 %v2134, %v2133
    %v2138 = vpack.c.bf16 %v2136, %v2135
    %2139 = vst [vmem:[#allocation5] sm:$0xff] 0.0
    %2140 = vst [vmem:[#allocation5 + $0x8] sm:$0xff] 0.0
    %2141 = vst [vmem:[#allocation5 + $0x10] sm:$0xff] 0.0
    %2142 = vst [vmem:[#allocation5 + $0x18] sm:$0xff] 0.0
    %v2143 = vld [vmem:[#allocation17] sm:$0xff]
    %v2144 = vld [vmem:[#allocation17 + $0x8] sm:$0xff]
    %v2145 = vld [vmem:[#allocation17 + $0x10] sm:$0xff]
    %v2146 = vld [vmem:[#allocation17 + $0x18] sm:$0xff]
    %v2147 = vld [vmem:[#allocation17 + $0x20] sm:$0xff]
    %v2148 = vld [vmem:[#allocation17 + $0x28] sm:$0xff]
    %v2149 = vld [vmem:[#allocation17 + $0x30] sm:$0xff]
    %v2150 = vld [vmem:[#allocation17 + $0x38] sm:$0xff]
    %v2151 = vld [vmem:[#allocation17 + $0x40] sm:$0xff]
    %v2152 = vld [vmem:[#allocation17 + $0x48] sm:$0xff]
    %v2153 = vld [vmem:[#allocation17 + $0x50] sm:$0xff]
    %v2154 = vld [vmem:[#allocation17 + $0x58] sm:$0xff]
    %v2155 = vld [vmem:[#allocation17 + $0x60] sm:$0xff]
    %v2156 = vld [vmem:[#allocation17 + $0x68] sm:$0xff]
    %v2157 = vld [vmem:[#allocation17 + $0x70] sm:$0xff]
    %v2158 = vld [vmem:[#allocation17 + $0x78] sm:$0xff]
    %v2159 = vld [vmem:[%s14] sm:$0x3]
    %v2161 = vlaneseq
    %v2162 = vshrl.u32 %v2161, 7
    %v2163 = vsub.s32 0, %v2162
    %v2164 = vrot.slane %v2159, %v2163
    %v2165 = vlaneseq
    %v2166 = vshrl.u32 %v2165, 7
    %v2167 = vsub.s32 1, %v2166
    %v2168 = vrot.slane %v2159, %v2167
    %v2187 = vunpack.c.l.b16 %v2143
    %v2188 = vunpack.c.h.b16 %v2143
    %v2189 = vunpack.c.l.b16 %v2144
    %v2190 = vunpack.c.h.b16 %v2144
    %v2191 = vunpack.c.l.b16 %v2145
    %v2192 = vunpack.c.h.b16 %v2145
    %v2193 = vunpack.c.l.b16 %v2146
    %v2194 = vunpack.c.h.b16 %v2146
    %v2195 = vunpack.c.l.b16 %v2147
    %v2196 = vunpack.c.h.b16 %v2147
    %v2197 = vunpack.c.l.b16 %v2148
    %v2198 = vunpack.c.h.b16 %v2148
    %v2199 = vunpack.c.l.b16 %v2149
    %v2200 = vunpack.c.h.b16 %v2149
    %v2201 = vunpack.c.l.b16 %v2150
    %v2202 = vunpack.c.h.b16 %v2150
    %v2203 = vunpack.c.l.b16 %v2151
    %v2204 = vunpack.c.h.b16 %v2151
    %v2205 = vunpack.c.l.b16 %v2152
    %v2206 = vunpack.c.h.b16 %v2152
    %v2207 = vunpack.c.l.b16 %v2153
    %v2208 = vunpack.c.h.b16 %v2153
    %v2209 = vunpack.c.l.b16 %v2154
    %v2210 = vunpack.c.h.b16 %v2154
    %v2211 = vunpack.c.l.b16 %v2155
    %v2212 = vunpack.c.h.b16 %v2155
    %v2213 = vunpack.c.l.b16 %v2156
    %v2214 = vunpack.c.h.b16 %v2156
    %v2215 = vunpack.c.l.b16 %v2157
    %v2216 = vunpack.c.h.b16 %v2157
    %v2217 = vunpack.c.l.b16 %v2158
    %v2218 = vunpack.c.h.b16 %v2158
    %v2219 = vpack.c.b16 %v2189, %v2187
    %v2220 = vpack.c.b16 %v2190, %v2188
    %v2221 = vpack.c.b16 %v2193, %v2191
    %v2222 = vpack.c.b16 %v2194, %v2192
    %v2223 = vpack.c.b16 %v2197, %v2195
    %v2224 = vpack.c.b16 %v2198, %v2196
    %v2225 = vpack.c.b16 %v2201, %v2199
    %v2226 = vpack.c.b16 %v2202, %v2200
    %v2227 = vpack.c.b16 %v2205, %v2203
    %v2228 = vpack.c.b16 %v2206, %v2204
    %v2229 = vpack.c.b16 %v2209, %v2207
    %v2230 = vpack.c.b16 %v2210, %v2208
    %v2231 = vpack.c.b16 %v2213, %v2211
    %v2232 = vpack.c.b16 %v2214, %v2212
    %v2233 = vpack.c.b16 %v2217, %v2215
    %v2234 = vpack.c.b16 %v2218, %v2216
    %2251 = vmatprep.subr.bf16.mxu0 %v2234
    %2252 = vmatpush1.bf16.msra.mxu0 %v2233
    %2253 = vmatprep.subr.bf16.mxu0 %v2232
    %2254 = vmatpush1.bf16.msra.mxu0 %v2231
    %2255 = vmatprep.subr.bf16.mxu0 %v2230
    %2256 = vmatpush1.bf16.msra.mxu0 %v2229
    %2257 = vmatprep.subr.bf16.mxu0 %v2228
    %2258 = vmatpush1.bf16.msra.mxu0 %v2227
    %2259 = vmatprep.subr.bf16.mxu0 %v2226
    %2260 = vmatpush1.bf16.msra.mxu0 %v2225
    %2261 = vmatprep.subr.bf16.mxu0 %v2224
    %2262 = vmatpush1.bf16.msra.mxu0 %v2223
    %2263 = vmatprep.subr.bf16.mxu0 %v2222
    %2264 = vmatpush1.bf16.msra.mxu0 %v2221
    %2265 = vmatprep.subr.bf16.mxu0 %v2220
    %2266 = vmatpush1.bf16.msra.mxu0 %v2219
    %2267 = vmatprep.subr.bf16.mxu0 0
    %2268 = vmatpush2.bf16.msra.mxu0 0
    %2269 = vmatprep.subr.bf16.mxu0 0
    %2270 = vmatpush2.bf16.msra.mxu0 0
    %2271 = vmatprep.subr.bf16.mxu0 0
    %2272 = vmatpush2.bf16.msra.mxu0 0
    %2273 = vmatprep.subr.bf16.mxu0 0
    %2274 = vmatpush2.bf16.msra.mxu0 0
    %2275 = vmatprep.subr.bf16.mxu0 0
    %2276 = vmatpush2.bf16.msra.mxu0 0
    %2277 = vmatprep.subr.bf16.mxu0 0
    %2278 = vmatpush2.bf16.msra.mxu0 0
    %2279 = vmatprep.subr.bf16.mxu0 0
    %2280 = vmatpush2.bf16.msra.mxu0 0
    %2281 = vmatprep.subr.bf16.mxu0 0
    %2282 = vmatpush2.bf16.msra.mxu0 0
    %2283 = vmatprep.mubr.bf16.mxu0 0
    %2284 = vmatmul.mubr.bf16.gmra.mxu0 %v2137
    %v2285 = vpop.f32.mrf.mxu0
    %v2286 = vadd.f32 %v2164, %v2285
    %v2287 = vpop.f32.mrf.mxu0
    %v2288 = vadd.f32 %v2168, %v2287
    %v2289 = vpop.f32.mrf.mxu0
    %v2290 = vadd.f32 %v2164, %v2289
    %v2291 = vpop.f32.mrf.mxu0
    %v2292 = vadd.f32 %v2168, %v2291
    %2293 = vmatprep.mubr.bf16.mxu0 0
    %2294 = vmatmul.mubr.bf16.gmra.mxu0 %v2138
    %v2295 = vpop.f32.mrf.mxu0
    %v2296 = vadd.f32 %v2164, %v2295
    %v2297 = vpop.f32.mrf.mxu0
    %v2298 = vadd.f32 %v2168, %v2297
    %v2299 = vpop.f32.mrf.mxu0
    %v2300 = vadd.f32 %v2164, %v2299
    %v2301 = vpop.f32.mrf.mxu0
    %v2302 = vadd.f32 %v2168, %v2301
    %2303 = vdwg.mxu0
    %v2304 = vmax.f32 %v2286, 0.0
    %v2305 = vmax.f32 %v2288, 0.0
    %v2306 = vmax.f32 %v2290, 0.0
    %v2307 = vmax.f32 %v2292, 0.0
    %v2308 = vmax.f32 %v2296, 0.0
    %v2309 = vmax.f32 %v2298, 0.0
    %v2310 = vmax.f32 %v2300, 0.0
    %v2311 = vmax.f32 %v2302, 0.0
    %v2312 = vld [vmem:[#allocation5] sm:$0xff]
    %v2313 = vld [vmem:[#allocation5 + $0x8] sm:$0xff]
    %v2314 = vld [vmem:[#allocation5 + $0x10] sm:$0xff]
    %v2315 = vld [vmem:[#allocation5 + $0x18] sm:$0xff]
    %v2316 = vpack.c.bf16 %v2306, %v2304
    %v2317 = vpack.c.bf16 %v2307, %v2305
    %v2318 = vpack.c.bf16 %v2310, %v2308
    %v2319 = vpack.c.bf16 %v2311, %v2309
    %v2320 = vld [vmem:[#allocation18] sm:$0xf]
    %v2321 = vld [vmem:[#allocation18 + $0x4] sm:$0xf]
    %v2322 = vld [vmem:[#allocation18 + $0x8] sm:$0xf]
    %v2323 = vld [vmem:[#allocation18 + $0xc] sm:$0xf]
    %v2324 = vld [vmem:[#allocation18 + $0x10] sm:$0xf]
    %v2325 = vld [vmem:[#allocation18 + $0x14] sm:$0xf]
    %v2326 = vld [vmem:[#allocation18 + $0x18] sm:$0xf]
    %v2327 = vld [vmem:[#allocation18 + $0x1c] sm:$0xf]
    %v2328 = vld [vmem:[#allocation18 + $0x20] sm:$0xf]
    %v2329 = vld [vmem:[#allocation18 + $0x24] sm:$0xf]
    %v2330 = vld [vmem:[#allocation18 + $0x28] sm:$0xf]
    %v2331 = vld [vmem:[#allocation18 + $0x2c] sm:$0xf]
    %v2332 = vld [vmem:[#allocation18 + $0x30] sm:$0xf]
    %v2333 = vld [vmem:[#allocation18 + $0x34] sm:$0xf]
    %v2334 = vld [vmem:[#allocation18 + $0x38] sm:$0xf]
    %v2335 = vld [vmem:[#allocation18 + $0x3c] sm:$0xf]
    %v2336 = vld [vmem:[#allocation18 + $0x40] sm:$0xf]
    %v2337 = vld [vmem:[#allocation18 + $0x44] sm:$0xf]
    %v2338 = vld [vmem:[#allocation18 + $0x48] sm:$0xf]
    %v2339 = vld [vmem:[#allocation18 + $0x4c] sm:$0xf]
    %v2340 = vld [vmem:[#allocation18 + $0x50] sm:$0xf]
    %v2341 = vld [vmem:[#allocation18 + $0x54] sm:$0xf]
    %v2342 = vld [vmem:[#allocation18 + $0x58] sm:$0xf]
    %v2343 = vld [vmem:[#allocation18 + $0x5c] sm:$0xf]
    %v2344 = vld [vmem:[#allocation18 + $0x60] sm:$0xf]
    %v2345 = vld [vmem:[#allocation18 + $0x64] sm:$0xf]
    %v2346 = vld [vmem:[#allocation18 + $0x68] sm:$0xf]
    %v2347 = vld [vmem:[#allocation18 + $0x6c] sm:$0xf]
    %v2348 = vld [vmem:[#allocation18 + $0x70] sm:$0xf]
    %v2349 = vld [vmem:[#allocation18 + $0x74] sm:$0xf]
    %v2350 = vld [vmem:[#allocation18 + $0x78] sm:$0xf]
    %v2351 = vld [vmem:[#allocation18 + $0x7c] sm:$0xf]
    %v2384 = vunpack.c.l.b16 %v2320
    %v2385 = vunpack.c.l.b16 %v2321
    %v2386 = vunpack.c.l.b16 %v2322
    %v2387 = vunpack.c.l.b16 %v2323
    %v2388 = vunpack.c.l.b16 %v2324
    %v2389 = vunpack.c.l.b16 %v2325
    %v2390 = vunpack.c.l.b16 %v2326
    %v2391 = vunpack.c.l.b16 %v2327
    %v2392 = vunpack.c.l.b16 %v2328
    %v2393 = vunpack.c.l.b16 %v2329
    %v2394 = vunpack.c.l.b16 %v2330
    %v2395 = vunpack.c.l.b16 %v2331
    %v2396 = vunpack.c.l.b16 %v2332
    %v2397 = vunpack.c.l.b16 %v2333
    %v2398 = vunpack.c.l.b16 %v2334
    %v2399 = vunpack.c.l.b16 %v2335
    %v2400 = vunpack.c.l.b16 %v2336
    %v2401 = vunpack.c.l.b16 %v2337
    %v2402 = vunpack.c.l.b16 %v2338
    %v2403 = vunpack.c.l.b16 %v2339
    %v2404 = vunpack.c.l.b16 %v2340
    %v2405 = vunpack.c.l.b16 %v2341
    %v2406 = vunpack.c.l.b16 %v2342
    %v2407 = vunpack.c.l.b16 %v2343
    %v2408 = vunpack.c.l.b16 %v2344
    %v2409 = vunpack.c.l.b16 %v2345
    %v2410 = vunpack.c.l.b16 %v2346
    %v2411 = vunpack.c.l.b16 %v2347
    %v2412 = vunpack.c.l.b16 %v2348
    %v2413 = vunpack.c.l.b16 %v2349
    %v2414 = vunpack.c.l.b16 %v2350
    %v2415 = vunpack.c.l.b16 %v2351
    %v2416 = vpack.c.b16 %v2385, %v2384
    %v2417 = vpack.c.b16 %v2387, %v2386
    %v2418 = vpack.c.b16 %v2389, %v2388
    %v2419 = vpack.c.b16 %v2391, %v2390
    %v2420 = vpack.c.b16 %v2393, %v2392
    %v2421 = vpack.c.b16 %v2395, %v2394
    %v2422 = vpack.c.b16 %v2397, %v2396
    %v2423 = vpack.c.b16 %v2399, %v2398
    %v2424 = vpack.c.b16 %v2401, %v2400
    %v2425 = vpack.c.b16 %v2403, %v2402
    %v2426 = vpack.c.b16 %v2405, %v2404
    %v2427 = vpack.c.b16 %v2407, %v2406
    %v2428 = vpack.c.b16 %v2409, %v2408
    %v2429 = vpack.c.b16 %v2411, %v2410
    %v2430 = vpack.c.b16 %v2413, %v2412
    %v2431 = vpack.c.b16 %v2415, %v2414
    %2448 = vmatprep.subr.bf16.mxu0 0
    %2449 = vmatpush1.bf16.msra.mxu0 %v2423
    %2450 = vmatprep.subr.bf16.mxu0 0
    %2451 = vmatpush1.bf16.msra.mxu0 %v2422
    %2452 = vmatprep.subr.bf16.mxu0 0
    %2453 = vmatpush1.bf16.msra.mxu0 %v2421
    %2454 = vmatprep.subr.bf16.mxu0 0
    %2455 = vmatpush1.bf16.msra.mxu0 %v2420
    %2456 = vmatprep.subr.bf16.mxu0 0
    %2457 = vmatpush1.bf16.msra.mxu0 %v2419
    %2458 = vmatprep.subr.bf16.mxu0 0
    %2459 = vmatpush1.bf16.msra.mxu0 %v2418
    %2460 = vmatprep.subr.bf16.mxu0 0
    %2461 = vmatpush1.bf16.msra.mxu0 %v2417
    %2462 = vmatprep.subr.bf16.mxu0 0
    %2463 = vmatpush1.bf16.msra.mxu0 %v2416
    %2464 = vmatprep.subr.bf16.mxu0 0
    %2465 = vmatpush2.bf16.msra.mxu0 %v2431
    %2466 = vmatprep.subr.bf16.mxu0 0
    %2467 = vmatpush2.bf16.msra.mxu0 %v2430
    %2468 = vmatprep.subr.bf16.mxu0 0
    %2469 = vmatpush2.bf16.msra.mxu0 %v2429
    %2470 = vmatprep.subr.bf16.mxu0 0
    %2471 = vmatpush2.bf16.msra.mxu0 %v2428
    %2472 = vmatprep.subr.bf16.mxu0 0
    %2473 = vmatpush2.bf16.msra.mxu0 %v2427
    %2474 = vmatprep.subr.bf16.mxu0 0
    %2475 = vmatpush2.bf16.msra.mxu0 %v2426
    %2476 = vmatprep.subr.bf16.mxu0 0
    %2477 = vmatpush2.bf16.msra.mxu0 %v2425
    %2478 = vmatprep.subr.bf16.mxu0 0
    %2479 = vmatpush2.bf16.msra.mxu0 %v2424
    %2480 = vmatprep.mubr.bf16.mxu0 %v2317
    %2481 = vmatmul.mubr.bf16.gmra.mxu0 %v2316
    %v2482 = vpop.f32.mrf.mxu0
    %v2483 = vadd.f32 0.0, %v2482
    %v2484 = vpop.f32.mrf.mxu0
    %v2485 = vpop.f32.mrf.mxu0
    %v2486 = vadd.f32 0.0, %v2485
    %v2487 = vpop.f32.mrf.mxu0
    %2488 = vmatprep.mubr.bf16.mxu0 %v2319
    %2489 = vmatmul.mubr.bf16.gmra.mxu0 %v2318
    %v2490 = vpop.f32.mrf.mxu0
    %v2491 = vadd.f32 0.0, %v2490
    %v2492 = vpop.f32.mrf.mxu0
    %v2493 = vpop.f32.mrf.mxu0
    %v2494 = vadd.f32 0.0, %v2493
    %v2495 = vpop.f32.mrf.mxu0
    %2496 = vdwg.mxu0
    %v2497 = vadd.f32 %v2312, %v2483
    %v2498 = vadd.f32 %v2313, %v2486
    %v2499 = vadd.f32 %v2314, %v2491
    %v2500 = vadd.f32 %v2315, %v2494
    %2501 = vst [vmem:[#allocation5] sm:$0xff] %v2497
    %2502 = vst [vmem:[#allocation5 + $0x8] sm:$0xff] %v2498
    %2503 = vst [vmem:[#allocation5 + $0x10] sm:$0xff] %v2499
    %2504 = vst [vmem:[#allocation5 + $0x18] sm:$0xff] %v2500
    %v2505 = vld [vmem:[#allocation5] sm:$0xff]
    %v2506 = vld [vmem:[#allocation5 + $0x8] sm:$0xff]
    %v2507 = vld [vmem:[#allocation5 + $0x10] sm:$0xff]
    %v2508 = vld [vmem:[#allocation5 + $0x18] sm:$0xff]
    %v2509 = vadd.f32 %v2039, %v2505
    %v2510 = vadd.f32 %v2040, %v2506
    %v2511 = vadd.f32 %v2041, %v2507
    %v2512 = vadd.f32 %v2042, %v2508
    %v2513 = vld [vmem:[%s16] sm:$0x1]
    %v2515 = vlaneseq
    %v2516 = vshrl.u32 %v2515, 7
    %v2517 = vsub.s32 0, %v2516
    %v2518 = vrot.slane %v2513, %v2517
    %v2520 = vadd.f32 %v2509, %v2518
    %v2521 = vadd.f32 %v2510, %v2518
    %v2522 = vadd.f32 %v2511, %v2518
    %v2523 = vadd.f32 %v2512, %v2518
    %2524 = vst [vmem:[#allocation20] sm:$0xff] %v2520
    %2525 = vst [vmem:[#allocation20 + $0x8] sm:$0xff] %v2521
    %2526 = vst [vmem:[#allocation20 + $0x10] sm:$0xff] %v2522
    %2527 = vst [vmem:[#allocation20 + $0x18] sm:$0xff] %v2523
    // Predicated region
    $region114: #{tpu_custom_call.1} parent=1 // pred_check
      _
    $region115: #{tpu_custom_call.1} parent=1 // pred_check_branch
      %2529 = sbr.rel (0) target = $region117
    $region116: #{tpu_custom_call.1} parent=1 // pred_region
      %s2531 = ssub.s32 512, 512
      %2532 = vsyncadd [#allocation8], %s2531
      %s2533 = sshll.u32 [#allocation20], 4
      %s2534 = int_to_ptr.vmem [resolvable:$true] %s2533
      %2539 = dma.vmem_to_hbm [thread:$0]  %s2534, 512, %s19, [#allocation8], 128, 128, 8
    $region117: #{tpu_custom_call.1} parent=1 // pred_fallthru
      _
    // Predicated region
    $region118: #{tpu_custom_call.1} parent=1 // pred_check
      _
    $region119: #{tpu_custom_call.1} parent=1 // pred_check_branch
      %2541 = sbr.rel (0) target = $region121
    $region120: #{tpu_custom_call.1} parent=1 // pred_region
      %2542 = dma.done [#allocation8], 512
    $region121: #{tpu_custom_call.1} parent=1 // pred_fallthru
      _
    %2543 = vsyncpa [#allocation7], 1
    %2544 = vsyncpa [#allocation10], 1
    %2545 = vsyncpa [#allocation13], 1
    %2546 = vsyncpa [#allocation16], 1
    %2547 = vsyncpa [#allocation19], 1
    %2548 = vsyncpa [#allocation8], 1

</llo_original>
